<compile_context>
chip_gen: v6e
topology: v6e:2x2x1
jax: 0.10.0
libtpu: 0.0.40
codegen_flags: <defaults>
</compile_context>

<pallas_src>
import numpy as np
import jax
import jax.numpy as jnp
from jax.experimental import pallas as pl
from jax.experimental.pallas import tpu as pltpu


# ----------------------------------------------------------------------------
# Host-side constant 0/1 tap-selection matrices, block-diagonal over the batch
# ----------------------------------------------------------------------------
def _selection_matrices(h, w, k, pad, n_batch, out_batch_major=True):
    """S[t, row_out, row_in] = 1 iff tap t=(i,j) of conv output position p_out
    of image n reads the in-bounds input pixel p_in of image n (stride 2).
    Zero padding is folded in (out-of-image taps select nothing -> 0).

    Input rows are batch-major: row_in = n*H*W + p_in.
    Output rows are batch-major (n*OH*OW + p_out) by default; with
    out_batch_major=False they are position-major (p_out*N + n), the layout the
    FC flatten/assembly wants after conv4."""
    oh = (h + 2 * pad - k) // 2 + 1
    ow = (w + 2 * pad - k) // 2 + 1
    m_in, m_out = h * w, oh * ow
    s = np.zeros((k * k, n_batch * m_out, n_batch * m_in), np.float32)
    for i in range(k):
        for j in range(k):
            t = i * k + j
            for r in range(oh):
                for c in range(ow):
                    hh, ww = 2 * r + i - pad, 2 * c + j - pad
                    if 0 <= hh < h and 0 <= ww < w:
                        p_out, p_in = r * ow + c, hh * w + ww
                        for n in range(n_batch):
                            row = (n * m_out + p_out) if out_batch_major \
                                  else (p_out * n_batch + n)
                            s[t, row, n * m_in + p_in] = 1.0
    return s


# ----------------------------------------------------------------------------
# Fused kernel: conv1 + conv2 + conv3 + conv4 + fc, all resident in VMEM
# ----------------------------------------------------------------------------
def _encoder_kernel(patches_ref, w1_ref, w2_ref, w3_ref, w4_ref,
                    s2_ref, s3_ref, s4_ref, bias_ref, wfc_hbm_ref,
                    out_ref, y4_scr, wfc_vmem, fc_sem):
    f32, bf16 = jnp.float32, jnp.bfloat16
    n_batch, latent = out_ref.shape
    half = latent // 2

    # Kick off the FC-weight DMA (two halves along latent) immediately so it
    # overlaps the whole conv stack; the first half is consumed while the
    # second is still in flight.
    fc_cp = [pltpu.make_async_copy(wfc_hbm_ref.at[h], wfc_vmem.at[h], fc_sem.at[h])
             for h in range(2)]
    fc_cp[0].start()
    fc_cp[1].start()

    def conv_taps(x, s_ref, w_ref):
        """sum_t (S_t @ x) @ W_t over the whole batch, f32 accumulation.
        The selection matmul is an exact 0/1 row gather, so the bf16 cast of
        its result is lossless."""
        acc = None
        for t in range(s_ref.shape[0]):
            sel = jnp.dot(s_ref[t], x, preferred_element_type=f32).astype(bf16)
            part = jnp.dot(sel, w_ref[t], preferred_element_type=f32)
            acc = part if acc is None else acc + part
        return acc

    def bias(row, width):                       # (1, width) f32 slice, lane 0
        return bias_ref[row:row + 1, 0:width]

    # ---- conv1: pre-im2col'ed patches -> one matmul over the whole batch ----
    a1 = jnp.dot(patches_ref[...], w1_ref[...], preferred_element_type=f32)
    y1 = jnp.maximum(a1 + bias(0, w1_ref.shape[1]), 0.0).astype(bf16)

    # ---- conv2 / conv3: per-tap selection matmuls, batch folded into M ------
    y2 = jnp.maximum(conv_taps(y1, s2_ref, w2_ref) + bias(1, w2_ref.shape[2]),
                     0.0).astype(bf16)
    y3 = jnp.maximum(conv_taps(y2, s3_ref, w3_ref) + bias(2, w3_ref.shape[2]),
                     0.0).astype(bf16)

    # ---- conv4 (output rows ordered position-major, batch-minor) ------------
    c4 = w4_ref.shape[2]
    n_sp4 = s4_ref.shape[1] // n_batch
    y4 = jnp.maximum(conv_taps(y3, s4_ref, w4_ref) + bias(3, c4), 0.0)  # f32

    # Assemble the flatten-ordered (N, n_sp4*c4) FC activation.  Column order
    # is (position, channel); the host-side wfc permutation matches it.
    for s in range(n_sp4):
        y4_scr[:, s * c4:(s + 1) * c4] = \
            y4[s * n_batch:(s + 1) * n_batch, :].astype(bf16)
    x_fc = y4_scr[...]                                    # (N, 1024) bf16

    # ---- fused fully connected layer: one matmul per DMA half ---------------
    fc_cp[0].wait()
    out_ref[:, 0:half] = (
        jnp.dot(x_fc, wfc_vmem[0], preferred_element_type=f32)
        + bias_ref[4:5, 0:half])
    fc_cp[1].wait()
    out_ref[:, half:latent] = (
        jnp.dot(x_fc, wfc_vmem[1], preferred_element_type=f32)
        + bias_ref[4:5, half:latent])


def _full_spec(shape):
    rank = len(shape)
    return pl.BlockSpec(shape, lambda i, _r=rank: (0,) * _r)


# ----------------------------------------------------------------------------
# Parameters (deterministic, PyTorch-default-style uniform init) and packing
# ----------------------------------------------------------------------------
def init_params(key, input_channels=1, latent_dim=1024):
    keys = jax.random.split(key, 10)

    def _conv(kw_, kb_, cout, cin, k):
        fan_in = cin * k * k
        bound = 1.0 / np.sqrt(fan_in)
        w = jax.random.uniform(kw_, (cout, cin, k, k), jnp.float32, -bound, bound)
        b = jax.random.uniform(kb_, (cout,), jnp.float32, -bound, bound)
        return w, b

    w1, b1 = _conv(keys[0], keys[1], 32, input_channels, 3)
    w2, b2 = _conv(keys[2], keys[3], 64, 32, 3)
    w3, b3 = _conv(keys[4], keys[5], 128, 64, 3)
    w4, b4 = _conv(keys[6], keys[7], 256, 128, 2)

    flat = 2 * 2 * 256
    bound = 1.0 / np.sqrt(flat)
    wfc = jax.random.uniform(keys[8], (latent_dim, flat), jnp.float32, -bound, bound)
    bfc = jax.random.uniform(keys[9], (latent_dim,), jnp.float32, -bound, bound)
    return dict(w1=w1, b1=b1, w2=w2, b2=b2, w3=w3, b3=b3, w4=w4, b4=b4,
                wfc=wfc, bfc=bfc)


def pack_params(params, n_batch, image_hw=28):
    """One-time repack into kernel layouts (bf16 matmul operands, f32 biases).
    Selection matrices are block-diagonal over the batch (depend on n_batch;
    ~1 MiB total at n_batch=2)."""
    def conv_pack(w):                        # (Cout,Cin,k,k) -> (k*k, Cin, Cout)
        cout, cin, kh, kw = w.shape
        return jnp.transpose(w, (2, 3, 1, 0)).reshape(kh * kw, cin, cout) \
                  .astype(jnp.bfloat16)

    w1 = params["w1"]
    cout1, cin1, k1, _ = w1.shape
    latent = params["bfc"].shape[0]
    assert latent % 256 == 0, "latent_dim must be a multiple of 256"

    # spatial chain for the fixed module geometry (28 -> 14 -> 7 -> 4 -> 2)
    h1 = (image_hw + 2 - 3) // 2 + 1
    h2 = (h1 + 2 - 3) // 2 + 1
    h3 = (h2 + 2 - 3) // 2 + 1
    h4 = (h3 - 2) // 2 + 1

    packed = dict(
        w1=conv_pack(w1).reshape(k1 * k1 * cin1, cout1),      # (9*Cin, 32)
        w2=conv_pack(params["w2"]),                           # (9, 32, 64)
        w3=conv_pack(params["w3"]),                           # (9, 64, 128)
        w4=conv_pack(params["w4"]),                           # (4, 128, 256)
        s2=jnp.asarray(_selection_matrices(h1, h1, 3, 1, n_batch), jnp.bfloat16),
        s3=jnp.asarray(_selection_matrices(h2, h2, 3, 1, n_batch), jnp.bfloat16),
        s4=jnp.asarray(_selection_matrices(h3, h3, 2, 0, n_batch,
                                           out_batch_major=False), jnp.bfloat16),
    )

    # All five biases in ONE f32 buffer (one DMA instead of five).
    bias_buf = np.zeros((5, latent), np.float32)
    for row, name in enumerate(["b1", "b2", "b3", "b4", "bfc"]):
        b = np.asarray(params[name])
        bias_buf[row, :b.shape[0]] = b
    packed["biases"] = jnp.asarray(bias_buf)

    # FC weight: PyTorch (latent, C*H*W) -> rows ordered (position, channel) to
    # match the in-kernel flatten, then split in two halves along latent for
    # the overlapped DMA:  (2, H*W*C, latent/2).
    wfc = params["wfc"]
    c4 = params["w4"].shape[0]
    flat = c4 * h4 * h4
    assert wfc.shape == (latent, flat), "flattened_size mismatch with conv geometry"
    wfcp = jnp.transpose(wfc.reshape(latent, c4, h4 * h4), (2, 1, 0)) \
              .reshape(flat, latent)
    wfcp = jnp.transpose(wfcp.reshape(flat, 2, latent // 2), (1, 0, 2))
    packed["wfc"] = wfcp.astype(jnp.bfloat16)
    return packed


# ----------------------------------------------------------------------------
# Forward pass (single fused Pallas call)
# ----------------------------------------------------------------------------
def cnn_encoder_forward(packed, x_nchw):
    n, c, h, w = x_nchw.shape
    latent = packed["biases"].shape[1]
    c4 = packed["w4"].shape[2]
    assert packed["s4"].shape[1] % n == 0, \
        "batch size must match pack_params(n_batch=...)"
    n_sp4 = packed["s4"].shape[1] // n

    # conv1 im2col on the tiny raw input (per-forward XLA glue, a few KB).
    # TODO(synk): conv1's im2col stays in the XLA wrapper; everything from the
    # conv1 matmul through the fc runs inside the single Pallas kernel.
    oh1 = (h + 2 - 3) // 2 + 1
    ow1 = (w + 2 - 3) // 2 + 1
    x = jnp.transpose(x_nchw, (0, 2, 3, 1))                    # NCHW -> NHWC
    xp = jnp.pad(x, ((0, 0), (1, 1), (1, 1), (0, 0)))
    cols = [xp[:, i:i + 2 * oh1:2, j:j + 2 * ow1:2, :]
            for i in range(3) for j in range(3)]
    patches = jnp.stack(cols, axis=3).reshape(n * oh1 * ow1, 9 * c)
    patches = patches.astype(jnp.bfloat16)

    args = (patches, packed["w1"], packed["w2"], packed["w3"], packed["w4"],
            packed["s2"], packed["s3"], packed["s4"], packed["biases"],
            packed["wfc"])
    in_specs = [_full_spec(a.shape) for a in args[:-1]]
    # The 2 MiB FC weight stays in HBM; the kernel DMAs it manually in halves.
    in_specs.append(pl.BlockSpec(memory_space=pl.ANY))

    return pl.pallas_call(
        _encoder_kernel,
        out_shape=jax.ShapeDtypeStruct((n, latent), jnp.float32),
        grid=(1,),
        in_specs=in_specs,
        out_specs=_full_spec((n, latent)),
        scratch_shapes=[
            pltpu.VMEM((n, n_sp4 * c4), jnp.bfloat16),      # flattened conv4 act
            pltpu.VMEM(packed["wfc"].shape, jnp.bfloat16),  # prefetched fc weight
            pltpu.SemaphoreType.DMA((2,)),
        ],
        compiler_params=pltpu.CompilerParams(
            dimension_semantics=("arbitrary",)),
    )(*args)


# ----------------------------------------------------------------------------
# Pure-JAX reference (sanity check for the Pallas path)
# ----------------------------------------------------------------------------
def reference_forward(params, x_nchw):
    def conv(x, w, b, stride, padding):
        y = jax.lax.conv_general_dilated(
            x, w, window_strides=(stride, stride),
            padding=((padding, padding), (padding, padding)),
            dimension_numbers=("NCHW", "OIHW", "NCHW"),
            precision=jax.lax.Precision.HIGHEST)
        return jax.nn.relu(y + b[None, :, None, None])

    x = conv(x_nchw, params["w1"], params["b1"], 2, 1)
    x = conv(x, params["w2"], params["b2"], 2, 1)
    x = conv(x, params["w3"], params["b3"], 2, 1)
    x = conv(x, params["w4"], params["b4"], 2, 0)
    x = x.reshape(x.shape[0], -1)
    return (jnp.dot(x, params["wfc"].T, precision=jax.lax.Precision.HIGHEST)
            + params["bfc"])


if __name__ == "__main__":
    key = jax.random.PRNGKey(0)
    pkey, xkey = jax.random.split(key)
    params = init_params(pkey, input_channels=1, latent_dim=1024)

    # Module geometry (flattened_size = 2*2*256) implies 28x28 spatial input.
    batch = 2
    packed = pack_params(params, n_batch=batch, image_hw=28)  # one-time repack
    x = jax.random.normal(xkey, (batch, 1, 28, 28), dtype=jnp.float32)

    fwd = jax.jit(cnn_encoder_forward)
    out = jax.block_until_ready(fwd(packed, x))
    assert out.shape == (batch, 1024) and out.dtype == jnp.float32

    ref = jax.block_until_ready(reference_forward(params, x))
    max_err = float(jnp.max(jnp.abs(out - ref)))
    # bf16 matmul operands with f32 accumulation: ~1e-2 deviations expected.
    assert max_err < 1e-1, f"mismatch vs reference: max abs err {max_err}"

    print("KERNEL_OK")
</pallas_src>

<mosaic_0001>
module attributes {stable_mosaic.version = 11 : i64} {
  func.func @_encoder_kernel(%arg0: i32, %arg1: memref<392x9xbf16, #tpu.memory_space<vmem>>, %arg2: memref<9x32xbf16, #tpu.memory_space<vmem>>, %arg3: memref<9x32x64xbf16, #tpu.memory_space<vmem>>, %arg4: memref<9x64x128xbf16, #tpu.memory_space<vmem>>, %arg5: memref<4x128x256xbf16, #tpu.memory_space<vmem>>, %arg6: memref<9x98x392xbf16, #tpu.memory_space<vmem>>, %arg7: memref<9x32x98xbf16, #tpu.memory_space<vmem>>, %arg8: memref<4x8x32xbf16, #tpu.memory_space<vmem>>, %arg9: memref<5x1024xf32, #tpu.memory_space<vmem>>, %arg10: memref<2x1024x512xbf16, #tpu.memory_space<any>>, %arg11: memref<2x1024xf32, #tpu.memory_space<vmem>>, %arg12: memref<2x1024xbf16, #tpu.memory_space<vmem>>, %arg13: memref<2x1024x512xbf16, #tpu.memory_space<vmem>>, %arg14: memref<2x!tpu.dma_semaphore, #tpu.memory_space<semaphore_mem>>) attributes {dimension_semantics = [#tpu.dimension_semantics<arbitrary>], iteration_bounds = array<i64: 1>, scalar_prefetch = 0 : i64, scratch_operands = 3 : i64, tpu.core_type = #tpu.core_type<tc>, window_params = [{pipeline_mode = #tpu.pipeline_mode<synchronous>, transform_indices = @transform_0, window_bounds = array<i64: 392, 9>}, {pipeline_mode = #tpu.pipeline_mode<synchronous>, transform_indices = @transform_1, window_bounds = array<i64: 9, 32>}, {pipeline_mode = #tpu.pipeline_mode<synchronous>, transform_indices = @transform_2, window_bounds = array<i64: 9, 32, 64>}, {pipeline_mode = #tpu.pipeline_mode<synchronous>, transform_indices = @transform_3, window_bounds = array<i64: 9, 64, 128>}, {pipeline_mode = #tpu.pipeline_mode<synchronous>, transform_indices = @transform_4, window_bounds = array<i64: 4, 128, 256>}, {pipeline_mode = #tpu.pipeline_mode<synchronous>, transform_indices = @transform_5, window_bounds = array<i64: 9, 98, 392>}, {pipeline_mode = #tpu.pipeline_mode<synchronous>, transform_indices = @transform_6, window_bounds = array<i64: 9, 32, 98>}, {pipeline_mode = #tpu.pipeline_mode<synchronous>, transform_indices = @transform_7, window_bounds = array<i64: 4, 8, 32>}, {pipeline_mode = #tpu.pipeline_mode<synchronous>, transform_indices = @transform_8, window_bounds = array<i64: 5, 1024>}, {}, {pipeline_mode = #tpu.pipeline_mode<synchronous>, transform_indices = @transform_10, window_bounds = array<i64: 2, 1024>}]} {
    %c0_i32 = arith.constant 0 : i32
    %c0_i32_0 = arith.constant 0 : i32
    %c0_i32_1 = arith.constant 0 : i32
    %c0_i32_2 = arith.constant 0 : i32
    %c0_i32_3 = arith.constant 0 : i32
    %0 = tpu.memref_slice %arg10[%c0_i32, %c0_i32_2, %c0_i32_3] : memref<2x1024x512xbf16, #tpu.memory_space<any>> -> memref<1x1024x512xbf16, #tpu.memory_space<any>>
    %1 = tpu.memref_squeeze %0 : memref<1x1024x512xbf16, #tpu.memory_space<any>> -> memref<1024x512xbf16, #tpu.memory_space<any>>
    %c0_i32_4 = arith.constant 0 : i32
    %c0_i32_5 = arith.constant 0 : i32
    %2 = tpu.memref_slice %arg13[%c0_i32_0, %c0_i32_4, %c0_i32_5] : memref<2x1024x512xbf16, #tpu.memory_space<vmem>> -> memref<1x1024x512xbf16, #tpu.memory_space<vmem>>
    %3 = tpu.memref_squeeze %2 : memref<1x1024x512xbf16, #tpu.memory_space<vmem>> -> memref<1024x512xbf16, #tpu.memory_space<vmem>>
    %4 = tpu.memref_slice %arg14[%c0_i32_1] : memref<2x!tpu.dma_semaphore, #tpu.memory_space<semaphore_mem>> -> memref<1x!tpu.dma_semaphore, #tpu.memory_space<semaphore_mem>>
    %5 = tpu.memref_squeeze %4 : memref<1x!tpu.dma_semaphore, #tpu.memory_space<semaphore_mem>> -> memref<!tpu.dma_semaphore, #tpu.memory_space<semaphore_mem>>
    tpu.enqueue_dma source(%1 : memref<1024x512xbf16, #tpu.memory_space<any>>) target(%3 : memref<1024x512xbf16, #tpu.memory_space<vmem>>) target_semaphore(%5 : memref<!tpu.dma_semaphore, #tpu.memory_space<semaphore_mem>>)
    %c1_i32 = arith.constant 1 : i32
    %c1_i32_6 = arith.constant 1 : i32
    %c1_i32_7 = arith.constant 1 : i32
    %c0_i32_8 = arith.constant 0 : i32
    %c0_i32_9 = arith.constant 0 : i32
    %6 = tpu.memref_slice %arg10[%c1_i32, %c0_i32_8, %c0_i32_9] : memref<2x1024x512xbf16, #tpu.memory_space<any>> -> memref<1x1024x512xbf16, #tpu.memory_space<any>>
    %7 = tpu.memref_squeeze %6 : memref<1x1024x512xbf16, #tpu.memory_space<any>> -> memref<1024x512xbf16, #tpu.memory_space<any>>
    %c0_i32_10 = arith.constant 0 : i32
    %c0_i32_11 = arith.constant 0 : i32
    %8 = tpu.memref_slice %arg13[%c1_i32_6, %c0_i32_10, %c0_i32_11] : memref<2x1024x512xbf16, #tpu.memory_space<vmem>> -> memref<1x1024x512xbf16, #tpu.memory_space<vmem>>
    %9 = tpu.memref_squeeze %8 : memref<1x1024x512xbf16, #tpu.memory_space<vmem>> -> memref<1024x512xbf16, #tpu.memory_space<vmem>>
    %10 = tpu.memref_slice %arg14[%c1_i32_7] : memref<2x!tpu.dma_semaphore, #tpu.memory_space<semaphore_mem>> -> memref<1x!tpu.dma_semaphore, #tpu.memory_space<semaphore_mem>>
    %11 = tpu.memref_squeeze %10 : memref<1x!tpu.dma_semaphore, #tpu.memory_space<semaphore_mem>> -> memref<!tpu.dma_semaphore, #tpu.memory_space<semaphore_mem>>
    tpu.enqueue_dma source(%7 : memref<1024x512xbf16, #tpu.memory_space<any>>) target(%9 : memref<1024x512xbf16, #tpu.memory_space<vmem>>) target_semaphore(%11 : memref<!tpu.dma_semaphore, #tpu.memory_space<semaphore_mem>>)
    %c0 = arith.constant 0 : index
    %c0_12 = arith.constant 0 : index
    %12 = vector.load %arg1[%c0, %c0_12] : memref<392x9xbf16, #tpu.memory_space<vmem>>, vector<392x9xbf16>
    %c0_13 = arith.constant 0 : index
    %c0_14 = arith.constant 0 : index
    %13 = vector.load %arg2[%c0_13, %c0_14] : memref<9x32xbf16, #tpu.memory_space<vmem>>, vector<9x32xbf16>
    %cst = arith.constant dense<0.000000e+00> : vector<392x32xf32>
    %14 = tpu.matmul %12, %13, %cst {dimension_numbers = #tpu.dot_dimension_numbers<[1], [0], [0], [1], [0, 0, 1, 1], [], []>} : vector<392x9xbf16>, vector<9x32xbf16>, vector<392x32xf32> -> vector<392x32xf32>
    %c0_15 = arith.constant 0 : index
    %c0_16 = arith.constant 0 : index
    %15 = vector.load %arg9[%c0_15, %c0_16] : memref<5x1024xf32, #tpu.memory_space<vmem>>, vector<1x32xf32>
    %16 = vector.broadcast %15 : vector<1x32xf32> to vector<392x32xf32>
    %17 = arith.addf %14, %16 : vector<392x32xf32>
    %cst_17 = arith.constant 0.000000e+00 : f32
    %18 = vector.broadcast %cst_17 : f32 to vector<392x32xf32>
    %19 = arith.maximumf %17, %18 : vector<392x32xf32>
    %20 = arith.truncf %19 : vector<392x32xf32> to vector<392x32xbf16>
    %c0_18 = arith.constant 0 : index
    %c0_19 = arith.constant 0 : index
    %c0_20 = arith.constant 0 : index
    %21 = vector.load %arg6[%c0_18, %c0_19, %c0_20] : memref<9x98x392xbf16, #tpu.memory_space<vmem>>, vector<1x98x392xbf16>
    %22 = vector.shape_cast %21 : vector<1x98x392xbf16> to vector<98x392xbf16>
    %cst_21 = arith.constant dense<0.000000e+00> : vector<98x32xf32>
    %23 = tpu.matmul %22, %20, %cst_21 {dimension_numbers = #tpu.dot_dimension_numbers<[1], [0], [0], [1], [0, 0, 1, 1], [], []>} : vector<98x392xbf16>, vector<392x32xbf16>, vector<98x32xf32> -> vector<98x32xf32>
    %24 = arith.truncf %23 : vector<98x32xf32> to vector<98x32xbf16>
    %c0_22 = arith.constant 0 : index
    %c0_23 = arith.constant 0 : index
    %c0_24 = arith.constant 0 : index
    %25 = vector.load %arg3[%c0_22, %c0_23, %c0_24] : memref<9x32x64xbf16, #tpu.memory_space<vmem>>, vector<1x32x64xbf16>
    %26 = vector.shape_cast %25 : vector<1x32x64xbf16> to vector<32x64xbf16>
    %cst_25 = arith.constant dense<0.000000e+00> : vector<98x64xf32>
    %27 = tpu.matmul %24, %26, %cst_25 {dimension_numbers = #tpu.dot_dimension_numbers<[1], [0], [0], [1], [0, 0, 1, 1], [], []>} : vector<98x32xbf16>, vector<32x64xbf16>, vector<98x64xf32> -> vector<98x64xf32>
    %c1 = arith.constant 1 : index
    %c0_26 = arith.constant 0 : index
    %c0_27 = arith.constant 0 : index
    %28 = vector.load %arg6[%c1, %c0_26, %c0_27] : memref<9x98x392xbf16, #tpu.memory_space<vmem>>, vector<1x98x392xbf16>
    %29 = vector.shape_cast %28 : vector<1x98x392xbf16> to vector<98x392xbf16>
    %cst_28 = arith.constant dense<0.000000e+00> : vector<98x32xf32>
    %30 = tpu.matmul %29, %20, %cst_28 {dimension_numbers = #tpu.dot_dimension_numbers<[1], [0], [0], [1], [0, 0, 1, 1], [], []>} : vector<98x392xbf16>, vector<392x32xbf16>, vector<98x32xf32> -> vector<98x32xf32>
    %31 = arith.truncf %30 : vector<98x32xf32> to vector<98x32xbf16>
    %c1_29 = arith.constant 1 : index
    %c0_30 = arith.constant 0 : index
    %c0_31 = arith.constant 0 : index
    %32 = vector.load %arg3[%c1_29, %c0_30, %c0_31] : memref<9x32x64xbf16, #tpu.memory_space<vmem>>, vector<1x32x64xbf16>
    %33 = vector.shape_cast %32 : vector<1x32x64xbf16> to vector<32x64xbf16>
    %cst_32 = arith.constant dense<0.000000e+00> : vector<98x64xf32>
    %34 = tpu.matmul %31, %33, %cst_32 {dimension_numbers = #tpu.dot_dimension_numbers<[1], [0], [0], [1], [0, 0, 1, 1], [], []>} : vector<98x32xbf16>, vector<32x64xbf16>, vector<98x64xf32> -> vector<98x64xf32>
    %35 = arith.addf %27, %34 : vector<98x64xf32>
    %c2 = arith.constant 2 : index
    %c0_33 = arith.constant 0 : index
    %c0_34 = arith.constant 0 : index
    %36 = vector.load %arg6[%c2, %c0_33, %c0_34] : memref<9x98x392xbf16, #tpu.memory_space<vmem>>, vector<1x98x392xbf16>
    %37 = vector.shape_cast %36 : vector<1x98x392xbf16> to vector<98x392xbf16>
    %cst_35 = arith.constant dense<0.000000e+00> : vector<98x32xf32>
    %38 = tpu.matmul %37, %20, %cst_35 {dimension_numbers = #tpu.dot_dimension_numbers<[1], [0], [0], [1], [0, 0, 1, 1], [], []>} : vector<98x392xbf16>, vector<392x32xbf16>, vector<98x32xf32> -> vector<98x32xf32>
    %39 = arith.truncf %38 : vector<98x32xf32> to vector<98x32xbf16>
    %c2_36 = arith.constant 2 : index
    %c0_37 = arith.constant 0 : index
    %c0_38 = arith.constant 0 : index
    %40 = vector.load %arg3[%c2_36, %c0_37, %c0_38] : memref<9x32x64xbf16, #tpu.memory_space<vmem>>, vector<1x32x64xbf16>
    %41 = vector.shape_cast %40 : vector<1x32x64xbf16> to vector<32x64xbf16>
    %cst_39 = arith.constant dense<0.000000e+00> : vector<98x64xf32>
    %42 = tpu.matmul %39, %41, %cst_39 {dimension_numbers = #tpu.dot_dimension_numbers<[1], [0], [0], [1], [0, 0, 1, 1], [], []>} : vector<98x32xbf16>, vector<32x64xbf16>, vector<98x64xf32> -> vector<98x64xf32>
    %43 = arith.addf %35, %42 : vector<98x64xf32>
    %c3 = arith.constant 3 : index
    %c0_40 = arith.constant 0 : index
    %c0_41 = arith.constant 0 : index
    %44 = vector.load %arg6[%c3, %c0_40, %c0_41] : memref<9x98x392xbf16, #tpu.memory_space<vmem>>, vector<1x98x392xbf16>
    %45 = vector.shape_cast %44 : vector<1x98x392xbf16> to vector<98x392xbf16>
    %cst_42 = arith.constant dense<0.000000e+00> : vector<98x32xf32>
    %46 = tpu.matmul %45, %20, %cst_42 {dimension_numbers = #tpu.dot_dimension_numbers<[1], [0], [0], [1], [0, 0, 1, 1], [], []>} : vector<98x392xbf16>, vector<392x32xbf16>, vector<98x32xf32> -> vector<98x32xf32>
    %47 = arith.truncf %46 : vector<98x32xf32> to vector<98x32xbf16>
    %c3_43 = arith.constant 3 : index
    %c0_44 = arith.constant 0 : index
    %c0_45 = arith.constant 0 : index
    %48 = vector.load %arg3[%c3_43, %c0_44, %c0_45] : memref<9x32x64xbf16, #tpu.memory_space<vmem>>, vector<1x32x64xbf16>
    %49 = vector.shape_cast %48 : vector<1x32x64xbf16> to vector<32x64xbf16>
    %cst_46 = arith.constant dense<0.000000e+00> : vector<98x64xf32>
    %50 = tpu.matmul %47, %49, %cst_46 {dimension_numbers = #tpu.dot_dimension_numbers<[1], [0], [0], [1], [0, 0, 1, 1], [], []>} : vector<98x32xbf16>, vector<32x64xbf16>, vector<98x64xf32> -> vector<98x64xf32>
    %51 = arith.addf %43, %50 : vector<98x64xf32>
    %c4 = arith.constant 4 : index
    %c0_47 = arith.constant 0 : index
    %c0_48 = arith.constant 0 : index
    %52 = vector.load %arg6[%c4, %c0_47, %c0_48] : memref<9x98x392xbf16, #tpu.memory_space<vmem>>, vector<1x98x392xbf16>
    %53 = vector.shape_cast %52 : vector<1x98x392xbf16> to vector<98x392xbf16>
    %cst_49 = arith.constant dense<0.000000e+00> : vector<98x32xf32>
    %54 = tpu.matmul %53, %20, %cst_49 {dimension_numbers = #tpu.dot_dimension_numbers<[1], [0], [0], [1], [0, 0, 1, 1], [], []>} : vector<98x392xbf16>, vector<392x32xbf16>, vector<98x32xf32> -> vector<98x32xf32>
    %55 = arith.truncf %54 : vector<98x32xf32> to vector<98x32xbf16>
    %c4_50 = arith.constant 4 : index
    %c0_51 = arith.constant 0 : index
    %c0_52 = arith.constant 0 : index
    %56 = vector.load %arg3[%c4_50, %c0_51, %c0_52] : memref<9x32x64xbf16, #tpu.memory_space<vmem>>, vector<1x32x64xbf16>
    %57 = vector.shape_cast %56 : vector<1x32x64xbf16> to vector<32x64xbf16>
    %cst_53 = arith.constant dense<0.000000e+00> : vector<98x64xf32>
    %58 = tpu.matmul %55, %57, %cst_53 {dimension_numbers = #tpu.dot_dimension_numbers<[1], [0], [0], [1], [0, 0, 1, 1], [], []>} : vector<98x32xbf16>, vector<32x64xbf16>, vector<98x64xf32> -> vector<98x64xf32>
    %59 = arith.addf %51, %58 : vector<98x64xf32>
    %c5 = arith.constant 5 : index
    %c0_54 = arith.constant 0 : index
    %c0_55 = arith.constant 0 : index
    %60 = vector.load %arg6[%c5, %c0_54, %c0_55] : memref<9x98x392xbf16, #tpu.memory_space<vmem>>, vector<1x98x392xbf16>
    %61 = vector.shape_cast %60 : vector<1x98x392xbf16> to vector<98x392xbf16>
    %cst_56 = arith.constant dense<0.000000e+00> : vector<98x32xf32>
    %62 = tpu.matmul %61, %20, %cst_56 {dimension_numbers = #tpu.dot_dimension_numbers<[1], [0], [0], [1], [0, 0, 1, 1], [], []>} : vector<98x392xbf16>, vector<392x32xbf16>, vector<98x32xf32> -> vector<98x32xf32>
    %63 = arith.truncf %62 : vector<98x32xf32> to vector<98x32xbf16>
    %c5_57 = arith.constant 5 : index
    %c0_58 = arith.constant 0 : index
    %c0_59 = arith.constant 0 : index
    %64 = vector.load %arg3[%c5_57, %c0_58, %c0_59] : memref<9x32x64xbf16, #tpu.memory_space<vmem>>, vector<1x32x64xbf16>
    %65 = vector.shape_cast %64 : vector<1x32x64xbf16> to vector<32x64xbf16>
    %cst_60 = arith.constant dense<0.000000e+00> : vector<98x64xf32>
    %66 = tpu.matmul %63, %65, %cst_60 {dimension_numbers = #tpu.dot_dimension_numbers<[1], [0], [0], [1], [0, 0, 1, 1], [], []>} : vector<98x32xbf16>, vector<32x64xbf16>, vector<98x64xf32> -> vector<98x64xf32>
    %67 = arith.addf %59, %66 : vector<98x64xf32>
    %c6 = arith.constant 6 : index
    %c0_61 = arith.constant 0 : index
    %c0_62 = arith.constant 0 : index
    %68 = vector.load %arg6[%c6, %c0_61, %c0_62] : memref<9x98x392xbf16, #tpu.memory_space<vmem>>, vector<1x98x392xbf16>
    %69 = vector.shape_cast %68 : vector<1x98x392xbf16> to vector<98x392xbf16>
    %cst_63 = arith.constant dense<0.000000e+00> : vector<98x32xf32>
    %70 = tpu.matmul %69, %20, %cst_63 {dimension_numbers = #tpu.dot_dimension_numbers<[1], [0], [0], [1], [0, 0, 1, 1], [], []>} : vector<98x392xbf16>, vector<392x32xbf16>, vector<98x32xf32> -> vector<98x32xf32>
    %71 = arith.truncf %70 : vector<98x32xf32> to vector<98x32xbf16>
    %c6_64 = arith.constant 6 : index
    %c0_65 = arith.constant 0 : index
    %c0_66 = arith.constant 0 : index
    %72 = vector.load %arg3[%c6_64, %c0_65, %c0_66] : memref<9x32x64xbf16, #tpu.memory_space<vmem>>, vector<1x32x64xbf16>
    %73 = vector.shape_cast %72 : vector<1x32x64xbf16> to vector<32x64xbf16>
    %cst_67 = arith.constant dense<0.000000e+00> : vector<98x64xf32>
    %74 = tpu.matmul %71, %73, %cst_67 {dimension_numbers = #tpu.dot_dimension_numbers<[1], [0], [0], [1], [0, 0, 1, 1], [], []>} : vector<98x32xbf16>, vector<32x64xbf16>, vector<98x64xf32> -> vector<98x64xf32>
    %75 = arith.addf %67, %74 : vector<98x64xf32>
    %c7 = arith.constant 7 : index
    %c0_68 = arith.constant 0 : index
    %c0_69 = arith.constant 0 : index
    %76 = vector.load %arg6[%c7, %c0_68, %c0_69] : memref<9x98x392xbf16, #tpu.memory_space<vmem>>, vector<1x98x392xbf16>
    %77 = vector.shape_cast %76 : vector<1x98x392xbf16> to vector<98x392xbf16>
    %cst_70 = arith.constant dense<0.000000e+00> : vector<98x32xf32>
    %78 = tpu.matmul %77, %20, %cst_70 {dimension_numbers = #tpu.dot_dimension_numbers<[1], [0], [0], [1], [0, 0, 1, 1], [], []>} : vector<98x392xbf16>, vector<392x32xbf16>, vector<98x32xf32> -> vector<98x32xf32>
    %79 = arith.truncf %78 : vector<98x32xf32> to vector<98x32xbf16>
    %c7_71 = arith.constant 7 : index
    %c0_72 = arith.constant 0 : index
    %c0_73 = arith.constant 0 : index
    %80 = vector.load %arg3[%c7_71, %c0_72, %c0_73] : memref<9x32x64xbf16, #tpu.memory_space<vmem>>, vector<1x32x64xbf16>
    %81 = vector.shape_cast %80 : vector<1x32x64xbf16> to vector<32x64xbf16>
    %cst_74 = arith.constant dense<0.000000e+00> : vector<98x64xf32>
    %82 = tpu.matmul %79, %81, %cst_74 {dimension_numbers = #tpu.dot_dimension_numbers<[1], [0], [0], [1], [0, 0, 1, 1], [], []>} : vector<98x32xbf16>, vector<32x64xbf16>, vector<98x64xf32> -> vector<98x64xf32>
    %83 = arith.addf %75, %82 : vector<98x64xf32>
    %c8 = arith.constant 8 : index
    %c0_75 = arith.constant 0 : index
    %c0_76 = arith.constant 0 : index
    %84 = vector.load %arg6[%c8, %c0_75, %c0_76] : memref<9x98x392xbf16, #tpu.memory_space<vmem>>, vector<1x98x392xbf16>
    %85 = vector.shape_cast %84 : vector<1x98x392xbf16> to vector<98x392xbf16>
    %cst_77 = arith.constant dense<0.000000e+00> : vector<98x32xf32>
    %86 = tpu.matmul %85, %20, %cst_77 {dimension_numbers = #tpu.dot_dimension_numbers<[1], [0], [0], [1], [0, 0, 1, 1], [], []>} : vector<98x392xbf16>, vector<392x32xbf16>, vector<98x32xf32> -> vector<98x32xf32>
    %87 = arith.truncf %86 : vector<98x32xf32> to vector<98x32xbf16>
    %c8_78 = arith.constant 8 : index
    %c0_79 = arith.constant 0 : index
    %c0_80 = arith.constant 0 : index
    %88 = vector.load %arg3[%c8_78, %c0_79, %c0_80] : memref<9x32x64xbf16, #tpu.memory_space<vmem>>, vector<1x32x64xbf16>
    %89 = vector.shape_cast %88 : vector<1x32x64xbf16> to vector<32x64xbf16>
    %cst_81 = arith.constant dense<0.000000e+00> : vector<98x64xf32>
    %90 = tpu.matmul %87, %89, %cst_81 {dimension_numbers = #tpu.dot_dimension_numbers<[1], [0], [0], [1], [0, 0, 1, 1], [], []>} : vector<98x32xbf16>, vector<32x64xbf16>, vector<98x64xf32> -> vector<98x64xf32>
    %91 = arith.addf %83, %90 : vector<98x64xf32>
    %c1_82 = arith.constant 1 : index
    %c0_83 = arith.constant 0 : index
    %92 = vector.load %arg9[%c1_82, %c0_83] : memref<5x1024xf32, #tpu.memory_space<vmem>>, vector<1x64xf32>
    %93 = vector.broadcast %92 : vector<1x64xf32> to vector<98x64xf32>
    %94 = arith.addf %91, %93 : vector<98x64xf32>
    %cst_84 = arith.constant 0.000000e+00 : f32
    %95 = vector.broadcast %cst_84 : f32 to vector<98x64xf32>
    %96 = arith.maximumf %94, %95 : vector<98x64xf32>
    %97 = arith.truncf %96 : vector<98x64xf32> to vector<98x64xbf16>
    %c0_85 = arith.constant 0 : index
    %c0_86 = arith.constant 0 : index
    %c0_87 = arith.constant 0 : index
    %98 = vector.load %arg7[%c0_85, %c0_86, %c0_87] : memref<9x32x98xbf16, #tpu.memory_space<vmem>>, vector<1x32x98xbf16>
    %99 = vector.shape_cast %98 : vector<1x32x98xbf16> to vector<32x98xbf16>
    %cst_88 = arith.constant dense<0.000000e+00> : vector<32x64xf32>
    %100 = tpu.matmul %99, %97, %cst_88 {dimension_numbers = #tpu.dot_dimension_numbers<[1], [0], [0], [1], [0, 0, 1, 1], [], []>} : vector<32x98xbf16>, vector<98x64xbf16>, vector<32x64xf32> -> vector<32x64xf32>
    %101 = arith.truncf %100 : vector<32x64xf32> to vector<32x64xbf16>
    %c0_89 = arith.constant 0 : index
    %c0_90 = arith.constant 0 : index
    %c0_91 = arith.constant 0 : index
    %102 = vector.load %arg4[%c0_89, %c0_90, %c0_91] : memref<9x64x128xbf16, #tpu.memory_space<vmem>>, vector<1x64x128xbf16>
    %103 = vector.shape_cast %102 : vector<1x64x128xbf16> to vector<64x128xbf16>
    %cst_92 = arith.constant dense<0.000000e+00> : vector<32x128xf32>
    %104 = tpu.matmul %101, %103, %cst_92 {dimension_numbers = #tpu.dot_dimension_numbers<[1], [0], [0], [1], [0, 0, 1, 1], [], []>} : vector<32x64xbf16>, vector<64x128xbf16>, vector<32x128xf32> -> vector<32x128xf32>
    %c1_93 = arith.constant 1 : index
    %c0_94 = arith.constant 0 : index
    %c0_95 = arith.constant 0 : index
    %105 = vector.load %arg7[%c1_93, %c0_94, %c0_95] : memref<9x32x98xbf16, #tpu.memory_space<vmem>>, vector<1x32x98xbf16>
    %106 = vector.shape_cast %105 : vector<1x32x98xbf16> to vector<32x98xbf16>
    %cst_96 = arith.constant dense<0.000000e+00> : vector<32x64xf32>
    %107 = tpu.matmul %106, %97, %cst_96 {dimension_numbers = #tpu.dot_dimension_numbers<[1], [0], [0], [1], [0, 0, 1, 1], [], []>} : vector<32x98xbf16>, vector<98x64xbf16>, vector<32x64xf32> -> vector<32x64xf32>
    %108 = arith.truncf %107 : vector<32x64xf32> to vector<32x64xbf16>
    %c1_97 = arith.constant 1 : index
    %c0_98 = arith.constant 0 : index
    %c0_99 = arith.constant 0 : index
    %109 = vector.load %arg4[%c1_97, %c0_98, %c0_99] : memref<9x64x128xbf16, #tpu.memory_space<vmem>>, vector<1x64x128xbf16>
    %110 = vector.shape_cast %109 : vector<1x64x128xbf16> to vector<64x128xbf16>
    %cst_100 = arith.constant dense<0.000000e+00> : vector<32x128xf32>
    %111 = tpu.matmul %108, %110, %cst_100 {dimension_numbers = #tpu.dot_dimension_numbers<[1], [0], [0], [1], [0, 0, 1, 1], [], []>} : vector<32x64xbf16>, vector<64x128xbf16>, vector<32x128xf32> -> vector<32x128xf32>
    %112 = arith.addf %104, %111 : vector<32x128xf32>
    %c2_101 = arith.constant 2 : index
    %c0_102 = arith.constant 0 : index
    %c0_103 = arith.constant 0 : index
    %113 = vector.load %arg7[%c2_101, %c0_102, %c0_103] : memref<9x32x98xbf16, #tpu.memory_space<vmem>>, vector<1x32x98xbf16>
    %114 = vector.shape_cast %113 : vector<1x32x98xbf16> to vector<32x98xbf16>
    %cst_104 = arith.constant dense<0.000000e+00> : vector<32x64xf32>
    %115 = tpu.matmul %114, %97, %cst_104 {dimension_numbers = #tpu.dot_dimension_numbers<[1], [0], [0], [1], [0, 0, 1, 1], [], []>} : vector<32x98xbf16>, vector<98x64xbf16>, vector<32x64xf32> -> vector<32x64xf32>
    %116 = arith.truncf %115 : vector<32x64xf32> to vector<32x64xbf16>
    %c2_105 = arith.constant 2 : index
    %c0_106 = arith.constant 0 : index
    %c0_107 = arith.constant 0 : index
    %117 = vector.load %arg4[%c2_105, %c0_106, %c0_107] : memref<9x64x128xbf16, #tpu.memory_space<vmem>>, vector<1x64x128xbf16>
    %118 = vector.shape_cast %117 : vector<1x64x128xbf16> to vector<64x128xbf16>
    %cst_108 = arith.constant dense<0.000000e+00> : vector<32x128xf32>
    %119 = tpu.matmul %116, %118, %cst_108 {dimension_numbers = #tpu.dot_dimension_numbers<[1], [0], [0], [1], [0, 0, 1, 1], [], []>} : vector<32x64xbf16>, vector<64x128xbf16>, vector<32x128xf32> -> vector<32x128xf32>
    %120 = arith.addf %112, %119 : vector<32x128xf32>
    %c3_109 = arith.constant 3 : index
    %c0_110 = arith.constant 0 : index
    %c0_111 = arith.constant 0 : index
    %121 = vector.load %arg7[%c3_109, %c0_110, %c0_111] : memref<9x32x98xbf16, #tpu.memory_space<vmem>>, vector<1x32x98xbf16>
    %122 = vector.shape_cast %121 : vector<1x32x98xbf16> to vector<32x98xbf16>
    %cst_112 = arith.constant dense<0.000000e+00> : vector<32x64xf32>
    %123 = tpu.matmul %122, %97, %cst_112 {dimension_numbers = #tpu.dot_dimension_numbers<[1], [0], [0], [1], [0, 0, 1, 1], [], []>} : vector<32x98xbf16>, vector<98x64xbf16>, vector<32x64xf32> -> vector<32x64xf32>
    %124 = arith.truncf %123 : vector<32x64xf32> to vector<32x64xbf16>
    %c3_113 = arith.constant 3 : index
    %c0_114 = arith.constant 0 : index
    %c0_115 = arith.constant 0 : index
    %125 = vector.load %arg4[%c3_113, %c0_114, %c0_115] : memref<9x64x128xbf16, #tpu.memory_space<vmem>>, vector<1x64x128xbf16>
    %126 = vector.shape_cast %125 : vector<1x64x128xbf16> to vector<64x128xbf16>
    %cst_116 = arith.constant dense<0.000000e+00> : vector<32x128xf32>
    %127 = tpu.matmul %124, %126, %cst_116 {dimension_numbers = #tpu.dot_dimension_numbers<[1], [0], [0], [1], [0, 0, 1, 1], [], []>} : vector<32x64xbf16>, vector<64x128xbf16>, vector<32x128xf32> -> vector<32x128xf32>
    %128 = arith.addf %120, %127 : vector<32x128xf32>
    %c4_117 = arith.constant 4 : index
    %c0_118 = arith.constant 0 : index
    %c0_119 = arith.constant 0 : index
    %129 = vector.load %arg7[%c4_117, %c0_118, %c0_119] : memref<9x32x98xbf16, #tpu.memory_space<vmem>>, vector<1x32x98xbf16>
    %130 = vector.shape_cast %129 : vector<1x32x98xbf16> to vector<32x98xbf16>
    %cst_120 = arith.constant dense<0.000000e+00> : vector<32x64xf32>
    %131 = tpu.matmul %130, %97, %cst_120 {dimension_numbers = #tpu.dot_dimension_numbers<[1], [0], [0], [1], [0, 0, 1, 1], [], []>} : vector<32x98xbf16>, vector<98x64xbf16>, vector<32x64xf32> -> vector<32x64xf32>
    %132 = arith.truncf %131 : vector<32x64xf32> to vector<32x64xbf16>
    %c4_121 = arith.constant 4 : index
    %c0_122 = arith.constant 0 : index
    %c0_123 = arith.constant 0 : index
    %133 = vector.load %arg4[%c4_121, %c0_122, %c0_123] : memref<9x64x128xbf16, #tpu.memory_space<vmem>>, vector<1x64x128xbf16>
    %134 = vector.shape_cast %133 : vector<1x64x128xbf16> to vector<64x128xbf16>
    %cst_124 = arith.constant dense<0.000000e+00> : vector<32x128xf32>
    %135 = tpu.matmul %132, %134, %cst_124 {dimension_numbers = #tpu.dot_dimension_numbers<[1], [0], [0], [1], [0, 0, 1, 1], [], []>} : vector<32x64xbf16>, vector<64x128xbf16>, vector<32x128xf32> -> vector<32x128xf32>
    %136 = arith.addf %128, %135 : vector<32x128xf32>
    %c5_125 = arith.constant 5 : index
    %c0_126 = arith.constant 0 : index
    %c0_127 = arith.constant 0 : index
    %137 = vector.load %arg7[%c5_125, %c0_126, %c0_127] : memref<9x32x98xbf16, #tpu.memory_space<vmem>>, vector<1x32x98xbf16>
    %138 = vector.shape_cast %137 : vector<1x32x98xbf16> to vector<32x98xbf16>
    %cst_128 = arith.constant dense<0.000000e+00> : vector<32x64xf32>
    %139 = tpu.matmul %138, %97, %cst_128 {dimension_numbers = #tpu.dot_dimension_numbers<[1], [0], [0], [1], [0, 0, 1, 1], [], []>} : vector<32x98xbf16>, vector<98x64xbf16>, vector<32x64xf32> -> vector<32x64xf32>
    %140 = arith.truncf %139 : vector<32x64xf32> to vector<32x64xbf16>
    %c5_129 = arith.constant 5 : index
    %c0_130 = arith.constant 0 : index
    %c0_131 = arith.constant 0 : index
    %141 = vector.load %arg4[%c5_129, %c0_130, %c0_131] : memref<9x64x128xbf16, #tpu.memory_space<vmem>>, vector<1x64x128xbf16>
    %142 = vector.shape_cast %141 : vector<1x64x128xbf16> to vector<64x128xbf16>
    %cst_132 = arith.constant dense<0.000000e+00> : vector<32x128xf32>
    %143 = tpu.matmul %140, %142, %cst_132 {dimension_numbers = #tpu.dot_dimension_numbers<[1], [0], [0], [1], [0, 0, 1, 1], [], []>} : vector<32x64xbf16>, vector<64x128xbf16>, vector<32x128xf32> -> vector<32x128xf32>
    %144 = arith.addf %136, %143 : vector<32x128xf32>
    %c6_133 = arith.constant 6 : index
    %c0_134 = arith.constant 0 : index
    %c0_135 = arith.constant 0 : index
    %145 = vector.load %arg7[%c6_133, %c0_134, %c0_135] : memref<9x32x98xbf16, #tpu.memory_space<vmem>>, vector<1x32x98xbf16>
    %146 = vector.shape_cast %145 : vector<1x32x98xbf16> to vector<32x98xbf16>
    %cst_136 = arith.constant dense<0.000000e+00> : vector<32x64xf32>
    %147 = tpu.matmul %146, %97, %cst_136 {dimension_numbers = #tpu.dot_dimension_numbers<[1], [0], [0], [1], [0, 0, 1, 1], [], []>} : vector<32x98xbf16>, vector<98x64xbf16>, vector<32x64xf32> -> vector<32x64xf32>
    %148 = arith.truncf %147 : vector<32x64xf32> to vector<32x64xbf16>
    %c6_137 = arith.constant 6 : index
    %c0_138 = arith.constant 0 : index
    %c0_139 = arith.constant 0 : index
    %149 = vector.load %arg4[%c6_137, %c0_138, %c0_139] : memref<9x64x128xbf16, #tpu.memory_space<vmem>>, vector<1x64x128xbf16>
    %150 = vector.shape_cast %149 : vector<1x64x128xbf16> to vector<64x128xbf16>
    %cst_140 = arith.constant dense<0.000000e+00> : vector<32x128xf32>
    %151 = tpu.matmul %148, %150, %cst_140 {dimension_numbers = #tpu.dot_dimension_numbers<[1], [0], [0], [1], [0, 0, 1, 1], [], []>} : vector<32x64xbf16>, vector<64x128xbf16>, vector<32x128xf32> -> vector<32x128xf32>
    %152 = arith.addf %144, %151 : vector<32x128xf32>
    %c7_141 = arith.constant 7 : index
    %c0_142 = arith.constant 0 : index
    %c0_143 = arith.constant 0 : index
    %153 = vector.load %arg7[%c7_141, %c0_142, %c0_143] : memref<9x32x98xbf16, #tpu.memory_space<vmem>>, vector<1x32x98xbf16>
    %154 = vector.shape_cast %153 : vector<1x32x98xbf16> to vector<32x98xbf16>
    %cst_144 = arith.constant dense<0.000000e+00> : vector<32x64xf32>
    %155 = tpu.matmul %154, %97, %cst_144 {dimension_numbers = #tpu.dot_dimension_numbers<[1], [0], [0], [1], [0, 0, 1, 1], [], []>} : vector<32x98xbf16>, vector<98x64xbf16>, vector<32x64xf32> -> vector<32x64xf32>
    %156 = arith.truncf %155 : vector<32x64xf32> to vector<32x64xbf16>
    %c7_145 = arith.constant 7 : index
    %c0_146 = arith.constant 0 : index
    %c0_147 = arith.constant 0 : index
    %157 = vector.load %arg4[%c7_145, %c0_146, %c0_147] : memref<9x64x128xbf16, #tpu.memory_space<vmem>>, vector<1x64x128xbf16>
    %158 = vector.shape_cast %157 : vector<1x64x128xbf16> to vector<64x128xbf16>
    %cst_148 = arith.constant dense<0.000000e+00> : vector<32x128xf32>
    %159 = tpu.matmul %156, %158, %cst_148 {dimension_numbers = #tpu.dot_dimension_numbers<[1], [0], [0], [1], [0, 0, 1, 1], [], []>} : vector<32x64xbf16>, vector<64x128xbf16>, vector<32x128xf32> -> vector<32x128xf32>
    %160 = arith.addf %152, %159 : vector<32x128xf32>
    %c8_149 = arith.constant 8 : index
    %c0_150 = arith.constant 0 : index
    %c0_151 = arith.constant 0 : index
    %161 = vector.load %arg7[%c8_149, %c0_150, %c0_151] : memref<9x32x98xbf16, #tpu.memory_space<vmem>>, vector<1x32x98xbf16>
    %162 = vector.shape_cast %161 : vector<1x32x98xbf16> to vector<32x98xbf16>
    %cst_152 = arith.constant dense<0.000000e+00> : vector<32x64xf32>
    %163 = tpu.matmul %162, %97, %cst_152 {dimension_numbers = #tpu.dot_dimension_numbers<[1], [0], [0], [1], [0, 0, 1, 1], [], []>} : vector<32x98xbf16>, vector<98x64xbf16>, vector<32x64xf32> -> vector<32x64xf32>
    %164 = arith.truncf %163 : vector<32x64xf32> to vector<32x64xbf16>
    %c8_153 = arith.constant 8 : index
    %c0_154 = arith.constant 0 : index
    %c0_155 = arith.constant 0 : index
    %165 = vector.load %arg4[%c8_153, %c0_154, %c0_155] : memref<9x64x128xbf16, #tpu.memory_space<vmem>>, vector<1x64x128xbf16>
    %166 = vector.shape_cast %165 : vector<1x64x128xbf16> to vector<64x128xbf16>
    %cst_156 = arith.constant dense<0.000000e+00> : vector<32x128xf32>
    %167 = tpu.matmul %164, %166, %cst_156 {dimension_numbers = #tpu.dot_dimension_numbers<[1], [0], [0], [1], [0, 0, 1, 1], [], []>} : vector<32x64xbf16>, vector<64x128xbf16>, vector<32x128xf32> -> vector<32x128xf32>
    %168 = arith.addf %160, %167 : vector<32x128xf32>
    %c2_157 = arith.constant 2 : index
    %c0_158 = arith.constant 0 : index
    %169 = vector.load %arg9[%c2_157, %c0_158] : memref<5x1024xf32, #tpu.memory_space<vmem>>, vector<1x128xf32>
    %170 = vector.broadcast %169 : vector<1x128xf32> to vector<32x128xf32>
    %171 = arith.addf %168, %170 : vector<32x128xf32>
    %cst_159 = arith.constant 0.000000e+00 : f32
    %172 = vector.broadcast %cst_159 : f32 to vector<32x128xf32>
    %173 = arith.maximumf %171, %172 : vector<32x128xf32>
    %174 = arith.truncf %173 : vector<32x128xf32> to vector<32x128xbf16>
    %c0_160 = arith.constant 0 : index
    %c0_161 = arith.constant 0 : index
    %c0_162 = arith.constant 0 : index
    %175 = vector.load %arg8[%c0_160, %c0_161, %c0_162] : memref<4x8x32xbf16, #tpu.memory_space<vmem>>, vector<1x8x32xbf16>
    %176 = vector.shape_cast %175 : vector<1x8x32xbf16> to vector<8x32xbf16>
    %cst_163 = arith.constant dense<0.000000e+00> : vector<8x128xf32>
    %177 = tpu.matmul %176, %174, %cst_163 {dimension_numbers = #tpu.dot_dimension_numbers<[1], [0], [0], [1], [0, 0, 1, 1], [], []>} : vector<8x32xbf16>, vector<32x128xbf16>, vector<8x128xf32> -> vector<8x128xf32>
    %178 = arith.truncf %177 : vector<8x128xf32> to vector<8x128xbf16>
    %c0_164 = arith.constant 0 : index
    %c0_165 = arith.constant 0 : index
    %c0_166 = arith.constant 0 : index
    %179 = vector.load %arg5[%c0_164, %c0_165, %c0_166] : memref<4x128x256xbf16, #tpu.memory_space<vmem>>, vector<1x128x256xbf16>
    %180 = vector.shape_cast %179 : vector<1x128x256xbf16> to vector<128x256xbf16>
    %cst_167 = arith.constant dense<0.000000e+00> : vector<8x256xf32>
    %181 = tpu.matmul %178, %180, %cst_167 {dimension_numbers = #tpu.dot_dimension_numbers<[1], [0], [0], [1], [0, 0, 1, 1], [], []>} : vector<8x128xbf16>, vector<128x256xbf16>, vector<8x256xf32> -> vector<8x256xf32>
    %c1_168 = arith.constant 1 : index
    %c0_169 = arith.constant 0 : index
    %c0_170 = arith.constant 0 : index
    %182 = vector.load %arg8[%c1_168, %c0_169, %c0_170] : memref<4x8x32xbf16, #tpu.memory_space<vmem>>, vector<1x8x32xbf16>
    %183 = vector.shape_cast %182 : vector<1x8x32xbf16> to vector<8x32xbf16>
    %cst_171 = arith.constant dense<0.000000e+00> : vector<8x128xf32>
    %184 = tpu.matmul %183, %174, %cst_171 {dimension_numbers = #tpu.dot_dimension_numbers<[1], [0], [0], [1], [0, 0, 1, 1], [], []>} : vector<8x32xbf16>, vector<32x128xbf16>, vector<8x128xf32> -> vector<8x128xf32>
    %185 = arith.truncf %184 : vector<8x128xf32> to vector<8x128xbf16>
    %c1_172 = arith.constant 1 : index
    %c0_173 = arith.constant 0 : index
    %c0_174 = arith.constant 0 : index
    %186 = vector.load %arg5[%c1_172, %c0_173, %c0_174] : memref<4x128x256xbf16, #tpu.memory_space<vmem>>, vector<1x128x256xbf16>
    %187 = vector.shape_cast %186 : vector<1x128x256xbf16> to vector<128x256xbf16>
    %cst_175 = arith.constant dense<0.000000e+00> : vector<8x256xf32>
    %188 = tpu.matmul %185, %187, %cst_175 {dimension_numbers = #tpu.dot_dimension_numbers<[1], [0], [0], [1], [0, 0, 1, 1], [], []>} : vector<8x128xbf16>, vector<128x256xbf16>, vector<8x256xf32> -> vector<8x256xf32>
    %189 = arith.addf %181, %188 : vector<8x256xf32>
    %c2_176 = arith.constant 2 : index
    %c0_177 = arith.constant 0 : index
    %c0_178 = arith.constant 0 : index
    %190 = vector.load %arg8[%c2_176, %c0_177, %c0_178] : memref<4x8x32xbf16, #tpu.memory_space<vmem>>, vector<1x8x32xbf16>
    %191 = vector.shape_cast %190 : vector<1x8x32xbf16> to vector<8x32xbf16>
    %cst_179 = arith.constant dense<0.000000e+00> : vector<8x128xf32>
    %192 = tpu.matmul %191, %174, %cst_179 {dimension_numbers = #tpu.dot_dimension_numbers<[1], [0], [0], [1], [0, 0, 1, 1], [], []>} : vector<8x32xbf16>, vector<32x128xbf16>, vector<8x128xf32> -> vector<8x128xf32>
    %193 = arith.truncf %192 : vector<8x128xf32> to vector<8x128xbf16>
    %c2_180 = arith.constant 2 : index
    %c0_181 = arith.constant 0 : index
    %c0_182 = arith.constant 0 : index
    %194 = vector.load %arg5[%c2_180, %c0_181, %c0_182] : memref<4x128x256xbf16, #tpu.memory_space<vmem>>, vector<1x128x256xbf16>
    %195 = vector.shape_cast %194 : vector<1x128x256xbf16> to vector<128x256xbf16>
    %cst_183 = arith.constant dense<0.000000e+00> : vector<8x256xf32>
    %196 = tpu.matmul %193, %195, %cst_183 {dimension_numbers = #tpu.dot_dimension_numbers<[1], [0], [0], [1], [0, 0, 1, 1], [], []>} : vector<8x128xbf16>, vector<128x256xbf16>, vector<8x256xf32> -> vector<8x256xf32>
    %197 = arith.addf %189, %196 : vector<8x256xf32>
    %c3_184 = arith.constant 3 : index
    %c0_185 = arith.constant 0 : index
    %c0_186 = arith.constant 0 : index
    %198 = vector.load %arg8[%c3_184, %c0_185, %c0_186] : memref<4x8x32xbf16, #tpu.memory_space<vmem>>, vector<1x8x32xbf16>
    %199 = vector.shape_cast %198 : vector<1x8x32xbf16> to vector<8x32xbf16>
    %cst_187 = arith.constant dense<0.000000e+00> : vector<8x128xf32>
    %200 = tpu.matmul %199, %174, %cst_187 {dimension_numbers = #tpu.dot_dimension_numbers<[1], [0], [0], [1], [0, 0, 1, 1], [], []>} : vector<8x32xbf16>, vector<32x128xbf16>, vector<8x128xf32> -> vector<8x128xf32>
    %201 = arith.truncf %200 : vector<8x128xf32> to vector<8x128xbf16>
    %c3_188 = arith.constant 3 : index
    %c0_189 = arith.constant 0 : index
    %c0_190 = arith.constant 0 : index
    %202 = vector.load %arg5[%c3_188, %c0_189, %c0_190] : memref<4x128x256xbf16, #tpu.memory_space<vmem>>, vector<1x128x256xbf16>
    %203 = vector.shape_cast %202 : vector<1x128x256xbf16> to vector<128x256xbf16>
    %cst_191 = arith.constant dense<0.000000e+00> : vector<8x256xf32>
    %204 = tpu.matmul %201, %203, %cst_191 {dimension_numbers = #tpu.dot_dimension_numbers<[1], [0], [0], [1], [0, 0, 1, 1], [], []>} : vector<8x128xbf16>, vector<128x256xbf16>, vector<8x256xf32> -> vector<8x256xf32>
    %205 = arith.addf %197, %204 : vector<8x256xf32>
    %c3_192 = arith.constant 3 : index
    %c0_193 = arith.constant 0 : index
    %206 = vector.load %arg9[%c3_192, %c0_193] : memref<5x1024xf32, #tpu.memory_space<vmem>>, vector<1x256xf32>
    %207 = vector.broadcast %206 : vector<1x256xf32> to vector<8x256xf32>
    %208 = arith.addf %205, %207 : vector<8x256xf32>
    %cst_194 = arith.constant 0.000000e+00 : f32
    %209 = vector.broadcast %cst_194 : f32 to vector<8x256xf32>
    %210 = arith.maximumf %208, %209 : vector<8x256xf32>
    %211 = vector.extract_strided_slice %210 {offsets = [0, 0], sizes = [2, 256], strides = [1, 1]} : vector<8x256xf32> to vector<2x256xf32>
    %212 = arith.truncf %211 : vector<2x256xf32> to vector<2x256xbf16>
    %c0_195 = arith.constant 0 : index
    %c0_196 = arith.constant 0 : index
    %213 = vector.load %arg12[%c0_195, %c0_196] : memref<2x1024xbf16, #tpu.memory_space<vmem>>, vector<2x256xbf16>
    tpu.vector_store %arg12[%c0_195, %c0_196], %212 {strides = array<i32>} : memref<2x1024xbf16, #tpu.memory_space<vmem>>, vector<2x256xbf16>,
    %214 = vector.extract_strided_slice %210 {offsets = [2, 0], sizes = [2, 256], strides = [1, 1]} : vector<8x256xf32> to vector<2x256xf32>
    %215 = arith.truncf %214 : vector<2x256xf32> to vector<2x256xbf16>
    %c0_197 = arith.constant 0 : index
    %c256 = arith.constant 256 : index
    %216 = vector.load %arg12[%c0_197, %c256] : memref<2x1024xbf16, #tpu.memory_space<vmem>>, vector<2x256xbf16>
    tpu.vector_store %arg12[%c0_197, %c256], %215 {strides = array<i32>} : memref<2x1024xbf16, #tpu.memory_space<vmem>>, vector<2x256xbf16>,
    %217 = vector.extract_strided_slice %210 {offsets = [4, 0], sizes = [2, 256], strides = [1, 1]} : vector<8x256xf32> to vector<2x256xf32>
    %218 = arith.truncf %217 : vector<2x256xf32> to vector<2x256xbf16>
    %c0_198 = arith.constant 0 : index
    %c512 = arith.constant 512 : index
    %219 = vector.load %arg12[%c0_198, %c512] : memref<2x1024xbf16, #tpu.memory_space<vmem>>, vector<2x256xbf16>
    tpu.vector_store %arg12[%c0_198, %c512], %218 {strides = array<i32>} : memref<2x1024xbf16, #tpu.memory_space<vmem>>, vector<2x256xbf16>,
    %220 = vector.extract_strided_slice %210 {offsets = [6, 0], sizes = [2, 256], strides = [1, 1]} : vector<8x256xf32> to vector<2x256xf32>
    %221 = arith.truncf %220 : vector<2x256xf32> to vector<2x256xbf16>
    %c0_199 = arith.constant 0 : index
    %c768 = arith.constant 768 : index
    %222 = vector.load %arg12[%c0_199, %c768] : memref<2x1024xbf16, #tpu.memory_space<vmem>>, vector<2x256xbf16>
    tpu.vector_store %arg12[%c0_199, %c768], %221 {strides = array<i32>} : memref<2x1024xbf16, #tpu.memory_space<vmem>>, vector<2x256xbf16>,
    %c0_200 = arith.constant 0 : index
    %c0_201 = arith.constant 0 : index
    %223 = vector.load %arg12[%c0_200, %c0_201] : memref<2x1024xbf16, #tpu.memory_space<vmem>>, vector<2x1024xbf16>
    %c0_i32_202 = arith.constant 0 : i32
    %c0_i32_203 = arith.constant 0 : i32
    %c0_i32_204 = arith.constant 0 : i32
    %c0_i32_205 = arith.constant 0 : i32
    %c0_i32_206 = arith.constant 0 : i32
    %224 = tpu.memref_slice %arg10[%c0_i32_202, %c0_i32_205, %c0_i32_206] : memref<2x1024x512xbf16, #tpu.memory_space<any>> -> memref<1x1024x512xbf16, #tpu.memory_space<any>>
    %225 = tpu.memref_squeeze %224 : memref<1x1024x512xbf16, #tpu.memory_space<any>> -> memref<1024x512xbf16, #tpu.memory_space<any>>
    %c0_i32_207 = arith.constant 0 : i32
    %c0_i32_208 = arith.constant 0 : i32
    %226 = tpu.memref_slice %arg13[%c0_i32_203, %c0_i32_207, %c0_i32_208] : memref<2x1024x512xbf16, #tpu.memory_space<vmem>> -> memref<1x1024x512xbf16, #tpu.memory_space<vmem>>
    %227 = tpu.memref_squeeze %226 : memref<1x1024x512xbf16, #tpu.memory_space<vmem>> -> memref<1024x512xbf16, #tpu.memory_space<vmem>>
    %228 = tpu.memref_slice %arg14[%c0_i32_204] : memref<2x!tpu.dma_semaphore, #tpu.memory_space<semaphore_mem>> -> memref<1x!tpu.dma_semaphore, #tpu.memory_space<semaphore_mem>>
    %229 = tpu.memref_squeeze %228 : memref<1x!tpu.dma_semaphore, #tpu.memory_space<semaphore_mem>> -> memref<!tpu.dma_semaphore, #tpu.memory_space<semaphore_mem>>
    tpu.wait_dma2 semaphore(%229 : memref<!tpu.dma_semaphore, #tpu.memory_space<semaphore_mem>>) src(%225 : memref<1024x512xbf16, #tpu.memory_space<any>>) dst(%227 : memref<1024x512xbf16, #tpu.memory_space<vmem>>)
    %c0_209 = arith.constant 0 : index
    %c0_210 = arith.constant 0 : index
    %c0_211 = arith.constant 0 : index
    %230 = vector.load %arg13[%c0_209, %c0_210, %c0_211] : memref<2x1024x512xbf16, #tpu.memory_space<vmem>>, vector<1x1024x512xbf16>
    %231 = vector.shape_cast %230 : vector<1x1024x512xbf16> to vector<1024x512xbf16>
    %cst_212 = arith.constant dense<0.000000e+00> : vector<2x512xf32>
    %232 = tpu.matmul %223, %231, %cst_212 {dimension_numbers = #tpu.dot_dimension_numbers<[1], [0], [0], [1], [0, 0, 1, 1], [], []>} : vector<2x1024xbf16>, vector<1024x512xbf16>, vector<2x512xf32> -> vector<2x512xf32>
    %c4_213 = arith.constant 4 : index
    %c0_214 = arith.constant 0 : index
    %233 = vector.load %arg9[%c4_213, %c0_214] : memref<5x1024xf32, #tpu.memory_space<vmem>>, vector<1x512xf32>
    %234 = vector.broadcast %233 : vector<1x512xf32> to vector<2x512xf32>
    %235 = arith.addf %232, %234 : vector<2x512xf32>
    %c0_215 = arith.constant 0 : index
    %c0_216 = arith.constant 0 : index
    %236 = vector.load %arg11[%c0_215, %c0_216] : memref<2x1024xf32, #tpu.memory_space<vmem>>, vector<2x512xf32>
    tpu.vector_store %arg11[%c0_215, %c0_216], %235 {strides = array<i32>} : memref<2x1024xf32, #tpu.memory_space<vmem>>, vector<2x512xf32>,
    %c1_i32_217 = arith.constant 1 : i32
    %c1_i32_218 = arith.constant 1 : i32
    %c1_i32_219 = arith.constant 1 : i32
    %c0_i32_220 = arith.constant 0 : i32
    %c0_i32_221 = arith.constant 0 : i32
    %237 = tpu.memref_slice %arg10[%c1_i32_217, %c0_i32_220, %c0_i32_221] : memref<2x1024x512xbf16, #tpu.memory_space<any>> -> memref<1x1024x512xbf16, #tpu.memory_space<any>>
    %238 = tpu.memref_squeeze %237 : memref<1x1024x512xbf16, #tpu.memory_space<any>> -> memref<1024x512xbf16, #tpu.memory_space<any>>
    %c0_i32_222 = arith.constant 0 : i32
    %c0_i32_223 = arith.constant 0 : i32
    %239 = tpu.memref_slice %arg13[%c1_i32_218, %c0_i32_222, %c0_i32_223] : memref<2x1024x512xbf16, #tpu.memory_space<vmem>> -> memref<1x1024x512xbf16, #tpu.memory_space<vmem>>
    %240 = tpu.memref_squeeze %239 : memref<1x1024x512xbf16, #tpu.memory_space<vmem>> -> memref<1024x512xbf16, #tpu.memory_space<vmem>>
    %241 = tpu.memref_slice %arg14[%c1_i32_219] : memref<2x!tpu.dma_semaphore, #tpu.memory_space<semaphore_mem>> -> memref<1x!tpu.dma_semaphore, #tpu.memory_space<semaphore_mem>>
    %242 = tpu.memref_squeeze %241 : memref<1x!tpu.dma_semaphore, #tpu.memory_space<semaphore_mem>> -> memref<!tpu.dma_semaphore, #tpu.memory_space<semaphore_mem>>
    tpu.wait_dma2 semaphore(%242 : memref<!tpu.dma_semaphore, #tpu.memory_space<semaphore_mem>>) src(%238 : memref<1024x512xbf16, #tpu.memory_space<any>>) dst(%240 : memref<1024x512xbf16, #tpu.memory_space<vmem>>)
    %c1_224 = arith.constant 1 : index
    %c0_225 = arith.constant 0 : index
    %c0_226 = arith.constant 0 : index
    %243 = vector.load %arg13[%c1_224, %c0_225, %c0_226] : memref<2x1024x512xbf16, #tpu.memory_space<vmem>>, vector<1x1024x512xbf16>
    %244 = vector.shape_cast %243 : vector<1x1024x512xbf16> to vector<1024x512xbf16>
    %cst_227 = arith.constant dense<0.000000e+00> : vector<2x512xf32>
    %245 = tpu.matmul %223, %244, %cst_227 {dimension_numbers = #tpu.dot_dimension_numbers<[1], [0], [0], [1], [0, 0, 1, 1], [], []>} : vector<2x1024xbf16>, vector<1024x512xbf16>, vector<2x512xf32> -> vector<2x512xf32>
    %c4_228 = arith.constant 4 : index
    %c512_229 = arith.constant 512 : index
    %246 = vector.load %arg9[%c4_228, %c512_229] : memref<5x1024xf32, #tpu.memory_space<vmem>>, vector<1x512xf32>
    %247 = vector.broadcast %246 : vector<1x512xf32> to vector<2x512xf32>
    %248 = arith.addf %245, %247 : vector<2x512xf32>
    %c0_230 = arith.constant 0 : index
    %c512_231 = arith.constant 512 : index
    %249 = vector.load %arg11[%c0_230, %c512_231] : memref<2x1024xf32, #tpu.memory_space<vmem>>, vector<2x512xf32>
    tpu.vector_store %arg11[%c0_230, %c512_231], %248 {strides = array<i32>} : memref<2x1024xf32, #tpu.memory_space<vmem>>, vector<2x512xf32>,
    return
  }
  func.func @transform_0(%arg0: i32) -> (i32, i32) {
    %c0_i32 = arith.constant 0 : i32
    %c0_i32_0 = arith.constant 0 : i32
    %c0_i32_1 = arith.constant 0 : i32
    return %c0_i32, %c0_i32_0 : i32, i32
  }
  func.func @transform_1(%arg0: i32) -> (i32, i32) {
    %c0_i32 = arith.constant 0 : i32
    %c0_i32_0 = arith.constant 0 : i32
    %c0_i32_1 = arith.constant 0 : i32
    return %c0_i32, %c0_i32_0 : i32, i32
  }
  func.func @transform_2(%arg0: i32) -> (i32, i32, i32) {
    %c0_i32 = arith.constant 0 : i32
    %c0_i32_0 = arith.constant 0 : i32
    %c0_i32_1 = arith.constant 0 : i32
    %c0_i32_2 = arith.constant 0 : i32
    return %c0_i32, %c0_i32_0, %c0_i32_1 : i32, i32, i32
  }
  func.func @transform_3(%arg0: i32) -> (i32, i32, i32) {
    %c0_i32 = arith.constant 0 : i32
    %c0_i32_0 = arith.constant 0 : i32
    %c0_i32_1 = arith.constant 0 : i32
    %c0_i32_2 = arith.constant 0 : i32
    return %c0_i32, %c0_i32_0, %c0_i32_1 : i32, i32, i32
  }
  func.func @transform_4(%arg0: i32) -> (i32, i32, i32) {
    %c0_i32 = arith.constant 0 : i32
    %c0_i32_0 = arith.constant 0 : i32
    %c0_i32_1 = arith.constant 0 : i32
    %c0_i32_2 = arith.constant 0 : i32
    return %c0_i32, %c0_i32_0, %c0_i32_1 : i32, i32, i32
  }
  func.func @transform_5(%arg0: i32) -> (i32, i32, i32) {
    %c0_i32 = arith.constant 0 : i32
    %c0_i32_0 = arith.constant 0 : i32
    %c0_i32_1 = arith.constant 0 : i32
    %c0_i32_2 = arith.constant 0 : i32
    return %c0_i32, %c0_i32_0, %c0_i32_1 : i32, i32, i32
  }
  func.func @transform_6(%arg0: i32) -> (i32, i32, i32) {
    %c0_i32 = arith.constant 0 : i32
    %c0_i32_0 = arith.constant 0 : i32
    %c0_i32_1 = arith.constant 0 : i32
    %c0_i32_2 = arith.constant 0 : i32
    return %c0_i32, %c0_i32_0, %c0_i32_1 : i32, i32, i32
  }
  func.func @transform_7(%arg0: i32) -> (i32, i32, i32) {
    %c0_i32 = arith.constant 0 : i32
    %c0_i32_0 = arith.constant 0 : i32
    %c0_i32_1 = arith.constant 0 : i32
    %c0_i32_2 = arith.constant 0 : i32
    return %c0_i32, %c0_i32_0, %c0_i32_1 : i32, i32, i32
  }
  func.func @transform_8(%arg0: i32) -> (i32, i32) {
    %c0_i32 = arith.constant 0 : i32
    %c0_i32_0 = arith.constant 0 : i32
    %c0_i32_1 = arith.constant 0 : i32
    return %c0_i32, %c0_i32_0 : i32, i32
  }
  func.func @transform_10(%arg0: i32) -> (i32, i32) {
    %c0_i32 = arith.constant 0 : i32
    %c0_i32_0 = arith.constant 0 : i32
    %c0_i32_1 = arith.constant 0 : i32
    return %c0_i32, %c0_i32_0 : i32, i32
  }
}

</mosaic_0001>

<llo_original>
// kernel: cnn_encoder_forward.1
$region0: #{cnn_encoder_forward.1}
  #allocation0 [shape = 'u32[]', space=smem, size = 0x4, offset = 0x4, fixed_abs, tag = 'smem constant byte address 0x4 - core index']
  #allocation1 [shape = 'u32[144,128]{1,0:T(1,128)}', space=vmem, size = 0x12000, scoped, tag = 'internal scratch']
  #allocation2 [shape = 'bf16[2,1024]{1,0:T(2,128)(2,1)}', space=vmem, size = 0x1000, scoped, tag = 'scratch operand']
  #allocation3 [shape = 'bf16[2,1024,512]{2,1,0:T(8,128)(2,1)}', space=vmem, size = 0x200000, scoped, tag = 'scratch operand']
  #allocation4 [shape = 's32[2]{0}', space=sflag, size = 0x8, scoped, tag = 'scratch operand']
  #allocation9 [shape = 's32[]', space=sflag, size = 0x4, offset = 0, fixed_abs, tag = 'sflag constant byte address 0x0 - dummy sync flag']
  #allocation10 [shape = 's32[]', space=sflag, size = 0x4, offset = 0, fixed_abs, tag = 'sflag constant byte address 0x0 - dummy sync flag']
  %s0 = inlined_call_operand.vmem [shape: bf16[392,9], index: 0, kind: input, shape index: {}]
  %s1 = inlined_call_operand.vmem [shape: bf16[9,32], index: 1, kind: input, shape index: {}]
  %s2 = inlined_call_operand.vmem [shape: bf16[9,32,64], index: 2, kind: input, shape index: {}]
  %s3 = inlined_call_operand.vmem [shape: bf16[9,64,128], index: 3, kind: input, shape index: {}]
  %s4 = inlined_call_operand.vmem [shape: bf16[4,128,256], index: 4, kind: input, shape index: {}]
  %s5 = inlined_call_operand.vmem [shape: bf16[9,98,392], index: 5, kind: input, shape index: {}]
  %s6 = inlined_call_operand.hbm [shape: bf16[9,32,98], index: 6, kind: input, shape index: {}]
  %s7 = inlined_call_operand.vmem [shape: bf16[4,8,32], index: 7, kind: input, shape index: {}]
  %s8 = inlined_call_operand.vmem [shape: f32[5,1024], index: 8, kind: input, shape index: {}]
  %s9 = inlined_call_operand.vmem [shape: bf16[2,1024,512], index: 9, kind: input, shape index: {}]
  %s10 = inlined_call_operand.hbm [shape: f32[2,1024], index: 10, kind: output, shape index: {}]
  %s11 = sld [smem:[#allocation0]]
  $region118: #{cnn_encoder_forward.1} parent=0
    _
  %s13 = ssub.s32 1, %s11
  %s14 = scalar_select 0, %s13, %s11
  $region1: #{cnn_encoder_forward.1} parent=0
    #allocation5 [shape = 'u8[73728]{0}', space=vmem, size = 0x12000, scoped, tag = 'input window, operand 6, single buffered']
    #allocation6 [shape = 's32[1]{0}', space=sflag, size = 0x4, scoped, tag = 'scoped memory for cnn_encoder_forward.1']
    #allocation7 [shape = 's32[1]{0}', space=sflag, size = 0x4, scoped, tag = 'scoped memory for cnn_encoder_forward.1']
    #allocation8 [shape = 'u8[8192]{0}', space=vmem, size = 0x2000, scoped, tag = 'output window, operand 0, single buffered']
    %15 = vsyncpa [#allocation6], 0
    %16 = vsyncpa [#allocation7], 0
    // Predicated region
    $region2: #{cnn_encoder_forward.1} parent=1 // pred_check
      _
    $region3: #{cnn_encoder_forward.1} parent=1 // pred_check_branch
      %18 = sbr.rel (0) target = $region5
    $region4: #{cnn_encoder_forward.1} parent=1 // pred_region
      _
    $region5: #{cnn_encoder_forward.1} parent=1 // pred_fallthru
      _
    // Predicated region
    $region6: #{cnn_encoder_forward.1} parent=1 // pred_check
      _
    $region7: #{cnn_encoder_forward.1} parent=1 // pred_check_branch
      %20 = sbr.rel (0) target = $region9
    $region8: #{cnn_encoder_forward.1} parent=1 // pred_region
      _
    $region9: #{cnn_encoder_forward.1} parent=1 // pred_fallthru
      _
    // Predicated region
    $region10: #{cnn_encoder_forward.1} parent=1 // pred_check
      _
    $region11: #{cnn_encoder_forward.1} parent=1 // pred_check_branch
      %22 = sbr.rel (0) target = $region13
    $region12: #{cnn_encoder_forward.1} parent=1 // pred_region
      _
    $region13: #{cnn_encoder_forward.1} parent=1 // pred_fallthru
      _
    // Predicated region
    $region14: #{cnn_encoder_forward.1} parent=1 // pred_check
      _
    $region15: #{cnn_encoder_forward.1} parent=1 // pred_check_branch
      %24 = sbr.rel (0) target = $region17
    $region16: #{cnn_encoder_forward.1} parent=1 // pred_region
      _
    $region17: #{cnn_encoder_forward.1} parent=1 // pred_fallthru
      _
    // Predicated region
    $region18: #{cnn_encoder_forward.1} parent=1 // pred_check
      _
    $region19: #{cnn_encoder_forward.1} parent=1 // pred_check_branch
      %26 = sbr.rel (0) target = $region21
    $region20: #{cnn_encoder_forward.1} parent=1 // pred_region
      _
    $region21: #{cnn_encoder_forward.1} parent=1 // pred_fallthru
      _
    // Predicated region
    $region22: #{cnn_encoder_forward.1} parent=1 // pred_check
      _
    $region23: #{cnn_encoder_forward.1} parent=1 // pred_check_branch
      %28 = sbr.rel (0) target = $region25
    $region24: #{cnn_encoder_forward.1} parent=1 // pred_region
      _
    $region25: #{cnn_encoder_forward.1} parent=1 // pred_fallthru
      _
    // Predicated region
    $region26: #{cnn_encoder_forward.1} parent=1 // pred_check
      _
    $region27: #{cnn_encoder_forward.1} parent=1 // pred_check_branch
      %30 = sbr.rel (0) target = $region29
    $region28: #{cnn_encoder_forward.1} parent=1 // pred_region
      %s32 = ssub.s32 2304, 2304
      %33 = vsyncadd [#allocation6], %s32
      %s34 = sshll.u32 [#allocation5], 4
      %s35 = int_to_ptr.vmem [resolvable:$true] %s34
      %40 = dma.hbm_to_vmem [thread:$0]  %s6, 2304, %s35, [#allocation6], 64, 64, 4
    $region29: #{cnn_encoder_forward.1} parent=1 // pred_fallthru
      _
    // Predicated region
    $region30: #{cnn_encoder_forward.1} parent=1 // pred_check
      _
    $region31: #{cnn_encoder_forward.1} parent=1 // pred_check_branch
      %42 = sbr.rel (0) target = $region33
    $region32: #{cnn_encoder_forward.1} parent=1 // pred_region
      _
    $region33: #{cnn_encoder_forward.1} parent=1 // pred_fallthru
      _
    // Predicated region
    $region34: #{cnn_encoder_forward.1} parent=1 // pred_check
      _
    $region35: #{cnn_encoder_forward.1} parent=1 // pred_check_branch
      %44 = sbr.rel (0) target = $region37
    $region36: #{cnn_encoder_forward.1} parent=1 // pred_region
      _
    $region37: #{cnn_encoder_forward.1} parent=1 // pred_fallthru
      _
    // Predicated region
    $region38: #{cnn_encoder_forward.1} parent=1 // pred_check
      _
    $region39: #{cnn_encoder_forward.1} parent=1 // pred_check_branch
      %46 = sbr.rel (0) target = $region41
    $region40: #{cnn_encoder_forward.1} parent=1 // pred_region
      %47 = dma.done [#allocation6], 2304
    $region41: #{cnn_encoder_forward.1} parent=1 // pred_fallthru
      _
    %p50 = scmp.lt.u32.totalorder 2048, 8
    %p51 = pneg %p50
    // Predicated region
    $region42: #{cnn_encoder_forward.1} parent=1 // pred_check
      _
    $region43: #{cnn_encoder_forward.1} parent=1 // pred_check_branch
      %53 = sbr.rel (%p50) target = $region45
    $region44: #{cnn_encoder_forward.1} parent=1 // pred_region
      %s69 = sand.u32 2048, 7
      %p70 = scmp.eq.s32.totalorder %s69, 0
      // Predicated region
      $region57: #{cnn_encoder_forward.1} parent=44 // pred_check
        %p71 = pneg %p70
      $region58: #{cnn_encoder_forward.1} parent=44 // pred_check_branch
        %73 = sbr.rel (%p71) target = $region60
      $region59: #{cnn_encoder_forward.1} parent=44 // pred_region
        loop: start=0, step=1, limit=1
        $region61: #{cnn_encoder_forward.1} parent=59 // loop_pre_header
          _
        $region62: #{cnn_encoder_forward.1} parent=59 // loop_header
          %s75 = sphi 0, %s79
          %p76 = scmp.ge.s32.totalorder %s75, 1
          %s80 = sphi %s9, %s9
          %s81 = sphi [#allocation3], [#allocation3]
        $region63: #{cnn_encoder_forward.1} parent=59 // loop_header_branch
          %78 = sbr.rel (%p76) target = $region67
        $region64: #{cnn_encoder_forward.1} parent=59 // loop_body
          %v82 = vld [vmem:[%s80] sm:$0xff]
          %83 = vst [vmem:[%s81] sm:$0xff] %v82
          %v84 = vld [vmem:[%s80 + $0x8] sm:$0xff]
          %85 = vst [vmem:[%s81 + $0x8] sm:$0xff] %v84
          %v86 = vld [vmem:[%s80 + $0x10] sm:$0xff]
          %87 = vst [vmem:[%s81 + $0x10] sm:$0xff] %v86
          %v88 = vld [vmem:[%s80 + $0x18] sm:$0xff]
          %89 = vst [vmem:[%s81 + $0x18] sm:$0xff] %v88
          %v90 = vld [vmem:[%s80 + $0x20] sm:$0xff]
          %91 = vst [vmem:[%s81 + $0x20] sm:$0xff] %v90
          %v92 = vld [vmem:[%s80 + $0x28] sm:$0xff]
          %93 = vst [vmem:[%s81 + $0x28] sm:$0xff] %v92
          %v94 = vld [vmem:[%s80 + $0x30] sm:$0xff]
          %95 = vst [vmem:[%s81 + $0x30] sm:$0xff] %v94
          %v96 = vld [vmem:[%s80 + $0x38] sm:$0xff]
          %97 = vst [vmem:[%s81 + $0x38] sm:$0xff] %v96
          %v98 = vld [vmem:[%s80 + $0x40] sm:$0xff]
          %99 = vst [vmem:[%s81 + $0x40] sm:$0xff] %v98
          %v100 = vld [vmem:[%s80 + $0x48] sm:$0xff]
          %101 = vst [vmem:[%s81 + $0x48] sm:$0xff] %v100
          %v102 = vld [vmem:[%s80 + $0x50] sm:$0xff]
          %103 = vst [vmem:[%s81 + $0x50] sm:$0xff] %v102
          %v104 = vld [vmem:[%s80 + $0x58] sm:$0xff]
          %105 = vst [vmem:[%s81 + $0x58] sm:$0xff] %v104
          %v106 = vld [vmem:[%s80 + $0x60] sm:$0xff]
          %107 = vst [vmem:[%s81 + $0x60] sm:$0xff] %v106
          %v108 = vld [vmem:[%s80 + $0x68] sm:$0xff]
          %109 = vst [vmem:[%s81 + $0x68] sm:$0xff] %v108
          %v110 = vld [vmem:[%s80 + $0x70] sm:$0xff]
          %111 = vst [vmem:[%s81 + $0x70] sm:$0xff] %v110
          %v112 = vld [vmem:[%s80 + $0x78] sm:$0xff]
          %113 = vst [vmem:[%s81 + $0x78] sm:$0xff] %v112
          %v114 = vld [vmem:[%s80 + $0x80] sm:$0xff]
          %115 = vst [vmem:[%s81 + $0x80] sm:$0xff] %v114
          %v116 = vld [vmem:[%s80 + $0x88] sm:$0xff]
          %117 = vst [vmem:[%s81 + $0x88] sm:$0xff] %v116
          %v118 = vld [vmem:[%s80 + $0x90] sm:$0xff]
          %119 = vst [vmem:[%s81 + $0x90] sm:$0xff] %v118
          %v120 = vld [vmem:[%s80 + $0x98] sm:$0xff]
          %121 = vst [vmem:[%s81 + $0x98] sm:$0xff] %v120
          %v122 = vld [vmem:[%s80 + $0xa0] sm:$0xff]
          %123 = vst [vmem:[%s81 + $0xa0] sm:$0xff] %v122
          %v124 = vld [vmem:[%s80 + $0xa8] sm:$0xff]
          %125 = vst [vmem:[%s81 + $0xa8] sm:$0xff] %v124
          %v126 = vld [vmem:[%s80 + $0xb0] sm:$0xff]
          %127 = vst [vmem:[%s81 + $0xb0] sm:$0xff] %v126
          %v128 = vld [vmem:[%s80 + $0xb8] sm:$0xff]
          %129 = vst [vmem:[%s81 + $0xb8] sm:$0xff] %v128
          %v130 = vld [vmem:[%s80 + $0xc0] sm:$0xff]
          %131 = vst [vmem:[%s81 + $0xc0] sm:$0xff] %v130
          %v132 = vld [vmem:[%s80 + $0xc8] sm:$0xff]
          %133 = vst [vmem:[%s81 + $0xc8] sm:$0xff] %v132
          %v134 = vld [vmem:[%s80 + $0xd0] sm:$0xff]
          %135 = vst [vmem:[%s81 + $0xd0] sm:$0xff] %v134
          %v136 = vld [vmem:[%s80 + $0xd8] sm:$0xff]
          %137 = vst [vmem:[%s81 + $0xd8] sm:$0xff] %v136
          %v138 = vld [vmem:[%s80 + $0xe0] sm:$0xff]
          %139 = vst [vmem:[%s81 + $0xe0] sm:$0xff] %v138
          %v140 = vld [vmem:[%s80 + $0xe8] sm:$0xff]
          %141 = vst [vmem:[%s81 + $0xe8] sm:$0xff] %v140
          %v142 = vld [vmem:[%s80 + $0xf0] sm:$0xff]
          %143 = vst [vmem:[%s81 + $0xf0] sm:$0xff] %v142
          %v144 = vld [vmem:[%s80 + $0xf8] sm:$0xff]
          %145 = vst [vmem:[%s81 + $0xf8] sm:$0xff] %v144
          %v146 = vld [vmem:[%s80 + $0x100] sm:$0xff]
          %147 = vst [vmem:[%s81 + $0x100] sm:$0xff] %v146
          %v148 = vld [vmem:[%s80 + $0x108] sm:$0xff]
          %149 = vst [vmem:[%s81 + $0x108] sm:$0xff] %v148
          %v150 = vld [vmem:[%s80 + $0x110] sm:$0xff]
          %151 = vst [vmem:[%s81 + $0x110] sm:$0xff] %v150
          %v152 = vld [vmem:[%s80 + $0x118] sm:$0xff]
          %153 = vst [vmem:[%s81 + $0x118] sm:$0xff] %v152
          %v154 = vld [vmem:[%s80 + $0x120] sm:$0xff]
          %155 = vst [vmem:[%s81 + $0x120] sm:$0xff] %v154
          %v156 = vld [vmem:[%s80 + $0x128] sm:$0xff]
          %157 = vst [vmem:[%s81 + $0x128] sm:$0xff] %v156
          %v158 = vld [vmem:[%s80 + $0x130] sm:$0xff]
          %159 = vst [vmem:[%s81 + $0x130] sm:$0xff] %v158
          %v160 = vld [vmem:[%s80 + $0x138] sm:$0xff]
          %161 = vst [vmem:[%s81 + $0x138] sm:$0xff] %v160
          %v162 = vld [vmem:[%s80 + $0x140] sm:$0xff]
          %163 = vst [vmem:[%s81 + $0x140] sm:$0xff] %v162
          %v164 = vld [vmem:[%s80 + $0x148] sm:$0xff]
          %165 = vst [vmem:[%s81 + $0x148] sm:$0xff] %v164
          %v166 = vld [vmem:[%s80 + $0x150] sm:$0xff]
          %167 = vst [vmem:[%s81 + $0x150] sm:$0xff] %v166
          %v168 = vld [vmem:[%s80 + $0x158] sm:$0xff]
          %169 = vst [vmem:[%s81 + $0x158] sm:$0xff] %v168
          %v170 = vld [vmem:[%s80 + $0x160] sm:$0xff]
          %171 = vst [vmem:[%s81 + $0x160] sm:$0xff] %v170
          %v172 = vld [vmem:[%s80 + $0x168] sm:$0xff]
          %173 = vst [vmem:[%s81 + $0x168] sm:$0xff] %v172
          %v174 = vld [vmem:[%s80 + $0x170] sm:$0xff]
          %175 = vst [vmem:[%s81 + $0x170] sm:$0xff] %v174
          %v176 = vld [vmem:[%s80 + $0x178] sm:$0xff]
          %177 = vst [vmem:[%s81 + $0x178] sm:$0xff] %v176
          %v178 = vld [vmem:[%s80 + $0x180] sm:$0xff]
          %179 = vst [vmem:[%s81 + $0x180] sm:$0xff] %v178
          %v180 = vld [vmem:[%s80 + $0x188] sm:$0xff]
          %181 = vst [vmem:[%s81 + $0x188] sm:$0xff] %v180
          %v182 = vld [vmem:[%s80 + $0x190] sm:$0xff]
          %183 = vst [vmem:[%s81 + $0x190] sm:$0xff] %v182
          %v184 = vld [vmem:[%s80 + $0x198] sm:$0xff]
          %185 = vst [vmem:[%s81 + $0x198] sm:$0xff] %v184
          %v186 = vld [vmem:[%s80 + $0x1a0] sm:$0xff]
          %187 = vst [vmem:[%s81 + $0x1a0] sm:$0xff] %v186
          %v188 = vld [vmem:[%s80 + $0x1a8] sm:$0xff]
          %189 = vst [vmem:[%s81 + $0x1a8] sm:$0xff] %v188
          %v190 = vld [vmem:[%s80 + $0x1b0] sm:$0xff]
          %191 = vst [vmem:[%s81 + $0x1b0] sm:$0xff] %v190
          %v192 = vld [vmem:[%s80 + $0x1b8] sm:$0xff]
          %193 = vst [vmem:[%s81 + $0x1b8] sm:$0xff] %v192
          %v194 = vld [vmem:[%s80 + $0x1c0] sm:$0xff]
          %195 = vst [vmem:[%s81 + $0x1c0] sm:$0xff] %v194
          %v196 = vld [vmem:[%s80 + $0x1c8] sm:$0xff]
          %197 = vst [vmem:[%s81 + $0x1c8] sm:$0xff] %v196
          %v198 = vld [vmem:[%s80 + $0x1d0] sm:$0xff]
          %199 = vst [vmem:[%s81 + $0x1d0] sm:$0xff] %v198
          %v200 = vld [vmem:[%s80 + $0x1d8] sm:$0xff]
          %201 = vst [vmem:[%s81 + $0x1d8] sm:$0xff] %v200
          %v202 = vld [vmem:[%s80 + $0x1e0] sm:$0xff]
          %203 = vst [vmem:[%s81 + $0x1e0] sm:$0xff] %v202
          %v204 = vld [vmem:[%s80 + $0x1e8] sm:$0xff]
          %205 = vst [vmem:[%s81 + $0x1e8] sm:$0xff] %v204
          %v206 = vld [vmem:[%s80 + $0x1f0] sm:$0xff]
          %207 = vst [vmem:[%s81 + $0x1f0] sm:$0xff] %v206
          %v208 = vld [vmem:[%s80 + $0x1f8] sm:$0xff]
          %209 = vst [vmem:[%s81 + $0x1f8] sm:$0xff] %v208
          %v210 = vld [vmem:[%s80 + $0x200] sm:$0xff]
          %211 = vst [vmem:[%s81 + $0x200] sm:$0xff] %v210
          %v212 = vld [vmem:[%s80 + $0x208] sm:$0xff]
          %213 = vst [vmem:[%s81 + $0x208] sm:$0xff] %v212
          %v214 = vld [vmem:[%s80 + $0x210] sm:$0xff]
          %215 = vst [vmem:[%s81 + $0x210] sm:$0xff] %v214
          %v216 = vld [vmem:[%s80 + $0x218] sm:$0xff]
          %217 = vst [vmem:[%s81 + $0x218] sm:$0xff] %v216
          %v218 = vld [vmem:[%s80 + $0x220] sm:$0xff]
          %219 = vst [vmem:[%s81 + $0x220] sm:$0xff] %v218
          %v220 = vld [vmem:[%s80 + $0x228] sm:$0xff]
          %221 = vst [vmem:[%s81 + $0x228] sm:$0xff] %v220
          %v222 = vld [vmem:[%s80 + $0x230] sm:$0xff]
          %223 = vst [vmem:[%s81 + $0x230] sm:$0xff] %v222
          %v224 = vld [vmem:[%s80 + $0x238] sm:$0xff]
          %225 = vst [vmem:[%s81 + $0x238] sm:$0xff] %v224
          %v226 = vld [vmem:[%s80 + $0x240] sm:$0xff]
          %227 = vst [vmem:[%s81 + $0x240] sm:$0xff] %v226
          %v228 = vld [vmem:[%s80 + $0x248] sm:$0xff]
          %229 = vst [vmem:[%s81 + $0x248] sm:$0xff] %v228
          %v230 = vld [vmem:[%s80 + $0x250] sm:$0xff]
          %231 = vst [vmem:[%s81 + $0x250] sm:$0xff] %v230
          %v232 = vld [vmem:[%s80 + $0x258] sm:$0xff]
          %233 = vst [vmem:[%s81 + $0x258] sm:$0xff] %v232
          %v234 = vld [vmem:[%s80 + $0x260] sm:$0xff]
          %235 = vst [vmem:[%s81 + $0x260] sm:$0xff] %v234
          %v236 = vld [vmem:[%s80 + $0x268] sm:$0xff]
          %237 = vst [vmem:[%s81 + $0x268] sm:$0xff] %v236
          %v238 = vld [vmem:[%s80 + $0x270] sm:$0xff]
          %239 = vst [vmem:[%s81 + $0x270] sm:$0xff] %v238
          %v240 = vld [vmem:[%s80 + $0x278] sm:$0xff]
          %241 = vst [vmem:[%s81 + $0x278] sm:$0xff] %v240
          %v242 = vld [vmem:[%s80 + $0x280] sm:$0xff]
          %243 = vst [vmem:[%s81 + $0x280] sm:$0xff] %v242
          %v244 = vld [vmem:[%s80 + $0x288] sm:$0xff]
          %245 = vst [vmem:[%s81 + $0x288] sm:$0xff] %v244
          %v246 = vld [vmem:[%s80 + $0x290] sm:$0xff]
          %247 = vst [vmem:[%s81 + $0x290] sm:$0xff] %v246
          %v248 = vld [vmem:[%s80 + $0x298] sm:$0xff]
          %249 = vst [vmem:[%s81 + $0x298] sm:$0xff] %v248
          %v250 = vld [vmem:[%s80 + $0x2a0] sm:$0xff]
          %251 = vst [vmem:[%s81 + $0x2a0] sm:$0xff] %v250
          %v252 = vld [vmem:[%s80 + $0x2a8] sm:$0xff]
          %253 = vst [vmem:[%s81 + $0x2a8] sm:$0xff] %v252
          %v254 = vld [vmem:[%s80 + $0x2b0] sm:$0xff]
          %255 = vst [vmem:[%s81 + $0x2b0] sm:$0xff] %v254
          %v256 = vld [vmem:[%s80 + $0x2b8] sm:$0xff]
          %257 = vst [vmem:[%s81 + $0x2b8] sm:$0xff] %v256
          %v258 = vld [vmem:[%s80 + $0x2c0] sm:$0xff]
          %259 = vst [vmem:[%s81 + $0x2c0] sm:$0xff] %v258
          %v260 = vld [vmem:[%s80 + $0x2c8] sm:$0xff]
          %261 = vst [vmem:[%s81 + $0x2c8] sm:$0xff] %v260
          %v262 = vld [vmem:[%s80 + $0x2d0] sm:$0xff]
          %263 = vst [vmem:[%s81 + $0x2d0] sm:$0xff] %v262
          %v264 = vld [vmem:[%s80 + $0x2d8] sm:$0xff]
          %265 = vst [vmem:[%s81 + $0x2d8] sm:$0xff] %v264
          %v266 = vld [vmem:[%s80 + $0x2e0] sm:$0xff]
          %267 = vst [vmem:[%s81 + $0x2e0] sm:$0xff] %v266
          %v268 = vld [vmem:[%s80 + $0x2e8] sm:$0xff]
          %269 = vst [vmem:[%s81 + $0x2e8] sm:$0xff] %v268
          %v270 = vld [vmem:[%s80 + $0x2f0] sm:$0xff]
          %271 = vst [vmem:[%s81 + $0x2f0] sm:$0xff] %v270
          %v272 = vld [vmem:[%s80 + $0x2f8] sm:$0xff]
          %273 = vst [vmem:[%s81 + $0x2f8] sm:$0xff] %v272
          %v274 = vld [vmem:[%s80 + $0x300] sm:$0xff]
          %275 = vst [vmem:[%s81 + $0x300] sm:$0xff] %v274
          %v276 = vld [vmem:[%s80 + $0x308] sm:$0xff]
          %277 = vst [vmem:[%s81 + $0x308] sm:$0xff] %v276
          %v278 = vld [vmem:[%s80 + $0x310] sm:$0xff]
          %279 = vst [vmem:[%s81 + $0x310] sm:$0xff] %v278
          %v280 = vld [vmem:[%s80 + $0x318] sm:$0xff]
          %281 = vst [vmem:[%s81 + $0x318] sm:$0xff] %v280
          %v282 = vld [vmem:[%s80 + $0x320] sm:$0xff]
          %283 = vst [vmem:[%s81 + $0x320] sm:$0xff] %v282
          %v284 = vld [vmem:[%s80 + $0x328] sm:$0xff]
          %285 = vst [vmem:[%s81 + $0x328] sm:$0xff] %v284
          %v286 = vld [vmem:[%s80 + $0x330] sm:$0xff]
          %287 = vst [vmem:[%s81 + $0x330] sm:$0xff] %v286
          %v288 = vld [vmem:[%s80 + $0x338] sm:$0xff]
          %289 = vst [vmem:[%s81 + $0x338] sm:$0xff] %v288
          %v290 = vld [vmem:[%s80 + $0x340] sm:$0xff]
          %291 = vst [vmem:[%s81 + $0x340] sm:$0xff] %v290
          %v292 = vld [vmem:[%s80 + $0x348] sm:$0xff]
          %293 = vst [vmem:[%s81 + $0x348] sm:$0xff] %v292
          %v294 = vld [vmem:[%s80 + $0x350] sm:$0xff]
          %295 = vst [vmem:[%s81 + $0x350] sm:$0xff] %v294
          %v296 = vld [vmem:[%s80 + $0x358] sm:$0xff]
          %297 = vst [vmem:[%s81 + $0x358] sm:$0xff] %v296
          %v298 = vld [vmem:[%s80 + $0x360] sm:$0xff]
          %299 = vst [vmem:[%s81 + $0x360] sm:$0xff] %v298
          %v300 = vld [vmem:[%s80 + $0x368] sm:$0xff]
          %301 = vst [vmem:[%s81 + $0x368] sm:$0xff] %v300
          %v302 = vld [vmem:[%s80 + $0x370] sm:$0xff]
          %303 = vst [vmem:[%s81 + $0x370] sm:$0xff] %v302
          %v304 = vld [vmem:[%s80 + $0x378] sm:$0xff]
          %305 = vst [vmem:[%s81 + $0x378] sm:$0xff] %v304
          %v306 = vld [vmem:[%s80 + $0x380] sm:$0xff]
          %307 = vst [vmem:[%s81 + $0x380] sm:$0xff] %v306
          %v308 = vld [vmem:[%s80 + $0x388] sm:$0xff]
          %309 = vst [vmem:[%s81 + $0x388] sm:$0xff] %v308
          %v310 = vld [vmem:[%s80 + $0x390] sm:$0xff]
          %311 = vst [vmem:[%s81 + $0x390] sm:$0xff] %v310
          %v312 = vld [vmem:[%s80 + $0x398] sm:$0xff]
          %313 = vst [vmem:[%s81 + $0x398] sm:$0xff] %v312
          %v314 = vld [vmem:[%s80 + $0x3a0] sm:$0xff]
          %315 = vst [vmem:[%s81 + $0x3a0] sm:$0xff] %v314
          %v316 = vld [vmem:[%s80 + $0x3a8] sm:$0xff]
          %317 = vst [vmem:[%s81 + $0x3a8] sm:$0xff] %v316
          %v318 = vld [vmem:[%s80 + $0x3b0] sm:$0xff]
          %319 = vst [vmem:[%s81 + $0x3b0] sm:$0xff] %v318
          %v320 = vld [vmem:[%s80 + $0x3b8] sm:$0xff]
          %321 = vst [vmem:[%s81 + $0x3b8] sm:$0xff] %v320
          %v322 = vld [vmem:[%s80 + $0x3c0] sm:$0xff]
          %323 = vst [vmem:[%s81 + $0x3c0] sm:$0xff] %v322
          %v324 = vld [vmem:[%s80 + $0x3c8] sm:$0xff]
          %325 = vst [vmem:[%s81 + $0x3c8] sm:$0xff] %v324
          %v326 = vld [vmem:[%s80 + $0x3d0] sm:$0xff]
          %327 = vst [vmem:[%s81 + $0x3d0] sm:$0xff] %v326
          %v328 = vld [vmem:[%s80 + $0x3d8] sm:$0xff]
          %329 = vst [vmem:[%s81 + $0x3d8] sm:$0xff] %v328
          %v330 = vld [vmem:[%s80 + $0x3e0] sm:$0xff]
          %331 = vst [vmem:[%s81 + $0x3e0] sm:$0xff] %v330
          %v332 = vld [vmem:[%s80 + $0x3e8] sm:$0xff]
          %333 = vst [vmem:[%s81 + $0x3e8] sm:$0xff] %v332
          %v334 = vld [vmem:[%s80 + $0x3f0] sm:$0xff]
          %335 = vst [vmem:[%s81 + $0x3f0] sm:$0xff] %v334
          %v336 = vld [vmem:[%s80 + $0x3f8] sm:$0xff]
          %337 = vst [vmem:[%s81 + $0x3f8] sm:$0xff] %v336
          %v338 = vld [vmem:[%s80 + $0x400] sm:$0xff]
          %339 = vst [vmem:[%s81 + $0x400] sm:$0xff] %v338
          %v340 = vld [vmem:[%s80 + $0x408] sm:$0xff]
          %341 = vst [vmem:[%s81 + $0x408] sm:$0xff] %v340
          %v342 = vld [vmem:[%s80 + $0x410] sm:$0xff]
          %343 = vst [vmem:[%s81 + $0x410] sm:$0xff] %v342
          %v344 = vld [vmem:[%s80 + $0x418] sm:$0xff]
          %345 = vst [vmem:[%s81 + $0x418] sm:$0xff] %v344
          %v346 = vld [vmem:[%s80 + $0x420] sm:$0xff]
          %347 = vst [vmem:[%s81 + $0x420] sm:$0xff] %v346
          %v348 = vld [vmem:[%s80 + $0x428] sm:$0xff]
          %349 = vst [vmem:[%s81 + $0x428] sm:$0xff] %v348
          %v350 = vld [vmem:[%s80 + $0x430] sm:$0xff]
          %351 = vst [vmem:[%s81 + $0x430] sm:$0xff] %v350
          %v352 = vld [vmem:[%s80 + $0x438] sm:$0xff]
          %353 = vst [vmem:[%s81 + $0x438] sm:$0xff] %v352
          %v354 = vld [vmem:[%s80 + $0x440] sm:$0xff]
          %355 = vst [vmem:[%s81 + $0x440] sm:$0xff] %v354
          %v356 = vld [vmem:[%s80 + $0x448] sm:$0xff]
          %357 = vst [vmem:[%s81 + $0x448] sm:$0xff] %v356
          %v358 = vld [vmem:[%s80 + $0x450] sm:$0xff]
          %359 = vst [vmem:[%s81 + $0x450] sm:$0xff] %v358
          %v360 = vld [vmem:[%s80 + $0x458] sm:$0xff]
          %361 = vst [vmem:[%s81 + $0x458] sm:$0xff] %v360
          %v362 = vld [vmem:[%s80 + $0x460] sm:$0xff]
          %363 = vst [vmem:[%s81 + $0x460] sm:$0xff] %v362
          %v364 = vld [vmem:[%s80 + $0x468] sm:$0xff]
          %365 = vst [vmem:[%s81 + $0x468] sm:$0xff] %v364
          %v366 = vld [vmem:[%s80 + $0x470] sm:$0xff]
          %367 = vst [vmem:[%s81 + $0x470] sm:$0xff] %v366
          %v368 = vld [vmem:[%s80 + $0x478] sm:$0xff]
          %369 = vst [vmem:[%s81 + $0x478] sm:$0xff] %v368
          %v370 = vld [vmem:[%s80 + $0x480] sm:$0xff]
          %371 = vst [vmem:[%s81 + $0x480] sm:$0xff] %v370
          %v372 = vld [vmem:[%s80 + $0x488] sm:$0xff]
          %373 = vst [vmem:[%s81 + $0x488] sm:$0xff] %v372
          %v374 = vld [vmem:[%s80 + $0x490] sm:$0xff]
          %375 = vst [vmem:[%s81 + $0x490] sm:$0xff] %v374
          %v376 = vld [vmem:[%s80 + $0x498] sm:$0xff]
          %377 = vst [vmem:[%s81 + $0x498] sm:$0xff] %v376
          %v378 = vld [vmem:[%s80 + $0x4a0] sm:$0xff]
          %379 = vst [vmem:[%s81 + $0x4a0] sm:$0xff] %v378
          %v380 = vld [vmem:[%s80 + $0x4a8] sm:$0xff]
          %381 = vst [vmem:[%s81 + $0x4a8] sm:$0xff] %v380
          %v382 = vld [vmem:[%s80 + $0x4b0] sm:$0xff]
          %383 = vst [vmem:[%s81 + $0x4b0] sm:$0xff] %v382
          %v384 = vld [vmem:[%s80 + $0x4b8] sm:$0xff]
          %385 = vst [vmem:[%s81 + $0x4b8] sm:$0xff] %v384
          %v386 = vld [vmem:[%s80 + $0x4c0] sm:$0xff]
          %387 = vst [vmem:[%s81 + $0x4c0] sm:$0xff] %v386
          %v388 = vld [vmem:[%s80 + $0x4c8] sm:$0xff]
          %389 = vst [vmem:[%s81 + $0x4c8] sm:$0xff] %v388
          %v390 = vld [vmem:[%s80 + $0x4d0] sm:$0xff]
          %391 = vst [vmem:[%s81 + $0x4d0] sm:$0xff] %v390
          %v392 = vld [vmem:[%s80 + $0x4d8] sm:$0xff]
          %393 = vst [vmem:[%s81 + $0x4d8] sm:$0xff] %v392
          %v394 = vld [vmem:[%s80 + $0x4e0] sm:$0xff]
          %395 = vst [vmem:[%s81 + $0x4e0] sm:$0xff] %v394
          %v396 = vld [vmem:[%s80 + $0x4e8] sm:$0xff]
          %397 = vst [vmem:[%s81 + $0x4e8] sm:$0xff] %v396
          %v398 = vld [vmem:[%s80 + $0x4f0] sm:$0xff]
          %399 = vst [vmem:[%s81 + $0x4f0] sm:$0xff] %v398
          %v400 = vld [vmem:[%s80 + $0x4f8] sm:$0xff]
          %401 = vst [vmem:[%s81 + $0x4f8] sm:$0xff] %v400
          %v402 = vld [vmem:[%s80 + $0x500] sm:$0xff]
          %403 = vst [vmem:[%s81 + $0x500] sm:$0xff] %v402
          %v404 = vld [vmem:[%s80 + $0x508] sm:$0xff]
          %405 = vst [vmem:[%s81 + $0x508] sm:$0xff] %v404
          %v406 = vld [vmem:[%s80 + $0x510] sm:$0xff]
          %407 = vst [vmem:[%s81 + $0x510] sm:$0xff] %v406
          %v408 = vld [vmem:[%s80 + $0x518] sm:$0xff]
          %409 = vst [vmem:[%s81 + $0x518] sm:$0xff] %v408
          %v410 = vld [vmem:[%s80 + $0x520] sm:$0xff]
          %411 = vst [vmem:[%s81 + $0x520] sm:$0xff] %v410
          %v412 = vld [vmem:[%s80 + $0x528] sm:$0xff]
          %413 = vst [vmem:[%s81 + $0x528] sm:$0xff] %v412
          %v414 = vld [vmem:[%s80 + $0x530] sm:$0xff]
          %415 = vst [vmem:[%s81 + $0x530] sm:$0xff] %v414
          %v416 = vld [vmem:[%s80 + $0x538] sm:$0xff]
          %417 = vst [vmem:[%s81 + $0x538] sm:$0xff] %v416
          %v418 = vld [vmem:[%s80 + $0x540] sm:$0xff]
          %419 = vst [vmem:[%s81 + $0x540] sm:$0xff] %v418
          %v420 = vld [vmem:[%s80 + $0x548] sm:$0xff]
          %421 = vst [vmem:[%s81 + $0x548] sm:$0xff] %v420
          %v422 = vld [vmem:[%s80 + $0x550] sm:$0xff]
          %423 = vst [vmem:[%s81 + $0x550] sm:$0xff] %v422
          %v424 = vld [vmem:[%s80 + $0x558] sm:$0xff]
          %425 = vst [vmem:[%s81 + $0x558] sm:$0xff] %v424
          %v426 = vld [vmem:[%s80 + $0x560] sm:$0xff]
          %427 = vst [vmem:[%s81 + $0x560] sm:$0xff] %v426
          %v428 = vld [vmem:[%s80 + $0x568] sm:$0xff]
          %429 = vst [vmem:[%s81 + $0x568] sm:$0xff] %v428
          %v430 = vld [vmem:[%s80 + $0x570] sm:$0xff]
          %431 = vst [vmem:[%s81 + $0x570] sm:$0xff] %v430
          %v432 = vld [vmem:[%s80 + $0x578] sm:$0xff]
          %433 = vst [vmem:[%s81 + $0x578] sm:$0xff] %v432
          %v434 = vld [vmem:[%s80 + $0x580] sm:$0xff]
          %435 = vst [vmem:[%s81 + $0x580] sm:$0xff] %v434
          %v436 = vld [vmem:[%s80 + $0x588] sm:$0xff]
          %437 = vst [vmem:[%s81 + $0x588] sm:$0xff] %v436
          %v438 = vld [vmem:[%s80 + $0x590] sm:$0xff]
          %439 = vst [vmem:[%s81 + $0x590] sm:$0xff] %v438
          %v440 = vld [vmem:[%s80 + $0x598] sm:$0xff]
          %441 = vst [vmem:[%s81 + $0x598] sm:$0xff] %v440
          %v442 = vld [vmem:[%s80 + $0x5a0] sm:$0xff]
          %443 = vst [vmem:[%s81 + $0x5a0] sm:$0xff] %v442
          %v444 = vld [vmem:[%s80 + $0x5a8] sm:$0xff]
          %445 = vst [vmem:[%s81 + $0x5a8] sm:$0xff] %v444
          %v446 = vld [vmem:[%s80 + $0x5b0] sm:$0xff]
          %447 = vst [vmem:[%s81 + $0x5b0] sm:$0xff] %v446
          %v448 = vld [vmem:[%s80 + $0x5b8] sm:$0xff]
          %449 = vst [vmem:[%s81 + $0x5b8] sm:$0xff] %v448
          %v450 = vld [vmem:[%s80 + $0x5c0] sm:$0xff]
          %451 = vst [vmem:[%s81 + $0x5c0] sm:$0xff] %v450
          %v452 = vld [vmem:[%s80 + $0x5c8] sm:$0xff]
          %453 = vst [vmem:[%s81 + $0x5c8] sm:$0xff] %v452
          %v454 = vld [vmem:[%s80 + $0x5d0] sm:$0xff]
          %455 = vst [vmem:[%s81 + $0x5d0] sm:$0xff] %v454
          %v456 = vld [vmem:[%s80 + $0x5d8] sm:$0xff]
          %457 = vst [vmem:[%s81 + $0x5d8] sm:$0xff] %v456
          %v458 = vld [vmem:[%s80 + $0x5e0] sm:$0xff]
          %459 = vst [vmem:[%s81 + $0x5e0] sm:$0xff] %v458
          %v460 = vld [vmem:[%s80 + $0x5e8] sm:$0xff]
          %461 = vst [vmem:[%s81 + $0x5e8] sm:$0xff] %v460
          %v462 = vld [vmem:[%s80 + $0x5f0] sm:$0xff]
          %463 = vst [vmem:[%s81 + $0x5f0] sm:$0xff] %v462
          %v464 = vld [vmem:[%s80 + $0x5f8] sm:$0xff]
          %465 = vst [vmem:[%s81 + $0x5f8] sm:$0xff] %v464
          %v466 = vld [vmem:[%s80 + $0x600] sm:$0xff]
          %467 = vst [vmem:[%s81 + $0x600] sm:$0xff] %v466
          %v468 = vld [vmem:[%s80 + $0x608] sm:$0xff]
          %469 = vst [vmem:[%s81 + $0x608] sm:$0xff] %v468
          %v470 = vld [vmem:[%s80 + $0x610] sm:$0xff]
          %471 = vst [vmem:[%s81 + $0x610] sm:$0xff] %v470
          %v472 = vld [vmem:[%s80 + $0x618] sm:$0xff]
          %473 = vst [vmem:[%s81 + $0x618] sm:$0xff] %v472
          %v474 = vld [vmem:[%s80 + $0x620] sm:$0xff]
          %475 = vst [vmem:[%s81 + $0x620] sm:$0xff] %v474
          %v476 = vld [vmem:[%s80 + $0x628] sm:$0xff]
          %477 = vst [vmem:[%s81 + $0x628] sm:$0xff] %v476
          %v478 = vld [vmem:[%s80 + $0x630] sm:$0xff]
          %479 = vst [vmem:[%s81 + $0x630] sm:$0xff] %v478
          %v480 = vld [vmem:[%s80 + $0x638] sm:$0xff]
          %481 = vst [vmem:[%s81 + $0x638] sm:$0xff] %v480
          %v482 = vld [vmem:[%s80 + $0x640] sm:$0xff]
          %483 = vst [vmem:[%s81 + $0x640] sm:$0xff] %v482
          %v484 = vld [vmem:[%s80 + $0x648] sm:$0xff]
          %485 = vst [vmem:[%s81 + $0x648] sm:$0xff] %v484
          %v486 = vld [vmem:[%s80 + $0x650] sm:$0xff]
          %487 = vst [vmem:[%s81 + $0x650] sm:$0xff] %v486
          %v488 = vld [vmem:[%s80 + $0x658] sm:$0xff]
          %489 = vst [vmem:[%s81 + $0x658] sm:$0xff] %v488
          %v490 = vld [vmem:[%s80 + $0x660] sm:$0xff]
          %491 = vst [vmem:[%s81 + $0x660] sm:$0xff] %v490
          %v492 = vld [vmem:[%s80 + $0x668] sm:$0xff]
          %493 = vst [vmem:[%s81 + $0x668] sm:$0xff] %v492
          %v494 = vld [vmem:[%s80 + $0x670] sm:$0xff]
          %495 = vst [vmem:[%s81 + $0x670] sm:$0xff] %v494
          %v496 = vld [vmem:[%s80 + $0x678] sm:$0xff]
          %497 = vst [vmem:[%s81 + $0x678] sm:$0xff] %v496
          %v498 = vld [vmem:[%s80 + $0x680] sm:$0xff]
          %499 = vst [vmem:[%s81 + $0x680] sm:$0xff] %v498
          %v500 = vld [vmem:[%s80 + $0x688] sm:$0xff]
          %501 = vst [vmem:[%s81 + $0x688] sm:$0xff] %v500
          %v502 = vld [vmem:[%s80 + $0x690] sm:$0xff]
          %503 = vst [vmem:[%s81 + $0x690] sm:$0xff] %v502
          %v504 = vld [vmem:[%s80 + $0x698] sm:$0xff]
          %505 = vst [vmem:[%s81 + $0x698] sm:$0xff] %v504
          %v506 = vld [vmem:[%s80 + $0x6a0] sm:$0xff]
          %507 = vst [vmem:[%s81 + $0x6a0] sm:$0xff] %v506
          %v508 = vld [vmem:[%s80 + $0x6a8] sm:$0xff]
          %509 = vst [vmem:[%s81 + $0x6a8] sm:$0xff] %v508
          %v510 = vld [vmem:[%s80 + $0x6b0] sm:$0xff]
          %511 = vst [vmem:[%s81 + $0x6b0] sm:$0xff] %v510
          %v512 = vld [vmem:[%s80 + $0x6b8] sm:$0xff]
          %513 = vst [vmem:[%s81 + $0x6b8] sm:$0xff] %v512
          %v514 = vld [vmem:[%s80 + $0x6c0] sm:$0xff]
          %515 = vst [vmem:[%s81 + $0x6c0] sm:$0xff] %v514
          %v516 = vld [vmem:[%s80 + $0x6c8] sm:$0xff]
          %517 = vst [vmem:[%s81 + $0x6c8] sm:$0xff] %v516
          %v518 = vld [vmem:[%s80 + $0x6d0] sm:$0xff]
          %519 = vst [vmem:[%s81 + $0x6d0] sm:$0xff] %v518
          %v520 = vld [vmem:[%s80 + $0x6d8] sm:$0xff]
          %521 = vst [vmem:[%s81 + $0x6d8] sm:$0xff] %v520
          %v522 = vld [vmem:[%s80 + $0x6e0] sm:$0xff]
          %523 = vst [vmem:[%s81 + $0x6e0] sm:$0xff] %v522
          %v524 = vld [vmem:[%s80 + $0x6e8] sm:$0xff]
          %525 = vst [vmem:[%s81 + $0x6e8] sm:$0xff] %v524
          %v526 = vld [vmem:[%s80 + $0x6f0] sm:$0xff]
          %527 = vst [vmem:[%s81 + $0x6f0] sm:$0xff] %v526
          %v528 = vld [vmem:[%s80 + $0x6f8] sm:$0xff]
          %529 = vst [vmem:[%s81 + $0x6f8] sm:$0xff] %v528
          %v530 = vld [vmem:[%s80 + $0x700] sm:$0xff]
          %531 = vst [vmem:[%s81 + $0x700] sm:$0xff] %v530
          %v532 = vld [vmem:[%s80 + $0x708] sm:$0xff]
          %533 = vst [vmem:[%s81 + $0x708] sm:$0xff] %v532
          %v534 = vld [vmem:[%s80 + $0x710] sm:$0xff]
          %535 = vst [vmem:[%s81 + $0x710] sm:$0xff] %v534
          %v536 = vld [vmem:[%s80 + $0x718] sm:$0xff]
          %537 = vst [vmem:[%s81 + $0x718] sm:$0xff] %v536
          %v538 = vld [vmem:[%s80 + $0x720] sm:$0xff]
          %539 = vst [vmem:[%s81 + $0x720] sm:$0xff] %v538
          %v540 = vld [vmem:[%s80 + $0x728] sm:$0xff]
          %541 = vst [vmem:[%s81 + $0x728] sm:$0xff] %v540
          %v542 = vld [vmem:[%s80 + $0x730] sm:$0xff]
          %543 = vst [vmem:[%s81 + $0x730] sm:$0xff] %v542
          %v544 = vld [vmem:[%s80 + $0x738] sm:$0xff]
          %545 = vst [vmem:[%s81 + $0x738] sm:$0xff] %v544
          %v546 = vld [vmem:[%s80 + $0x740] sm:$0xff]
          %547 = vst [vmem:[%s81 + $0x740] sm:$0xff] %v546
          %v548 = vld [vmem:[%s80 + $0x748] sm:$0xff]
          %549 = vst [vmem:[%s81 + $0x748] sm:$0xff] %v548
          %v550 = vld [vmem:[%s80 + $0x750] sm:$0xff]
          %551 = vst [vmem:[%s81 + $0x750] sm:$0xff] %v550
          %v552 = vld [vmem:[%s80 + $0x758] sm:$0xff]
          %553 = vst [vmem:[%s81 + $0x758] sm:$0xff] %v552
          %v554 = vld [vmem:[%s80 + $0x760] sm:$0xff]
          %555 = vst [vmem:[%s81 + $0x760] sm:$0xff] %v554
          %v556 = vld [vmem:[%s80 + $0x768] sm:$0xff]
          %557 = vst [vmem:[%s81 + $0x768] sm:$0xff] %v556
          %v558 = vld [vmem:[%s80 + $0x770] sm:$0xff]
          %559 = vst [vmem:[%s81 + $0x770] sm:$0xff] %v558
          %v560 = vld [vmem:[%s80 + $0x778] sm:$0xff]
          %561 = vst [vmem:[%s81 + $0x778] sm:$0xff] %v560
          %v562 = vld [vmem:[%s80 + $0x780] sm:$0xff]
          %563 = vst [vmem:[%s81 + $0x780] sm:$0xff] %v562
          %v564 = vld [vmem:[%s80 + $0x788] sm:$0xff]
          %565 = vst [vmem:[%s81 + $0x788] sm:$0xff] %v564
          %v566 = vld [vmem:[%s80 + $0x790] sm:$0xff]
          %567 = vst [vmem:[%s81 + $0x790] sm:$0xff] %v566
          %v568 = vld [vmem:[%s80 + $0x798] sm:$0xff]
          %569 = vst [vmem:[%s81 + $0x798] sm:$0xff] %v568
          %v570 = vld [vmem:[%s80 + $0x7a0] sm:$0xff]
          %571 = vst [vmem:[%s81 + $0x7a0] sm:$0xff] %v570
          %v572 = vld [vmem:[%s80 + $0x7a8] sm:$0xff]
          %573 = vst [vmem:[%s81 + $0x7a8] sm:$0xff] %v572
          %v574 = vld [vmem:[%s80 + $0x7b0] sm:$0xff]
          %575 = vst [vmem:[%s81 + $0x7b0] sm:$0xff] %v574
          %v576 = vld [vmem:[%s80 + $0x7b8] sm:$0xff]
          %577 = vst [vmem:[%s81 + $0x7b8] sm:$0xff] %v576
          %v578 = vld [vmem:[%s80 + $0x7c0] sm:$0xff]
          %579 = vst [vmem:[%s81 + $0x7c0] sm:$0xff] %v578
          %v580 = vld [vmem:[%s80 + $0x7c8] sm:$0xff]
          %581 = vst [vmem:[%s81 + $0x7c8] sm:$0xff] %v580
          %v582 = vld [vmem:[%s80 + $0x7d0] sm:$0xff]
          %583 = vst [vmem:[%s81 + $0x7d0] sm:$0xff] %v582
          %v584 = vld [vmem:[%s80 + $0x7d8] sm:$0xff]
          %585 = vst [vmem:[%s81 + $0x7d8] sm:$0xff] %v584
          %v586 = vld [vmem:[%s80 + $0x7e0] sm:$0xff]
          %587 = vst [vmem:[%s81 + $0x7e0] sm:$0xff] %v586
          %v588 = vld [vmem:[%s80 + $0x7e8] sm:$0xff]
          %589 = vst [vmem:[%s81 + $0x7e8] sm:$0xff] %v588
          %v590 = vld [vmem:[%s80 + $0x7f0] sm:$0xff]
          %591 = vst [vmem:[%s81 + $0x7f0] sm:$0xff] %v590
          %v592 = vld [vmem:[%s80 + $0x7f8] sm:$0xff]
          %593 = vst [vmem:[%s81 + $0x7f8] sm:$0xff] %v592
        $region65: #{cnn_encoder_forward.1} parent=59 // loop_footer
          %s79 = sadd.s32 1, %s75
        $region66: #{cnn_encoder_forward.1} parent=59 // loop_footer_branch
          %74 = sbr.rel target = $region62
        $region67: #{cnn_encoder_forward.1} parent=59 // loop_exit
          _
      $region60: #{cnn_encoder_forward.1} parent=44 // pred_fallthru
        _
      %p594 = pneg %p70
      // Predicated region
      $region68: #{cnn_encoder_forward.1} parent=44 // pred_check
        _
      $region69: #{cnn_encoder_forward.1} parent=44 // pred_check_branch
        %596 = sbr.rel (%p70) target = $region71
      $region70: #{cnn_encoder_forward.1} parent=44 // pred_region
        %s597 = sand.u32 2048, 7
      $region71: #{cnn_encoder_forward.1} parent=44 // pred_fallthru
        _
    $region45: #{cnn_encoder_forward.1} parent=1 // pred_fallthru
      _
    // Predicated region
    $region46: #{cnn_encoder_forward.1} parent=1 // pred_check
      %p54 = pneg %p50
    $region47: #{cnn_encoder_forward.1} parent=1 // pred_check_branch
      %56 = sbr.rel (%p54) target = $region49
    $region48: #{cnn_encoder_forward.1} parent=1 // pred_region
      %s57 = sshll.u32 1, 2048
      %s58 = ssub.s32 %s57, 1
      loop: start=0, step=1, limit=1
      $region50: #{cnn_encoder_forward.1} parent=48 // loop_pre_header
        _
      $region51: #{cnn_encoder_forward.1} parent=48 // loop_header
        %s60 = sphi 0, %s64
        %p61 = scmp.ge.s32.totalorder %s60, 1
        %s65 = sphi %s9, %s9
        %s66 = sphi [#allocation3], [#allocation3]
      $region52: #{cnn_encoder_forward.1} parent=48 // loop_header_branch
        %63 = sbr.rel (%p61) target = $region56
      $region53: #{cnn_encoder_forward.1} parent=48 // loop_body
        %v67 = vld [vmem:[%s65] sm:%s58]
        %68 = vst [vmem:[%s66] sm:%s58] %v67
      $region54: #{cnn_encoder_forward.1} parent=48 // loop_footer
        %s64 = sadd.s32 1, %s60
      $region55: #{cnn_encoder_forward.1} parent=48 // loop_footer_branch
        %59 = sbr.rel target = $region51
      $region56: #{cnn_encoder_forward.1} parent=48 // loop_exit
        _
    $region49: #{cnn_encoder_forward.1} parent=1 // pred_fallthru
      _
    // Predicated region
    $region72: #{cnn_encoder_forward.1} parent=1 // pred_check
      _
    $region73: #{cnn_encoder_forward.1} parent=1 // pred_check_branch
      %600 = sbr.rel (0) target = $region75
    $region74: #{cnn_encoder_forward.1} parent=1 // pred_region
      %601 = vsyncadd [#allocation4], 32768
    $region75: #{cnn_encoder_forward.1} parent=1 // pred_fallthru
      _
    %s602 = scalar_lea.vmem %s9, 2048
    %s603 = scalar_lea.vmem [#allocation3], 2048
    %s604 = scalar_lea.sflag [#allocation4], 1
    %p606 = scmp.lt.u32.totalorder 2048, 8
    %p607 = pneg %p606
    // Predicated region
    $region76: #{cnn_encoder_forward.1} parent=1 // pred_check
      _
    $region77: #{cnn_encoder_forward.1} parent=1 // pred_check_branch
      %609 = sbr.rel (%p606) target = $region79
    $region78: #{cnn_encoder_forward.1} parent=1 // pred_region
      %s625 = sand.u32 2048, 7
      %p626 = scmp.eq.s32.totalorder %s625, 0
      // Predicated region
      $region91: #{cnn_encoder_forward.1} parent=78 // pred_check
        %p627 = pneg %p626
      $region92: #{cnn_encoder_forward.1} parent=78 // pred_check_branch
        %629 = sbr.rel (%p627) target = $region94
      $region93: #{cnn_encoder_forward.1} parent=78 // pred_region
        loop: start=0, step=1, limit=1
        $region95: #{cnn_encoder_forward.1} parent=93 // loop_pre_header
          _
        $region96: #{cnn_encoder_forward.1} parent=93 // loop_header
          %s631 = sphi 0, %s635
          %p632 = scmp.ge.s32.totalorder %s631, 1
          %s636 = sphi %s602, %s602
          %s637 = sphi %s603, %s603
        $region97: #{cnn_encoder_forward.1} parent=93 // loop_header_branch
          %634 = sbr.rel (%p632) target = $region101
        $region98: #{cnn_encoder_forward.1} parent=93 // loop_body
          %v638 = vld [vmem:[%s636] sm:$0xff]
          %639 = vst [vmem:[%s637] sm:$0xff] %v638
          %v640 = vld [vmem:[%s636 + $0x8] sm:$0xff]
          %641 = vst [vmem:[%s637 + $0x8] sm:$0xff] %v640
          %v642 = vld [vmem:[%s636 + $0x10] sm:$0xff]
          %643 = vst [vmem:[%s637 + $0x10] sm:$0xff] %v642
          %v644 = vld [vmem:[%s636 + $0x18] sm:$0xff]
          %645 = vst [vmem:[%s637 + $0x18] sm:$0xff] %v644
          %v646 = vld [vmem:[%s636 + $0x20] sm:$0xff]
          %647 = vst [vmem:[%s637 + $0x20] sm:$0xff] %v646
          %v648 = vld [vmem:[%s636 + $0x28] sm:$0xff]
          %649 = vst [vmem:[%s637 + $0x28] sm:$0xff] %v648
          %v650 = vld [vmem:[%s636 + $0x30] sm:$0xff]
          %651 = vst [vmem:[%s637 + $0x30] sm:$0xff] %v650
          %v652 = vld [vmem:[%s636 + $0x38] sm:$0xff]
          %653 = vst [vmem:[%s637 + $0x38] sm:$0xff] %v652
          %v654 = vld [vmem:[%s636 + $0x40] sm:$0xff]
          %655 = vst [vmem:[%s637 + $0x40] sm:$0xff] %v654
          %v656 = vld [vmem:[%s636 + $0x48] sm:$0xff]
          %657 = vst [vmem:[%s637 + $0x48] sm:$0xff] %v656
          %v658 = vld [vmem:[%s636 + $0x50] sm:$0xff]
          %659 = vst [vmem:[%s637 + $0x50] sm:$0xff] %v658
          %v660 = vld [vmem:[%s636 + $0x58] sm:$0xff]
          %661 = vst [vmem:[%s637 + $0x58] sm:$0xff] %v660
          %v662 = vld [vmem:[%s636 + $0x60] sm:$0xff]
          %663 = vst [vmem:[%s637 + $0x60] sm:$0xff] %v662
          %v664 = vld [vmem:[%s636 + $0x68] sm:$0xff]
          %665 = vst [vmem:[%s637 + $0x68] sm:$0xff] %v664
          %v666 = vld [vmem:[%s636 + $0x70] sm:$0xff]
          %667 = vst [vmem:[%s637 + $0x70] sm:$0xff] %v666
          %v668 = vld [vmem:[%s636 + $0x78] sm:$0xff]
          %669 = vst [vmem:[%s637 + $0x78] sm:$0xff] %v668
          %v670 = vld [vmem:[%s636 + $0x80] sm:$0xff]
          %671 = vst [vmem:[%s637 + $0x80] sm:$0xff] %v670
          %v672 = vld [vmem:[%s636 + $0x88] sm:$0xff]
          %673 = vst [vmem:[%s637 + $0x88] sm:$0xff] %v672
          %v674 = vld [vmem:[%s636 + $0x90] sm:$0xff]
          %675 = vst [vmem:[%s637 + $0x90] sm:$0xff] %v674
          %v676 = vld [vmem:[%s636 + $0x98] sm:$0xff]
          %677 = vst [vmem:[%s637 + $0x98] sm:$0xff] %v676
          %v678 = vld [vmem:[%s636 + $0xa0] sm:$0xff]
          %679 = vst [vmem:[%s637 + $0xa0] sm:$0xff] %v678
          %v680 = vld [vmem:[%s636 + $0xa8] sm:$0xff]
          %681 = vst [vmem:[%s637 + $0xa8] sm:$0xff] %v680
          %v682 = vld [vmem:[%s636 + $0xb0] sm:$0xff]
          %683 = vst [vmem:[%s637 + $0xb0] sm:$0xff] %v682
          %v684 = vld [vmem:[%s636 + $0xb8] sm:$0xff]
          %685 = vst [vmem:[%s637 + $0xb8] sm:$0xff] %v684
          %v686 = vld [vmem:[%s636 + $0xc0] sm:$0xff]
          %687 = vst [vmem:[%s637 + $0xc0] sm:$0xff] %v686
          %v688 = vld [vmem:[%s636 + $0xc8] sm:$0xff]
          %689 = vst [vmem:[%s637 + $0xc8] sm:$0xff] %v688
          %v690 = vld [vmem:[%s636 + $0xd0] sm:$0xff]
          %691 = vst [vmem:[%s637 + $0xd0] sm:$0xff] %v690
          %v692 = vld [vmem:[%s636 + $0xd8] sm:$0xff]
          %693 = vst [vmem:[%s637 + $0xd8] sm:$0xff] %v692
          %v694 = vld [vmem:[%s636 + $0xe0] sm:$0xff]
          %695 = vst [vmem:[%s637 + $0xe0] sm:$0xff] %v694
          %v696 = vld [vmem:[%s636 + $0xe8] sm:$0xff]
          %697 = vst [vmem:[%s637 + $0xe8] sm:$0xff] %v696
          %v698 = vld [vmem:[%s636 + $0xf0] sm:$0xff]
          %699 = vst [vmem:[%s637 + $0xf0] sm:$0xff] %v698
          %v700 = vld [vmem:[%s636 + $0xf8] sm:$0xff]
          %701 = vst [vmem:[%s637 + $0xf8] sm:$0xff] %v700
          %v702 = vld [vmem:[%s636 + $0x100] sm:$0xff]
          %703 = vst [vmem:[%s637 + $0x100] sm:$0xff] %v702
          %v704 = vld [vmem:[%s636 + $0x108] sm:$0xff]
          %705 = vst [vmem:[%s637 + $0x108] sm:$0xff] %v704
          %v706 = vld [vmem:[%s636 + $0x110] sm:$0xff]
          %707 = vst [vmem:[%s637 + $0x110] sm:$0xff] %v706
          %v708 = vld [vmem:[%s636 + $0x118] sm:$0xff]
          %709 = vst [vmem:[%s637 + $0x118] sm:$0xff] %v708
          %v710 = vld [vmem:[%s636 + $0x120] sm:$0xff]
          %711 = vst [vmem:[%s637 + $0x120] sm:$0xff] %v710
          %v712 = vld [vmem:[%s636 + $0x128] sm:$0xff]
          %713 = vst [vmem:[%s637 + $0x128] sm:$0xff] %v712
          %v714 = vld [vmem:[%s636 + $0x130] sm:$0xff]
          %715 = vst [vmem:[%s637 + $0x130] sm:$0xff] %v714
          %v716 = vld [vmem:[%s636 + $0x138] sm:$0xff]
          %717 = vst [vmem:[%s637 + $0x138] sm:$0xff] %v716
          %v718 = vld [vmem:[%s636 + $0x140] sm:$0xff]
          %719 = vst [vmem:[%s637 + $0x140] sm:$0xff] %v718
          %v720 = vld [vmem:[%s636 + $0x148] sm:$0xff]
          %721 = vst [vmem:[%s637 + $0x148] sm:$0xff] %v720
          %v722 = vld [vmem:[%s636 + $0x150] sm:$0xff]
          %723 = vst [vmem:[%s637 + $0x150] sm:$0xff] %v722
          %v724 = vld [vmem:[%s636 + $0x158] sm:$0xff]
          %725 = vst [vmem:[%s637 + $0x158] sm:$0xff] %v724
          %v726 = vld [vmem:[%s636 + $0x160] sm:$0xff]
          %727 = vst [vmem:[%s637 + $0x160] sm:$0xff] %v726
          %v728 = vld [vmem:[%s636 + $0x168] sm:$0xff]
          %729 = vst [vmem:[%s637 + $0x168] sm:$0xff] %v728
          %v730 = vld [vmem:[%s636 + $0x170] sm:$0xff]
          %731 = vst [vmem:[%s637 + $0x170] sm:$0xff] %v730
          %v732 = vld [vmem:[%s636 + $0x178] sm:$0xff]
          %733 = vst [vmem:[%s637 + $0x178] sm:$0xff] %v732
          %v734 = vld [vmem:[%s636 + $0x180] sm:$0xff]
          %735 = vst [vmem:[%s637 + $0x180] sm:$0xff] %v734
          %v736 = vld [vmem:[%s636 + $0x188] sm:$0xff]
          %737 = vst [vmem:[%s637 + $0x188] sm:$0xff] %v736
          %v738 = vld [vmem:[%s636 + $0x190] sm:$0xff]
          %739 = vst [vmem:[%s637 + $0x190] sm:$0xff] %v738
          %v740 = vld [vmem:[%s636 + $0x198] sm:$0xff]
          %741 = vst [vmem:[%s637 + $0x198] sm:$0xff] %v740
          %v742 = vld [vmem:[%s636 + $0x1a0] sm:$0xff]
          %743 = vst [vmem:[%s637 + $0x1a0] sm:$0xff] %v742
          %v744 = vld [vmem:[%s636 + $0x1a8] sm:$0xff]
          %745 = vst [vmem:[%s637 + $0x1a8] sm:$0xff] %v744
          %v746 = vld [vmem:[%s636 + $0x1b0] sm:$0xff]
          %747 = vst [vmem:[%s637 + $0x1b0] sm:$0xff] %v746
          %v748 = vld [vmem:[%s636 + $0x1b8] sm:$0xff]
          %749 = vst [vmem:[%s637 + $0x1b8] sm:$0xff] %v748
          %v750 = vld [vmem:[%s636 + $0x1c0] sm:$0xff]
          %751 = vst [vmem:[%s637 + $0x1c0] sm:$0xff] %v750
          %v752 = vld [vmem:[%s636 + $0x1c8] sm:$0xff]
          %753 = vst [vmem:[%s637 + $0x1c8] sm:$0xff] %v752
          %v754 = vld [vmem:[%s636 + $0x1d0] sm:$0xff]
          %755 = vst [vmem:[%s637 + $0x1d0] sm:$0xff] %v754
          %v756 = vld [vmem:[%s636 + $0x1d8] sm:$0xff]
          %757 = vst [vmem:[%s637 + $0x1d8] sm:$0xff] %v756
          %v758 = vld [vmem:[%s636 + $0x1e0] sm:$0xff]
          %759 = vst [vmem:[%s637 + $0x1e0] sm:$0xff] %v758
          %v760 = vld [vmem:[%s636 + $0x1e8] sm:$0xff]
          %761 = vst [vmem:[%s637 + $0x1e8] sm:$0xff] %v760
          %v762 = vld [vmem:[%s636 + $0x1f0] sm:$0xff]
          %763 = vst [vmem:[%s637 + $0x1f0] sm:$0xff] %v762
          %v764 = vld [vmem:[%s636 + $0x1f8] sm:$0xff]
          %765 = vst [vmem:[%s637 + $0x1f8] sm:$0xff] %v764
          %v766 = vld [vmem:[%s636 + $0x200] sm:$0xff]
          %767 = vst [vmem:[%s637 + $0x200] sm:$0xff] %v766
          %v768 = vld [vmem:[%s636 + $0x208] sm:$0xff]
          %769 = vst [vmem:[%s637 + $0x208] sm:$0xff] %v768
          %v770 = vld [vmem:[%s636 + $0x210] sm:$0xff]
          %771 = vst [vmem:[%s637 + $0x210] sm:$0xff] %v770
          %v772 = vld [vmem:[%s636 + $0x218] sm:$0xff]
          %773 = vst [vmem:[%s637 + $0x218] sm:$0xff] %v772
          %v774 = vld [vmem:[%s636 + $0x220] sm:$0xff]
          %775 = vst [vmem:[%s637 + $0x220] sm:$0xff] %v774
          %v776 = vld [vmem:[%s636 + $0x228] sm:$0xff]
          %777 = vst [vmem:[%s637 + $0x228] sm:$0xff] %v776
          %v778 = vld [vmem:[%s636 + $0x230] sm:$0xff]
          %779 = vst [vmem:[%s637 + $0x230] sm:$0xff] %v778
          %v780 = vld [vmem:[%s636 + $0x238] sm:$0xff]
          %781 = vst [vmem:[%s637 + $0x238] sm:$0xff] %v780
          %v782 = vld [vmem:[%s636 + $0x240] sm:$0xff]
          %783 = vst [vmem:[%s637 + $0x240] sm:$0xff] %v782
          %v784 = vld [vmem:[%s636 + $0x248] sm:$0xff]
          %785 = vst [vmem:[%s637 + $0x248] sm:$0xff] %v784
          %v786 = vld [vmem:[%s636 + $0x250] sm:$0xff]
          %787 = vst [vmem:[%s637 + $0x250] sm:$0xff] %v786
          %v788 = vld [vmem:[%s636 + $0x258] sm:$0xff]
          %789 = vst [vmem:[%s637 + $0x258] sm:$0xff] %v788
          %v790 = vld [vmem:[%s636 + $0x260] sm:$0xff]
          %791 = vst [vmem:[%s637 + $0x260] sm:$0xff] %v790
          %v792 = vld [vmem:[%s636 + $0x268] sm:$0xff]
          %793 = vst [vmem:[%s637 + $0x268] sm:$0xff] %v792
          %v794 = vld [vmem:[%s636 + $0x270] sm:$0xff]
          %795 = vst [vmem:[%s637 + $0x270] sm:$0xff] %v794
          %v796 = vld [vmem:[%s636 + $0x278] sm:$0xff]
          %797 = vst [vmem:[%s637 + $0x278] sm:$0xff] %v796
          %v798 = vld [vmem:[%s636 + $0x280] sm:$0xff]
          %799 = vst [vmem:[%s637 + $0x280] sm:$0xff] %v798
          %v800 = vld [vmem:[%s636 + $0x288] sm:$0xff]
          %801 = vst [vmem:[%s637 + $0x288] sm:$0xff] %v800
          %v802 = vld [vmem:[%s636 + $0x290] sm:$0xff]
          %803 = vst [vmem:[%s637 + $0x290] sm:$0xff] %v802
          %v804 = vld [vmem:[%s636 + $0x298] sm:$0xff]
          %805 = vst [vmem:[%s637 + $0x298] sm:$0xff] %v804
          %v806 = vld [vmem:[%s636 + $0x2a0] sm:$0xff]
          %807 = vst [vmem:[%s637 + $0x2a0] sm:$0xff] %v806
          %v808 = vld [vmem:[%s636 + $0x2a8] sm:$0xff]
          %809 = vst [vmem:[%s637 + $0x2a8] sm:$0xff] %v808
          %v810 = vld [vmem:[%s636 + $0x2b0] sm:$0xff]
          %811 = vst [vmem:[%s637 + $0x2b0] sm:$0xff] %v810
          %v812 = vld [vmem:[%s636 + $0x2b8] sm:$0xff]
          %813 = vst [vmem:[%s637 + $0x2b8] sm:$0xff] %v812
          %v814 = vld [vmem:[%s636 + $0x2c0] sm:$0xff]
          %815 = vst [vmem:[%s637 + $0x2c0] sm:$0xff] %v814
          %v816 = vld [vmem:[%s636 + $0x2c8] sm:$0xff]
          %817 = vst [vmem:[%s637 + $0x2c8] sm:$0xff] %v816
          %v818 = vld [vmem:[%s636 + $0x2d0] sm:$0xff]
          %819 = vst [vmem:[%s637 + $0x2d0] sm:$0xff] %v818
          %v820 = vld [vmem:[%s636 + $0x2d8] sm:$0xff]
          %821 = vst [vmem:[%s637 + $0x2d8] sm:$0xff] %v820
          %v822 = vld [vmem:[%s636 + $0x2e0] sm:$0xff]
          %823 = vst [vmem:[%s637 + $0x2e0] sm:$0xff] %v822
          %v824 = vld [vmem:[%s636 + $0x2e8] sm:$0xff]
          %825 = vst [vmem:[%s637 + $0x2e8] sm:$0xff] %v824
          %v826 = vld [vmem:[%s636 + $0x2f0] sm:$0xff]
          %827 = vst [vmem:[%s637 + $0x2f0] sm:$0xff] %v826
          %v828 = vld [vmem:[%s636 + $0x2f8] sm:$0xff]
          %829 = vst [vmem:[%s637 + $0x2f8] sm:$0xff] %v828
          %v830 = vld [vmem:[%s636 + $0x300] sm:$0xff]
          %831 = vst [vmem:[%s637 + $0x300] sm:$0xff] %v830
          %v832 = vld [vmem:[%s636 + $0x308] sm:$0xff]
          %833 = vst [vmem:[%s637 + $0x308] sm:$0xff] %v832
          %v834 = vld [vmem:[%s636 + $0x310] sm:$0xff]
          %835 = vst [vmem:[%s637 + $0x310] sm:$0xff] %v834
          %v836 = vld [vmem:[%s636 + $0x318] sm:$0xff]
          %837 = vst [vmem:[%s637 + $0x318] sm:$0xff] %v836
          %v838 = vld [vmem:[%s636 + $0x320] sm:$0xff]
          %839 = vst [vmem:[%s637 + $0x320] sm:$0xff] %v838
          %v840 = vld [vmem:[%s636 + $0x328] sm:$0xff]
          %841 = vst [vmem:[%s637 + $0x328] sm:$0xff] %v840
          %v842 = vld [vmem:[%s636 + $0x330] sm:$0xff]
          %843 = vst [vmem:[%s637 + $0x330] sm:$0xff] %v842
          %v844 = vld [vmem:[%s636 + $0x338] sm:$0xff]
          %845 = vst [vmem:[%s637 + $0x338] sm:$0xff] %v844
          %v846 = vld [vmem:[%s636 + $0x340] sm:$0xff]
          %847 = vst [vmem:[%s637 + $0x340] sm:$0xff] %v846
          %v848 = vld [vmem:[%s636 + $0x348] sm:$0xff]
          %849 = vst [vmem:[%s637 + $0x348] sm:$0xff] %v848
          %v850 = vld [vmem:[%s636 + $0x350] sm:$0xff]
          %851 = vst [vmem:[%s637 + $0x350] sm:$0xff] %v850
          %v852 = vld [vmem:[%s636 + $0x358] sm:$0xff]
          %853 = vst [vmem:[%s637 + $0x358] sm:$0xff] %v852
          %v854 = vld [vmem:[%s636 + $0x360] sm:$0xff]
          %855 = vst [vmem:[%s637 + $0x360] sm:$0xff] %v854
          %v856 = vld [vmem:[%s636 + $0x368] sm:$0xff]
          %857 = vst [vmem:[%s637 + $0x368] sm:$0xff] %v856
          %v858 = vld [vmem:[%s636 + $0x370] sm:$0xff]
          %859 = vst [vmem:[%s637 + $0x370] sm:$0xff] %v858
          %v860 = vld [vmem:[%s636 + $0x378] sm:$0xff]
          %861 = vst [vmem:[%s637 + $0x378] sm:$0xff] %v860
          %v862 = vld [vmem:[%s636 + $0x380] sm:$0xff]
          %863 = vst [vmem:[%s637 + $0x380] sm:$0xff] %v862
          %v864 = vld [vmem:[%s636 + $0x388] sm:$0xff]
          %865 = vst [vmem:[%s637 + $0x388] sm:$0xff] %v864
          %v866 = vld [vmem:[%s636 + $0x390] sm:$0xff]
          %867 = vst [vmem:[%s637 + $0x390] sm:$0xff] %v866
          %v868 = vld [vmem:[%s636 + $0x398] sm:$0xff]
          %869 = vst [vmem:[%s637 + $0x398] sm:$0xff] %v868
          %v870 = vld [vmem:[%s636 + $0x3a0] sm:$0xff]
          %871 = vst [vmem:[%s637 + $0x3a0] sm:$0xff] %v870
          %v872 = vld [vmem:[%s636 + $0x3a8] sm:$0xff]
          %873 = vst [vmem:[%s637 + $0x3a8] sm:$0xff] %v872
          %v874 = vld [vmem:[%s636 + $0x3b0] sm:$0xff]
          %875 = vst [vmem:[%s637 + $0x3b0] sm:$0xff] %v874
          %v876 = vld [vmem:[%s636 + $0x3b8] sm:$0xff]
          %877 = vst [vmem:[%s637 + $0x3b8] sm:$0xff] %v876
          %v878 = vld [vmem:[%s636 + $0x3c0] sm:$0xff]
          %879 = vst [vmem:[%s637 + $0x3c0] sm:$0xff] %v878
          %v880 = vld [vmem:[%s636 + $0x3c8] sm:$0xff]
          %881 = vst [vmem:[%s637 + $0x3c8] sm:$0xff] %v880
          %v882 = vld [vmem:[%s636 + $0x3d0] sm:$0xff]
          %883 = vst [vmem:[%s637 + $0x3d0] sm:$0xff] %v882
          %v884 = vld [vmem:[%s636 + $0x3d8] sm:$0xff]
          %885 = vst [vmem:[%s637 + $0x3d8] sm:$0xff] %v884
          %v886 = vld [vmem:[%s636 + $0x3e0] sm:$0xff]
          %887 = vst [vmem:[%s637 + $0x3e0] sm:$0xff] %v886
          %v888 = vld [vmem:[%s636 + $0x3e8] sm:$0xff]
          %889 = vst [vmem:[%s637 + $0x3e8] sm:$0xff] %v888
          %v890 = vld [vmem:[%s636 + $0x3f0] sm:$0xff]
          %891 = vst [vmem:[%s637 + $0x3f0] sm:$0xff] %v890
          %v892 = vld [vmem:[%s636 + $0x3f8] sm:$0xff]
          %893 = vst [vmem:[%s637 + $0x3f8] sm:$0xff] %v892
          %v894 = vld [vmem:[%s636 + $0x400] sm:$0xff]
          %895 = vst [vmem:[%s637 + $0x400] sm:$0xff] %v894
          %v896 = vld [vmem:[%s636 + $0x408] sm:$0xff]
          %897 = vst [vmem:[%s637 + $0x408] sm:$0xff] %v896
          %v898 = vld [vmem:[%s636 + $0x410] sm:$0xff]
          %899 = vst [vmem:[%s637 + $0x410] sm:$0xff] %v898
          %v900 = vld [vmem:[%s636 + $0x418] sm:$0xff]
          %901 = vst [vmem:[%s637 + $0x418] sm:$0xff] %v900
          %v902 = vld [vmem:[%s636 + $0x420] sm:$0xff]
          %903 = vst [vmem:[%s637 + $0x420] sm:$0xff] %v902
          %v904 = vld [vmem:[%s636 + $0x428] sm:$0xff]
          %905 = vst [vmem:[%s637 + $0x428] sm:$0xff] %v904
          %v906 = vld [vmem:[%s636 + $0x430] sm:$0xff]
          %907 = vst [vmem:[%s637 + $0x430] sm:$0xff] %v906
          %v908 = vld [vmem:[%s636 + $0x438] sm:$0xff]
          %909 = vst [vmem:[%s637 + $0x438] sm:$0xff] %v908
          %v910 = vld [vmem:[%s636 + $0x440] sm:$0xff]
          %911 = vst [vmem:[%s637 + $0x440] sm:$0xff] %v910
          %v912 = vld [vmem:[%s636 + $0x448] sm:$0xff]
          %913 = vst [vmem:[%s637 + $0x448] sm:$0xff] %v912
          %v914 = vld [vmem:[%s636 + $0x450] sm:$0xff]
          %915 = vst [vmem:[%s637 + $0x450] sm:$0xff] %v914
          %v916 = vld [vmem:[%s636 + $0x458] sm:$0xff]
          %917 = vst [vmem:[%s637 + $0x458] sm:$0xff] %v916
          %v918 = vld [vmem:[%s636 + $0x460] sm:$0xff]
          %919 = vst [vmem:[%s637 + $0x460] sm:$0xff] %v918
          %v920 = vld [vmem:[%s636 + $0x468] sm:$0xff]
          %921 = vst [vmem:[%s637 + $0x468] sm:$0xff] %v920
          %v922 = vld [vmem:[%s636 + $0x470] sm:$0xff]
          %923 = vst [vmem:[%s637 + $0x470] sm:$0xff] %v922
          %v924 = vld [vmem:[%s636 + $0x478] sm:$0xff]
          %925 = vst [vmem:[%s637 + $0x478] sm:$0xff] %v924
          %v926 = vld [vmem:[%s636 + $0x480] sm:$0xff]
          %927 = vst [vmem:[%s637 + $0x480] sm:$0xff] %v926
          %v928 = vld [vmem:[%s636 + $0x488] sm:$0xff]
          %929 = vst [vmem:[%s637 + $0x488] sm:$0xff] %v928
          %v930 = vld [vmem:[%s636 + $0x490] sm:$0xff]
          %931 = vst [vmem:[%s637 + $0x490] sm:$0xff] %v930
          %v932 = vld [vmem:[%s636 + $0x498] sm:$0xff]
          %933 = vst [vmem:[%s637 + $0x498] sm:$0xff] %v932
          %v934 = vld [vmem:[%s636 + $0x4a0] sm:$0xff]
          %935 = vst [vmem:[%s637 + $0x4a0] sm:$0xff] %v934
          %v936 = vld [vmem:[%s636 + $0x4a8] sm:$0xff]
          %937 = vst [vmem:[%s637 + $0x4a8] sm:$0xff] %v936
          %v938 = vld [vmem:[%s636 + $0x4b0] sm:$0xff]
          %939 = vst [vmem:[%s637 + $0x4b0] sm:$0xff] %v938
          %v940 = vld [vmem:[%s636 + $0x4b8] sm:$0xff]
          %941 = vst [vmem:[%s637 + $0x4b8] sm:$0xff] %v940
          %v942 = vld [vmem:[%s636 + $0x4c0] sm:$0xff]
          %943 = vst [vmem:[%s637 + $0x4c0] sm:$0xff] %v942
          %v944 = vld [vmem:[%s636 + $0x4c8] sm:$0xff]
          %945 = vst [vmem:[%s637 + $0x4c8] sm:$0xff] %v944
          %v946 = vld [vmem:[%s636 + $0x4d0] sm:$0xff]
          %947 = vst [vmem:[%s637 + $0x4d0] sm:$0xff] %v946
          %v948 = vld [vmem:[%s636 + $0x4d8] sm:$0xff]
          %949 = vst [vmem:[%s637 + $0x4d8] sm:$0xff] %v948
          %v950 = vld [vmem:[%s636 + $0x4e0] sm:$0xff]
          %951 = vst [vmem:[%s637 + $0x4e0] sm:$0xff] %v950
          %v952 = vld [vmem:[%s636 + $0x4e8] sm:$0xff]
          %953 = vst [vmem:[%s637 + $0x4e8] sm:$0xff] %v952
          %v954 = vld [vmem:[%s636 + $0x4f0] sm:$0xff]
          %955 = vst [vmem:[%s637 + $0x4f0] sm:$0xff] %v954
          %v956 = vld [vmem:[%s636 + $0x4f8] sm:$0xff]
          %957 = vst [vmem:[%s637 + $0x4f8] sm:$0xff] %v956
          %v958 = vld [vmem:[%s636 + $0x500] sm:$0xff]
          %959 = vst [vmem:[%s637 + $0x500] sm:$0xff] %v958
          %v960 = vld [vmem:[%s636 + $0x508] sm:$0xff]
          %961 = vst [vmem:[%s637 + $0x508] sm:$0xff] %v960
          %v962 = vld [vmem:[%s636 + $0x510] sm:$0xff]
          %963 = vst [vmem:[%s637 + $0x510] sm:$0xff] %v962
          %v964 = vld [vmem:[%s636 + $0x518] sm:$0xff]
          %965 = vst [vmem:[%s637 + $0x518] sm:$0xff] %v964
          %v966 = vld [vmem:[%s636 + $0x520] sm:$0xff]
          %967 = vst [vmem:[%s637 + $0x520] sm:$0xff] %v966
          %v968 = vld [vmem:[%s636 + $0x528] sm:$0xff]
          %969 = vst [vmem:[%s637 + $0x528] sm:$0xff] %v968
          %v970 = vld [vmem:[%s636 + $0x530] sm:$0xff]
          %971 = vst [vmem:[%s637 + $0x530] sm:$0xff] %v970
          %v972 = vld [vmem:[%s636 + $0x538] sm:$0xff]
          %973 = vst [vmem:[%s637 + $0x538] sm:$0xff] %v972
          %v974 = vld [vmem:[%s636 + $0x540] sm:$0xff]
          %975 = vst [vmem:[%s637 + $0x540] sm:$0xff] %v974
          %v976 = vld [vmem:[%s636 + $0x548] sm:$0xff]
          %977 = vst [vmem:[%s637 + $0x548] sm:$0xff] %v976
          %v978 = vld [vmem:[%s636 + $0x550] sm:$0xff]
          %979 = vst [vmem:[%s637 + $0x550] sm:$0xff] %v978
          %v980 = vld [vmem:[%s636 + $0x558] sm:$0xff]
          %981 = vst [vmem:[%s637 + $0x558] sm:$0xff] %v980
          %v982 = vld [vmem:[%s636 + $0x560] sm:$0xff]
          %983 = vst [vmem:[%s637 + $0x560] sm:$0xff] %v982
          %v984 = vld [vmem:[%s636 + $0x568] sm:$0xff]
          %985 = vst [vmem:[%s637 + $0x568] sm:$0xff] %v984
          %v986 = vld [vmem:[%s636 + $0x570] sm:$0xff]
          %987 = vst [vmem:[%s637 + $0x570] sm:$0xff] %v986
          %v988 = vld [vmem:[%s636 + $0x578] sm:$0xff]
          %989 = vst [vmem:[%s637 + $0x578] sm:$0xff] %v988
          %v990 = vld [vmem:[%s636 + $0x580] sm:$0xff]
          %991 = vst [vmem:[%s637 + $0x580] sm:$0xff] %v990
          %v992 = vld [vmem:[%s636 + $0x588] sm:$0xff]
          %993 = vst [vmem:[%s637 + $0x588] sm:$0xff] %v992
          %v994 = vld [vmem:[%s636 + $0x590] sm:$0xff]
          %995 = vst [vmem:[%s637 + $0x590] sm:$0xff] %v994
          %v996 = vld [vmem:[%s636 + $0x598] sm:$0xff]
          %997 = vst [vmem:[%s637 + $0x598] sm:$0xff] %v996
          %v998 = vld [vmem:[%s636 + $0x5a0] sm:$0xff]
          %999 = vst [vmem:[%s637 + $0x5a0] sm:$0xff] %v998
          %v1000 = vld [vmem:[%s636 + $0x5a8] sm:$0xff]
          %1001 = vst [vmem:[%s637 + $0x5a8] sm:$0xff] %v1000
          %v1002 = vld [vmem:[%s636 + $0x5b0] sm:$0xff]
          %1003 = vst [vmem:[%s637 + $0x5b0] sm:$0xff] %v1002
          %v1004 = vld [vmem:[%s636 + $0x5b8] sm:$0xff]
          %1005 = vst [vmem:[%s637 + $0x5b8] sm:$0xff] %v1004
          %v1006 = vld [vmem:[%s636 + $0x5c0] sm:$0xff]
          %1007 = vst [vmem:[%s637 + $0x5c0] sm:$0xff] %v1006
          %v1008 = vld [vmem:[%s636 + $0x5c8] sm:$0xff]
          %1009 = vst [vmem:[%s637 + $0x5c8] sm:$0xff] %v1008
          %v1010 = vld [vmem:[%s636 + $0x5d0] sm:$0xff]
          %1011 = vst [vmem:[%s637 + $0x5d0] sm:$0xff] %v1010
          %v1012 = vld [vmem:[%s636 + $0x5d8] sm:$0xff]
          %1013 = vst [vmem:[%s637 + $0x5d8] sm:$0xff] %v1012
          %v1014 = vld [vmem:[%s636 + $0x5e0] sm:$0xff]
          %1015 = vst [vmem:[%s637 + $0x5e0] sm:$0xff] %v1014
          %v1016 = vld [vmem:[%s636 + $0x5e8] sm:$0xff]
          %1017 = vst [vmem:[%s637 + $0x5e8] sm:$0xff] %v1016
          %v1018 = vld [vmem:[%s636 + $0x5f0] sm:$0xff]
          %1019 = vst [vmem:[%s637 + $0x5f0] sm:$0xff] %v1018
          %v1020 = vld [vmem:[%s636 + $0x5f8] sm:$0xff]
          %1021 = vst [vmem:[%s637 + $0x5f8] sm:$0xff] %v1020
          %v1022 = vld [vmem:[%s636 + $0x600] sm:$0xff]
          %1023 = vst [vmem:[%s637 + $0x600] sm:$0xff] %v1022
          %v1024 = vld [vmem:[%s636 + $0x608] sm:$0xff]
          %1025 = vst [vmem:[%s637 + $0x608] sm:$0xff] %v1024
          %v1026 = vld [vmem:[%s636 + $0x610] sm:$0xff]
          %1027 = vst [vmem:[%s637 + $0x610] sm:$0xff] %v1026
          %v1028 = vld [vmem:[%s636 + $0x618] sm:$0xff]
          %1029 = vst [vmem:[%s637 + $0x618] sm:$0xff] %v1028
          %v1030 = vld [vmem:[%s636 + $0x620] sm:$0xff]
          %1031 = vst [vmem:[%s637 + $0x620] sm:$0xff] %v1030
          %v1032 = vld [vmem:[%s636 + $0x628] sm:$0xff]
          %1033 = vst [vmem:[%s637 + $0x628] sm:$0xff] %v1032
          %v1034 = vld [vmem:[%s636 + $0x630] sm:$0xff]
          %1035 = vst [vmem:[%s637 + $0x630] sm:$0xff] %v1034
          %v1036 = vld [vmem:[%s636 + $0x638] sm:$0xff]
          %1037 = vst [vmem:[%s637 + $0x638] sm:$0xff] %v1036
          %v1038 = vld [vmem:[%s636 + $0x640] sm:$0xff]
          %1039 = vst [vmem:[%s637 + $0x640] sm:$0xff] %v1038
          %v1040 = vld [vmem:[%s636 + $0x648] sm:$0xff]
          %1041 = vst [vmem:[%s637 + $0x648] sm:$0xff] %v1040
          %v1042 = vld [vmem:[%s636 + $0x650] sm:$0xff]
          %1043 = vst [vmem:[%s637 + $0x650] sm:$0xff] %v1042
          %v1044 = vld [vmem:[%s636 + $0x658] sm:$0xff]
          %1045 = vst [vmem:[%s637 + $0x658] sm:$0xff] %v1044
          %v1046 = vld [vmem:[%s636 + $0x660] sm:$0xff]
          %1047 = vst [vmem:[%s637 + $0x660] sm:$0xff] %v1046
          %v1048 = vld [vmem:[%s636 + $0x668] sm:$0xff]
          %1049 = vst [vmem:[%s637 + $0x668] sm:$0xff] %v1048
          %v1050 = vld [vmem:[%s636 + $0x670] sm:$0xff]
          %1051 = vst [vmem:[%s637 + $0x670] sm:$0xff] %v1050
          %v1052 = vld [vmem:[%s636 + $0x678] sm:$0xff]
          %1053 = vst [vmem:[%s637 + $0x678] sm:$0xff] %v1052
          %v1054 = vld [vmem:[%s636 + $0x680] sm:$0xff]
          %1055 = vst [vmem:[%s637 + $0x680] sm:$0xff] %v1054
          %v1056 = vld [vmem:[%s636 + $0x688] sm:$0xff]
          %1057 = vst [vmem:[%s637 + $0x688] sm:$0xff] %v1056
          %v1058 = vld [vmem:[%s636 + $0x690] sm:$0xff]
          %1059 = vst [vmem:[%s637 + $0x690] sm:$0xff] %v1058
          %v1060 = vld [vmem:[%s636 + $0x698] sm:$0xff]
          %1061 = vst [vmem:[%s637 + $0x698] sm:$0xff] %v1060
          %v1062 = vld [vmem:[%s636 + $0x6a0] sm:$0xff]
          %1063 = vst [vmem:[%s637 + $0x6a0] sm:$0xff] %v1062
          %v1064 = vld [vmem:[%s636 + $0x6a8] sm:$0xff]
          %1065 = vst [vmem:[%s637 + $0x6a8] sm:$0xff] %v1064
          %v1066 = vld [vmem:[%s636 + $0x6b0] sm:$0xff]
          %1067 = vst [vmem:[%s637 + $0x6b0] sm:$0xff] %v1066
          %v1068 = vld [vmem:[%s636 + $0x6b8] sm:$0xff]
          %1069 = vst [vmem:[%s637 + $0x6b8] sm:$0xff] %v1068
          %v1070 = vld [vmem:[%s636 + $0x6c0] sm:$0xff]
          %1071 = vst [vmem:[%s637 + $0x6c0] sm:$0xff] %v1070
          %v1072 = vld [vmem:[%s636 + $0x6c8] sm:$0xff]
          %1073 = vst [vmem:[%s637 + $0x6c8] sm:$0xff] %v1072
          %v1074 = vld [vmem:[%s636 + $0x6d0] sm:$0xff]
          %1075 = vst [vmem:[%s637 + $0x6d0] sm:$0xff] %v1074
          %v1076 = vld [vmem:[%s636 + $0x6d8] sm:$0xff]
          %1077 = vst [vmem:[%s637 + $0x6d8] sm:$0xff] %v1076
          %v1078 = vld [vmem:[%s636 + $0x6e0] sm:$0xff]
          %1079 = vst [vmem:[%s637 + $0x6e0] sm:$0xff] %v1078
          %v1080 = vld [vmem:[%s636 + $0x6e8] sm:$0xff]
          %1081 = vst [vmem:[%s637 + $0x6e8] sm:$0xff] %v1080
          %v1082 = vld [vmem:[%s636 + $0x6f0] sm:$0xff]
          %1083 = vst [vmem:[%s637 + $0x6f0] sm:$0xff] %v1082
          %v1084 = vld [vmem:[%s636 + $0x6f8] sm:$0xff]
          %1085 = vst [vmem:[%s637 + $0x6f8] sm:$0xff] %v1084
          %v1086 = vld [vmem:[%s636 + $0x700] sm:$0xff]
          %1087 = vst [vmem:[%s637 + $0x700] sm:$0xff] %v1086
          %v1088 = vld [vmem:[%s636 + $0x708] sm:$0xff]
          %1089 = vst [vmem:[%s637 + $0x708] sm:$0xff] %v1088
          %v1090 = vld [vmem:[%s636 + $0x710] sm:$0xff]
          %1091 = vst [vmem:[%s637 + $0x710] sm:$0xff] %v1090
          %v1092 = vld [vmem:[%s636 + $0x718] sm:$0xff]
          %1093 = vst [vmem:[%s637 + $0x718] sm:$0xff] %v1092
          %v1094 = vld [vmem:[%s636 + $0x720] sm:$0xff]
          %1095 = vst [vmem:[%s637 + $0x720] sm:$0xff] %v1094
          %v1096 = vld [vmem:[%s636 + $0x728] sm:$0xff]
          %1097 = vst [vmem:[%s637 + $0x728] sm:$0xff] %v1096
          %v1098 = vld [vmem:[%s636 + $0x730] sm:$0xff]
          %1099 = vst [vmem:[%s637 + $0x730] sm:$0xff] %v1098
          %v1100 = vld [vmem:[%s636 + $0x738] sm:$0xff]
          %1101 = vst [vmem:[%s637 + $0x738] sm:$0xff] %v1100
          %v1102 = vld [vmem:[%s636 + $0x740] sm:$0xff]
          %1103 = vst [vmem:[%s637 + $0x740] sm:$0xff] %v1102
          %v1104 = vld [vmem:[%s636 + $0x748] sm:$0xff]
          %1105 = vst [vmem:[%s637 + $0x748] sm:$0xff] %v1104
          %v1106 = vld [vmem:[%s636 + $0x750] sm:$0xff]
          %1107 = vst [vmem:[%s637 + $0x750] sm:$0xff] %v1106
          %v1108 = vld [vmem:[%s636 + $0x758] sm:$0xff]
          %1109 = vst [vmem:[%s637 + $0x758] sm:$0xff] %v1108
          %v1110 = vld [vmem:[%s636 + $0x760] sm:$0xff]
          %1111 = vst [vmem:[%s637 + $0x760] sm:$0xff] %v1110
          %v1112 = vld [vmem:[%s636 + $0x768] sm:$0xff]
          %1113 = vst [vmem:[%s637 + $0x768] sm:$0xff] %v1112
          %v1114 = vld [vmem:[%s636 + $0x770] sm:$0xff]
          %1115 = vst [vmem:[%s637 + $0x770] sm:$0xff] %v1114
          %v1116 = vld [vmem:[%s636 + $0x778] sm:$0xff]
          %1117 = vst [vmem:[%s637 + $0x778] sm:$0xff] %v1116
          %v1118 = vld [vmem:[%s636 + $0x780] sm:$0xff]
          %1119 = vst [vmem:[%s637 + $0x780] sm:$0xff] %v1118
          %v1120 = vld [vmem:[%s636 + $0x788] sm:$0xff]
          %1121 = vst [vmem:[%s637 + $0x788] sm:$0xff] %v1120
          %v1122 = vld [vmem:[%s636 + $0x790] sm:$0xff]
          %1123 = vst [vmem:[%s637 + $0x790] sm:$0xff] %v1122
          %v1124 = vld [vmem:[%s636 + $0x798] sm:$0xff]
          %1125 = vst [vmem:[%s637 + $0x798] sm:$0xff] %v1124
          %v1126 = vld [vmem:[%s636 + $0x7a0] sm:$0xff]
          %1127 = vst [vmem:[%s637 + $0x7a0] sm:$0xff] %v1126
          %v1128 = vld [vmem:[%s636 + $0x7a8] sm:$0xff]
          %1129 = vst [vmem:[%s637 + $0x7a8] sm:$0xff] %v1128
          %v1130 = vld [vmem:[%s636 + $0x7b0] sm:$0xff]
          %1131 = vst [vmem:[%s637 + $0x7b0] sm:$0xff] %v1130
          %v1132 = vld [vmem:[%s636 + $0x7b8] sm:$0xff]
          %1133 = vst [vmem:[%s637 + $0x7b8] sm:$0xff] %v1132
          %v1134 = vld [vmem:[%s636 + $0x7c0] sm:$0xff]
          %1135 = vst [vmem:[%s637 + $0x7c0] sm:$0xff] %v1134
          %v1136 = vld [vmem:[%s636 + $0x7c8] sm:$0xff]
          %1137 = vst [vmem:[%s637 + $0x7c8] sm:$0xff] %v1136
          %v1138 = vld [vmem:[%s636 + $0x7d0] sm:$0xff]
          %1139 = vst [vmem:[%s637 + $0x7d0] sm:$0xff] %v1138
          %v1140 = vld [vmem:[%s636 + $0x7d8] sm:$0xff]
          %1141 = vst [vmem:[%s637 + $0x7d8] sm:$0xff] %v1140
          %v1142 = vld [vmem:[%s636 + $0x7e0] sm:$0xff]
          %1143 = vst [vmem:[%s637 + $0x7e0] sm:$0xff] %v1142
          %v1144 = vld [vmem:[%s636 + $0x7e8] sm:$0xff]
          %1145 = vst [vmem:[%s637 + $0x7e8] sm:$0xff] %v1144
          %v1146 = vld [vmem:[%s636 + $0x7f0] sm:$0xff]
          %1147 = vst [vmem:[%s637 + $0x7f0] sm:$0xff] %v1146
          %v1148 = vld [vmem:[%s636 + $0x7f8] sm:$0xff]
          %1149 = vst [vmem:[%s637 + $0x7f8] sm:$0xff] %v1148
        $region99: #{cnn_encoder_forward.1} parent=93 // loop_footer
          %s635 = sadd.s32 1, %s631
        $region100: #{cnn_encoder_forward.1} parent=93 // loop_footer_branch
          %630 = sbr.rel target = $region96
        $region101: #{cnn_encoder_forward.1} parent=93 // loop_exit
          _
      $region94: #{cnn_encoder_forward.1} parent=78 // pred_fallthru
        _
      %p1150 = pneg %p626
      // Predicated region
      $region102: #{cnn_encoder_forward.1} parent=78 // pred_check
        _
      $region103: #{cnn_encoder_forward.1} parent=78 // pred_check_branch
        %1152 = sbr.rel (%p626) target = $region105
      $region104: #{cnn_encoder_forward.1} parent=78 // pred_region
        %s1153 = sand.u32 2048, 7
      $region105: #{cnn_encoder_forward.1} parent=78 // pred_fallthru
        _
    $region79: #{cnn_encoder_forward.1} parent=1 // pred_fallthru
      _
    // Predicated region
    $region80: #{cnn_encoder_forward.1} parent=1 // pred_check
      %p610 = pneg %p606
    $region81: #{cnn_encoder_forward.1} parent=1 // pred_check_branch
      %612 = sbr.rel (%p610) target = $region83
    $region82: #{cnn_encoder_forward.1} parent=1 // pred_region
      %s613 = sshll.u32 1, 2048
      %s614 = ssub.s32 %s613, 1
      loop: start=0, step=1, limit=1
      $region84: #{cnn_encoder_forward.1} parent=82 // loop_pre_header
        _
      $region85: #{cnn_encoder_forward.1} parent=82 // loop_header
        %s616 = sphi 0, %s620
        %p617 = scmp.ge.s32.totalorder %s616, 1
        %s621 = sphi %s602, %s602
        %s622 = sphi %s603, %s603
      $region86: #{cnn_encoder_forward.1} parent=82 // loop_header_branch
        %619 = sbr.rel (%p617) target = $region90
      $region87: #{cnn_encoder_forward.1} parent=82 // loop_body
        %v623 = vld [vmem:[%s621] sm:%s614]
        %624 = vst [vmem:[%s622] sm:%s614] %v623
      $region88: #{cnn_encoder_forward.1} parent=82 // loop_footer
        %s620 = sadd.s32 1, %s616
      $region89: #{cnn_encoder_forward.1} parent=82 // loop_footer_branch
        %615 = sbr.rel target = $region85
      $region90: #{cnn_encoder_forward.1} parent=82 // loop_exit
        _
    $region83: #{cnn_encoder_forward.1} parent=1 // pred_fallthru
      _
    // Predicated region
    $region106: #{cnn_encoder_forward.1} parent=1 // pred_check
      _
    $region107: #{cnn_encoder_forward.1} parent=1 // pred_check_branch
      %1156 = sbr.rel (0) target = $region109
    $region108: #{cnn_encoder_forward.1} parent=1 // pred_region
      %1157 = vsyncadd %s604, 32768
    $region109: #{cnn_encoder_forward.1} parent=1 // pred_fallthru
      _
    %v1158 = vld [vmem:[%s0] sm:$0xf]
    %v1159 = vld [vmem:[%s0 + $0x4] sm:$0xf]
    %v1160 = vld [vmem:[%s0 + $0x8] sm:$0xf]
    %v1161 = vld [vmem:[%s0 + $0xc] sm:$0xf]
    %v1162 = vld [vmem:[%s0 + $0x10] sm:$0xf]
    %v1163 = vld [vmem:[%s0 + $0x14] sm:$0xf]
    %v1164 = vld [vmem:[%s0 + $0x18] sm:$0xf]
    %v1165 = vld [vmem:[%s0 + $0x1c] sm:$0xf]
    %v1166 = vld [vmem:[%s0 + $0x20] sm:$0xf]
    %v1167 = vld [vmem:[%s0 + $0x24] sm:$0xf]
    %v1168 = vld [vmem:[%s0 + $0x28] sm:$0xf]
    %v1169 = vld [vmem:[%s0 + $0x2c] sm:$0xf]
    %v1170 = vld [vmem:[%s0 + $0x30] sm:$0xf]
    %v1171 = vld [vmem:[%s0 + $0x34] sm:$0xf]
    %v1172 = vld [vmem:[%s0 + $0x38] sm:$0xf]
    %v1173 = vld [vmem:[%s0 + $0x3c] sm:$0xf]
    %v1174 = vld [vmem:[%s0 + $0x40] sm:$0xf]
    %v1175 = vld [vmem:[%s0 + $0x44] sm:$0xf]
    %v1176 = vld [vmem:[%s0 + $0x48] sm:$0xf]
    %v1177 = vld [vmem:[%s0 + $0x4c] sm:$0xf]
    %v1178 = vld [vmem:[%s0 + $0x50] sm:$0xf]
    %v1179 = vld [vmem:[%s0 + $0x54] sm:$0xf]
    %v1180 = vld [vmem:[%s0 + $0x58] sm:$0xf]
    %v1181 = vld [vmem:[%s0 + $0x5c] sm:$0xf]
    %v1182 = vld [vmem:[%s0 + $0x60] sm:$0xf]
    %v1183 = vld [vmem:[%s0 + $0x64] sm:$0xf]
    %v1184 = vld [vmem:[%s0 + $0x68] sm:$0xf]
    %v1185 = vld [vmem:[%s0 + $0x6c] sm:$0xf]
    %v1186 = vld [vmem:[%s0 + $0x70] sm:$0xf]
    %v1187 = vld [vmem:[%s0 + $0x74] sm:$0xf]
    %v1188 = vld [vmem:[%s0 + $0x78] sm:$0xf]
    %v1189 = vld [vmem:[%s0 + $0x7c] sm:$0xf]
    %v1190 = vld [vmem:[%s0 + $0x80] sm:$0xf]
    %v1191 = vld [vmem:[%s0 + $0x84] sm:$0xf]
    %v1192 = vld [vmem:[%s0 + $0x88] sm:$0xf]
    %v1193 = vld [vmem:[%s0 + $0x8c] sm:$0xf]
    %v1194 = vld [vmem:[%s0 + $0x90] sm:$0xf]
    %v1195 = vld [vmem:[%s0 + $0x94] sm:$0xf]
    %v1196 = vld [vmem:[%s0 + $0x98] sm:$0xf]
    %v1197 = vld [vmem:[%s0 + $0x9c] sm:$0xf]
    %v1198 = vld [vmem:[%s0 + $0xa0] sm:$0xf]
    %v1199 = vld [vmem:[%s0 + $0xa4] sm:$0xf]
    %v1200 = vld [vmem:[%s0 + $0xa8] sm:$0xf]
    %v1201 = vld [vmem:[%s0 + $0xac] sm:$0xf]
    %v1202 = vld [vmem:[%s0 + $0xb0] sm:$0xf]
    %v1203 = vld [vmem:[%s0 + $0xb4] sm:$0xf]
    %v1204 = vld [vmem:[%s0 + $0xb8] sm:$0xf]
    %v1205 = vld [vmem:[%s0 + $0xbc] sm:$0xf]
    %v1206 = vld [vmem:[%s0 + $0xc0] sm:$0xf]
    %v1207 = vld [vmem:[%s1] sm:$0xf]
    %v1208 = vld [vmem:[%s1 + $0x4] sm:$0x1]
    %v1209 = vld [vmem:[%s8] ss:$0 sm:$0xff]
    %v1259 = vunpack.c.l.b16 %v1158
    %v1260 = vunpack.c.l.b16 %v1159
    %v1261 = vunpack.c.l.b16 %v1160
    %v1262 = vunpack.c.l.b16 %v1161
    %v1263 = vunpack.c.l.b16 %v1162
    %v1264 = vunpack.c.l.b16 %v1163
    %v1265 = vunpack.c.l.b16 %v1164
    %v1266 = vunpack.c.l.b16 %v1165
    %v1267 = vunpack.c.l.b16 %v1166
    %v1268 = vunpack.c.l.b16 %v1167
    %v1269 = vunpack.c.l.b16 %v1168
    %v1270 = vunpack.c.l.b16 %v1169
    %v1271 = vunpack.c.l.b16 %v1170
    %v1272 = vunpack.c.l.b16 %v1171
    %v1273 = vunpack.c.l.b16 %v1172
    %v1274 = vunpack.c.l.b16 %v1173
    %v1275 = vunpack.c.l.b16 %v1174
    %v1276 = vunpack.c.l.b16 %v1175
    %v1277 = vunpack.c.l.b16 %v1176
    %v1278 = vunpack.c.l.b16 %v1177
    %v1279 = vunpack.c.l.b16 %v1178
    %v1280 = vunpack.c.l.b16 %v1179
    %v1281 = vunpack.c.l.b16 %v1180
    %v1282 = vunpack.c.l.b16 %v1181
    %v1283 = vunpack.c.l.b16 %v1182
    %v1284 = vunpack.c.l.b16 %v1183
    %v1285 = vunpack.c.l.b16 %v1184
    %v1286 = vunpack.c.l.b16 %v1185
    %v1287 = vunpack.c.l.b16 %v1186
    %v1288 = vunpack.c.l.b16 %v1187
    %v1289 = vunpack.c.l.b16 %v1188
    %v1290 = vunpack.c.l.b16 %v1189
    %v1291 = vunpack.c.l.b16 %v1190
    %v1292 = vunpack.c.l.b16 %v1191
    %v1293 = vunpack.c.l.b16 %v1192
    %v1294 = vunpack.c.l.b16 %v1193
    %v1295 = vunpack.c.l.b16 %v1194
    %v1296 = vunpack.c.l.b16 %v1195
    %v1297 = vunpack.c.l.b16 %v1196
    %v1298 = vunpack.c.l.b16 %v1197
    %v1299 = vunpack.c.l.b16 %v1198
    %v1300 = vunpack.c.l.b16 %v1199
    %v1301 = vunpack.c.l.b16 %v1200
    %v1302 = vunpack.c.l.b16 %v1201
    %v1303 = vunpack.c.l.b16 %v1202
    %v1304 = vunpack.c.l.b16 %v1203
    %v1305 = vunpack.c.l.b16 %v1204
    %v1306 = vunpack.c.l.b16 %v1205
    %v1307 = vunpack.c.l.b16 %v1206
    %v1308 = vpack.c.b16 %v1260, %v1259
    %v1309 = vpack.c.b16 %v1262, %v1261
    %v1310 = vpack.c.b16 %v1264, %v1263
    %v1311 = vpack.c.b16 %v1266, %v1265
    %v1312 = vpack.c.b16 %v1268, %v1267
    %v1313 = vpack.c.b16 %v1270, %v1269
    %v1314 = vpack.c.b16 %v1272, %v1271
    %v1315 = vpack.c.b16 %v1274, %v1273
    %v1316 = vpack.c.b16 %v1276, %v1275
    %v1317 = vpack.c.b16 %v1278, %v1277
    %v1318 = vpack.c.b16 %v1280, %v1279
    %v1319 = vpack.c.b16 %v1282, %v1281
    %v1320 = vpack.c.b16 %v1284, %v1283
    %v1321 = vpack.c.b16 %v1286, %v1285
    %v1322 = vpack.c.b16 %v1288, %v1287
    %v1323 = vpack.c.b16 %v1290, %v1289
    %v1324 = vpack.c.b16 %v1292, %v1291
    %v1325 = vpack.c.b16 %v1294, %v1293
    %v1326 = vpack.c.b16 %v1296, %v1295
    %v1327 = vpack.c.b16 %v1298, %v1297
    %v1328 = vpack.c.b16 %v1300, %v1299
    %v1329 = vpack.c.b16 %v1302, %v1301
    %v1330 = vpack.c.b16 %v1304, %v1303
    %v1331 = vpack.c.b16 %v1306, %v1305
    %v1332 = vpack.c.b16 %v1307, %v1307
    %v1335 = vunpack.c.l.b16 %v1207
    %v1336 = vunpack.c.l.b16 %v1208
    %v1337 = vpack.c.b16 %v1336, %v1335
    %vm1338 = vcmask 72704
    %v1340 = vsel %vm1338, %v1308, 0
    %v1343 = vsel %vm1338, %v1309, 0
    %v1346 = vsel %vm1338, %v1310, 0
    %v1349 = vsel %vm1338, %v1311, 0
    %v1352 = vsel %vm1338, %v1312, 0
    %v1355 = vsel %vm1338, %v1313, 0
    %v1358 = vsel %vm1338, %v1314, 0
    %v1361 = vsel %vm1338, %v1315, 0
    %v1364 = vsel %vm1338, %v1316, 0
    %v1367 = vsel %vm1338, %v1317, 0
    %v1370 = vsel %vm1338, %v1318, 0
    %v1373 = vsel %vm1338, %v1319, 0
    %v1376 = vsel %vm1338, %v1320, 0
    %v1379 = vsel %vm1338, %v1321, 0
    %v1382 = vsel %vm1338, %v1322, 0
    %v1385 = vsel %vm1338, %v1323, 0
    %v1388 = vsel %vm1338, %v1324, 0
    %v1391 = vsel %vm1338, %v1325, 0
    %v1394 = vsel %vm1338, %v1326, 0
    %v1397 = vsel %vm1338, %v1327, 0
    %v1400 = vsel %vm1338, %v1328, 0
    %v1403 = vsel %vm1338, %v1329, 0
    %v1406 = vsel %vm1338, %v1330, 0
    %v1409 = vsel %vm1338, %v1331, 0
    %v1412 = vsel %vm1338, %v1332, 0
    %vm1414 = vcmask 1043456
    %vm1415 = vcmask 1044480
    %v1416 = vsel %vm1414, 4294967295, 65535
    %v1417 = vsel %vm1415, %v1416, 0
    %v1419 = vand.u32 %v1337, %v1417
    %1421 = vmatprep.subr.bf16.mxu0 0
    %1422 = vmatpush1.bf16.msra.mxu0 0
    %1423 = vmatprep.subr.bf16.mxu0 0
    %1424 = vmatpush1.bf16.msra.mxu0 0
    %1425 = vmatprep.subr.bf16.mxu0 0
    %1426 = vmatpush1.bf16.msra.mxu0 0
    %1427 = vmatprep.subr.bf16.mxu0 0
    %1428 = vmatpush1.bf16.msra.mxu0 0
    %1429 = vmatprep.subr.bf16.mxu0 0
    %1430 = vmatpush1.bf16.msra.mxu0 0
    %1431 = vmatprep.subr.bf16.mxu0 0
    %1432 = vmatpush1.bf16.msra.mxu0 0
    %1433 = vmatprep.subr.bf16.mxu0 0
    %1434 = vmatpush1.bf16.msra.mxu0 0
    %1435 = vmatprep.subr.bf16.mxu0 0
    %1436 = vmatpush1.bf16.msra.mxu0 %v1419
    %1437 = vmatprep.subr.bf16.mxu0 0
    %1438 = vmatpush2.bf16.msra.mxu0 0
    %1439 = vmatprep.subr.bf16.mxu0 0
    %1440 = vmatpush2.bf16.msra.mxu0 0
    %1441 = vmatprep.subr.bf16.mxu0 0
    %1442 = vmatpush2.bf16.msra.mxu0 0
    %1443 = vmatprep.subr.bf16.mxu0 0
    %1444 = vmatpush2.bf16.msra.mxu0 0
    %1445 = vmatprep.subr.bf16.mxu0 0
    %1446 = vmatpush2.bf16.msra.mxu0 0
    %1447 = vmatprep.subr.bf16.mxu0 0
    %1448 = vmatpush2.bf16.msra.mxu0 0
    %1449 = vmatprep.subr.bf16.mxu0 0
    %1450 = vmatpush2.bf16.msra.mxu0 0
    %1451 = vmatprep.subr.bf16.mxu0 0
    %1452 = vmatpush2.bf16.msra.mxu0 0
    %1453 = vmatprep.mubr.bf16.mxu0 0
    %1454 = vmatmul.mubr.bf16.gmra.mxu0 %v1340
    %v1455 = vpop.f32.mrf.mxu0
    %v1456 = vadd.f32 %v1209, %v1455
    %v1457 = vpop.f32.mrf.mxu0
    %v1458 = vpop.f32.mrf.mxu0
    %v1459 = vadd.f32 %v1209, %v1458
    %v1460 = vpop.f32.mrf.mxu0
    %1461 = vmatprep.mubr.bf16.mxu0 0
    %1462 = vmatmul.mubr.bf16.gmra.mxu0 %v1343
    %v1463 = vpop.f32.mrf.mxu0
    %v1464 = vadd.f32 %v1209, %v1463
    %v1465 = vpop.f32.mrf.mxu0
    %v1466 = vpop.f32.mrf.mxu0
    %v1467 = vadd.f32 %v1209, %v1466
    %v1468 = vpop.f32.mrf.mxu0
    %1469 = vmatprep.mubr.bf16.mxu0 0
    %1470 = vmatmul.mubr.bf16.gmra.mxu0 %v1346
    %v1471 = vpop.f32.mrf.mxu0
    %v1472 = vadd.f32 %v1209, %v1471
    %v1473 = vpop.f32.mrf.mxu0
    %v1474 = vpop.f32.mrf.mxu0
    %v1475 = vadd.f32 %v1209, %v1474
    %v1476 = vpop.f32.mrf.mxu0
    %1477 = vmatprep.mubr.bf16.mxu0 0
    %1478 = vmatmul.mubr.bf16.gmra.mxu0 %v1349
    %v1479 = vpop.f32.mrf.mxu0
    %v1480 = vadd.f32 %v1209, %v1479
    %v1481 = vpop.f32.mrf.mxu0
    %v1482 = vpop.f32.mrf.mxu0
    %v1483 = vadd.f32 %v1209, %v1482
    %v1484 = vpop.f32.mrf.mxu0
    %1485 = vmatprep.mubr.bf16.mxu0 0
    %1486 = vmatmul.mubr.bf16.gmra.mxu0 %v1352
    %v1487 = vpop.f32.mrf.mxu0
    %v1488 = vadd.f32 %v1209, %v1487
    %v1489 = vpop.f32.mrf.mxu0
    %v1490 = vpop.f32.mrf.mxu0
    %v1491 = vadd.f32 %v1209, %v1490
    %v1492 = vpop.f32.mrf.mxu0
    %1493 = vmatprep.mubr.bf16.mxu0 0
    %1494 = vmatmul.mubr.bf16.gmra.mxu0 %v1355
    %v1495 = vpop.f32.mrf.mxu0
    %v1496 = vadd.f32 %v1209, %v1495
    %v1497 = vpop.f32.mrf.mxu0
    %v1498 = vpop.f32.mrf.mxu0
    %v1499 = vadd.f32 %v1209, %v1498
    %v1500 = vpop.f32.mrf.mxu0
    %1501 = vmatprep.mubr.bf16.mxu0 0
    %1502 = vmatmul.mubr.bf16.gmra.mxu0 %v1358
    %v1503 = vpop.f32.mrf.mxu0
    %v1504 = vadd.f32 %v1209, %v1503
    %v1505 = vpop.f32.mrf.mxu0
    %v1506 = vpop.f32.mrf.mxu0
    %v1507 = vadd.f32 %v1209, %v1506
    %v1508 = vpop.f32.mrf.mxu0
    %1509 = vmatprep.mubr.bf16.mxu0 0
    %1510 = vmatmul.mubr.bf16.gmra.mxu0 %v1361
    %v1511 = vpop.f32.mrf.mxu0
    %v1512 = vadd.f32 %v1209, %v1511
    %v1513 = vpop.f32.mrf.mxu0
    %v1514 = vpop.f32.mrf.mxu0
    %v1515 = vadd.f32 %v1209, %v1514
    %v1516 = vpop.f32.mrf.mxu0
    %1517 = vmatprep.mubr.bf16.mxu0 0
    %1518 = vmatmul.mubr.bf16.gmra.mxu0 %v1364
    %v1519 = vpop.f32.mrf.mxu0
    %v1520 = vadd.f32 %v1209, %v1519
    %v1521 = vpop.f32.mrf.mxu0
    %v1522 = vpop.f32.mrf.mxu0
    %v1523 = vadd.f32 %v1209, %v1522
    %v1524 = vpop.f32.mrf.mxu0
    %1525 = vmatprep.mubr.bf16.mxu0 0
    %1526 = vmatmul.mubr.bf16.gmra.mxu0 %v1367
    %v1527 = vpop.f32.mrf.mxu0
    %v1528 = vadd.f32 %v1209, %v1527
    %v1529 = vpop.f32.mrf.mxu0
    %v1530 = vpop.f32.mrf.mxu0
    %v1531 = vadd.f32 %v1209, %v1530
    %v1532 = vpop.f32.mrf.mxu0
    %1533 = vmatprep.mubr.bf16.mxu0 0
    %1534 = vmatmul.mubr.bf16.gmra.mxu0 %v1370
    %v1535 = vpop.f32.mrf.mxu0
    %v1536 = vadd.f32 %v1209, %v1535
    %v1537 = vpop.f32.mrf.mxu0
    %v1538 = vpop.f32.mrf.mxu0
    %v1539 = vadd.f32 %v1209, %v1538
    %v1540 = vpop.f32.mrf.mxu0
    %1541 = vmatprep.mubr.bf16.mxu0 0
    %1542 = vmatmul.mubr.bf16.gmra.mxu0 %v1373
    %v1543 = vpop.f32.mrf.mxu0
    %v1544 = vadd.f32 %v1209, %v1543
    %v1545 = vpop.f32.mrf.mxu0
    %v1546 = vpop.f32.mrf.mxu0
    %v1547 = vadd.f32 %v1209, %v1546
    %v1548 = vpop.f32.mrf.mxu0
    %1549 = vmatprep.mubr.bf16.mxu0 0
    %1550 = vmatmul.mubr.bf16.gmra.mxu0 %v1376
    %v1551 = vpop.f32.mrf.mxu0
    %v1552 = vadd.f32 %v1209, %v1551
    %v1553 = vpop.f32.mrf.mxu0
    %v1554 = vpop.f32.mrf.mxu0
    %v1555 = vadd.f32 %v1209, %v1554
    %v1556 = vpop.f32.mrf.mxu0
    %1557 = vmatprep.mubr.bf16.mxu0 0
    %1558 = vmatmul.mubr.bf16.gmra.mxu0 %v1379
    %v1559 = vpop.f32.mrf.mxu0
    %v1560 = vadd.f32 %v1209, %v1559
    %v1561 = vpop.f32.mrf.mxu0
    %v1562 = vpop.f32.mrf.mxu0
    %v1563 = vadd.f32 %v1209, %v1562
    %v1564 = vpop.f32.mrf.mxu0
    %1565 = vmatprep.mubr.bf16.mxu0 0
    %1566 = vmatmul.mubr.bf16.gmra.mxu0 %v1382
    %v1567 = vpop.f32.mrf.mxu0
    %v1568 = vadd.f32 %v1209, %v1567
    %v1569 = vpop.f32.mrf.mxu0
    %v1570 = vpop.f32.mrf.mxu0
    %v1571 = vadd.f32 %v1209, %v1570
    %v1572 = vpop.f32.mrf.mxu0
    %1573 = vmatprep.mubr.bf16.mxu0 0
    %1574 = vmatmul.mubr.bf16.gmra.mxu0 %v1385
    %v1575 = vpop.f32.mrf.mxu0
    %v1576 = vadd.f32 %v1209, %v1575
    %v1577 = vpop.f32.mrf.mxu0
    %v1578 = vpop.f32.mrf.mxu0
    %v1579 = vadd.f32 %v1209, %v1578
    %v1580 = vpop.f32.mrf.mxu0
    %1581 = vmatprep.mubr.bf16.mxu0 0
    %1582 = vmatmul.mubr.bf16.gmra.mxu0 %v1388
    %v1583 = vpop.f32.mrf.mxu0
    %v1584 = vadd.f32 %v1209, %v1583
    %v1585 = vpop.f32.mrf.mxu0
    %v1586 = vpop.f32.mrf.mxu0
    %v1587 = vadd.f32 %v1209, %v1586
    %v1588 = vpop.f32.mrf.mxu0
    %1589 = vmatprep.mubr.bf16.mxu0 0
    %1590 = vmatmul.mubr.bf16.gmra.mxu0 %v1391
    %v1591 = vpop.f32.mrf.mxu0
    %v1592 = vadd.f32 %v1209, %v1591
    %v1593 = vpop.f32.mrf.mxu0
    %v1594 = vpop.f32.mrf.mxu0
    %v1595 = vadd.f32 %v1209, %v1594
    %v1596 = vpop.f32.mrf.mxu0
    %1597 = vmatprep.mubr.bf16.mxu0 0
    %1598 = vmatmul.mubr.bf16.gmra.mxu0 %v1394
    %v1599 = vpop.f32.mrf.mxu0
    %v1600 = vadd.f32 %v1209, %v1599
    %v1601 = vpop.f32.mrf.mxu0
    %v1602 = vpop.f32.mrf.mxu0
    %v1603 = vadd.f32 %v1209, %v1602
    %v1604 = vpop.f32.mrf.mxu0
    %1605 = vmatprep.mubr.bf16.mxu0 0
    %1606 = vmatmul.mubr.bf16.gmra.mxu0 %v1397
    %v1607 = vpop.f32.mrf.mxu0
    %v1608 = vadd.f32 %v1209, %v1607
    %v1609 = vpop.f32.mrf.mxu0
    %v1610 = vpop.f32.mrf.mxu0
    %v1611 = vadd.f32 %v1209, %v1610
    %v1612 = vpop.f32.mrf.mxu0
    %1613 = vmatprep.mubr.bf16.mxu0 0
    %1614 = vmatmul.mubr.bf16.gmra.mxu0 %v1400
    %v1615 = vpop.f32.mrf.mxu0
    %v1616 = vadd.f32 %v1209, %v1615
    %v1617 = vpop.f32.mrf.mxu0
    %v1618 = vpop.f32.mrf.mxu0
    %v1619 = vadd.f32 %v1209, %v1618
    %v1620 = vpop.f32.mrf.mxu0
    %1621 = vmatprep.mubr.bf16.mxu0 0
    %1622 = vmatmul.mubr.bf16.gmra.mxu0 %v1403
    %v1623 = vpop.f32.mrf.mxu0
    %v1624 = vadd.f32 %v1209, %v1623
    %v1625 = vpop.f32.mrf.mxu0
    %v1626 = vpop.f32.mrf.mxu0
    %v1627 = vadd.f32 %v1209, %v1626
    %v1628 = vpop.f32.mrf.mxu0
    %1629 = vmatprep.mubr.bf16.mxu0 0
    %1630 = vmatmul.mubr.bf16.gmra.mxu0 %v1406
    %v1631 = vpop.f32.mrf.mxu0
    %v1632 = vadd.f32 %v1209, %v1631
    %v1633 = vpop.f32.mrf.mxu0
    %v1634 = vpop.f32.mrf.mxu0
    %v1635 = vadd.f32 %v1209, %v1634
    %v1636 = vpop.f32.mrf.mxu0
    %1637 = vmatprep.mubr.bf16.mxu0 0
    %1638 = vmatmul.mubr.bf16.gmra.mxu0 %v1409
    %v1639 = vpop.f32.mrf.mxu0
    %v1640 = vadd.f32 %v1209, %v1639
    %v1641 = vpop.f32.mrf.mxu0
    %v1642 = vpop.f32.mrf.mxu0
    %v1643 = vadd.f32 %v1209, %v1642
    %v1644 = vpop.f32.mrf.mxu0
    %1645 = vmatprep.mubr.bf16.mxu0 0
    %1646 = vmatmul.mubr.bf16.gmra.mxu0 %v1412
    %v1647 = vpop.f32.mrf.mxu0
    %v1648 = vadd.f32 %v1209, %v1647
    %v1649 = vpop.f32.mrf.mxu0
    %v1650 = vpop.f32.mrf.mxu0
    %v1651 = vpop.f32.mrf.mxu0
    %1652 = vdwg.mxu0
    %v1653 = vmax.f32 %v1456, 0.0
    %v1654 = vmax.f32 %v1459, 0.0
    %v1655 = vmax.f32 %v1464, 0.0
    %v1656 = vmax.f32 %v1467, 0.0
    %v1657 = vmax.f32 %v1472, 0.0
    %v1658 = vmax.f32 %v1475, 0.0
    %v1659 = vmax.f32 %v1480, 0.0
    %v1660 = vmax.f32 %v1483, 0.0
    %v1661 = vmax.f32 %v1488, 0.0
    %v1662 = vmax.f32 %v1491, 0.0
    %v1663 = vmax.f32 %v1496, 0.0
    %v1664 = vmax.f32 %v1499, 0.0
    %v1665 = vmax.f32 %v1504, 0.0
    %v1666 = vmax.f32 %v1507, 0.0
    %v1667 = vmax.f32 %v1512, 0.0
    %v1668 = vmax.f32 %v1515, 0.0
    %v1669 = vmax.f32 %v1520, 0.0
    %v1670 = vmax.f32 %v1523, 0.0
    %v1671 = vmax.f32 %v1528, 0.0
    %v1672 = vmax.f32 %v1531, 0.0
    %v1673 = vmax.f32 %v1536, 0.0
    %v1674 = vmax.f32 %v1539, 0.0
    %v1675 = vmax.f32 %v1544, 0.0
    %v1676 = vmax.f32 %v1547, 0.0
    %v1677 = vmax.f32 %v1552, 0.0
    %v1678 = vmax.f32 %v1555, 0.0
    %v1679 = vmax.f32 %v1560, 0.0
    %v1680 = vmax.f32 %v1563, 0.0
    %v1681 = vmax.f32 %v1568, 0.0
    %v1682 = vmax.f32 %v1571, 0.0
    %v1683 = vmax.f32 %v1576, 0.0
    %v1684 = vmax.f32 %v1579, 0.0
    %v1685 = vmax.f32 %v1584, 0.0
    %v1686 = vmax.f32 %v1587, 0.0
    %v1687 = vmax.f32 %v1592, 0.0
    %v1688 = vmax.f32 %v1595, 0.0
    %v1689 = vmax.f32 %v1600, 0.0
    %v1690 = vmax.f32 %v1603, 0.0
    %v1691 = vmax.f32 %v1608, 0.0
    %v1692 = vmax.f32 %v1611, 0.0
    %v1693 = vmax.f32 %v1616, 0.0
    %v1694 = vmax.f32 %v1619, 0.0
    %v1695 = vmax.f32 %v1624, 0.0
    %v1696 = vmax.f32 %v1627, 0.0
    %v1697 = vmax.f32 %v1632, 0.0
    %v1698 = vmax.f32 %v1635, 0.0
    %v1699 = vmax.f32 %v1640, 0.0
    %v1700 = vmax.f32 %v1643, 0.0
    %v1701 = vmax.f32 %v1648, 0.0
    %v1702 = vpack.c.bf16 %v1654, %v1653
    %v1703 = vpack.c.bf16 %v1656, %v1655
    %v1704 = vpack.c.bf16 %v1658, %v1657
    %v1705 = vpack.c.bf16 %v1660, %v1659
    %v1706 = vpack.c.bf16 %v1662, %v1661
    %v1707 = vpack.c.bf16 %v1664, %v1663
    %v1708 = vpack.c.bf16 %v1666, %v1665
    %v1709 = vpack.c.bf16 %v1668, %v1667
    %v1710 = vpack.c.bf16 %v1670, %v1669
    %v1711 = vpack.c.bf16 %v1672, %v1671
    %v1712 = vpack.c.bf16 %v1674, %v1673
    %v1713 = vpack.c.bf16 %v1676, %v1675
    %v1714 = vpack.c.bf16 %v1678, %v1677
    %v1715 = vpack.c.bf16 %v1680, %v1679
    %v1716 = vpack.c.bf16 %v1682, %v1681
    %v1717 = vpack.c.bf16 %v1684, %v1683
    %v1718 = vpack.c.bf16 %v1686, %v1685
    %v1719 = vpack.c.bf16 %v1688, %v1687
    %v1720 = vpack.c.bf16 %v1690, %v1689
    %v1721 = vpack.c.bf16 %v1692, %v1691
    %v1722 = vpack.c.bf16 %v1694, %v1693
    %v1723 = vpack.c.bf16 %v1696, %v1695
    %v1724 = vpack.c.bf16 %v1698, %v1697
    %v1725 = vpack.c.bf16 %v1700, %v1699
    %v1726 = vpack.c.bf16 %v1701, %v1701
    %v1727 = vld [vmem:[%s5] sm:$0xff]
    %v1728 = vld [vmem:[%s5 + $0x8] sm:$0xff]
    %v1729 = vld [vmem:[%s5 + $0x10] sm:$0xff]
    %v1730 = vld [vmem:[%s5 + $0x18] sm:$0xff]
    %v1731 = vld [vmem:[%s5 + $0x20] sm:$0xff]
    %v1732 = vld [vmem:[%s5 + $0x28] sm:$0xff]
    %v1733 = vld [vmem:[%s5 + $0x30] sm:$0xff]
    %v1734 = vld [vmem:[%s5 + $0x38] sm:$0xff]
    %v1735 = vld [vmem:[%s5 + $0x40] sm:$0xff]
    %v1736 = vld [vmem:[%s5 + $0x48] sm:$0xff]
    %v1737 = vld [vmem:[%s5 + $0x50] sm:$0xff]
    %v1738 = vld [vmem:[%s5 + $0x58] sm:$0xff]
    %v1739 = vld [vmem:[%s5 + $0x60] sm:$0xff]
    %v1740 = vld [vmem:[%s5 + $0x68] sm:$0xff]
    %v1741 = vld [vmem:[%s5 + $0x70] sm:$0xff]
    %v1742 = vld [vmem:[%s5 + $0x78] sm:$0xff]
    %v1743 = vld [vmem:[%s5 + $0x80] sm:$0xff]
    %v1744 = vld [vmem:[%s5 + $0x88] sm:$0xff]
    %v1745 = vld [vmem:[%s5 + $0x90] sm:$0xff]
    %v1746 = vld [vmem:[%s5 + $0x98] sm:$0xff]
    %v1747 = vld [vmem:[%s5 + $0xa0] sm:$0xff]
    %v1748 = vld [vmem:[%s5 + $0xa8] sm:$0xff]
    %v1749 = vld [vmem:[%s5 + $0xb0] sm:$0xff]
    %v1750 = vld [vmem:[%s5 + $0xb8] sm:$0xff]
    %v1751 = vld [vmem:[%s5 + $0xc0] sm:$0x11]
    %v1752 = vld [vmem:[%s5 + $0xc8] sm:$0x11]
    %v1779 = vunpack.c.l.b16 %v1727
    %v1780 = vunpack.c.h.b16 %v1727
    %v1781 = vunpack.c.l.b16 %v1728
    %v1782 = vunpack.c.h.b16 %v1728
    %v1783 = vunpack.c.l.b16 %v1729
    %v1784 = vunpack.c.h.b16 %v1729
    %v1785 = vunpack.c.l.b16 %v1730
    %v1786 = vunpack.c.h.b16 %v1730
    %v1787 = vunpack.c.l.b16 %v1731
    %v1788 = vunpack.c.h.b16 %v1731
    %v1789 = vunpack.c.l.b16 %v1732
    %v1790 = vunpack.c.h.b16 %v1732
    %v1791 = vunpack.c.l.b16 %v1733
    %v1792 = vunpack.c.h.b16 %v1733
    %v1793 = vunpack.c.l.b16 %v1734
    %v1794 = vunpack.c.h.b16 %v1734
    %v1795 = vunpack.c.l.b16 %v1735
    %v1796 = vunpack.c.h.b16 %v1735
    %v1797 = vunpack.c.l.b16 %v1736
    %v1798 = vunpack.c.h.b16 %v1736
    %v1799 = vunpack.c.l.b16 %v1737
    %v1800 = vunpack.c.h.b16 %v1737
    %v1801 = vunpack.c.l.b16 %v1738
    %v1802 = vunpack.c.h.b16 %v1738
    %v1803 = vunpack.c.l.b16 %v1739
    %v1804 = vunpack.c.h.b16 %v1739
    %v1805 = vunpack.c.l.b16 %v1740
    %v1806 = vunpack.c.h.b16 %v1740
    %v1807 = vunpack.c.l.b16 %v1741
    %v1808 = vunpack.c.h.b16 %v1741
    %v1809 = vunpack.c.l.b16 %v1742
    %v1810 = vunpack.c.h.b16 %v1742
    %v1811 = vunpack.c.l.b16 %v1743
    %v1812 = vunpack.c.h.b16 %v1743
    %v1813 = vunpack.c.l.b16 %v1744
    %v1814 = vunpack.c.h.b16 %v1744
    %v1815 = vunpack.c.l.b16 %v1745
    %v1816 = vunpack.c.h.b16 %v1745
    %v1817 = vunpack.c.l.b16 %v1746
    %v1818 = vunpack.c.h.b16 %v1746
    %v1819 = vunpack.c.l.b16 %v1747
    %v1820 = vunpack.c.h.b16 %v1747
    %v1821 = vunpack.c.l.b16 %v1748
    %v1822 = vunpack.c.h.b16 %v1748
    %v1823 = vunpack.c.l.b16 %v1749
    %v1824 = vunpack.c.h.b16 %v1749
    %v1825 = vunpack.c.l.b16 %v1750
    %v1826 = vunpack.c.h.b16 %v1750
    %v1827 = vunpack.c.l.b16 %v1751
    %v1828 = vunpack.c.h.b16 %v1751
    %v1829 = vunpack.c.l.b16 %v1752
    %v1830 = vunpack.c.h.b16 %v1752
    %v1831 = vpack.c.b16 %v1783, %v1779
    %v1832 = vpack.c.b16 %v1784, %v1780
    %v1833 = vpack.c.b16 %v1785, %v1781
    %v1834 = vpack.c.b16 %v1786, %v1782
    %v1835 = vpack.c.b16 %v1791, %v1787
    %v1836 = vpack.c.b16 %v1792, %v1788
    %v1837 = vpack.c.b16 %v1793, %v1789
    %v1838 = vpack.c.b16 %v1794, %v1790
    %v1839 = vpack.c.b16 %v1799, %v1795
    %v1840 = vpack.c.b16 %v1800, %v1796
    %v1841 = vpack.c.b16 %v1801, %v1797
    %v1842 = vpack.c.b16 %v1802, %v1798
    %v1843 = vpack.c.b16 %v1807, %v1803
    %v1844 = vpack.c.b16 %v1808, %v1804
    %v1845 = vpack.c.b16 %v1809, %v1805
    %v1846 = vpack.c.b16 %v1810, %v1806
    %v1847 = vpack.c.b16 %v1815, %v1811
    %v1848 = vpack.c.b16 %v1816, %v1812
    %v1849 = vpack.c.b16 %v1817, %v1813
    %v1850 = vpack.c.b16 %v1818, %v1814
    %v1851 = vpack.c.b16 %v1823, %v1819
    %v1852 = vpack.c.b16 %v1824, %v1820
    %v1853 = vpack.c.b16 %v1825, %v1821
    %v1854 = vpack.c.b16 %v1826, %v1822
    %v1855 = vpack.c.b16 %v1827, %v1827
    %v1856 = vpack.c.b16 %v1828, %v1828
    %v1857 = vpack.c.b16 %v1829, %v1829
    %v1858 = vpack.c.b16 %v1830, %v1830
    %vm1880 = vcmask 64512
    %v1882 = vsel %vm1880, %v1834, 0
    %v1885 = vsel %vm1880, %v1838, 0
    %v1888 = vsel %vm1880, %v1842, 0
    %v1891 = vsel %vm1880, %v1846, 0
    %v1894 = vsel %vm1880, %v1850, 0
    %v1897 = vsel %vm1880, %v1854, 0
    %v1900 = vsel %vm1880, %v1858, 0
    %v1903 = vsel %vm1414, %v1726, 0
    %1905 = vmatprep.subr.bf16.mxu0 0
    %1906 = vmatpush1.bf16.msra.mxu0 %v1709
    %1907 = vmatprep.subr.bf16.mxu0 0
    %1908 = vmatpush1.bf16.msra.mxu0 %v1708
    %1909 = vmatprep.subr.bf16.mxu0 0
    %1910 = vmatpush1.bf16.msra.mxu0 %v1707
    %1911 = vmatprep.subr.bf16.mxu0 0
    %1912 = vmatpush1.bf16.msra.mxu0 %v1706
    %1913 = vmatprep.subr.bf16.mxu0 0
    %1914 = vmatpush1.bf16.msra.mxu0 %v1705
    %1915 = vmatprep.subr.bf16.mxu0 0
    %1916 = vmatpush1.bf16.msra.mxu0 %v1704
    %1917 = vmatprep.subr.bf16.mxu0 0
    %1918 = vmatpush1.bf16.msra.mxu0 %v1703
    %1919 = vmatprep.subr.bf16.mxu0 0
    %1920 = vmatpush1.bf16.msra.mxu0 %v1702
    %1921 = vmatprep.subr.bf16.mxu0 0
    %1922 = vmatpush2.bf16.msra.mxu0 %v1717
    %1923 = vmatprep.subr.bf16.mxu0 0
    %1924 = vmatpush2.bf16.msra.mxu0 %v1716
    %1925 = vmatprep.subr.bf16.mxu0 0
    %1926 = vmatpush2.bf16.msra.mxu0 %v1715
    %1927 = vmatprep.subr.bf16.mxu0 0
    %1928 = vmatpush2.bf16.msra.mxu0 %v1714
    %1929 = vmatprep.subr.bf16.mxu0 0
    %1930 = vmatpush2.bf16.msra.mxu0 %v1713
    %1931 = vmatprep.subr.bf16.mxu0 0
    %1932 = vmatpush2.bf16.msra.mxu0 %v1712
    %1933 = vmatprep.subr.bf16.mxu0 0
    %1934 = vmatpush2.bf16.msra.mxu0 %v1711
    %1935 = vmatprep.subr.bf16.mxu0 0
    %1936 = vmatpush2.bf16.msra.mxu0 %v1710
    %1937 = vmatprep.mubr.bf16.mxu0 %v1832
    %1938 = vmatmul.mubr.bf16.gmra.mxu0 %v1831
    %v1939 = vpop.f32.mrf.mxu0
    %v1940 = vadd.f32 0.0, %v1939
    %v1941 = vpop.f32.mrf.mxu0
    %v1942 = vpop.f32.mrf.mxu0
    %v1943 = vadd.f32 0.0, %v1942
    %v1944 = vpop.f32.mrf.mxu0
    %1945 = vmatprep.mubr.bf16.mxu0 %v1836
    %1946 = vmatmul.mubr.bf16.gmra.mxu0 %v1835
    %v1947 = vpop.f32.mrf.mxu0
    %v1948 = vadd.f32 0.0, %v1947
    %v1949 = vpop.f32.mrf.mxu0
    %v1950 = vpop.f32.mrf.mxu0
    %v1951 = vadd.f32 0.0, %v1950
    %v1952 = vpop.f32.mrf.mxu0
    %1953 = vmatprep.mubr.bf16.mxu0 %v1840
    %1954 = vmatmul.mubr.bf16.gmra.mxu0 %v1839
    %v1955 = vpop.f32.mrf.mxu0
    %v1956 = vadd.f32 0.0, %v1955
    %v1957 = vpop.f32.mrf.mxu0
    %v1958 = vpop.f32.mrf.mxu0
    %v1959 = vadd.f32 0.0, %v1958
    %v1960 = vpop.f32.mrf.mxu0
    %1961 = vmatprep.mubr.bf16.mxu0 %v1844
    %1962 = vmatmul.mubr.bf16.gmra.mxu0 %v1843
    %v1963 = vpop.f32.mrf.mxu0
    %v1964 = vadd.f32 0.0, %v1963
    %v1965 = vpop.f32.mrf.mxu0
    %v1966 = vpop.f32.mrf.mxu0
    %v1967 = vadd.f32 0.0, %v1966
    %v1968 = vpop.f32.mrf.mxu0
    %1969 = vmatprep.mubr.bf16.mxu0 %v1848
    %1970 = vmatmul.mubr.bf16.gmra.mxu0 %v1847
    %v1971 = vpop.f32.mrf.mxu0
    %v1972 = vadd.f32 0.0, %v1971
    %v1973 = vpop.f32.mrf.mxu0
    %v1974 = vpop.f32.mrf.mxu0
    %v1975 = vadd.f32 0.0, %v1974
    %v1976 = vpop.f32.mrf.mxu0
    %1977 = vmatprep.mubr.bf16.mxu0 %v1852
    %1978 = vmatmul.mubr.bf16.gmra.mxu0 %v1851
    %v1979 = vpop.f32.mrf.mxu0
    %v1980 = vadd.f32 0.0, %v1979
    %v1981 = vpop.f32.mrf.mxu0
    %v1982 = vpop.f32.mrf.mxu0
    %v1983 = vadd.f32 0.0, %v1982
    %v1984 = vpop.f32.mrf.mxu0
    %1985 = vmatprep.mubr.bf16.mxu0 %v1856
    %1986 = vmatmul.mubr.bf16.gmra.mxu0 %v1855
    %v1987 = vpop.f32.mrf.mxu0
    %v1988 = vadd.f32 0.0, %v1987
    %v1989 = vpop.f32.mrf.mxu0
    %v1990 = vpop.f32.mrf.mxu0
    %v1991 = vpop.f32.mrf.mxu0
    %1992 = vdwg.mxu0
    %1993 = vmatprep.subr.bf16.mxu0 0
    %1994 = vmatpush1.bf16.msra.mxu0 %v1725
    %1995 = vmatprep.subr.bf16.mxu0 0
    %1996 = vmatpush1.bf16.msra.mxu0 %v1724
    %1997 = vmatprep.subr.bf16.mxu0 0
    %1998 = vmatpush1.bf16.msra.mxu0 %v1723
    %1999 = vmatprep.subr.bf16.mxu0 0
    %2000 = vmatpush1.bf16.msra.mxu0 %v1722
    %2001 = vmatprep.subr.bf16.mxu0 0
    %2002 = vmatpush1.bf16.msra.mxu0 %v1721
    %2003 = vmatprep.subr.bf16.mxu0 0
    %2004 = vmatpush1.bf16.msra.mxu0 %v1720
    %2005 = vmatprep.subr.bf16.mxu0 0
    %2006 = vmatpush1.bf16.msra.mxu0 %v1719
    %2007 = vmatprep.subr.bf16.mxu0 0
    %2008 = vmatpush1.bf16.msra.mxu0 %v1718
    %2009 = vmatprep.subr.bf16.mxu0 0
    %2010 = vmatpush2.bf16.msra.mxu0 0
    %2011 = vmatprep.subr.bf16.mxu0 0
    %2012 = vmatpush2.bf16.msra.mxu0 0
    %2013 = vmatprep.subr.bf16.mxu0 0
    %2014 = vmatpush2.bf16.msra.mxu0 0
    %2015 = vmatprep.subr.bf16.mxu0 0
    %2016 = vmatpush2.bf16.msra.mxu0 0
    %2017 = vmatprep.subr.bf16.mxu0 0
    %2018 = vmatpush2.bf16.msra.mxu0 0
    %2019 = vmatprep.subr.bf16.mxu0 0
    %2020 = vmatpush2.bf16.msra.mxu0 0
    %2021 = vmatprep.subr.bf16.mxu0 0
    %2022 = vmatpush2.bf16.msra.mxu0 0
    %2023 = vmatprep.subr.bf16.mxu0 0
    %2024 = vmatpush2.bf16.msra.mxu0 %v1903
    %2025 = vmatprep.mubr.bf16.mxu0 %v1882
    %2026 = vmatmul.mubr.bf16.gmra.mxu0 %v1833
    %v2027 = vpop.f32.mrf.mxu0
    %v2028 = vadd.f32 %v1940, %v2027
    %v2029 = vpop.f32.mrf.mxu0
    %v2030 = vpop.f32.mrf.mxu0
    %v2031 = vadd.f32 %v1943, %v2030
    %v2032 = vpop.f32.mrf.mxu0
    %2033 = vmatprep.mubr.bf16.mxu0 %v1885
    %2034 = vmatmul.mubr.bf16.gmra.mxu0 %v1837
    %v2035 = vpop.f32.mrf.mxu0
    %v2036 = vadd.f32 %v1948, %v2035
    %v2037 = vpop.f32.mrf.mxu0
    %v2038 = vpop.f32.mrf.mxu0
    %v2039 = vadd.f32 %v1951, %v2038
    %v2040 = vpop.f32.mrf.mxu0
    %2041 = vmatprep.mubr.bf16.mxu0 %v1888
    %2042 = vmatmul.mubr.bf16.gmra.mxu0 %v1841
    %v2043 = vpop.f32.mrf.mxu0
    %v2044 = vadd.f32 %v1956, %v2043
    %v2045 = vpop.f32.mrf.mxu0
    %v2046 = vpop.f32.mrf.mxu0
    %v2047 = vadd.f32 %v1959, %v2046
    %v2048 = vpop.f32.mrf.mxu0
    %2049 = vmatprep.mubr.bf16.mxu0 %v1891
    %2050 = vmatmul.mubr.bf16.gmra.mxu0 %v1845
    %v2051 = vpop.f32.mrf.mxu0
    %v2052 = vadd.f32 %v1964, %v2051
    %v2053 = vpop.f32.mrf.mxu0
    %v2054 = vpop.f32.mrf.mxu0
    %v2055 = vadd.f32 %v1967, %v2054
    %v2056 = vpop.f32.mrf.mxu0
    %2057 = vmatprep.mubr.bf16.mxu0 %v1894
    %2058 = vmatmul.mubr.bf16.gmra.mxu0 %v1849
    %v2059 = vpop.f32.mrf.mxu0
    %v2060 = vadd.f32 %v1972, %v2059
    %v2061 = vpop.f32.mrf.mxu0
    %v2062 = vpop.f32.mrf.mxu0
    %v2063 = vadd.f32 %v1975, %v2062
    %v2064 = vpop.f32.mrf.mxu0
    %2065 = vmatprep.mubr.bf16.mxu0 %v1897
    %2066 = vmatmul.mubr.bf16.gmra.mxu0 %v1853
    %v2067 = vpop.f32.mrf.mxu0
    %v2068 = vadd.f32 %v1980, %v2067
    %v2069 = vpop.f32.mrf.mxu0
    %v2070 = vpop.f32.mrf.mxu0
    %v2071 = vadd.f32 %v1983, %v2070
    %v2072 = vpop.f32.mrf.mxu0
    %2073 = vmatprep.mubr.bf16.mxu0 %v1900
    %2074 = vmatmul.mubr.bf16.gmra.mxu0 %v1857
    %v2075 = vpop.f32.mrf.mxu0
    %v2076 = vadd.f32 %v1988, %v2075
    %v2077 = vpop.f32.mrf.mxu0
    %v2078 = vpop.f32.mrf.mxu0
    %v2079 = vpop.f32.mrf.mxu0
    %2080 = vdwg.mxu0
    %v2081 = vpack.c.bf16 %v2031, %v2028
    %v2082 = vpack.c.bf16 %v2039, %v2036
    %v2083 = vpack.c.bf16 %v2047, %v2044
    %v2084 = vpack.c.bf16 %v2055, %v2052
    %v2085 = vpack.c.bf16 %v2063, %v2060
    %v2086 = vpack.c.bf16 %v2071, %v2068
    %v2087 = vpack.c.bf16 %v2076, %v2076
    %v2088 = vld [vmem:[%s2] sm:$0xf]
    %v2089 = vld [vmem:[%s2 + $0x4] sm:$0xf]
    %v2090 = vld [vmem:[%s2 + $0x8] sm:$0xf]
    %v2091 = vld [vmem:[%s2 + $0xc] sm:$0xf]
    %s2092 = scalar_lea.vmem %s5, 208
    %v2093 = vld [vmem:[%s2092] sm:$0xff]
    %v2094 = vld [vmem:[%s2092 + $0x8] sm:$0xff]
    %v2095 = vld [vmem:[%s2092 + $0x10] sm:$0xff]
    %v2096 = vld [vmem:[%s2092 + $0x18] sm:$0xff]
    %v2097 = vld [vmem:[%s2092 + $0x20] sm:$0xff]
    %v2098 = vld [vmem:[%s2092 + $0x28] sm:$0xff]
    %v2099 = vld [vmem:[%s2092 + $0x30] sm:$0xff]
    %v2100 = vld [vmem:[%s2092 + $0x38] sm:$0xff]
    %v2101 = vld [vmem:[%s2092 + $0x40] sm:$0xff]
    %v2102 = vld [vmem:[%s2092 + $0x48] sm:$0xff]
    %v2103 = vld [vmem:[%s2092 + $0x50] sm:$0xff]
    %v2104 = vld [vmem:[%s2092 + $0x58] sm:$0xff]
    %v2105 = vld [vmem:[%s2092 + $0x60] sm:$0xff]
    %v2106 = vld [vmem:[%s2092 + $0x68] sm:$0xff]
    %v2107 = vld [vmem:[%s2092 + $0x70] sm:$0xff]
    %v2108 = vld [vmem:[%s2092 + $0x78] sm:$0xff]
    %v2109 = vld [vmem:[%s2092 + $0x80] sm:$0xff]
    %v2110 = vld [vmem:[%s2092 + $0x88] sm:$0xff]
    %v2111 = vld [vmem:[%s2092 + $0x90] sm:$0xff]
    %v2112 = vld [vmem:[%s2092 + $0x98] sm:$0xff]
    %v2113 = vld [vmem:[%s2092 + $0xa0] sm:$0xff]
    %v2114 = vld [vmem:[%s2092 + $0xa8] sm:$0xff]
    %v2115 = vld [vmem:[%s2092 + $0xb0] sm:$0xff]
    %v2116 = vld [vmem:[%s2092 + $0xb8] sm:$0xff]
    %v2117 = vld [vmem:[%s2092 + $0xc0] sm:$0x11]
    %v2118 = vld [vmem:[%s2092 + $0xc8] sm:$0x11]
    %v2145 = vunpack.c.l.b16 %v2093
    %v2146 = vunpack.c.h.b16 %v2093
    %v2147 = vunpack.c.l.b16 %v2094
    %v2148 = vunpack.c.h.b16 %v2094
    %v2149 = vunpack.c.l.b16 %v2095
    %v2150 = vunpack.c.h.b16 %v2095
    %v2151 = vunpack.c.l.b16 %v2096
    %v2152 = vunpack.c.h.b16 %v2096
    %v2153 = vunpack.c.l.b16 %v2097
    %v2154 = vunpack.c.h.b16 %v2097
    %v2155 = vunpack.c.l.b16 %v2098
    %v2156 = vunpack.c.h.b16 %v2098
    %v2157 = vunpack.c.l.b16 %v2099
    %v2158 = vunpack.c.h.b16 %v2099
    %v2159 = vunpack.c.l.b16 %v2100
    %v2160 = vunpack.c.h.b16 %v2100
    %v2161 = vunpack.c.l.b16 %v2101
    %v2162 = vunpack.c.h.b16 %v2101
    %v2163 = vunpack.c.l.b16 %v2102
    %v2164 = vunpack.c.h.b16 %v2102
    %v2165 = vunpack.c.l.b16 %v2103
    %v2166 = vunpack.c.h.b16 %v2103
    %v2167 = vunpack.c.l.b16 %v2104
    %v2168 = vunpack.c.h.b16 %v2104
    %v2169 = vunpack.c.l.b16 %v2105
    %v2170 = vunpack.c.h.b16 %v2105
    %v2171 = vunpack.c.l.b16 %v2106
    %v2172 = vunpack.c.h.b16 %v2106
    %v2173 = vunpack.c.l.b16 %v2107
    %v2174 = vunpack.c.h.b16 %v2107
    %v2175 = vunpack.c.l.b16 %v2108
    %v2176 = vunpack.c.h.b16 %v2108
    %v2177 = vunpack.c.l.b16 %v2109
    %v2178 = vunpack.c.h.b16 %v2109
    %v2179 = vunpack.c.l.b16 %v2110
    %v2180 = vunpack.c.h.b16 %v2110
    %v2181 = vunpack.c.l.b16 %v2111
    %v2182 = vunpack.c.h.b16 %v2111
    %v2183 = vunpack.c.l.b16 %v2112
    %v2184 = vunpack.c.h.b16 %v2112
    %v2185 = vunpack.c.l.b16 %v2113
    %v2186 = vunpack.c.h.b16 %v2113
    %v2187 = vunpack.c.l.b16 %v2114
    %v2188 = vunpack.c.h.b16 %v2114
    %v2189 = vunpack.c.l.b16 %v2115
    %v2190 = vunpack.c.h.b16 %v2115
    %v2191 = vunpack.c.l.b16 %v2116
    %v2192 = vunpack.c.h.b16 %v2116
    %v2193 = vunpack.c.l.b16 %v2117
    %v2194 = vunpack.c.h.b16 %v2117
    %v2195 = vunpack.c.l.b16 %v2118
    %v2196 = vunpack.c.h.b16 %v2118
    %v2197 = vpack.c.b16 %v2149, %v2145
    %v2198 = vpack.c.b16 %v2150, %v2146
    %v2199 = vpack.c.b16 %v2151, %v2147
    %v2200 = vpack.c.b16 %v2152, %v2148
    %v2201 = vpack.c.b16 %v2157, %v2153
    %v2202 = vpack.c.b16 %v2158, %v2154
    %v2203 = vpack.c.b16 %v2159, %v2155
    %v2204 = vpack.c.b16 %v2160, %v2156
    %v2205 = vpack.c.b16 %v2165, %v2161
    %v2206 = vpack.c.b16 %v2166, %v2162
    %v2207 = vpack.c.b16 %v2167, %v2163
    %v2208 = vpack.c.b16 %v2168, %v2164
    %v2209 = vpack.c.b16 %v2173, %v2169
    %v2210 = vpack.c.b16 %v2174, %v2170
    %v2211 = vpack.c.b16 %v2175, %v2171
    %v2212 = vpack.c.b16 %v2176, %v2172
    %v2213 = vpack.c.b16 %v2181, %v2177
    %v2214 = vpack.c.b16 %v2182, %v2178
    %v2215 = vpack.c.b16 %v2183, %v2179
    %v2216 = vpack.c.b16 %v2184, %v2180
    %v2217 = vpack.c.b16 %v2189, %v2185
    %v2218 = vpack.c.b16 %v2190, %v2186
    %v2219 = vpack.c.b16 %v2191, %v2187
    %v2220 = vpack.c.b16 %v2192, %v2188
    %v2221 = vpack.c.b16 %v2193, %v2193
    %v2222 = vpack.c.b16 %v2194, %v2194
    %v2223 = vpack.c.b16 %v2195, %v2195
    %v2224 = vpack.c.b16 %v2196, %v2196
    %v2247 = vsel %vm1880, %v2200, 0
    %v2250 = vsel %vm1880, %v2204, 0
    %v2253 = vsel %vm1880, %v2208, 0
    %v2256 = vsel %vm1880, %v2212, 0
    %v2259 = vsel %vm1880, %v2216, 0
    %v2262 = vsel %vm1880, %v2220, 0
    %v2265 = vsel %vm1880, %v2224, 0
    %2267 = vmatprep.subr.bf16.mxu0 0
    %2268 = vmatpush1.bf16.msra.mxu0 %v1709
    %2269 = vmatprep.subr.bf16.mxu0 0
    %2270 = vmatpush1.bf16.msra.mxu0 %v1708
    %2271 = vmatprep.subr.bf16.mxu0 0
    %2272 = vmatpush1.bf16.msra.mxu0 %v1707
    %2273 = vmatprep.subr.bf16.mxu0 0
    %2274 = vmatpush1.bf16.msra.mxu0 %v1706
    %2275 = vmatprep.subr.bf16.mxu0 0
    %2276 = vmatpush1.bf16.msra.mxu0 %v1705
    %2277 = vmatprep.subr.bf16.mxu0 0
    %2278 = vmatpush1.bf16.msra.mxu0 %v1704
    %2279 = vmatprep.subr.bf16.mxu0 0
    %2280 = vmatpush1.bf16.msra.mxu0 %v1703
    %2281 = vmatprep.subr.bf16.mxu0 0
    %2282 = vmatpush1.bf16.msra.mxu0 %v1702
    %2283 = vmatprep.subr.bf16.mxu0 0
    %2284 = vmatpush2.bf16.msra.mxu0 %v1717
    %2285 = vmatprep.subr.bf16.mxu0 0
    %2286 = vmatpush2.bf16.msra.mxu0 %v1716
    %2287 = vmatprep.subr.bf16.mxu0 0
    %2288 = vmatpush2.bf16.msra.mxu0 %v1715
    %2289 = vmatprep.subr.bf16.mxu0 0
    %2290 = vmatpush2.bf16.msra.mxu0 %v1714
    %2291 = vmatprep.subr.bf16.mxu0 0
    %2292 = vmatpush2.bf16.msra.mxu0 %v1713
    %2293 = vmatprep.subr.bf16.mxu0 0
    %2294 = vmatpush2.bf16.msra.mxu0 %v1712
    %2295 = vmatprep.subr.bf16.mxu0 0
    %2296 = vmatpush2.bf16.msra.mxu0 %v1711
    %2297 = vmatprep.subr.bf16.mxu0 0
    %2298 = vmatpush2.bf16.msra.mxu0 %v1710
    %2299 = vmatprep.mubr.bf16.mxu0 %v2198
    %2300 = vmatmul.mubr.bf16.gmra.mxu0 %v2197
    %v2301 = vpop.f32.mrf.mxu0
    %v2302 = vadd.f32 0.0, %v2301
    %v2303 = vpop.f32.mrf.mxu0
    %v2304 = vpop.f32.mrf.mxu0
    %v2305 = vadd.f32 0.0, %v2304
    %v2306 = vpop.f32.mrf.mxu0
    %2307 = vmatprep.mubr.bf16.mxu0 %v2202
    %2308 = vmatmul.mubr.bf16.gmra.mxu0 %v2201
    %v2309 = vpop.f32.mrf.mxu0
    %v2310 = vadd.f32 0.0, %v2309
    %v2311 = vpop.f32.mrf.mxu0
    %v2312 = vpop.f32.mrf.mxu0
    %v2313 = vadd.f32 0.0, %v2312
    %v2314 = vpop.f32.mrf.mxu0
    %2315 = vmatprep.mubr.bf16.mxu0 %v2206
    %2316 = vmatmul.mubr.bf16.gmra.mxu0 %v2205
    %v2317 = vpop.f32.mrf.mxu0
    %v2318 = vadd.f32 0.0, %v2317
    %v2319 = vpop.f32.mrf.mxu0
    %v2320 = vpop.f32.mrf.mxu0
    %v2321 = vadd.f32 0.0, %v2320
    %v2322 = vpop.f32.mrf.mxu0
    %2323 = vmatprep.mubr.bf16.mxu0 %v2210
    %2324 = vmatmul.mubr.bf16.gmra.mxu0 %v2209
    %v2325 = vpop.f32.mrf.mxu0
    %v2326 = vadd.f32 0.0, %v2325
    %v2327 = vpop.f32.mrf.mxu0
    %v2328 = vpop.f32.mrf.mxu0
    %v2329 = vadd.f32 0.0, %v2328
    %v2330 = vpop.f32.mrf.mxu0
    %2331 = vmatprep.mubr.bf16.mxu0 %v2214
    %2332 = vmatmul.mubr.bf16.gmra.mxu0 %v2213
    %v2333 = vpop.f32.mrf.mxu0
    %v2334 = vadd.f32 0.0, %v2333
    %v2335 = vpop.f32.mrf.mxu0
    %v2336 = vpop.f32.mrf.mxu0
    %v2337 = vadd.f32 0.0, %v2336
    %v2338 = vpop.f32.mrf.mxu0
    %2339 = vmatprep.mubr.bf16.mxu0 %v2218
    %2340 = vmatmul.mubr.bf16.gmra.mxu0 %v2217
    %v2341 = vpop.f32.mrf.mxu0
    %v2342 = vadd.f32 0.0, %v2341
    %v2343 = vpop.f32.mrf.mxu0
    %v2344 = vpop.f32.mrf.mxu0
    %v2345 = vadd.f32 0.0, %v2344
    %v2346 = vpop.f32.mrf.mxu0
    %2347 = vmatprep.mubr.bf16.mxu0 %v2222
    %2348 = vmatmul.mubr.bf16.gmra.mxu0 %v2221
    %v2349 = vpop.f32.mrf.mxu0
    %v2350 = vadd.f32 0.0, %v2349
    %v2351 = vpop.f32.mrf.mxu0
    %v2352 = vpop.f32.mrf.mxu0
    %v2353 = vpop.f32.mrf.mxu0
    %2354 = vdwg.mxu0
    %2355 = vmatprep.subr.bf16.mxu0 0
    %2356 = vmatpush1.bf16.msra.mxu0 %v1725
    %2357 = vmatprep.subr.bf16.mxu0 0
    %2358 = vmatpush1.bf16.msra.mxu0 %v1724
    %2359 = vmatprep.subr.bf16.mxu0 0
    %2360 = vmatpush1.bf16.msra.mxu0 %v1723
    %2361 = vmatprep.subr.bf16.mxu0 0
    %2362 = vmatpush1.bf16.msra.mxu0 %v1722
    %2363 = vmatprep.subr.bf16.mxu0 0
    %2364 = vmatpush1.bf16.msra.mxu0 %v1721
    %2365 = vmatprep.subr.bf16.mxu0 0
    %2366 = vmatpush1.bf16.msra.mxu0 %v1720
    %2367 = vmatprep.subr.bf16.mxu0 0
    %2368 = vmatpush1.bf16.msra.mxu0 %v1719
    %2369 = vmatprep.subr.bf16.mxu0 0
    %2370 = vmatpush1.bf16.msra.mxu0 %v1718
    %2371 = vmatprep.subr.bf16.mxu0 0
    %2372 = vmatpush2.bf16.msra.mxu0 0
    %2373 = vmatprep.subr.bf16.mxu0 0
    %2374 = vmatpush2.bf16.msra.mxu0 0
    %2375 = vmatprep.subr.bf16.mxu0 0
    %2376 = vmatpush2.bf16.msra.mxu0 0
    %2377 = vmatprep.subr.bf16.mxu0 0
    %2378 = vmatpush2.bf16.msra.mxu0 0
    %2379 = vmatprep.subr.bf16.mxu0 0
    %2380 = vmatpush2.bf16.msra.mxu0 0
    %2381 = vmatprep.subr.bf16.mxu0 0
    %2382 = vmatpush2.bf16.msra.mxu0 0
    %2383 = vmatprep.subr.bf16.mxu0 0
    %2384 = vmatpush2.bf16.msra.mxu0 0
    %2385 = vmatprep.subr.bf16.mxu0 0
    %2386 = vmatpush2.bf16.msra.mxu0 %v1903
    %2387 = vmatprep.mubr.bf16.mxu0 %v2247
    %2388 = vmatmul.mubr.bf16.gmra.mxu0 %v2199
    %v2389 = vpop.f32.mrf.mxu0
    %v2390 = vadd.f32 %v2302, %v2389
    %v2391 = vpop.f32.mrf.mxu0
    %v2392 = vpop.f32.mrf.mxu0
    %v2393 = vadd.f32 %v2305, %v2392
    %v2394 = vpop.f32.mrf.mxu0
    %2395 = vmatprep.mubr.bf16.mxu0 %v2250
    %2396 = vmatmul.mubr.bf16.gmra.mxu0 %v2203
    %v2397 = vpop.f32.mrf.mxu0
    %v2398 = vadd.f32 %v2310, %v2397
    %v2399 = vpop.f32.mrf.mxu0
    %v2400 = vpop.f32.mrf.mxu0
    %v2401 = vadd.f32 %v2313, %v2400
    %v2402 = vpop.f32.mrf.mxu0
    %2403 = vmatprep.mubr.bf16.mxu0 %v2253
    %2404 = vmatmul.mubr.bf16.gmra.mxu0 %v2207
    %v2405 = vpop.f32.mrf.mxu0
    %v2406 = vadd.f32 %v2318, %v2405
    %v2407 = vpop.f32.mrf.mxu0
    %v2408 = vpop.f32.mrf.mxu0
    %v2409 = vadd.f32 %v2321, %v2408
    %v2410 = vpop.f32.mrf.mxu0
    %2411 = vmatprep.mubr.bf16.mxu0 %v2256
    %2412 = vmatmul.mubr.bf16.gmra.mxu0 %v2211
    %v2413 = vpop.f32.mrf.mxu0
    %v2414 = vadd.f32 %v2326, %v2413
    %v2415 = vpop.f32.mrf.mxu0
    %v2416 = vpop.f32.mrf.mxu0
    %v2417 = vadd.f32 %v2329, %v2416
    %v2418 = vpop.f32.mrf.mxu0
    %2419 = vmatprep.mubr.bf16.mxu0 %v2259
    %2420 = vmatmul.mubr.bf16.gmra.mxu0 %v2215
    %v2421 = vpop.f32.mrf.mxu0
    %v2422 = vadd.f32 %v2334, %v2421
    %v2423 = vpop.f32.mrf.mxu0
    %v2424 = vpop.f32.mrf.mxu0
    %v2425 = vadd.f32 %v2337, %v2424
    %v2426 = vpop.f32.mrf.mxu0
    %2427 = vmatprep.mubr.bf16.mxu0 %v2262
    %2428 = vmatmul.mubr.bf16.gmra.mxu0 %v2219
    %v2429 = vpop.f32.mrf.mxu0
    %v2430 = vadd.f32 %v2342, %v2429
    %v2431 = vpop.f32.mrf.mxu0
    %v2432 = vpop.f32.mrf.mxu0
    %v2433 = vadd.f32 %v2345, %v2432
    %v2434 = vpop.f32.mrf.mxu0
    %2435 = vmatprep.mubr.bf16.mxu0 %v2265
    %2436 = vmatmul.mubr.bf16.gmra.mxu0 %v2223
    %v2437 = vpop.f32.mrf.mxu0
    %v2438 = vadd.f32 %v2350, %v2437
    %v2439 = vpop.f32.mrf.mxu0
    %v2440 = vpop.f32.mrf.mxu0
    %v2441 = vpop.f32.mrf.mxu0
    %2442 = vdwg.mxu0
    %v2443 = vpack.c.bf16 %v2393, %v2390
    %v2444 = vpack.c.bf16 %v2401, %v2398
    %v2445 = vpack.c.bf16 %v2409, %v2406
    %v2446 = vpack.c.bf16 %v2417, %v2414
    %v2447 = vpack.c.bf16 %v2425, %v2422
    %v2448 = vpack.c.bf16 %v2433, %v2430
    %v2449 = vpack.c.bf16 %v2438, %v2438
    %s2450 = scalar_lea.vmem %s2, 16
    %v2451 = vld [vmem:[%s2450] sm:$0xf]
    %v2452 = vld [vmem:[%s2450 + $0x4] sm:$0xf]
    %v2453 = vld [vmem:[%s2450 + $0x8] sm:$0xf]
    %v2454 = vld [vmem:[%s2450 + $0xc] sm:$0xf]
    %v2459 = vunpack.c.l.b16 %v2451
    %v2460 = vunpack.c.l.b16 %v2452
    %v2461 = vunpack.c.l.b16 %v2453
    %v2462 = vunpack.c.l.b16 %v2454
    %v2463 = vpack.c.b16 %v2460, %v2459
    %v2464 = vpack.c.b16 %v2462, %v2461
    %vm2467 = vcmask 261120
    %v2469 = vsel %vm2467, %v2443, 0
    %v2472 = vsel %vm2467, %v2444, 0
    %v2475 = vsel %vm2467, %v2445, 0
    %v2478 = vsel %vm2467, %v2446, 0
    %v2481 = vsel %vm2467, %v2447, 0
    %v2484 = vsel %vm2467, %v2448, 0
    %v2487 = vsel %vm2467, %v2449, 0
    %2489 = vmatprep.subr.bf16.mxu0 0
    %2490 = vmatpush1.bf16.msra.mxu0 0
    %2491 = vmatprep.subr.bf16.mxu0 0
    %2492 = vmatpush1.bf16.msra.mxu0 0
    %2493 = vmatprep.subr.bf16.mxu0 0
    %2494 = vmatpush1.bf16.msra.mxu0 0
    %2495 = vmatprep.subr.bf16.mxu0 0
    %2496 = vmatpush1.bf16.msra.mxu0 0
    %2497 = vmatprep.subr.bf16.mxu0 0
    %2498 = vmatpush1.bf16.msra.mxu0 0
    %2499 = vmatprep.subr.bf16.mxu0 0
    %2500 = vmatpush1.bf16.msra.mxu0 0
    %2501 = vmatprep.subr.bf16.mxu0 0
    %2502 = vmatpush1.bf16.msra.mxu0 %v2464
    %2503 = vmatprep.subr.bf16.mxu0 0
    %2504 = vmatpush1.bf16.msra.mxu0 %v2463
    %2505 = vmatprep.subr.bf16.mxu0 0
    %2506 = vmatpush2.bf16.msra.mxu0 0
    %2507 = vmatprep.subr.bf16.mxu0 0
    %2508 = vmatpush2.bf16.msra.mxu0 0
    %2509 = vmatprep.subr.bf16.mxu0 0
    %2510 = vmatpush2.bf16.msra.mxu0 0
    %2511 = vmatprep.subr.bf16.mxu0 0
    %2512 = vmatpush2.bf16.msra.mxu0 0
    %2513 = vmatprep.subr.bf16.mxu0 0
    %2514 = vmatpush2.bf16.msra.mxu0 0
    %2515 = vmatprep.subr.bf16.mxu0 0
    %2516 = vmatpush2.bf16.msra.mxu0 0
    %2517 = vmatprep.subr.bf16.mxu0 0
    %2518 = vmatpush2.bf16.msra.mxu0 0
    %2519 = vmatprep.subr.bf16.mxu0 0
    %2520 = vmatpush2.bf16.msra.mxu0 0
    %2521 = vmatprep.mubr.bf16.mxu0 0
    %2522 = vmatmul.mubr.bf16.gmra.mxu0 %v2469
    %v2523 = vpop.f32.mrf.mxu0
    %v2524 = vadd.f32 0.0, %v2523
    %v2525 = vpop.f32.mrf.mxu0
    %v2526 = vpop.f32.mrf.mxu0
    %v2527 = vadd.f32 0.0, %v2526
    %v2528 = vpop.f32.mrf.mxu0
    %2529 = vmatprep.mubr.bf16.mxu0 0
    %2530 = vmatmul.mubr.bf16.gmra.mxu0 %v2472
    %v2531 = vpop.f32.mrf.mxu0
    %v2532 = vadd.f32 0.0, %v2531
    %v2533 = vpop.f32.mrf.mxu0
    %v2534 = vpop.f32.mrf.mxu0
    %v2535 = vadd.f32 0.0, %v2534
    %v2536 = vpop.f32.mrf.mxu0
    %2537 = vmatprep.mubr.bf16.mxu0 0
    %2538 = vmatmul.mubr.bf16.gmra.mxu0 %v2475
    %v2539 = vpop.f32.mrf.mxu0
    %v2540 = vadd.f32 0.0, %v2539
    %v2541 = vpop.f32.mrf.mxu0
    %v2542 = vpop.f32.mrf.mxu0
    %v2543 = vadd.f32 0.0, %v2542
    %v2544 = vpop.f32.mrf.mxu0
    %2545 = vmatprep.mubr.bf16.mxu0 0
    %2546 = vmatmul.mubr.bf16.gmra.mxu0 %v2478
    %v2547 = vpop.f32.mrf.mxu0
    %v2548 = vadd.f32 0.0, %v2547
    %v2549 = vpop.f32.mrf.mxu0
    %v2550 = vpop.f32.mrf.mxu0
    %v2551 = vadd.f32 0.0, %v2550
    %v2552 = vpop.f32.mrf.mxu0
    %2553 = vmatprep.mubr.bf16.mxu0 0
    %2554 = vmatmul.mubr.bf16.gmra.mxu0 %v2481
    %v2555 = vpop.f32.mrf.mxu0
    %v2556 = vadd.f32 0.0, %v2555
    %v2557 = vpop.f32.mrf.mxu0
    %v2558 = vpop.f32.mrf.mxu0
    %v2559 = vadd.f32 0.0, %v2558
    %v2560 = vpop.f32.mrf.mxu0
    %2561 = vmatprep.mubr.bf16.mxu0 0
    %2562 = vmatmul.mubr.bf16.gmra.mxu0 %v2484
    %v2563 = vpop.f32.mrf.mxu0
    %v2564 = vadd.f32 0.0, %v2563
    %v2565 = vpop.f32.mrf.mxu0
    %v2566 = vpop.f32.mrf.mxu0
    %v2567 = vadd.f32 0.0, %v2566
    %v2568 = vpop.f32.mrf.mxu0
    %2569 = vmatprep.mubr.bf16.mxu0 0
    %2570 = vmatmul.mubr.bf16.gmra.mxu0 %v2487
    %v2571 = vpop.f32.mrf.mxu0
    %v2572 = vadd.f32 0.0, %v2571
    %v2573 = vpop.f32.mrf.mxu0
    %v2574 = vpop.f32.mrf.mxu0
    %v2575 = vpop.f32.mrf.mxu0
    %2576 = vdwg.mxu0
    %v2581 = vunpack.c.l.b16 %v2088
    %v2582 = vunpack.c.l.b16 %v2089
    %v2583 = vunpack.c.l.b16 %v2090
    %v2584 = vunpack.c.l.b16 %v2091
    %v2585 = vpack.c.b16 %v2582, %v2581
    %v2586 = vpack.c.b16 %v2584, %v2583
    %v2590 = vsel %vm2467, %v2081, 0
    %v2593 = vsel %vm2467, %v2082, 0
    %v2596 = vsel %vm2467, %v2083, 0
    %v2599 = vsel %vm2467, %v2084, 0
    %v2602 = vsel %vm2467, %v2085, 0
    %v2605 = vsel %vm2467, %v2086, 0
    %v2608 = vsel %vm2467, %v2087, 0
    %2610 = vmatprep.subr.bf16.mxu0 0
    %2611 = vmatpush1.bf16.msra.mxu0 0
    %2612 = vmatprep.subr.bf16.mxu0 0
    %2613 = vmatpush1.bf16.msra.mxu0 0
    %2614 = vmatprep.subr.bf16.mxu0 0
    %2615 = vmatpush1.bf16.msra.mxu0 0
    %2616 = vmatprep.subr.bf16.mxu0 0
    %2617 = vmatpush1.bf16.msra.mxu0 0
    %2618 = vmatprep.subr.bf16.mxu0 0
    %2619 = vmatpush1.bf16.msra.mxu0 0
    %2620 = vmatprep.subr.bf16.mxu0 0
    %2621 = vmatpush1.bf16.msra.mxu0 0
    %2622 = vmatprep.subr.bf16.mxu0 0
    %2623 = vmatpush1.bf16.msra.mxu0 %v2586
    %2624 = vmatprep.subr.bf16.mxu0 0
    %2625 = vmatpush1.bf16.msra.mxu0 %v2585
    %2626 = vmatprep.subr.bf16.mxu0 0
    %2627 = vmatpush2.bf16.msra.mxu0 0
    %2628 = vmatprep.subr.bf16.mxu0 0
    %2629 = vmatpush2.bf16.msra.mxu0 0
    %2630 = vmatprep.subr.bf16.mxu0 0
    %2631 = vmatpush2.bf16.msra.mxu0 0
    %2632 = vmatprep.subr.bf16.mxu0 0
    %2633 = vmatpush2.bf16.msra.mxu0 0
    %2634 = vmatprep.subr.bf16.mxu0 0
    %2635 = vmatpush2.bf16.msra.mxu0 0
    %2636 = vmatprep.subr.bf16.mxu0 0
    %2637 = vmatpush2.bf16.msra.mxu0 0
    %2638 = vmatprep.subr.bf16.mxu0 0
    %2639 = vmatpush2.bf16.msra.mxu0 0
    %2640 = vmatprep.subr.bf16.mxu0 0
    %2641 = vmatpush2.bf16.msra.mxu0 0
    %2642 = vmatprep.mubr.bf16.mxu0 0
    %2643 = vmatmul.mubr.bf16.gmra.mxu0 %v2590
    %v2644 = vpop.f32.mrf.mxu0
    %v2645 = vadd.f32 %v2524, %v2644
    %v2646 = vpop.f32.mrf.mxu0
    %v2647 = vpop.f32.mrf.mxu0
    %v2648 = vadd.f32 %v2527, %v2647
    %v2649 = vpop.f32.mrf.mxu0
    %2650 = vmatprep.mubr.bf16.mxu0 0
    %2651 = vmatmul.mubr.bf16.gmra.mxu0 %v2593
    %v2652 = vpop.f32.mrf.mxu0
    %v2653 = vadd.f32 %v2532, %v2652
    %v2654 = vpop.f32.mrf.mxu0
    %v2655 = vpop.f32.mrf.mxu0
    %v2656 = vadd.f32 %v2535, %v2655
    %v2657 = vpop.f32.mrf.mxu0
    %2658 = vmatprep.mubr.bf16.mxu0 0
    %2659 = vmatmul.mubr.bf16.gmra.mxu0 %v2596
    %v2660 = vpop.f32.mrf.mxu0
    %v2661 = vadd.f32 %v2540, %v2660
    %v2662 = vpop.f32.mrf.mxu0
    %v2663 = vpop.f32.mrf.mxu0
    %v2664 = vadd.f32 %v2543, %v2663
    %v2665 = vpop.f32.mrf.mxu0
    %2666 = vmatprep.mubr.bf16.mxu0 0
    %2667 = vmatmul.mubr.bf16.gmra.mxu0 %v2599
    %v2668 = vpop.f32.mrf.mxu0
    %v2669 = vadd.f32 %v2548, %v2668
    %v2670 = vpop.f32.mrf.mxu0
    %v2671 = vpop.f32.mrf.mxu0
    %v2672 = vadd.f32 %v2551, %v2671
    %v2673 = vpop.f32.mrf.mxu0
    %2674 = vmatprep.mubr.bf16.mxu0 0
    %2675 = vmatmul.mubr.bf16.gmra.mxu0 %v2602
    %v2676 = vpop.f32.mrf.mxu0
    %v2677 = vadd.f32 %v2556, %v2676
    %v2678 = vpop.f32.mrf.mxu0
    %v2679 = vpop.f32.mrf.mxu0
    %v2680 = vadd.f32 %v2559, %v2679
    %v2681 = vpop.f32.mrf.mxu0
    %2682 = vmatprep.mubr.bf16.mxu0 0
    %2683 = vmatmul.mubr.bf16.gmra.mxu0 %v2605
    %v2684 = vpop.f32.mrf.mxu0
    %v2685 = vadd.f32 %v2564, %v2684
    %v2686 = vpop.f32.mrf.mxu0
    %v2687 = vpop.f32.mrf.mxu0
    %v2688 = vadd.f32 %v2567, %v2687
    %v2689 = vpop.f32.mrf.mxu0
    %2690 = vmatprep.mubr.bf16.mxu0 0
    %2691 = vmatmul.mubr.bf16.gmra.mxu0 %v2608
    %v2692 = vpop.f32.mrf.mxu0
    %v2693 = vadd.f32 %v2572, %v2692
    %v2694 = vpop.f32.mrf.mxu0
    %v2695 = vpop.f32.mrf.mxu0
    %v2696 = vpop.f32.mrf.mxu0
    %2697 = vdwg.mxu0
    %s2698 = scalar_lea.vmem %s5, 416
    %v2699 = vld [vmem:[%s2698] sm:$0xff]
    %v2700 = vld [vmem:[%s2698 + $0x8] sm:$0xff]
    %v2701 = vld [vmem:[%s2698 + $0x10] sm:$0xff]
    %v2702 = vld [vmem:[%s2698 + $0x18] sm:$0xff]
    %v2703 = vld [vmem:[%s2698 + $0x20] sm:$0xff]
    %v2704 = vld [vmem:[%s2698 + $0x28] sm:$0xff]
    %v2705 = vld [vmem:[%s2698 + $0x30] sm:$0xff]
    %v2706 = vld [vmem:[%s2698 + $0x38] sm:$0xff]
    %v2707 = vld [vmem:[%s2698 + $0x40] sm:$0xff]
    %v2708 = vld [vmem:[%s2698 + $0x48] sm:$0xff]
    %v2709 = vld [vmem:[%s2698 + $0x50] sm:$0xff]
    %v2710 = vld [vmem:[%s2698 + $0x58] sm:$0xff]
    %v2711 = vld [vmem:[%s2698 + $0x60] sm:$0xff]
    %v2712 = vld [vmem:[%s2698 + $0x68] sm:$0xff]
    %v2713 = vld [vmem:[%s2698 + $0x70] sm:$0xff]
    %v2714 = vld [vmem:[%s2698 + $0x78] sm:$0xff]
    %v2715 = vld [vmem:[%s2698 + $0x80] sm:$0xff]
    %v2716 = vld [vmem:[%s2698 + $0x88] sm:$0xff]
    %v2717 = vld [vmem:[%s2698 + $0x90] sm:$0xff]
    %v2718 = vld [vmem:[%s2698 + $0x98] sm:$0xff]
    %v2719 = vld [vmem:[%s2698 + $0xa0] sm:$0xff]
    %v2720 = vld [vmem:[%s2698 + $0xa8] sm:$0xff]
    %v2721 = vld [vmem:[%s2698 + $0xb0] sm:$0xff]
    %v2722 = vld [vmem:[%s2698 + $0xb8] sm:$0xff]
    %v2723 = vld [vmem:[%s2698 + $0xc0] sm:$0x11]
    %v2724 = vld [vmem:[%s2698 + $0xc8] sm:$0x11]
    %v2751 = vunpack.c.l.b16 %v2699
    %v2752 = vunpack.c.h.b16 %v2699
    %v2753 = vunpack.c.l.b16 %v2700
    %v2754 = vunpack.c.h.b16 %v2700
    %v2755 = vunpack.c.l.b16 %v2701
    %v2756 = vunpack.c.h.b16 %v2701
    %v2757 = vunpack.c.l.b16 %v2702
    %v2758 = vunpack.c.h.b16 %v2702
    %v2759 = vunpack.c.l.b16 %v2703
    %v2760 = vunpack.c.h.b16 %v2703
    %v2761 = vunpack.c.l.b16 %v2704
    %v2762 = vunpack.c.h.b16 %v2704
    %v2763 = vunpack.c.l.b16 %v2705
    %v2764 = vunpack.c.h.b16 %v2705
    %v2765 = vunpack.c.l.b16 %v2706
    %v2766 = vunpack.c.h.b16 %v2706
    %v2767 = vunpack.c.l.b16 %v2707
    %v2768 = vunpack.c.h.b16 %v2707
    %v2769 = vunpack.c.l.b16 %v2708
    %v2770 = vunpack.c.h.b16 %v2708
    %v2771 = vunpack.c.l.b16 %v2709
    %v2772 = vunpack.c.h.b16 %v2709
    %v2773 = vunpack.c.l.b16 %v2710
    %v2774 = vunpack.c.h.b16 %v2710
    %v2775 = vunpack.c.l.b16 %v2711
    %v2776 = vunpack.c.h.b16 %v2711
    %v2777 = vunpack.c.l.b16 %v2712
    %v2778 = vunpack.c.h.b16 %v2712
    %v2779 = vunpack.c.l.b16 %v2713
    %v2780 = vunpack.c.h.b16 %v2713
    %v2781 = vunpack.c.l.b16 %v2714
    %v2782 = vunpack.c.h.b16 %v2714
    %v2783 = vunpack.c.l.b16 %v2715
    %v2784 = vunpack.c.h.b16 %v2715
    %v2785 = vunpack.c.l.b16 %v2716
    %v2786 = vunpack.c.h.b16 %v2716
    %v2787 = vunpack.c.l.b16 %v2717
    %v2788 = vunpack.c.h.b16 %v2717
    %v2789 = vunpack.c.l.b16 %v2718
    %v2790 = vunpack.c.h.b16 %v2718
    %v2791 = vunpack.c.l.b16 %v2719
    %v2792 = vunpack.c.h.b16 %v2719
    %v2793 = vunpack.c.l.b16 %v2720
    %v2794 = vunpack.c.h.b16 %v2720
    %v2795 = vunpack.c.l.b16 %v2721
    %v2796 = vunpack.c.h.b16 %v2721
    %v2797 = vunpack.c.l.b16 %v2722
    %v2798 = vunpack.c.h.b16 %v2722
    %v2799 = vunpack.c.l.b16 %v2723
    %v2800 = vunpack.c.h.b16 %v2723
    %v2801 = vunpack.c.l.b16 %v2724
    %v2802 = vunpack.c.h.b16 %v2724
    %v2803 = vpack.c.b16 %v2755, %v2751
    %v2804 = vpack.c.b16 %v2756, %v2752
    %v2805 = vpack.c.b16 %v2757, %v2753
    %v2806 = vpack.c.b16 %v2758, %v2754
    %v2807 = vpack.c.b16 %v2763, %v2759
    %v2808 = vpack.c.b16 %v2764, %v2760
    %v2809 = vpack.c.b16 %v2765, %v2761
    %v2810 = vpack.c.b16 %v2766, %v2762
    %v2811 = vpack.c.b16 %v2771, %v2767
    %v2812 = vpack.c.b16 %v2772, %v2768
    %v2813 = vpack.c.b16 %v2773, %v2769
    %v2814 = vpack.c.b16 %v2774, %v2770
    %v2815 = vpack.c.b16 %v2779, %v2775
    %v2816 = vpack.c.b16 %v2780, %v2776
    %v2817 = vpack.c.b16 %v2781, %v2777
    %v2818 = vpack.c.b16 %v2782, %v2778
    %v2819 = vpack.c.b16 %v2787, %v2783
    %v2820 = vpack.c.b16 %v2788, %v2784
    %v2821 = vpack.c.b16 %v2789, %v2785
    %v2822 = vpack.c.b16 %v2790, %v2786
    %v2823 = vpack.c.b16 %v2795, %v2791
    %v2824 = vpack.c.b16 %v2796, %v2792
    %v2825 = vpack.c.b16 %v2797, %v2793
    %v2826 = vpack.c.b16 %v2798, %v2794
    %v2827 = vpack.c.b16 %v2799, %v2799
    %v2828 = vpack.c.b16 %v2800, %v2800
    %v2829 = vpack.c.b16 %v2801, %v2801
    %v2830 = vpack.c.b16 %v2802, %v2802
    %v2853 = vsel %vm1880, %v2806, 0
    %v2856 = vsel %vm1880, %v2810, 0
    %v2859 = vsel %vm1880, %v2814, 0
    %v2862 = vsel %vm1880, %v2818, 0
    %v2865 = vsel %vm1880, %v2822, 0
    %v2868 = vsel %vm1880, %v2826, 0
    %v2871 = vsel %vm1880, %v2830, 0
    %2873 = vmatprep.subr.bf16.mxu0 0
    %2874 = vmatpush1.bf16.msra.mxu0 %v1709
    %2875 = vmatprep.subr.bf16.mxu0 0
    %2876 = vmatpush1.bf16.msra.mxu0 %v1708
    %2877 = vmatprep.subr.bf16.mxu0 0
    %2878 = vmatpush1.bf16.msra.mxu0 %v1707
    %2879 = vmatprep.subr.bf16.mxu0 0
    %2880 = vmatpush1.bf16.msra.mxu0 %v1706
    %2881 = vmatprep.subr.bf16.mxu0 0
    %2882 = vmatpush1.bf16.msra.mxu0 %v1705
    %2883 = vmatprep.subr.bf16.mxu0 0
    %2884 = vmatpush1.bf16.msra.mxu0 %v1704
    %2885 = vmatprep.subr.bf16.mxu0 0
    %2886 = vmatpush1.bf16.msra.mxu0 %v1703
    %2887 = vmatprep.subr.bf16.mxu0 0
    %2888 = vmatpush1.bf16.msra.mxu0 %v1702
    %2889 = vmatprep.subr.bf16.mxu0 0
    %2890 = vmatpush2.bf16.msra.mxu0 %v1717
    %2891 = vmatprep.subr.bf16.mxu0 0
    %2892 = vmatpush2.bf16.msra.mxu0 %v1716
    %2893 = vmatprep.subr.bf16.mxu0 0
    %2894 = vmatpush2.bf16.msra.mxu0 %v1715
    %2895 = vmatprep.subr.bf16.mxu0 0
    %2896 = vmatpush2.bf16.msra.mxu0 %v1714
    %2897 = vmatprep.subr.bf16.mxu0 0
    %2898 = vmatpush2.bf16.msra.mxu0 %v1713
    %2899 = vmatprep.subr.bf16.mxu0 0
    %2900 = vmatpush2.bf16.msra.mxu0 %v1712
    %2901 = vmatprep.subr.bf16.mxu0 0
    %2902 = vmatpush2.bf16.msra.mxu0 %v1711
    %2903 = vmatprep.subr.bf16.mxu0 0
    %2904 = vmatpush2.bf16.msra.mxu0 %v1710
    %2905 = vmatprep.mubr.bf16.mxu0 %v2804
    %2906 = vmatmul.mubr.bf16.gmra.mxu0 %v2803
    %v2907 = vpop.f32.mrf.mxu0
    %v2908 = vadd.f32 0.0, %v2907
    %v2909 = vpop.f32.mrf.mxu0
    %v2910 = vpop.f32.mrf.mxu0
    %v2911 = vadd.f32 0.0, %v2910
    %v2912 = vpop.f32.mrf.mxu0
    %2913 = vmatprep.mubr.bf16.mxu0 %v2808
    %2914 = vmatmul.mubr.bf16.gmra.mxu0 %v2807
    %v2915 = vpop.f32.mrf.mxu0
    %v2916 = vadd.f32 0.0, %v2915
    %v2917 = vpop.f32.mrf.mxu0
    %v2918 = vpop.f32.mrf.mxu0
    %v2919 = vadd.f32 0.0, %v2918
    %v2920 = vpop.f32.mrf.mxu0
    %2921 = vmatprep.mubr.bf16.mxu0 %v2812
    %2922 = vmatmul.mubr.bf16.gmra.mxu0 %v2811
    %v2923 = vpop.f32.mrf.mxu0
    %v2924 = vadd.f32 0.0, %v2923
    %v2925 = vpop.f32.mrf.mxu0
    %v2926 = vpop.f32.mrf.mxu0
    %v2927 = vadd.f32 0.0, %v2926
    %v2928 = vpop.f32.mrf.mxu0
    %2929 = vmatprep.mubr.bf16.mxu0 %v2816
    %2930 = vmatmul.mubr.bf16.gmra.mxu0 %v2815
    %v2931 = vpop.f32.mrf.mxu0
    %v2932 = vadd.f32 0.0, %v2931
    %v2933 = vpop.f32.mrf.mxu0
    %v2934 = vpop.f32.mrf.mxu0
    %v2935 = vadd.f32 0.0, %v2934
    %v2936 = vpop.f32.mrf.mxu0
    %2937 = vmatprep.mubr.bf16.mxu0 %v2820
    %2938 = vmatmul.mubr.bf16.gmra.mxu0 %v2819
    %v2939 = vpop.f32.mrf.mxu0
    %v2940 = vadd.f32 0.0, %v2939
    %v2941 = vpop.f32.mrf.mxu0
    %v2942 = vpop.f32.mrf.mxu0
    %v2943 = vadd.f32 0.0, %v2942
    %v2944 = vpop.f32.mrf.mxu0
    %2945 = vmatprep.mubr.bf16.mxu0 %v2824
    %2946 = vmatmul.mubr.bf16.gmra.mxu0 %v2823
    %v2947 = vpop.f32.mrf.mxu0
    %v2948 = vadd.f32 0.0, %v2947
    %v2949 = vpop.f32.mrf.mxu0
    %v2950 = vpop.f32.mrf.mxu0
    %v2951 = vadd.f32 0.0, %v2950
    %v2952 = vpop.f32.mrf.mxu0
    %2953 = vmatprep.mubr.bf16.mxu0 %v2828
    %2954 = vmatmul.mubr.bf16.gmra.mxu0 %v2827
    %v2955 = vpop.f32.mrf.mxu0
    %v2956 = vadd.f32 0.0, %v2955
    %v2957 = vpop.f32.mrf.mxu0
    %v2958 = vpop.f32.mrf.mxu0
    %v2959 = vpop.f32.mrf.mxu0
    %2960 = vdwg.mxu0
    %2961 = vmatprep.subr.bf16.mxu0 0
    %2962 = vmatpush1.bf16.msra.mxu0 %v1725
    %2963 = vmatprep.subr.bf16.mxu0 0
    %2964 = vmatpush1.bf16.msra.mxu0 %v1724
    %2965 = vmatprep.subr.bf16.mxu0 0
    %2966 = vmatpush1.bf16.msra.mxu0 %v1723
    %2967 = vmatprep.subr.bf16.mxu0 0
    %2968 = vmatpush1.bf16.msra.mxu0 %v1722
    %2969 = vmatprep.subr.bf16.mxu0 0
    %2970 = vmatpush1.bf16.msra.mxu0 %v1721
    %2971 = vmatprep.subr.bf16.mxu0 0
    %2972 = vmatpush1.bf16.msra.mxu0 %v1720
    %2973 = vmatprep.subr.bf16.mxu0 0
    %2974 = vmatpush1.bf16.msra.mxu0 %v1719
    %2975 = vmatprep.subr.bf16.mxu0 0
    %2976 = vmatpush1.bf16.msra.mxu0 %v1718
    %2977 = vmatprep.subr.bf16.mxu0 0
    %2978 = vmatpush2.bf16.msra.mxu0 0
    %2979 = vmatprep.subr.bf16.mxu0 0
    %2980 = vmatpush2.bf16.msra.mxu0 0
    %2981 = vmatprep.subr.bf16.mxu0 0
    %2982 = vmatpush2.bf16.msra.mxu0 0
    %2983 = vmatprep.subr.bf16.mxu0 0
    %2984 = vmatpush2.bf16.msra.mxu0 0
    %2985 = vmatprep.subr.bf16.mxu0 0
    %2986 = vmatpush2.bf16.msra.mxu0 0
    %2987 = vmatprep.subr.bf16.mxu0 0
    %2988 = vmatpush2.bf16.msra.mxu0 0
    %2989 = vmatprep.subr.bf16.mxu0 0
    %2990 = vmatpush2.bf16.msra.mxu0 0
    %2991 = vmatprep.subr.bf16.mxu0 0
    %2992 = vmatpush2.bf16.msra.mxu0 %v1903
    %2993 = vmatprep.mubr.bf16.mxu0 %v2853
    %2994 = vmatmul.mubr.bf16.gmra.mxu0 %v2805
    %v2995 = vpop.f32.mrf.mxu0
    %v2996 = vadd.f32 %v2908, %v2995
    %v2997 = vpop.f32.mrf.mxu0
    %v2998 = vpop.f32.mrf.mxu0
    %v2999 = vadd.f32 %v2911, %v2998
    %v3000 = vpop.f32.mrf.mxu0
    %3001 = vmatprep.mubr.bf16.mxu0 %v2856
    %3002 = vmatmul.mubr.bf16.gmra.mxu0 %v2809
    %v3003 = vpop.f32.mrf.mxu0
    %v3004 = vadd.f32 %v2916, %v3003
    %v3005 = vpop.f32.mrf.mxu0
    %v3006 = vpop.f32.mrf.mxu0
    %v3007 = vadd.f32 %v2919, %v3006
    %v3008 = vpop.f32.mrf.mxu0
    %3009 = vmatprep.mubr.bf16.mxu0 %v2859
    %3010 = vmatmul.mubr.bf16.gmra.mxu0 %v2813
    %v3011 = vpop.f32.mrf.mxu0
    %v3012 = vadd.f32 %v2924, %v3011
    %v3013 = vpop.f32.mrf.mxu0
    %v3014 = vpop.f32.mrf.mxu0
    %v3015 = vadd.f32 %v2927, %v3014
    %v3016 = vpop.f32.mrf.mxu0
    %3017 = vmatprep.mubr.bf16.mxu0 %v2862
    %3018 = vmatmul.mubr.bf16.gmra.mxu0 %v2817
    %v3019 = vpop.f32.mrf.mxu0
    %v3020 = vadd.f32 %v2932, %v3019
    %v3021 = vpop.f32.mrf.mxu0
    %v3022 = vpop.f32.mrf.mxu0
    %v3023 = vadd.f32 %v2935, %v3022
    %v3024 = vpop.f32.mrf.mxu0
    %3025 = vmatprep.mubr.bf16.mxu0 %v2865
    %3026 = vmatmul.mubr.bf16.gmra.mxu0 %v2821
    %v3027 = vpop.f32.mrf.mxu0
    %v3028 = vadd.f32 %v2940, %v3027
    %v3029 = vpop.f32.mrf.mxu0
    %v3030 = vpop.f32.mrf.mxu0
    %v3031 = vadd.f32 %v2943, %v3030
    %v3032 = vpop.f32.mrf.mxu0
    %3033 = vmatprep.mubr.bf16.mxu0 %v2868
    %3034 = vmatmul.mubr.bf16.gmra.mxu0 %v2825
    %v3035 = vpop.f32.mrf.mxu0
    %v3036 = vadd.f32 %v2948, %v3035
    %v3037 = vpop.f32.mrf.mxu0
    %v3038 = vpop.f32.mrf.mxu0
    %v3039 = vadd.f32 %v2951, %v3038
    %v3040 = vpop.f32.mrf.mxu0
    %3041 = vmatprep.mubr.bf16.mxu0 %v2871
    %3042 = vmatmul.mubr.bf16.gmra.mxu0 %v2829
    %v3043 = vpop.f32.mrf.mxu0
    %v3044 = vadd.f32 %v2956, %v3043
    %v3045 = vpop.f32.mrf.mxu0
    %v3046 = vpop.f32.mrf.mxu0
    %v3047 = vpop.f32.mrf.mxu0
    %3048 = vdwg.mxu0
    %v3049 = vpack.c.bf16 %v2999, %v2996
    %v3050 = vpack.c.bf16 %v3007, %v3004
    %v3051 = vpack.c.bf16 %v3015, %v3012
    %v3052 = vpack.c.bf16 %v3023, %v3020
    %v3053 = vpack.c.bf16 %v3031, %v3028
    %v3054 = vpack.c.bf16 %v3039, %v3036
    %v3055 = vpack.c.bf16 %v3044, %v3044
    %s3056 = scalar_lea.vmem %s2, 32
    %v3057 = vld [vmem:[%s3056] sm:$0xf]
    %v3058 = vld [vmem:[%s3056 + $0x4] sm:$0xf]
    %v3059 = vld [vmem:[%s3056 + $0x8] sm:$0xf]
    %v3060 = vld [vmem:[%s3056 + $0xc] sm:$0xf]
    %v3065 = vunpack.c.l.b16 %v3057
    %v3066 = vunpack.c.l.b16 %v3058
    %v3067 = vunpack.c.l.b16 %v3059
    %v3068 = vunpack.c.l.b16 %v3060
    %v3069 = vpack.c.b16 %v3066, %v3065
    %v3070 = vpack.c.b16 %v3068, %v3067
    %v3074 = vsel %vm2467, %v3049, 0
    %v3077 = vsel %vm2467, %v3050, 0
    %v3080 = vsel %vm2467, %v3051, 0
    %v3083 = vsel %vm2467, %v3052, 0
    %v3086 = vsel %vm2467, %v3053, 0
    %v3089 = vsel %vm2467, %v3054, 0
    %v3092 = vsel %vm2467, %v3055, 0
    %3094 = vmatprep.subr.bf16.mxu0 0
    %3095 = vmatpush1.bf16.msra.mxu0 0
    %3096 = vmatprep.subr.bf16.mxu0 0
    %3097 = vmatpush1.bf16.msra.mxu0 0
    %3098 = vmatprep.subr.bf16.mxu0 0
    %3099 = vmatpush1.bf16.msra.mxu0 0
    %3100 = vmatprep.subr.bf16.mxu0 0
    %3101 = vmatpush1.bf16.msra.mxu0 0
    %3102 = vmatprep.subr.bf16.mxu0 0
    %3103 = vmatpush1.bf16.msra.mxu0 0
    %3104 = vmatprep.subr.bf16.mxu0 0
    %3105 = vmatpush1.bf16.msra.mxu0 0
    %3106 = vmatprep.subr.bf16.mxu0 0
    %3107 = vmatpush1.bf16.msra.mxu0 %v3070
    %3108 = vmatprep.subr.bf16.mxu0 0
    %3109 = vmatpush1.bf16.msra.mxu0 %v3069
    %3110 = vmatprep.subr.bf16.mxu0 0
    %3111 = vmatpush2.bf16.msra.mxu0 0
    %3112 = vmatprep.subr.bf16.mxu0 0
    %3113 = vmatpush2.bf16.msra.mxu0 0
    %3114 = vmatprep.subr.bf16.mxu0 0
    %3115 = vmatpush2.bf16.msra.mxu0 0
    %3116 = vmatprep.subr.bf16.mxu0 0
    %3117 = vmatpush2.bf16.msra.mxu0 0
    %3118 = vmatprep.subr.bf16.mxu0 0
    %3119 = vmatpush2.bf16.msra.mxu0 0
    %3120 = vmatprep.subr.bf16.mxu0 0
    %3121 = vmatpush2.bf16.msra.mxu0 0
    %3122 = vmatprep.subr.bf16.mxu0 0
    %3123 = vmatpush2.bf16.msra.mxu0 0
    %3124 = vmatprep.subr.bf16.mxu0 0
    %3125 = vmatpush2.bf16.msra.mxu0 0
    %3126 = vmatprep.mubr.bf16.mxu0 0
    %3127 = vmatmul.mubr.bf16.gmra.mxu0 %v3074
    %v3128 = vpop.f32.mrf.mxu0
    %v3129 = vadd.f32 0.0, %v3128
    %v3130 = vpop.f32.mrf.mxu0
    %v3131 = vpop.f32.mrf.mxu0
    %v3132 = vadd.f32 0.0, %v3131
    %v3133 = vpop.f32.mrf.mxu0
    %3134 = vmatprep.mubr.bf16.mxu0 0
    %3135 = vmatmul.mubr.bf16.gmra.mxu0 %v3077
    %v3136 = vpop.f32.mrf.mxu0
    %v3137 = vadd.f32 0.0, %v3136
    %v3138 = vpop.f32.mrf.mxu0
    %v3139 = vpop.f32.mrf.mxu0
    %v3140 = vadd.f32 0.0, %v3139
    %v3141 = vpop.f32.mrf.mxu0
    %3142 = vmatprep.mubr.bf16.mxu0 0
    %3143 = vmatmul.mubr.bf16.gmra.mxu0 %v3080
    %v3144 = vpop.f32.mrf.mxu0
    %v3145 = vadd.f32 0.0, %v3144
    %v3146 = vpop.f32.mrf.mxu0
    %v3147 = vpop.f32.mrf.mxu0
    %v3148 = vadd.f32 0.0, %v3147
    %v3149 = vpop.f32.mrf.mxu0
    %3150 = vmatprep.mubr.bf16.mxu0 0
    %3151 = vmatmul.mubr.bf16.gmra.mxu0 %v3083
    %v3152 = vpop.f32.mrf.mxu0
    %v3153 = vadd.f32 0.0, %v3152
    %v3154 = vpop.f32.mrf.mxu0
    %v3155 = vpop.f32.mrf.mxu0
    %v3156 = vadd.f32 0.0, %v3155
    %v3157 = vpop.f32.mrf.mxu0
    %3158 = vmatprep.mubr.bf16.mxu0 0
    %3159 = vmatmul.mubr.bf16.gmra.mxu0 %v3086
    %v3160 = vpop.f32.mrf.mxu0
    %v3161 = vadd.f32 0.0, %v3160
    %v3162 = vpop.f32.mrf.mxu0
    %v3163 = vpop.f32.mrf.mxu0
    %v3164 = vadd.f32 0.0, %v3163
    %v3165 = vpop.f32.mrf.mxu0
    %3166 = vmatprep.mubr.bf16.mxu0 0
    %3167 = vmatmul.mubr.bf16.gmra.mxu0 %v3089
    %v3168 = vpop.f32.mrf.mxu0
    %v3169 = vadd.f32 0.0, %v3168
    %v3170 = vpop.f32.mrf.mxu0
    %v3171 = vpop.f32.mrf.mxu0
    %v3172 = vadd.f32 0.0, %v3171
    %v3173 = vpop.f32.mrf.mxu0
    %3174 = vmatprep.mubr.bf16.mxu0 0
    %3175 = vmatmul.mubr.bf16.gmra.mxu0 %v3092
    %v3176 = vpop.f32.mrf.mxu0
    %v3177 = vadd.f32 0.0, %v3176
    %v3178 = vpop.f32.mrf.mxu0
    %v3179 = vpop.f32.mrf.mxu0
    %v3180 = vpop.f32.mrf.mxu0
    %3181 = vdwg.mxu0
    %v3182 = vadd.f32 %v2645, %v3129
    %v3183 = vadd.f32 %v2648, %v3132
    %v3184 = vadd.f32 %v2653, %v3137
    %v3185 = vadd.f32 %v2656, %v3140
    %v3186 = vadd.f32 %v2661, %v3145
    %v3187 = vadd.f32 %v2664, %v3148
    %v3188 = vadd.f32 %v2669, %v3153
    %v3189 = vadd.f32 %v2672, %v3156
    %v3190 = vadd.f32 %v2677, %v3161
    %v3191 = vadd.f32 %v2680, %v3164
    %v3192 = vadd.f32 %v2685, %v3169
    %v3193 = vadd.f32 %v2688, %v3172
    %v3194 = vadd.f32 %v2693, %v3177
    %s3195 = scalar_lea.vmem %s5, 624
    %v3196 = vld [vmem:[%s3195] sm:$0xff]
    %v3197 = vld [vmem:[%s3195 + $0x8] sm:$0xff]
    %v3198 = vld [vmem:[%s3195 + $0x10] sm:$0xff]
    %v3199 = vld [vmem:[%s3195 + $0x18] sm:$0xff]
    %v3200 = vld [vmem:[%s3195 + $0x20] sm:$0xff]
    %v3201 = vld [vmem:[%s3195 + $0x28] sm:$0xff]
    %v3202 = vld [vmem:[%s3195 + $0x30] sm:$0xff]
    %v3203 = vld [vmem:[%s3195 + $0x38] sm:$0xff]
    %v3204 = vld [vmem:[%s3195 + $0x40] sm:$0xff]
    %v3205 = vld [vmem:[%s3195 + $0x48] sm:$0xff]
    %v3206 = vld [vmem:[%s3195 + $0x50] sm:$0xff]
    %v3207 = vld [vmem:[%s3195 + $0x58] sm:$0xff]
    %v3208 = vld [vmem:[%s3195 + $0x60] sm:$0xff]
    %v3209 = vld [vmem:[%s3195 + $0x68] sm:$0xff]
    %v3210 = vld [vmem:[%s3195 + $0x70] sm:$0xff]
    %v3211 = vld [vmem:[%s3195 + $0x78] sm:$0xff]
    %v3212 = vld [vmem:[%s3195 + $0x80] sm:$0xff]
    %v3213 = vld [vmem:[%s3195 + $0x88] sm:$0xff]
    %v3214 = vld [vmem:[%s3195 + $0x90] sm:$0xff]
    %v3215 = vld [vmem:[%s3195 + $0x98] sm:$0xff]
    %v3216 = vld [vmem:[%s3195 + $0xa0] sm:$0xff]
    %v3217 = vld [vmem:[%s3195 + $0xa8] sm:$0xff]
    %v3218 = vld [vmem:[%s3195 + $0xb0] sm:$0xff]
    %v3219 = vld [vmem:[%s3195 + $0xb8] sm:$0xff]
    %v3220 = vld [vmem:[%s3195 + $0xc0] sm:$0x11]
    %v3221 = vld [vmem:[%s3195 + $0xc8] sm:$0x11]
    %v3248 = vunpack.c.l.b16 %v3196
    %v3249 = vunpack.c.h.b16 %v3196
    %v3250 = vunpack.c.l.b16 %v3197
    %v3251 = vunpack.c.h.b16 %v3197
    %v3252 = vunpack.c.l.b16 %v3198
    %v3253 = vunpack.c.h.b16 %v3198
    %v3254 = vunpack.c.l.b16 %v3199
    %v3255 = vunpack.c.h.b16 %v3199
    %v3256 = vunpack.c.l.b16 %v3200
    %v3257 = vunpack.c.h.b16 %v3200
    %v3258 = vunpack.c.l.b16 %v3201
    %v3259 = vunpack.c.h.b16 %v3201
    %v3260 = vunpack.c.l.b16 %v3202
    %v3261 = vunpack.c.h.b16 %v3202
    %v3262 = vunpack.c.l.b16 %v3203
    %v3263 = vunpack.c.h.b16 %v3203
    %v3264 = vunpack.c.l.b16 %v3204
    %v3265 = vunpack.c.h.b16 %v3204
    %v3266 = vunpack.c.l.b16 %v3205
    %v3267 = vunpack.c.h.b16 %v3205
    %v3268 = vunpack.c.l.b16 %v3206
    %v3269 = vunpack.c.h.b16 %v3206
    %v3270 = vunpack.c.l.b16 %v3207
    %v3271 = vunpack.c.h.b16 %v3207
    %v3272 = vunpack.c.l.b16 %v3208
    %v3273 = vunpack.c.h.b16 %v3208
    %v3274 = vunpack.c.l.b16 %v3209
    %v3275 = vunpack.c.h.b16 %v3209
    %v3276 = vunpack.c.l.b16 %v3210
    %v3277 = vunpack.c.h.b16 %v3210
    %v3278 = vunpack.c.l.b16 %v3211
    %v3279 = vunpack.c.h.b16 %v3211
    %v3280 = vunpack.c.l.b16 %v3212
    %v3281 = vunpack.c.h.b16 %v3212
    %v3282 = vunpack.c.l.b16 %v3213
    %v3283 = vunpack.c.h.b16 %v3213
    %v3284 = vunpack.c.l.b16 %v3214
    %v3285 = vunpack.c.h.b16 %v3214
    %v3286 = vunpack.c.l.b16 %v3215
    %v3287 = vunpack.c.h.b16 %v3215
    %v3288 = vunpack.c.l.b16 %v3216
    %v3289 = vunpack.c.h.b16 %v3216
    %v3290 = vunpack.c.l.b16 %v3217
    %v3291 = vunpack.c.h.b16 %v3217
    %v3292 = vunpack.c.l.b16 %v3218
    %v3293 = vunpack.c.h.b16 %v3218
    %v3294 = vunpack.c.l.b16 %v3219
    %v3295 = vunpack.c.h.b16 %v3219
    %v3296 = vunpack.c.l.b16 %v3220
    %v3297 = vunpack.c.h.b16 %v3220
    %v3298 = vunpack.c.l.b16 %v3221
    %v3299 = vunpack.c.h.b16 %v3221
    %v3300 = vpack.c.b16 %v3252, %v3248
    %v3301 = vpack.c.b16 %v3253, %v3249
    %v3302 = vpack.c.b16 %v3254, %v3250
    %v3303 = vpack.c.b16 %v3255, %v3251
    %v3304 = vpack.c.b16 %v3260, %v3256
    %v3305 = vpack.c.b16 %v3261, %v3257
    %v3306 = vpack.c.b16 %v3262, %v3258
    %v3307 = vpack.c.b16 %v3263, %v3259
    %v3308 = vpack.c.b16 %v3268, %v3264
    %v3309 = vpack.c.b16 %v3269, %v3265
    %v3310 = vpack.c.b16 %v3270, %v3266
    %v3311 = vpack.c.b16 %v3271, %v3267
    %v3312 = vpack.c.b16 %v3276, %v3272
    %v3313 = vpack.c.b16 %v3277, %v3273
    %v3314 = vpack.c.b16 %v3278, %v3274
    %v3315 = vpack.c.b16 %v3279, %v3275
    %v3316 = vpack.c.b16 %v3284, %v3280
    %v3317 = vpack.c.b16 %v3285, %v3281
    %v3318 = vpack.c.b16 %v3286, %v3282
    %v3319 = vpack.c.b16 %v3287, %v3283
    %v3320 = vpack.c.b16 %v3292, %v3288
    %v3321 = vpack.c.b16 %v3293, %v3289
    %v3322 = vpack.c.b16 %v3294, %v3290
    %v3323 = vpack.c.b16 %v3295, %v3291
    %v3324 = vpack.c.b16 %v3296, %v3296
    %v3325 = vpack.c.b16 %v3297, %v3297
    %v3326 = vpack.c.b16 %v3298, %v3298
    %v3327 = vpack.c.b16 %v3299, %v3299
    %v3350 = vsel %vm1880, %v3303, 0
    %v3353 = vsel %vm1880, %v3307, 0
    %v3356 = vsel %vm1880, %v3311, 0
    %v3359 = vsel %vm1880, %v3315, 0
    %v3362 = vsel %vm1880, %v3319, 0
    %v3365 = vsel %vm1880, %v3323, 0
    %v3368 = vsel %vm1880, %v3327, 0
    %3370 = vmatprep.subr.bf16.mxu0 0
    %3371 = vmatpush1.bf16.msra.mxu0 %v1709
    %3372 = vmatprep.subr.bf16.mxu0 0
    %3373 = vmatpush1.bf16.msra.mxu0 %v1708
    %3374 = vmatprep.subr.bf16.mxu0 0
    %3375 = vmatpush1.bf16.msra.mxu0 %v1707
    %3376 = vmatprep.subr.bf16.mxu0 0
    %3377 = vmatpush1.bf16.msra.mxu0 %v1706
    %3378 = vmatprep.subr.bf16.mxu0 0
    %3379 = vmatpush1.bf16.msra.mxu0 %v1705
    %3380 = vmatprep.subr.bf16.mxu0 0
    %3381 = vmatpush1.bf16.msra.mxu0 %v1704
    %3382 = vmatprep.subr.bf16.mxu0 0
    %3383 = vmatpush1.bf16.msra.mxu0 %v1703
    %3384 = vmatprep.subr.bf16.mxu0 0
    %3385 = vmatpush1.bf16.msra.mxu0 %v1702
    %3386 = vmatprep.subr.bf16.mxu0 0
    %3387 = vmatpush2.bf16.msra.mxu0 %v1717
    %3388 = vmatprep.subr.bf16.mxu0 0
    %3389 = vmatpush2.bf16.msra.mxu0 %v1716
    %3390 = vmatprep.subr.bf16.mxu0 0
    %3391 = vmatpush2.bf16.msra.mxu0 %v1715
    %3392 = vmatprep.subr.bf16.mxu0 0
    %3393 = vmatpush2.bf16.msra.mxu0 %v1714
    %3394 = vmatprep.subr.bf16.mxu0 0
    %3395 = vmatpush2.bf16.msra.mxu0 %v1713
    %3396 = vmatprep.subr.bf16.mxu0 0
    %3397 = vmatpush2.bf16.msra.mxu0 %v1712
    %3398 = vmatprep.subr.bf16.mxu0 0
    %3399 = vmatpush2.bf16.msra.mxu0 %v1711
    %3400 = vmatprep.subr.bf16.mxu0 0
    %3401 = vmatpush2.bf16.msra.mxu0 %v1710
    %3402 = vmatprep.mubr.bf16.mxu0 %v3301
    %3403 = vmatmul.mubr.bf16.gmra.mxu0 %v3300
    %v3404 = vpop.f32.mrf.mxu0
    %v3405 = vadd.f32 0.0, %v3404
    %v3406 = vpop.f32.mrf.mxu0
    %v3407 = vpop.f32.mrf.mxu0
    %v3408 = vadd.f32 0.0, %v3407
    %v3409 = vpop.f32.mrf.mxu0
    %3410 = vmatprep.mubr.bf16.mxu0 %v3305
    %3411 = vmatmul.mubr.bf16.gmra.mxu0 %v3304
    %v3412 = vpop.f32.mrf.mxu0
    %v3413 = vadd.f32 0.0, %v3412
    %v3414 = vpop.f32.mrf.mxu0
    %v3415 = vpop.f32.mrf.mxu0
    %v3416 = vadd.f32 0.0, %v3415
    %v3417 = vpop.f32.mrf.mxu0
    %3418 = vmatprep.mubr.bf16.mxu0 %v3309
    %3419 = vmatmul.mubr.bf16.gmra.mxu0 %v3308
    %v3420 = vpop.f32.mrf.mxu0
    %v3421 = vadd.f32 0.0, %v3420
    %v3422 = vpop.f32.mrf.mxu0
    %v3423 = vpop.f32.mrf.mxu0
    %v3424 = vadd.f32 0.0, %v3423
    %v3425 = vpop.f32.mrf.mxu0
    %3426 = vmatprep.mubr.bf16.mxu0 %v3313
    %3427 = vmatmul.mubr.bf16.gmra.mxu0 %v3312
    %v3428 = vpop.f32.mrf.mxu0
    %v3429 = vadd.f32 0.0, %v3428
    %v3430 = vpop.f32.mrf.mxu0
    %v3431 = vpop.f32.mrf.mxu0
    %v3432 = vadd.f32 0.0, %v3431
    %v3433 = vpop.f32.mrf.mxu0
    %3434 = vmatprep.mubr.bf16.mxu0 %v3317
    %3435 = vmatmul.mubr.bf16.gmra.mxu0 %v3316
    %v3436 = vpop.f32.mrf.mxu0
    %v3437 = vadd.f32 0.0, %v3436
    %v3438 = vpop.f32.mrf.mxu0
    %v3439 = vpop.f32.mrf.mxu0
    %v3440 = vadd.f32 0.0, %v3439
    %v3441 = vpop.f32.mrf.mxu0
    %3442 = vmatprep.mubr.bf16.mxu0 %v3321
    %3443 = vmatmul.mubr.bf16.gmra.mxu0 %v3320
    %v3444 = vpop.f32.mrf.mxu0
    %v3445 = vadd.f32 0.0, %v3444
    %v3446 = vpop.f32.mrf.mxu0
    %v3447 = vpop.f32.mrf.mxu0
    %v3448 = vadd.f32 0.0, %v3447
    %v3449 = vpop.f32.mrf.mxu0
    %3450 = vmatprep.mubr.bf16.mxu0 %v3325
    %3451 = vmatmul.mubr.bf16.gmra.mxu0 %v3324
    %v3452 = vpop.f32.mrf.mxu0
    %v3453 = vadd.f32 0.0, %v3452
    %v3454 = vpop.f32.mrf.mxu0
    %v3455 = vpop.f32.mrf.mxu0
    %v3456 = vpop.f32.mrf.mxu0
    %3457 = vdwg.mxu0
    %3458 = vmatprep.subr.bf16.mxu0 0
    %3459 = vmatpush1.bf16.msra.mxu0 %v1725
    %3460 = vmatprep.subr.bf16.mxu0 0
    %3461 = vmatpush1.bf16.msra.mxu0 %v1724
    %3462 = vmatprep.subr.bf16.mxu0 0
    %3463 = vmatpush1.bf16.msra.mxu0 %v1723
    %3464 = vmatprep.subr.bf16.mxu0 0
    %3465 = vmatpush1.bf16.msra.mxu0 %v1722
    %3466 = vmatprep.subr.bf16.mxu0 0
    %3467 = vmatpush1.bf16.msra.mxu0 %v1721
    %3468 = vmatprep.subr.bf16.mxu0 0
    %3469 = vmatpush1.bf16.msra.mxu0 %v1720
    %3470 = vmatprep.subr.bf16.mxu0 0
    %3471 = vmatpush1.bf16.msra.mxu0 %v1719
    %3472 = vmatprep.subr.bf16.mxu0 0
    %3473 = vmatpush1.bf16.msra.mxu0 %v1718
    %3474 = vmatprep.subr.bf16.mxu0 0
    %3475 = vmatpush2.bf16.msra.mxu0 0
    %3476 = vmatprep.subr.bf16.mxu0 0
    %3477 = vmatpush2.bf16.msra.mxu0 0
    %3478 = vmatprep.subr.bf16.mxu0 0
    %3479 = vmatpush2.bf16.msra.mxu0 0
    %3480 = vmatprep.subr.bf16.mxu0 0
    %3481 = vmatpush2.bf16.msra.mxu0 0
    %3482 = vmatprep.subr.bf16.mxu0 0
    %3483 = vmatpush2.bf16.msra.mxu0 0
    %3484 = vmatprep.subr.bf16.mxu0 0
    %3485 = vmatpush2.bf16.msra.mxu0 0
    %3486 = vmatprep.subr.bf16.mxu0 0
    %3487 = vmatpush2.bf16.msra.mxu0 0
    %3488 = vmatprep.subr.bf16.mxu0 0
    %3489 = vmatpush2.bf16.msra.mxu0 %v1903
    %3490 = vmatprep.mubr.bf16.mxu0 %v3350
    %3491 = vmatmul.mubr.bf16.gmra.mxu0 %v3302
    %v3492 = vpop.f32.mrf.mxu0
    %v3493 = vadd.f32 %v3405, %v3492
    %v3494 = vpop.f32.mrf.mxu0
    %v3495 = vpop.f32.mrf.mxu0
    %v3496 = vadd.f32 %v3408, %v3495
    %v3497 = vpop.f32.mrf.mxu0
    %3498 = vmatprep.mubr.bf16.mxu0 %v3353
    %3499 = vmatmul.mubr.bf16.gmra.mxu0 %v3306
    %v3500 = vpop.f32.mrf.mxu0
    %v3501 = vadd.f32 %v3413, %v3500
    %v3502 = vpop.f32.mrf.mxu0
    %v3503 = vpop.f32.mrf.mxu0
    %v3504 = vadd.f32 %v3416, %v3503
    %v3505 = vpop.f32.mrf.mxu0
    %3506 = vmatprep.mubr.bf16.mxu0 %v3356
    %3507 = vmatmul.mubr.bf16.gmra.mxu0 %v3310
    %v3508 = vpop.f32.mrf.mxu0
    %v3509 = vadd.f32 %v3421, %v3508
    %v3510 = vpop.f32.mrf.mxu0
    %v3511 = vpop.f32.mrf.mxu0
    %v3512 = vadd.f32 %v3424, %v3511
    %v3513 = vpop.f32.mrf.mxu0
    %3514 = vmatprep.mubr.bf16.mxu0 %v3359
    %3515 = vmatmul.mubr.bf16.gmra.mxu0 %v3314
    %v3516 = vpop.f32.mrf.mxu0
    %v3517 = vadd.f32 %v3429, %v3516
    %v3518 = vpop.f32.mrf.mxu0
    %v3519 = vpop.f32.mrf.mxu0
    %v3520 = vadd.f32 %v3432, %v3519
    %v3521 = vpop.f32.mrf.mxu0
    %3522 = vmatprep.mubr.bf16.mxu0 %v3362
    %3523 = vmatmul.mubr.bf16.gmra.mxu0 %v3318
    %v3524 = vpop.f32.mrf.mxu0
    %v3525 = vadd.f32 %v3437, %v3524
    %v3526 = vpop.f32.mrf.mxu0
    %v3527 = vpop.f32.mrf.mxu0
    %v3528 = vadd.f32 %v3440, %v3527
    %v3529 = vpop.f32.mrf.mxu0
    %3530 = vmatprep.mubr.bf16.mxu0 %v3365
    %3531 = vmatmul.mubr.bf16.gmra.mxu0 %v3322
    %v3532 = vpop.f32.mrf.mxu0
    %v3533 = vadd.f32 %v3445, %v3532
    %v3534 = vpop.f32.mrf.mxu0
    %v3535 = vpop.f32.mrf.mxu0
    %v3536 = vadd.f32 %v3448, %v3535
    %v3537 = vpop.f32.mrf.mxu0
    %3538 = vmatprep.mubr.bf16.mxu0 %v3368
    %3539 = vmatmul.mubr.bf16.gmra.mxu0 %v3326
    %v3540 = vpop.f32.mrf.mxu0
    %v3541 = vadd.f32 %v3453, %v3540
    %v3542 = vpop.f32.mrf.mxu0
    %v3543 = vpop.f32.mrf.mxu0
    %v3544 = vpop.f32.mrf.mxu0
    %3545 = vdwg.mxu0
    %v3546 = vpack.c.bf16 %v3496, %v3493
    %v3547 = vpack.c.bf16 %v3504, %v3501
    %v3548 = vpack.c.bf16 %v3512, %v3509
    %v3549 = vpack.c.bf16 %v3520, %v3517
    %v3550 = vpack.c.bf16 %v3528, %v3525
    %v3551 = vpack.c.bf16 %v3536, %v3533
    %v3552 = vpack.c.bf16 %v3541, %v3541
    %s3553 = scalar_lea.vmem %s2, 48
    %v3554 = vld [vmem:[%s3553] sm:$0xf]
    %v3555 = vld [vmem:[%s3553 + $0x4] sm:$0xf]
    %v3556 = vld [vmem:[%s3553 + $0x8] sm:$0xf]
    %v3557 = vld [vmem:[%s3553 + $0xc] sm:$0xf]
    %v3562 = vunpack.c.l.b16 %v3554
    %v3563 = vunpack.c.l.b16 %v3555
    %v3564 = vunpack.c.l.b16 %v3556
    %v3565 = vunpack.c.l.b16 %v3557
    %v3566 = vpack.c.b16 %v3563, %v3562
    %v3567 = vpack.c.b16 %v3565, %v3564
    %v3571 = vsel %vm2467, %v3546, 0
    %v3574 = vsel %vm2467, %v3547, 0
    %v3577 = vsel %vm2467, %v3548, 0
    %v3580 = vsel %vm2467, %v3549, 0
    %v3583 = vsel %vm2467, %v3550, 0
    %v3586 = vsel %vm2467, %v3551, 0
    %v3589 = vsel %vm2467, %v3552, 0
    %3591 = vmatprep.subr.bf16.mxu0 0
    %3592 = vmatpush1.bf16.msra.mxu0 0
    %3593 = vmatprep.subr.bf16.mxu0 0
    %3594 = vmatpush1.bf16.msra.mxu0 0
    %3595 = vmatprep.subr.bf16.mxu0 0
    %3596 = vmatpush1.bf16.msra.mxu0 0
    %3597 = vmatprep.subr.bf16.mxu0 0
    %3598 = vmatpush1.bf16.msra.mxu0 0
    %3599 = vmatprep.subr.bf16.mxu0 0
    %3600 = vmatpush1.bf16.msra.mxu0 0
    %3601 = vmatprep.subr.bf16.mxu0 0
    %3602 = vmatpush1.bf16.msra.mxu0 0
    %3603 = vmatprep.subr.bf16.mxu0 0
    %3604 = vmatpush1.bf16.msra.mxu0 %v3567
    %3605 = vmatprep.subr.bf16.mxu0 0
    %3606 = vmatpush1.bf16.msra.mxu0 %v3566
    %3607 = vmatprep.subr.bf16.mxu0 0
    %3608 = vmatpush2.bf16.msra.mxu0 0
    %3609 = vmatprep.subr.bf16.mxu0 0
    %3610 = vmatpush2.bf16.msra.mxu0 0
    %3611 = vmatprep.subr.bf16.mxu0 0
    %3612 = vmatpush2.bf16.msra.mxu0 0
    %3613 = vmatprep.subr.bf16.mxu0 0
    %3614 = vmatpush2.bf16.msra.mxu0 0
    %3615 = vmatprep.subr.bf16.mxu0 0
    %3616 = vmatpush2.bf16.msra.mxu0 0
    %3617 = vmatprep.subr.bf16.mxu0 0
    %3618 = vmatpush2.bf16.msra.mxu0 0
    %3619 = vmatprep.subr.bf16.mxu0 0
    %3620 = vmatpush2.bf16.msra.mxu0 0
    %3621 = vmatprep.subr.bf16.mxu0 0
    %3622 = vmatpush2.bf16.msra.mxu0 0
    %3623 = vmatprep.mubr.bf16.mxu0 0
    %3624 = vmatmul.mubr.bf16.gmra.mxu0 %v3571
    %v3625 = vpop.f32.mrf.mxu0
    %v3626 = vadd.f32 0.0, %v3625
    %v3627 = vpop.f32.mrf.mxu0
    %v3628 = vpop.f32.mrf.mxu0
    %v3629 = vadd.f32 0.0, %v3628
    %v3630 = vpop.f32.mrf.mxu0
    %3631 = vmatprep.mubr.bf16.mxu0 0
    %3632 = vmatmul.mubr.bf16.gmra.mxu0 %v3574
    %v3633 = vpop.f32.mrf.mxu0
    %v3634 = vadd.f32 0.0, %v3633
    %v3635 = vpop.f32.mrf.mxu0
    %v3636 = vpop.f32.mrf.mxu0
    %v3637 = vadd.f32 0.0, %v3636
    %v3638 = vpop.f32.mrf.mxu0
    %3639 = vmatprep.mubr.bf16.mxu0 0
    %3640 = vmatmul.mubr.bf16.gmra.mxu0 %v3577
    %v3641 = vpop.f32.mrf.mxu0
    %v3642 = vadd.f32 0.0, %v3641
    %v3643 = vpop.f32.mrf.mxu0
    %v3644 = vpop.f32.mrf.mxu0
    %v3645 = vadd.f32 0.0, %v3644
    %v3646 = vpop.f32.mrf.mxu0
    %3647 = vmatprep.mubr.bf16.mxu0 0
    %3648 = vmatmul.mubr.bf16.gmra.mxu0 %v3580
    %v3649 = vpop.f32.mrf.mxu0
    %v3650 = vadd.f32 0.0, %v3649
    %v3651 = vpop.f32.mrf.mxu0
    %v3652 = vpop.f32.mrf.mxu0
    %v3653 = vadd.f32 0.0, %v3652
    %v3654 = vpop.f32.mrf.mxu0
    %3655 = vmatprep.mubr.bf16.mxu0 0
    %3656 = vmatmul.mubr.bf16.gmra.mxu0 %v3583
    %v3657 = vpop.f32.mrf.mxu0
    %v3658 = vadd.f32 0.0, %v3657
    %v3659 = vpop.f32.mrf.mxu0
    %v3660 = vpop.f32.mrf.mxu0
    %v3661 = vadd.f32 0.0, %v3660
    %v3662 = vpop.f32.mrf.mxu0
    %3663 = vmatprep.mubr.bf16.mxu0 0
    %3664 = vmatmul.mubr.bf16.gmra.mxu0 %v3586
    %v3665 = vpop.f32.mrf.mxu0
    %v3666 = vadd.f32 0.0, %v3665
    %v3667 = vpop.f32.mrf.mxu0
    %v3668 = vpop.f32.mrf.mxu0
    %v3669 = vadd.f32 0.0, %v3668
    %v3670 = vpop.f32.mrf.mxu0
    %3671 = vmatprep.mubr.bf16.mxu0 0
    %3672 = vmatmul.mubr.bf16.gmra.mxu0 %v3589
    %v3673 = vpop.f32.mrf.mxu0
    %v3674 = vadd.f32 0.0, %v3673
    %v3675 = vpop.f32.mrf.mxu0
    %v3676 = vpop.f32.mrf.mxu0
    %v3677 = vpop.f32.mrf.mxu0
    %3678 = vdwg.mxu0
    %v3679 = vadd.f32 %v3182, %v3626
    %v3680 = vadd.f32 %v3183, %v3629
    %v3681 = vadd.f32 %v3184, %v3634
    %v3682 = vadd.f32 %v3185, %v3637
    %v3683 = vadd.f32 %v3186, %v3642
    %v3684 = vadd.f32 %v3187, %v3645
    %v3685 = vadd.f32 %v3188, %v3650
    %v3686 = vadd.f32 %v3189, %v3653
    %v3687 = vadd.f32 %v3190, %v3658
    %v3688 = vadd.f32 %v3191, %v3661
    %v3689 = vadd.f32 %v3192, %v3666
    %v3690 = vadd.f32 %v3193, %v3669
    %v3691 = vadd.f32 %v3194, %v3674
    %s3692 = scalar_lea.vmem %s5, 832
    %v3693 = vld [vmem:[%s3692] sm:$0xff]
    %v3694 = vld [vmem:[%s3692 + $0x8] sm:$0xff]
    %v3695 = vld [vmem:[%s3692 + $0x10] sm:$0xff]
    %v3696 = vld [vmem:[%s3692 + $0x18] sm:$0xff]
    %v3697 = vld [vmem:[%s3692 + $0x20] sm:$0xff]
    %v3698 = vld [vmem:[%s3692 + $0x28] sm:$0xff]
    %v3699 = vld [vmem:[%s3692 + $0x30] sm:$0xff]
    %v3700 = vld [vmem:[%s3692 + $0x38] sm:$0xff]
    %v3701 = vld [vmem:[%s3692 + $0x40] sm:$0xff]
    %v3702 = vld [vmem:[%s3692 + $0x48] sm:$0xff]
    %v3703 = vld [vmem:[%s3692 + $0x50] sm:$0xff]
    %v3704 = vld [vmem:[%s3692 + $0x58] sm:$0xff]
    %v3705 = vld [vmem:[%s3692 + $0x60] sm:$0xff]
    %v3706 = vld [vmem:[%s3692 + $0x68] sm:$0xff]
    %v3707 = vld [vmem:[%s3692 + $0x70] sm:$0xff]
    %v3708 = vld [vmem:[%s3692 + $0x78] sm:$0xff]
    %v3709 = vld [vmem:[%s3692 + $0x80] sm:$0xff]
    %v3710 = vld [vmem:[%s3692 + $0x88] sm:$0xff]
    %v3711 = vld [vmem:[%s3692 + $0x90] sm:$0xff]
    %v3712 = vld [vmem:[%s3692 + $0x98] sm:$0xff]
    %v3713 = vld [vmem:[%s3692 + $0xa0] sm:$0xff]
    %v3714 = vld [vmem:[%s3692 + $0xa8] sm:$0xff]
    %v3715 = vld [vmem:[%s3692 + $0xb0] sm:$0xff]
    %v3716 = vld [vmem:[%s3692 + $0xb8] sm:$0xff]
    %v3717 = vld [vmem:[%s3692 + $0xc0] sm:$0x11]
    %v3718 = vld [vmem:[%s3692 + $0xc8] sm:$0x11]
    %v3745 = vunpack.c.l.b16 %v3693
    %v3746 = vunpack.c.h.b16 %v3693
    %v3747 = vunpack.c.l.b16 %v3694
    %v3748 = vunpack.c.h.b16 %v3694
    %v3749 = vunpack.c.l.b16 %v3695
    %v3750 = vunpack.c.h.b16 %v3695
    %v3751 = vunpack.c.l.b16 %v3696
    %v3752 = vunpack.c.h.b16 %v3696
    %v3753 = vunpack.c.l.b16 %v3697
    %v3754 = vunpack.c.h.b16 %v3697
    %v3755 = vunpack.c.l.b16 %v3698
    %v3756 = vunpack.c.h.b16 %v3698
    %v3757 = vunpack.c.l.b16 %v3699
    %v3758 = vunpack.c.h.b16 %v3699
    %v3759 = vunpack.c.l.b16 %v3700
    %v3760 = vunpack.c.h.b16 %v3700
    %v3761 = vunpack.c.l.b16 %v3701
    %v3762 = vunpack.c.h.b16 %v3701
    %v3763 = vunpack.c.l.b16 %v3702
    %v3764 = vunpack.c.h.b16 %v3702
    %v3765 = vunpack.c.l.b16 %v3703
    %v3766 = vunpack.c.h.b16 %v3703
    %v3767 = vunpack.c.l.b16 %v3704
    %v3768 = vunpack.c.h.b16 %v3704
    %v3769 = vunpack.c.l.b16 %v3705
    %v3770 = vunpack.c.h.b16 %v3705
    %v3771 = vunpack.c.l.b16 %v3706
    %v3772 = vunpack.c.h.b16 %v3706
    %v3773 = vunpack.c.l.b16 %v3707
    %v3774 = vunpack.c.h.b16 %v3707
    %v3775 = vunpack.c.l.b16 %v3708
    %v3776 = vunpack.c.h.b16 %v3708
    %v3777 = vunpack.c.l.b16 %v3709
    %v3778 = vunpack.c.h.b16 %v3709
    %v3779 = vunpack.c.l.b16 %v3710
    %v3780 = vunpack.c.h.b16 %v3710
    %v3781 = vunpack.c.l.b16 %v3711
    %v3782 = vunpack.c.h.b16 %v3711
    %v3783 = vunpack.c.l.b16 %v3712
    %v3784 = vunpack.c.h.b16 %v3712
    %v3785 = vunpack.c.l.b16 %v3713
    %v3786 = vunpack.c.h.b16 %v3713
    %v3787 = vunpack.c.l.b16 %v3714
    %v3788 = vunpack.c.h.b16 %v3714
    %v3789 = vunpack.c.l.b16 %v3715
    %v3790 = vunpack.c.h.b16 %v3715
    %v3791 = vunpack.c.l.b16 %v3716
    %v3792 = vunpack.c.h.b16 %v3716
    %v3793 = vunpack.c.l.b16 %v3717
    %v3794 = vunpack.c.h.b16 %v3717
    %v3795 = vunpack.c.l.b16 %v3718
    %v3796 = vunpack.c.h.b16 %v3718
    %v3797 = vpack.c.b16 %v3749, %v3745
    %v3798 = vpack.c.b16 %v3750, %v3746
    %v3799 = vpack.c.b16 %v3751, %v3747
    %v3800 = vpack.c.b16 %v3752, %v3748
    %v3801 = vpack.c.b16 %v3757, %v3753
    %v3802 = vpack.c.b16 %v3758, %v3754
    %v3803 = vpack.c.b16 %v3759, %v3755
    %v3804 = vpack.c.b16 %v3760, %v3756
    %v3805 = vpack.c.b16 %v3765, %v3761
    %v3806 = vpack.c.b16 %v3766, %v3762
    %v3807 = vpack.c.b16 %v3767, %v3763
    %v3808 = vpack.c.b16 %v3768, %v3764
    %v3809 = vpack.c.b16 %v3773, %v3769
    %v3810 = vpack.c.b16 %v3774, %v3770
    %v3811 = vpack.c.b16 %v3775, %v3771
    %v3812 = vpack.c.b16 %v3776, %v3772
    %v3813 = vpack.c.b16 %v3781, %v3777
    %v3814 = vpack.c.b16 %v3782, %v3778
    %v3815 = vpack.c.b16 %v3783, %v3779
    %v3816 = vpack.c.b16 %v3784, %v3780
    %v3817 = vpack.c.b16 %v3789, %v3785
    %v3818 = vpack.c.b16 %v3790, %v3786
    %v3819 = vpack.c.b16 %v3791, %v3787
    %v3820 = vpack.c.b16 %v3792, %v3788
    %v3821 = vpack.c.b16 %v3793, %v3793
    %v3822 = vpack.c.b16 %v3794, %v3794
    %v3823 = vpack.c.b16 %v3795, %v3795
    %v3824 = vpack.c.b16 %v3796, %v3796
    %v3847 = vsel %vm1880, %v3800, 0
    %v3850 = vsel %vm1880, %v3804, 0
    %v3853 = vsel %vm1880, %v3808, 0
    %v3856 = vsel %vm1880, %v3812, 0
    %v3859 = vsel %vm1880, %v3816, 0
    %v3862 = vsel %vm1880, %v3820, 0
    %v3865 = vsel %vm1880, %v3824, 0
    %3867 = vmatprep.subr.bf16.mxu0 0
    %3868 = vmatpush1.bf16.msra.mxu0 %v1709
    %3869 = vmatprep.subr.bf16.mxu0 0
    %3870 = vmatpush1.bf16.msra.mxu0 %v1708
    %3871 = vmatprep.subr.bf16.mxu0 0
    %3872 = vmatpush1.bf16.msra.mxu0 %v1707
    %3873 = vmatprep.subr.bf16.mxu0 0
    %3874 = vmatpush1.bf16.msra.mxu0 %v1706
    %3875 = vmatprep.subr.bf16.mxu0 0
    %3876 = vmatpush1.bf16.msra.mxu0 %v1705
    %3877 = vmatprep.subr.bf16.mxu0 0
    %3878 = vmatpush1.bf16.msra.mxu0 %v1704
    %3879 = vmatprep.subr.bf16.mxu0 0
    %3880 = vmatpush1.bf16.msra.mxu0 %v1703
    %3881 = vmatprep.subr.bf16.mxu0 0
    %3882 = vmatpush1.bf16.msra.mxu0 %v1702
    %3883 = vmatprep.subr.bf16.mxu0 0
    %3884 = vmatpush2.bf16.msra.mxu0 %v1717
    %3885 = vmatprep.subr.bf16.mxu0 0
    %3886 = vmatpush2.bf16.msra.mxu0 %v1716
    %3887 = vmatprep.subr.bf16.mxu0 0
    %3888 = vmatpush2.bf16.msra.mxu0 %v1715
    %3889 = vmatprep.subr.bf16.mxu0 0
    %3890 = vmatpush2.bf16.msra.mxu0 %v1714
    %3891 = vmatprep.subr.bf16.mxu0 0
    %3892 = vmatpush2.bf16.msra.mxu0 %v1713
    %3893 = vmatprep.subr.bf16.mxu0 0
    %3894 = vmatpush2.bf16.msra.mxu0 %v1712
    %3895 = vmatprep.subr.bf16.mxu0 0
    %3896 = vmatpush2.bf16.msra.mxu0 %v1711
    %3897 = vmatprep.subr.bf16.mxu0 0
    %3898 = vmatpush2.bf16.msra.mxu0 %v1710
    %3899 = vmatprep.mubr.bf16.mxu0 %v3798
    %3900 = vmatmul.mubr.bf16.gmra.mxu0 %v3797
    %v3901 = vpop.f32.mrf.mxu0
    %v3902 = vadd.f32 0.0, %v3901
    %v3903 = vpop.f32.mrf.mxu0
    %v3904 = vpop.f32.mrf.mxu0
    %v3905 = vadd.f32 0.0, %v3904
    %v3906 = vpop.f32.mrf.mxu0
    %3907 = vmatprep.mubr.bf16.mxu0 %v3802
    %3908 = vmatmul.mubr.bf16.gmra.mxu0 %v3801
    %v3909 = vpop.f32.mrf.mxu0
    %v3910 = vadd.f32 0.0, %v3909
    %v3911 = vpop.f32.mrf.mxu0
    %v3912 = vpop.f32.mrf.mxu0
    %v3913 = vadd.f32 0.0, %v3912
    %v3914 = vpop.f32.mrf.mxu0
    %3915 = vmatprep.mubr.bf16.mxu0 %v3806
    %3916 = vmatmul.mubr.bf16.gmra.mxu0 %v3805
    %v3917 = vpop.f32.mrf.mxu0
    %v3918 = vadd.f32 0.0, %v3917
    %v3919 = vpop.f32.mrf.mxu0
    %v3920 = vpop.f32.mrf.mxu0
    %v3921 = vadd.f32 0.0, %v3920
    %v3922 = vpop.f32.mrf.mxu0
    %3923 = vmatprep.mubr.bf16.mxu0 %v3810
    %3924 = vmatmul.mubr.bf16.gmra.mxu0 %v3809
    %v3925 = vpop.f32.mrf.mxu0
    %v3926 = vadd.f32 0.0, %v3925
    %v3927 = vpop.f32.mrf.mxu0
    %v3928 = vpop.f32.mrf.mxu0
    %v3929 = vadd.f32 0.0, %v3928
    %v3930 = vpop.f32.mrf.mxu0
    %3931 = vmatprep.mubr.bf16.mxu0 %v3814
    %3932 = vmatmul.mubr.bf16.gmra.mxu0 %v3813
    %v3933 = vpop.f32.mrf.mxu0
    %v3934 = vadd.f32 0.0, %v3933
    %v3935 = vpop.f32.mrf.mxu0
    %v3936 = vpop.f32.mrf.mxu0
    %v3937 = vadd.f32 0.0, %v3936
    %v3938 = vpop.f32.mrf.mxu0
    %3939 = vmatprep.mubr.bf16.mxu0 %v3818
    %3940 = vmatmul.mubr.bf16.gmra.mxu0 %v3817
    %v3941 = vpop.f32.mrf.mxu0
    %v3942 = vadd.f32 0.0, %v3941
    %v3943 = vpop.f32.mrf.mxu0
    %v3944 = vpop.f32.mrf.mxu0
    %v3945 = vadd.f32 0.0, %v3944
    %v3946 = vpop.f32.mrf.mxu0
    %3947 = vmatprep.mubr.bf16.mxu0 %v3822
    %3948 = vmatmul.mubr.bf16.gmra.mxu0 %v3821
    %v3949 = vpop.f32.mrf.mxu0
    %v3950 = vadd.f32 0.0, %v3949
    %v3951 = vpop.f32.mrf.mxu0
    %v3952 = vpop.f32.mrf.mxu0
    %v3953 = vpop.f32.mrf.mxu0
    %3954 = vdwg.mxu0
    %3955 = vmatprep.subr.bf16.mxu0 0
    %3956 = vmatpush1.bf16.msra.mxu0 %v1725
    %3957 = vmatprep.subr.bf16.mxu0 0
    %3958 = vmatpush1.bf16.msra.mxu0 %v1724
    %3959 = vmatprep.subr.bf16.mxu0 0
    %3960 = vmatpush1.bf16.msra.mxu0 %v1723
    %3961 = vmatprep.subr.bf16.mxu0 0
    %3962 = vmatpush1.bf16.msra.mxu0 %v1722
    %3963 = vmatprep.subr.bf16.mxu0 0
    %3964 = vmatpush1.bf16.msra.mxu0 %v1721
    %3965 = vmatprep.subr.bf16.mxu0 0
    %3966 = vmatpush1.bf16.msra.mxu0 %v1720
    %3967 = vmatprep.subr.bf16.mxu0 0
    %3968 = vmatpush1.bf16.msra.mxu0 %v1719
    %3969 = vmatprep.subr.bf16.mxu0 0
    %3970 = vmatpush1.bf16.msra.mxu0 %v1718
    %3971 = vmatprep.subr.bf16.mxu0 0
    %3972 = vmatpush2.bf16.msra.mxu0 0
    %3973 = vmatprep.subr.bf16.mxu0 0
    %3974 = vmatpush2.bf16.msra.mxu0 0
    %3975 = vmatprep.subr.bf16.mxu0 0
    %3976 = vmatpush2.bf16.msra.mxu0 0
    %3977 = vmatprep.subr.bf16.mxu0 0
    %3978 = vmatpush2.bf16.msra.mxu0 0
    %3979 = vmatprep.subr.bf16.mxu0 0
    %3980 = vmatpush2.bf16.msra.mxu0 0
    %3981 = vmatprep.subr.bf16.mxu0 0
    %3982 = vmatpush2.bf16.msra.mxu0 0
    %3983 = vmatprep.subr.bf16.mxu0 0
    %3984 = vmatpush2.bf16.msra.mxu0 0
    %3985 = vmatprep.subr.bf16.mxu0 0
    %3986 = vmatpush2.bf16.msra.mxu0 %v1903
    %3987 = vmatprep.mubr.bf16.mxu0 %v3847
    %3988 = vmatmul.mubr.bf16.gmra.mxu0 %v3799
    %v3989 = vpop.f32.mrf.mxu0
    %v3990 = vadd.f32 %v3902, %v3989
    %v3991 = vpop.f32.mrf.mxu0
    %v3992 = vpop.f32.mrf.mxu0
    %v3993 = vadd.f32 %v3905, %v3992
    %v3994 = vpop.f32.mrf.mxu0
    %3995 = vmatprep.mubr.bf16.mxu0 %v3850
    %3996 = vmatmul.mubr.bf16.gmra.mxu0 %v3803
    %v3997 = vpop.f32.mrf.mxu0
    %v3998 = vadd.f32 %v3910, %v3997
    %v3999 = vpop.f32.mrf.mxu0
    %v4000 = vpop.f32.mrf.mxu0
    %v4001 = vadd.f32 %v3913, %v4000
    %v4002 = vpop.f32.mrf.mxu0
    %4003 = vmatprep.mubr.bf16.mxu0 %v3853
    %4004 = vmatmul.mubr.bf16.gmra.mxu0 %v3807
    %v4005 = vpop.f32.mrf.mxu0
    %v4006 = vadd.f32 %v3918, %v4005
    %v4007 = vpop.f32.mrf.mxu0
    %v4008 = vpop.f32.mrf.mxu0
    %v4009 = vadd.f32 %v3921, %v4008
    %v4010 = vpop.f32.mrf.mxu0
    %4011 = vmatprep.mubr.bf16.mxu0 %v3856
    %4012 = vmatmul.mubr.bf16.gmra.mxu0 %v3811
    %v4013 = vpop.f32.mrf.mxu0
    %v4014 = vadd.f32 %v3926, %v4013
    %v4015 = vpop.f32.mrf.mxu0
    %v4016 = vpop.f32.mrf.mxu0
    %v4017 = vadd.f32 %v3929, %v4016
    %v4018 = vpop.f32.mrf.mxu0
    %4019 = vmatprep.mubr.bf16.mxu0 %v3859
    %4020 = vmatmul.mubr.bf16.gmra.mxu0 %v3815
    %v4021 = vpop.f32.mrf.mxu0
    %v4022 = vadd.f32 %v3934, %v4021
    %v4023 = vpop.f32.mrf.mxu0
    %v4024 = vpop.f32.mrf.mxu0
    %v4025 = vadd.f32 %v3937, %v4024
    %v4026 = vpop.f32.mrf.mxu0
    %4027 = vmatprep.mubr.bf16.mxu0 %v3862
    %4028 = vmatmul.mubr.bf16.gmra.mxu0 %v3819
    %v4029 = vpop.f32.mrf.mxu0
    %v4030 = vadd.f32 %v3942, %v4029
    %v4031 = vpop.f32.mrf.mxu0
    %v4032 = vpop.f32.mrf.mxu0
    %v4033 = vadd.f32 %v3945, %v4032
    %v4034 = vpop.f32.mrf.mxu0
    %4035 = vmatprep.mubr.bf16.mxu0 %v3865
    %4036 = vmatmul.mubr.bf16.gmra.mxu0 %v3823
    %v4037 = vpop.f32.mrf.mxu0
    %v4038 = vadd.f32 %v3950, %v4037
    %v4039 = vpop.f32.mrf.mxu0
    %v4040 = vpop.f32.mrf.mxu0
    %v4041 = vpop.f32.mrf.mxu0
    %4042 = vdwg.mxu0
    %v4043 = vpack.c.bf16 %v3993, %v3990
    %v4044 = vpack.c.bf16 %v4001, %v3998
    %v4045 = vpack.c.bf16 %v4009, %v4006
    %v4046 = vpack.c.bf16 %v4017, %v4014
    %v4047 = vpack.c.bf16 %v4025, %v4022
    %v4048 = vpack.c.bf16 %v4033, %v4030
    %v4049 = vpack.c.bf16 %v4038, %v4038
    %s4050 = scalar_lea.vmem %s2, 64
    %v4051 = vld [vmem:[%s4050] sm:$0xf]
    %v4052 = vld [vmem:[%s4050 + $0x4] sm:$0xf]
    %v4053 = vld [vmem:[%s4050 + $0x8] sm:$0xf]
    %v4054 = vld [vmem:[%s4050 + $0xc] sm:$0xf]
    %v4059 = vunpack.c.l.b16 %v4051
    %v4060 = vunpack.c.l.b16 %v4052
    %v4061 = vunpack.c.l.b16 %v4053
    %v4062 = vunpack.c.l.b16 %v4054
    %v4063 = vpack.c.b16 %v4060, %v4059
    %v4064 = vpack.c.b16 %v4062, %v4061
    %v4068 = vsel %vm2467, %v4043, 0
    %v4071 = vsel %vm2467, %v4044, 0
    %v4074 = vsel %vm2467, %v4045, 0
    %v4077 = vsel %vm2467, %v4046, 0
    %v4080 = vsel %vm2467, %v4047, 0
    %v4083 = vsel %vm2467, %v4048, 0
    %v4086 = vsel %vm2467, %v4049, 0
    %4088 = vmatprep.subr.bf16.mxu0 0
    %4089 = vmatpush1.bf16.msra.mxu0 0
    %4090 = vmatprep.subr.bf16.mxu0 0
    %4091 = vmatpush1.bf16.msra.mxu0 0
    %4092 = vmatprep.subr.bf16.mxu0 0
    %4093 = vmatpush1.bf16.msra.mxu0 0
    %4094 = vmatprep.subr.bf16.mxu0 0
    %4095 = vmatpush1.bf16.msra.mxu0 0
    %4096 = vmatprep.subr.bf16.mxu0 0
    %4097 = vmatpush1.bf16.msra.mxu0 0
    %4098 = vmatprep.subr.bf16.mxu0 0
    %4099 = vmatpush1.bf16.msra.mxu0 0
    %4100 = vmatprep.subr.bf16.mxu0 0
    %4101 = vmatpush1.bf16.msra.mxu0 %v4064
    %4102 = vmatprep.subr.bf16.mxu0 0
    %4103 = vmatpush1.bf16.msra.mxu0 %v4063
    %4104 = vmatprep.subr.bf16.mxu0 0
    %4105 = vmatpush2.bf16.msra.mxu0 0
    %4106 = vmatprep.subr.bf16.mxu0 0
    %4107 = vmatpush2.bf16.msra.mxu0 0
    %4108 = vmatprep.subr.bf16.mxu0 0
    %4109 = vmatpush2.bf16.msra.mxu0 0
    %4110 = vmatprep.subr.bf16.mxu0 0
    %4111 = vmatpush2.bf16.msra.mxu0 0
    %4112 = vmatprep.subr.bf16.mxu0 0
    %4113 = vmatpush2.bf16.msra.mxu0 0
    %4114 = vmatprep.subr.bf16.mxu0 0
    %4115 = vmatpush2.bf16.msra.mxu0 0
    %4116 = vmatprep.subr.bf16.mxu0 0
    %4117 = vmatpush2.bf16.msra.mxu0 0
    %4118 = vmatprep.subr.bf16.mxu0 0
    %4119 = vmatpush2.bf16.msra.mxu0 0
    %4120 = vmatprep.mubr.bf16.mxu0 0
    %4121 = vmatmul.mubr.bf16.gmra.mxu0 %v4068
    %v4122 = vpop.f32.mrf.mxu0
    %v4123 = vadd.f32 0.0, %v4122
    %v4124 = vpop.f32.mrf.mxu0
    %v4125 = vpop.f32.mrf.mxu0
    %v4126 = vadd.f32 0.0, %v4125
    %v4127 = vpop.f32.mrf.mxu0
    %4128 = vmatprep.mubr.bf16.mxu0 0
    %4129 = vmatmul.mubr.bf16.gmra.mxu0 %v4071
    %v4130 = vpop.f32.mrf.mxu0
    %v4131 = vadd.f32 0.0, %v4130
    %v4132 = vpop.f32.mrf.mxu0
    %v4133 = vpop.f32.mrf.mxu0
    %v4134 = vadd.f32 0.0, %v4133
    %v4135 = vpop.f32.mrf.mxu0
    %4136 = vmatprep.mubr.bf16.mxu0 0
    %4137 = vmatmul.mubr.bf16.gmra.mxu0 %v4074
    %v4138 = vpop.f32.mrf.mxu0
    %v4139 = vadd.f32 0.0, %v4138
    %v4140 = vpop.f32.mrf.mxu0
    %v4141 = vpop.f32.mrf.mxu0
    %v4142 = vadd.f32 0.0, %v4141
    %v4143 = vpop.f32.mrf.mxu0
    %4144 = vmatprep.mubr.bf16.mxu0 0
    %4145 = vmatmul.mubr.bf16.gmra.mxu0 %v4077
    %v4146 = vpop.f32.mrf.mxu0
    %v4147 = vadd.f32 0.0, %v4146
    %v4148 = vpop.f32.mrf.mxu0
    %v4149 = vpop.f32.mrf.mxu0
    %v4150 = vadd.f32 0.0, %v4149
    %v4151 = vpop.f32.mrf.mxu0
    %4152 = vmatprep.mubr.bf16.mxu0 0
    %4153 = vmatmul.mubr.bf16.gmra.mxu0 %v4080
    %v4154 = vpop.f32.mrf.mxu0
    %v4155 = vadd.f32 0.0, %v4154
    %v4156 = vpop.f32.mrf.mxu0
    %v4157 = vpop.f32.mrf.mxu0
    %v4158 = vadd.f32 0.0, %v4157
    %v4159 = vpop.f32.mrf.mxu0
    %4160 = vmatprep.mubr.bf16.mxu0 0
    %4161 = vmatmul.mubr.bf16.gmra.mxu0 %v4083
    %v4162 = vpop.f32.mrf.mxu0
    %v4163 = vadd.f32 0.0, %v4162
    %v4164 = vpop.f32.mrf.mxu0
    %v4165 = vpop.f32.mrf.mxu0
    %v4166 = vadd.f32 0.0, %v4165
    %v4167 = vpop.f32.mrf.mxu0
    %4168 = vmatprep.mubr.bf16.mxu0 0
    %4169 = vmatmul.mubr.bf16.gmra.mxu0 %v4086
    %v4170 = vpop.f32.mrf.mxu0
    %v4171 = vadd.f32 0.0, %v4170
    %v4172 = vpop.f32.mrf.mxu0
    %v4173 = vpop.f32.mrf.mxu0
    %v4174 = vpop.f32.mrf.mxu0
    %4175 = vdwg.mxu0
    %v4176 = vadd.f32 %v3679, %v4123
    %v4177 = vadd.f32 %v3680, %v4126
    %v4178 = vadd.f32 %v3681, %v4131
    %v4179 = vadd.f32 %v3682, %v4134
    %v4180 = vadd.f32 %v3683, %v4139
    %v4181 = vadd.f32 %v3684, %v4142
    %v4182 = vadd.f32 %v3685, %v4147
    %v4183 = vadd.f32 %v3686, %v4150
    %v4184 = vadd.f32 %v3687, %v4155
    %v4185 = vadd.f32 %v3688, %v4158
    %v4186 = vadd.f32 %v3689, %v4163
    %v4187 = vadd.f32 %v3690, %v4166
    %v4188 = vadd.f32 %v3691, %v4171
    %s4189 = scalar_lea.vmem %s5, 1040
    %v4190 = vld [vmem:[%s4189] sm:$0xff]
    %v4191 = vld [vmem:[%s4189 + $0x8] sm:$0xff]
    %v4192 = vld [vmem:[%s4189 + $0x10] sm:$0xff]
    %v4193 = vld [vmem:[%s4189 + $0x18] sm:$0xff]
    %v4194 = vld [vmem:[%s4189 + $0x20] sm:$0xff]
    %v4195 = vld [vmem:[%s4189 + $0x28] sm:$0xff]
    %v4196 = vld [vmem:[%s4189 + $0x30] sm:$0xff]
    %v4197 = vld [vmem:[%s4189 + $0x38] sm:$0xff]
    %v4198 = vld [vmem:[%s4189 + $0x40] sm:$0xff]
    %v4199 = vld [vmem:[%s4189 + $0x48] sm:$0xff]
    %v4200 = vld [vmem:[%s4189 + $0x50] sm:$0xff]
    %v4201 = vld [vmem:[%s4189 + $0x58] sm:$0xff]
    %v4202 = vld [vmem:[%s4189 + $0x60] sm:$0xff]
    %v4203 = vld [vmem:[%s4189 + $0x68] sm:$0xff]
    %v4204 = vld [vmem:[%s4189 + $0x70] sm:$0xff]
    %v4205 = vld [vmem:[%s4189 + $0x78] sm:$0xff]
    %v4206 = vld [vmem:[%s4189 + $0x80] sm:$0xff]
    %v4207 = vld [vmem:[%s4189 + $0x88] sm:$0xff]
    %v4208 = vld [vmem:[%s4189 + $0x90] sm:$0xff]
    %v4209 = vld [vmem:[%s4189 + $0x98] sm:$0xff]
    %v4210 = vld [vmem:[%s4189 + $0xa0] sm:$0xff]
    %v4211 = vld [vmem:[%s4189 + $0xa8] sm:$0xff]
    %v4212 = vld [vmem:[%s4189 + $0xb0] sm:$0xff]
    %v4213 = vld [vmem:[%s4189 + $0xb8] sm:$0xff]
    %v4214 = vld [vmem:[%s4189 + $0xc0] sm:$0x11]
    %v4215 = vld [vmem:[%s4189 + $0xc8] sm:$0x11]
    %v4242 = vunpack.c.l.b16 %v4190
    %v4243 = vunpack.c.h.b16 %v4190
    %v4244 = vunpack.c.l.b16 %v4191
    %v4245 = vunpack.c.h.b16 %v4191
    %v4246 = vunpack.c.l.b16 %v4192
    %v4247 = vunpack.c.h.b16 %v4192
    %v4248 = vunpack.c.l.b16 %v4193
    %v4249 = vunpack.c.h.b16 %v4193
    %v4250 = vunpack.c.l.b16 %v4194
    %v4251 = vunpack.c.h.b16 %v4194
    %v4252 = vunpack.c.l.b16 %v4195
    %v4253 = vunpack.c.h.b16 %v4195
    %v4254 = vunpack.c.l.b16 %v4196
    %v4255 = vunpack.c.h.b16 %v4196
    %v4256 = vunpack.c.l.b16 %v4197
    %v4257 = vunpack.c.h.b16 %v4197
    %v4258 = vunpack.c.l.b16 %v4198
    %v4259 = vunpack.c.h.b16 %v4198
    %v4260 = vunpack.c.l.b16 %v4199
    %v4261 = vunpack.c.h.b16 %v4199
    %v4262 = vunpack.c.l.b16 %v4200
    %v4263 = vunpack.c.h.b16 %v4200
    %v4264 = vunpack.c.l.b16 %v4201
    %v4265 = vunpack.c.h.b16 %v4201
    %v4266 = vunpack.c.l.b16 %v4202
    %v4267 = vunpack.c.h.b16 %v4202
    %v4268 = vunpack.c.l.b16 %v4203
    %v4269 = vunpack.c.h.b16 %v4203
    %v4270 = vunpack.c.l.b16 %v4204
    %v4271 = vunpack.c.h.b16 %v4204
    %v4272 = vunpack.c.l.b16 %v4205
    %v4273 = vunpack.c.h.b16 %v4205
    %v4274 = vunpack.c.l.b16 %v4206
    %v4275 = vunpack.c.h.b16 %v4206
    %v4276 = vunpack.c.l.b16 %v4207
    %v4277 = vunpack.c.h.b16 %v4207
    %v4278 = vunpack.c.l.b16 %v4208
    %v4279 = vunpack.c.h.b16 %v4208
    %v4280 = vunpack.c.l.b16 %v4209
    %v4281 = vunpack.c.h.b16 %v4209
    %v4282 = vunpack.c.l.b16 %v4210
    %v4283 = vunpack.c.h.b16 %v4210
    %v4284 = vunpack.c.l.b16 %v4211
    %v4285 = vunpack.c.h.b16 %v4211
    %v4286 = vunpack.c.l.b16 %v4212
    %v4287 = vunpack.c.h.b16 %v4212
    %v4288 = vunpack.c.l.b16 %v4213
    %v4289 = vunpack.c.h.b16 %v4213
    %v4290 = vunpack.c.l.b16 %v4214
    %v4291 = vunpack.c.h.b16 %v4214
    %v4292 = vunpack.c.l.b16 %v4215
    %v4293 = vunpack.c.h.b16 %v4215
    %v4294 = vpack.c.b16 %v4246, %v4242
    %v4295 = vpack.c.b16 %v4247, %v4243
    %v4296 = vpack.c.b16 %v4248, %v4244
    %v4297 = vpack.c.b16 %v4249, %v4245
    %v4298 = vpack.c.b16 %v4254, %v4250
    %v4299 = vpack.c.b16 %v4255, %v4251
    %v4300 = vpack.c.b16 %v4256, %v4252
    %v4301 = vpack.c.b16 %v4257, %v4253
    %v4302 = vpack.c.b16 %v4262, %v4258
    %v4303 = vpack.c.b16 %v4263, %v4259
    %v4304 = vpack.c.b16 %v4264, %v4260
    %v4305 = vpack.c.b16 %v4265, %v4261
    %v4306 = vpack.c.b16 %v4270, %v4266
    %v4307 = vpack.c.b16 %v4271, %v4267
    %v4308 = vpack.c.b16 %v4272, %v4268
    %v4309 = vpack.c.b16 %v4273, %v4269
    %v4310 = vpack.c.b16 %v4278, %v4274
    %v4311 = vpack.c.b16 %v4279, %v4275
    %v4312 = vpack.c.b16 %v4280, %v4276
    %v4313 = vpack.c.b16 %v4281, %v4277
    %v4314 = vpack.c.b16 %v4286, %v4282
    %v4315 = vpack.c.b16 %v4287, %v4283
    %v4316 = vpack.c.b16 %v4288, %v4284
    %v4317 = vpack.c.b16 %v4289, %v4285
    %v4318 = vpack.c.b16 %v4290, %v4290
    %v4319 = vpack.c.b16 %v4291, %v4291
    %v4320 = vpack.c.b16 %v4292, %v4292
    %v4321 = vpack.c.b16 %v4293, %v4293
    %v4344 = vsel %vm1880, %v4297, 0
    %v4347 = vsel %vm1880, %v4301, 0
    %v4350 = vsel %vm1880, %v4305, 0
    %v4353 = vsel %vm1880, %v4309, 0
    %v4356 = vsel %vm1880, %v4313, 0
    %v4359 = vsel %vm1880, %v4317, 0
    %v4362 = vsel %vm1880, %v4321, 0
    %4364 = vmatprep.subr.bf16.mxu0 0
    %4365 = vmatpush1.bf16.msra.mxu0 %v1709
    %4366 = vmatprep.subr.bf16.mxu0 0
    %4367 = vmatpush1.bf16.msra.mxu0 %v1708
    %4368 = vmatprep.subr.bf16.mxu0 0
    %4369 = vmatpush1.bf16.msra.mxu0 %v1707
    %4370 = vmatprep.subr.bf16.mxu0 0
    %4371 = vmatpush1.bf16.msra.mxu0 %v1706
    %4372 = vmatprep.subr.bf16.mxu0 0
    %4373 = vmatpush1.bf16.msra.mxu0 %v1705
    %4374 = vmatprep.subr.bf16.mxu0 0
    %4375 = vmatpush1.bf16.msra.mxu0 %v1704
    %4376 = vmatprep.subr.bf16.mxu0 0
    %4377 = vmatpush1.bf16.msra.mxu0 %v1703
    %4378 = vmatprep.subr.bf16.mxu0 0
    %4379 = vmatpush1.bf16.msra.mxu0 %v1702
    %4380 = vmatprep.subr.bf16.mxu0 0
    %4381 = vmatpush2.bf16.msra.mxu0 %v1717
    %4382 = vmatprep.subr.bf16.mxu0 0
    %4383 = vmatpush2.bf16.msra.mxu0 %v1716
    %4384 = vmatprep.subr.bf16.mxu0 0
    %4385 = vmatpush2.bf16.msra.mxu0 %v1715
    %4386 = vmatprep.subr.bf16.mxu0 0
    %4387 = vmatpush2.bf16.msra.mxu0 %v1714
    %4388 = vmatprep.subr.bf16.mxu0 0
    %4389 = vmatpush2.bf16.msra.mxu0 %v1713
    %4390 = vmatprep.subr.bf16.mxu0 0
    %4391 = vmatpush2.bf16.msra.mxu0 %v1712
    %4392 = vmatprep.subr.bf16.mxu0 0
    %4393 = vmatpush2.bf16.msra.mxu0 %v1711
    %4394 = vmatprep.subr.bf16.mxu0 0
    %4395 = vmatpush2.bf16.msra.mxu0 %v1710
    %4396 = vmatprep.mubr.bf16.mxu0 %v4295
    %4397 = vmatmul.mubr.bf16.gmra.mxu0 %v4294
    %v4398 = vpop.f32.mrf.mxu0
    %v4399 = vadd.f32 0.0, %v4398
    %v4400 = vpop.f32.mrf.mxu0
    %v4401 = vpop.f32.mrf.mxu0
    %v4402 = vadd.f32 0.0, %v4401
    %v4403 = vpop.f32.mrf.mxu0
    %4404 = vmatprep.mubr.bf16.mxu0 %v4299
    %4405 = vmatmul.mubr.bf16.gmra.mxu0 %v4298
    %v4406 = vpop.f32.mrf.mxu0
    %v4407 = vadd.f32 0.0, %v4406
    %v4408 = vpop.f32.mrf.mxu0
    %v4409 = vpop.f32.mrf.mxu0
    %v4410 = vadd.f32 0.0, %v4409
    %v4411 = vpop.f32.mrf.mxu0
    %4412 = vmatprep.mubr.bf16.mxu0 %v4303
    %4413 = vmatmul.mubr.bf16.gmra.mxu0 %v4302
    %v4414 = vpop.f32.mrf.mxu0
    %v4415 = vadd.f32 0.0, %v4414
    %v4416 = vpop.f32.mrf.mxu0
    %v4417 = vpop.f32.mrf.mxu0
    %v4418 = vadd.f32 0.0, %v4417
    %v4419 = vpop.f32.mrf.mxu0
    %4420 = vmatprep.mubr.bf16.mxu0 %v4307
    %4421 = vmatmul.mubr.bf16.gmra.mxu0 %v4306
    %v4422 = vpop.f32.mrf.mxu0
    %v4423 = vadd.f32 0.0, %v4422
    %v4424 = vpop.f32.mrf.mxu0
    %v4425 = vpop.f32.mrf.mxu0
    %v4426 = vadd.f32 0.0, %v4425
    %v4427 = vpop.f32.mrf.mxu0
    %4428 = vmatprep.mubr.bf16.mxu0 %v4311
    %4429 = vmatmul.mubr.bf16.gmra.mxu0 %v4310
    %v4430 = vpop.f32.mrf.mxu0
    %v4431 = vadd.f32 0.0, %v4430
    %v4432 = vpop.f32.mrf.mxu0
    %v4433 = vpop.f32.mrf.mxu0
    %v4434 = vadd.f32 0.0, %v4433
    %v4435 = vpop.f32.mrf.mxu0
    %4436 = vmatprep.mubr.bf16.mxu0 %v4315
    %4437 = vmatmul.mubr.bf16.gmra.mxu0 %v4314
    %v4438 = vpop.f32.mrf.mxu0
    %v4439 = vadd.f32 0.0, %v4438
    %v4440 = vpop.f32.mrf.mxu0
    %v4441 = vpop.f32.mrf.mxu0
    %v4442 = vadd.f32 0.0, %v4441
    %v4443 = vpop.f32.mrf.mxu0
    %4444 = vmatprep.mubr.bf16.mxu0 %v4319
    %4445 = vmatmul.mubr.bf16.gmra.mxu0 %v4318
    %v4446 = vpop.f32.mrf.mxu0
    %v4447 = vadd.f32 0.0, %v4446
    %v4448 = vpop.f32.mrf.mxu0
    %v4449 = vpop.f32.mrf.mxu0
    %v4450 = vpop.f32.mrf.mxu0
    %4451 = vdwg.mxu0
    %4452 = vmatprep.subr.bf16.mxu0 0
    %4453 = vmatpush1.bf16.msra.mxu0 %v1725
    %4454 = vmatprep.subr.bf16.mxu0 0
    %4455 = vmatpush1.bf16.msra.mxu0 %v1724
    %4456 = vmatprep.subr.bf16.mxu0 0
    %4457 = vmatpush1.bf16.msra.mxu0 %v1723
    %4458 = vmatprep.subr.bf16.mxu0 0
    %4459 = vmatpush1.bf16.msra.mxu0 %v1722
    %4460 = vmatprep.subr.bf16.mxu0 0
    %4461 = vmatpush1.bf16.msra.mxu0 %v1721
    %4462 = vmatprep.subr.bf16.mxu0 0
    %4463 = vmatpush1.bf16.msra.mxu0 %v1720
    %4464 = vmatprep.subr.bf16.mxu0 0
    %4465 = vmatpush1.bf16.msra.mxu0 %v1719
    %4466 = vmatprep.subr.bf16.mxu0 0
    %4467 = vmatpush1.bf16.msra.mxu0 %v1718
    %4468 = vmatprep.subr.bf16.mxu0 0
    %4469 = vmatpush2.bf16.msra.mxu0 0
    %4470 = vmatprep.subr.bf16.mxu0 0
    %4471 = vmatpush2.bf16.msra.mxu0 0
    %4472 = vmatprep.subr.bf16.mxu0 0
    %4473 = vmatpush2.bf16.msra.mxu0 0
    %4474 = vmatprep.subr.bf16.mxu0 0
    %4475 = vmatpush2.bf16.msra.mxu0 0
    %4476 = vmatprep.subr.bf16.mxu0 0
    %4477 = vmatpush2.bf16.msra.mxu0 0
    %4478 = vmatprep.subr.bf16.mxu0 0
    %4479 = vmatpush2.bf16.msra.mxu0 0
    %4480 = vmatprep.subr.bf16.mxu0 0
    %4481 = vmatpush2.bf16.msra.mxu0 0
    %4482 = vmatprep.subr.bf16.mxu0 0
    %4483 = vmatpush2.bf16.msra.mxu0 %v1903
    %4484 = vmatprep.mubr.bf16.mxu0 %v4344
    %4485 = vmatmul.mubr.bf16.gmra.mxu0 %v4296
    %v4486 = vpop.f32.mrf.mxu0
    %v4487 = vadd.f32 %v4399, %v4486
    %v4488 = vpop.f32.mrf.mxu0
    %v4489 = vpop.f32.mrf.mxu0
    %v4490 = vadd.f32 %v4402, %v4489
    %v4491 = vpop.f32.mrf.mxu0
    %4492 = vmatprep.mubr.bf16.mxu0 %v4347
    %4493 = vmatmul.mubr.bf16.gmra.mxu0 %v4300
    %v4494 = vpop.f32.mrf.mxu0
    %v4495 = vadd.f32 %v4407, %v4494
    %v4496 = vpop.f32.mrf.mxu0
    %v4497 = vpop.f32.mrf.mxu0
    %v4498 = vadd.f32 %v4410, %v4497
    %v4499 = vpop.f32.mrf.mxu0
    %4500 = vmatprep.mubr.bf16.mxu0 %v4350
    %4501 = vmatmul.mubr.bf16.gmra.mxu0 %v4304
    %v4502 = vpop.f32.mrf.mxu0
    %v4503 = vadd.f32 %v4415, %v4502
    %v4504 = vpop.f32.mrf.mxu0
    %v4505 = vpop.f32.mrf.mxu0
    %v4506 = vadd.f32 %v4418, %v4505
    %v4507 = vpop.f32.mrf.mxu0
    %4508 = vmatprep.mubr.bf16.mxu0 %v4353
    %4509 = vmatmul.mubr.bf16.gmra.mxu0 %v4308
    %v4510 = vpop.f32.mrf.mxu0
    %v4511 = vadd.f32 %v4423, %v4510
    %v4512 = vpop.f32.mrf.mxu0
    %v4513 = vpop.f32.mrf.mxu0
    %v4514 = vadd.f32 %v4426, %v4513
    %v4515 = vpop.f32.mrf.mxu0
    %4516 = vmatprep.mubr.bf16.mxu0 %v4356
    %4517 = vmatmul.mubr.bf16.gmra.mxu0 %v4312
    %v4518 = vpop.f32.mrf.mxu0
    %v4519 = vadd.f32 %v4431, %v4518
    %v4520 = vpop.f32.mrf.mxu0
    %v4521 = vpop.f32.mrf.mxu0
    %v4522 = vadd.f32 %v4434, %v4521
    %v4523 = vpop.f32.mrf.mxu0
    %4524 = vmatprep.mubr.bf16.mxu0 %v4359
    %4525 = vmatmul.mubr.bf16.gmra.mxu0 %v4316
    %v4526 = vpop.f32.mrf.mxu0
    %v4527 = vadd.f32 %v4439, %v4526
    %v4528 = vpop.f32.mrf.mxu0
    %v4529 = vpop.f32.mrf.mxu0
    %v4530 = vadd.f32 %v4442, %v4529
    %v4531 = vpop.f32.mrf.mxu0
    %4532 = vmatprep.mubr.bf16.mxu0 %v4362
    %4533 = vmatmul.mubr.bf16.gmra.mxu0 %v4320
    %v4534 = vpop.f32.mrf.mxu0
    %v4535 = vadd.f32 %v4447, %v4534
    %v4536 = vpop.f32.mrf.mxu0
    %v4537 = vpop.f32.mrf.mxu0
    %v4538 = vpop.f32.mrf.mxu0
    %4539 = vdwg.mxu0
    %v4540 = vpack.c.bf16 %v4490, %v4487
    %v4541 = vpack.c.bf16 %v4498, %v4495
    %v4542 = vpack.c.bf16 %v4506, %v4503
    %v4543 = vpack.c.bf16 %v4514, %v4511
    %v4544 = vpack.c.bf16 %v4522, %v4519
    %v4545 = vpack.c.bf16 %v4530, %v4527
    %v4546 = vpack.c.bf16 %v4535, %v4535
    %s4547 = scalar_lea.vmem %s2, 80
    %v4548 = vld [vmem:[%s4547] sm:$0xf]
    %v4549 = vld [vmem:[%s4547 + $0x4] sm:$0xf]
    %v4550 = vld [vmem:[%s4547 + $0x8] sm:$0xf]
    %v4551 = vld [vmem:[%s4547 + $0xc] sm:$0xf]
    %v4556 = vunpack.c.l.b16 %v4548
    %v4557 = vunpack.c.l.b16 %v4549
    %v4558 = vunpack.c.l.b16 %v4550
    %v4559 = vunpack.c.l.b16 %v4551
    %v4560 = vpack.c.b16 %v4557, %v4556
    %v4561 = vpack.c.b16 %v4559, %v4558
    %v4565 = vsel %vm2467, %v4540, 0
    %v4568 = vsel %vm2467, %v4541, 0
    %v4571 = vsel %vm2467, %v4542, 0
    %v4574 = vsel %vm2467, %v4543, 0
    %v4577 = vsel %vm2467, %v4544, 0
    %v4580 = vsel %vm2467, %v4545, 0
    %v4583 = vsel %vm2467, %v4546, 0
    %4585 = vmatprep.subr.bf16.mxu0 0
    %4586 = vmatpush1.bf16.msra.mxu0 0
    %4587 = vmatprep.subr.bf16.mxu0 0
    %4588 = vmatpush1.bf16.msra.mxu0 0
    %4589 = vmatprep.subr.bf16.mxu0 0
    %4590 = vmatpush1.bf16.msra.mxu0 0
    %4591 = vmatprep.subr.bf16.mxu0 0
    %4592 = vmatpush1.bf16.msra.mxu0 0
    %4593 = vmatprep.subr.bf16.mxu0 0
    %4594 = vmatpush1.bf16.msra.mxu0 0
    %4595 = vmatprep.subr.bf16.mxu0 0
    %4596 = vmatpush1.bf16.msra.mxu0 0
    %4597 = vmatprep.subr.bf16.mxu0 0
    %4598 = vmatpush1.bf16.msra.mxu0 %v4561
    %4599 = vmatprep.subr.bf16.mxu0 0
    %4600 = vmatpush1.bf16.msra.mxu0 %v4560
    %4601 = vmatprep.subr.bf16.mxu0 0
    %4602 = vmatpush2.bf16.msra.mxu0 0
    %4603 = vmatprep.subr.bf16.mxu0 0
    %4604 = vmatpush2.bf16.msra.mxu0 0
    %4605 = vmatprep.subr.bf16.mxu0 0
    %4606 = vmatpush2.bf16.msra.mxu0 0
    %4607 = vmatprep.subr.bf16.mxu0 0
    %4608 = vmatpush2.bf16.msra.mxu0 0
    %4609 = vmatprep.subr.bf16.mxu0 0
    %4610 = vmatpush2.bf16.msra.mxu0 0
    %4611 = vmatprep.subr.bf16.mxu0 0
    %4612 = vmatpush2.bf16.msra.mxu0 0
    %4613 = vmatprep.subr.bf16.mxu0 0
    %4614 = vmatpush2.bf16.msra.mxu0 0
    %4615 = vmatprep.subr.bf16.mxu0 0
    %4616 = vmatpush2.bf16.msra.mxu0 0
    %4617 = vmatprep.mubr.bf16.mxu0 0
    %4618 = vmatmul.mubr.bf16.gmra.mxu0 %v4565
    %v4619 = vpop.f32.mrf.mxu0
    %v4620 = vadd.f32 0.0, %v4619
    %v4621 = vpop.f32.mrf.mxu0
    %v4622 = vpop.f32.mrf.mxu0
    %v4623 = vadd.f32 0.0, %v4622
    %v4624 = vpop.f32.mrf.mxu0
    %4625 = vmatprep.mubr.bf16.mxu0 0
    %4626 = vmatmul.mubr.bf16.gmra.mxu0 %v4568
    %v4627 = vpop.f32.mrf.mxu0
    %v4628 = vadd.f32 0.0, %v4627
    %v4629 = vpop.f32.mrf.mxu0
    %v4630 = vpop.f32.mrf.mxu0
    %v4631 = vadd.f32 0.0, %v4630
    %v4632 = vpop.f32.mrf.mxu0
    %4633 = vmatprep.mubr.bf16.mxu0 0
    %4634 = vmatmul.mubr.bf16.gmra.mxu0 %v4571
    %v4635 = vpop.f32.mrf.mxu0
    %v4636 = vadd.f32 0.0, %v4635
    %v4637 = vpop.f32.mrf.mxu0
    %v4638 = vpop.f32.mrf.mxu0
    %v4639 = vadd.f32 0.0, %v4638
    %v4640 = vpop.f32.mrf.mxu0
    %4641 = vmatprep.mubr.bf16.mxu0 0
    %4642 = vmatmul.mubr.bf16.gmra.mxu0 %v4574
    %v4643 = vpop.f32.mrf.mxu0
    %v4644 = vadd.f32 0.0, %v4643
    %v4645 = vpop.f32.mrf.mxu0
    %v4646 = vpop.f32.mrf.mxu0
    %v4647 = vadd.f32 0.0, %v4646
    %v4648 = vpop.f32.mrf.mxu0
    %4649 = vmatprep.mubr.bf16.mxu0 0
    %4650 = vmatmul.mubr.bf16.gmra.mxu0 %v4577
    %v4651 = vpop.f32.mrf.mxu0
    %v4652 = vadd.f32 0.0, %v4651
    %v4653 = vpop.f32.mrf.mxu0
    %v4654 = vpop.f32.mrf.mxu0
    %v4655 = vadd.f32 0.0, %v4654
    %v4656 = vpop.f32.mrf.mxu0
    %4657 = vmatprep.mubr.bf16.mxu0 0
    %4658 = vmatmul.mubr.bf16.gmra.mxu0 %v4580
    %v4659 = vpop.f32.mrf.mxu0
    %v4660 = vadd.f32 0.0, %v4659
    %v4661 = vpop.f32.mrf.mxu0
    %v4662 = vpop.f32.mrf.mxu0
    %v4663 = vadd.f32 0.0, %v4662
    %v4664 = vpop.f32.mrf.mxu0
    %4665 = vmatprep.mubr.bf16.mxu0 0
    %4666 = vmatmul.mubr.bf16.gmra.mxu0 %v4583
    %v4667 = vpop.f32.mrf.mxu0
    %v4668 = vadd.f32 0.0, %v4667
    %v4669 = vpop.f32.mrf.mxu0
    %v4670 = vpop.f32.mrf.mxu0
    %v4671 = vpop.f32.mrf.mxu0
    %4672 = vdwg.mxu0
    %v4673 = vadd.f32 %v4176, %v4620
    %v4674 = vadd.f32 %v4177, %v4623
    %v4675 = vadd.f32 %v4178, %v4628
    %v4676 = vadd.f32 %v4179, %v4631
    %v4677 = vadd.f32 %v4180, %v4636
    %v4678 = vadd.f32 %v4181, %v4639
    %v4679 = vadd.f32 %v4182, %v4644
    %v4680 = vadd.f32 %v4183, %v4647
    %v4681 = vadd.f32 %v4184, %v4652
    %v4682 = vadd.f32 %v4185, %v4655
    %v4683 = vadd.f32 %v4186, %v4660
    %v4684 = vadd.f32 %v4187, %v4663
    %v4685 = vadd.f32 %v4188, %v4668
    %s4686 = scalar_lea.vmem %s5, 1248
    %v4687 = vld [vmem:[%s4686] sm:$0xff]
    %v4688 = vld [vmem:[%s4686 + $0x8] sm:$0xff]
    %v4689 = vld [vmem:[%s4686 + $0x10] sm:$0xff]
    %v4690 = vld [vmem:[%s4686 + $0x18] sm:$0xff]
    %v4691 = vld [vmem:[%s4686 + $0x20] sm:$0xff]
    %v4692 = vld [vmem:[%s4686 + $0x28] sm:$0xff]
    %v4693 = vld [vmem:[%s4686 + $0x30] sm:$0xff]
    %v4694 = vld [vmem:[%s4686 + $0x38] sm:$0xff]
    %v4695 = vld [vmem:[%s4686 + $0x40] sm:$0xff]
    %v4696 = vld [vmem:[%s4686 + $0x48] sm:$0xff]
    %v4697 = vld [vmem:[%s4686 + $0x50] sm:$0xff]
    %v4698 = vld [vmem:[%s4686 + $0x58] sm:$0xff]
    %v4699 = vld [vmem:[%s4686 + $0x60] sm:$0xff]
    %v4700 = vld [vmem:[%s4686 + $0x68] sm:$0xff]
    %v4701 = vld [vmem:[%s4686 + $0x70] sm:$0xff]
    %v4702 = vld [vmem:[%s4686 + $0x78] sm:$0xff]
    %v4703 = vld [vmem:[%s4686 + $0x80] sm:$0xff]
    %v4704 = vld [vmem:[%s4686 + $0x88] sm:$0xff]
    %v4705 = vld [vmem:[%s4686 + $0x90] sm:$0xff]
    %v4706 = vld [vmem:[%s4686 + $0x98] sm:$0xff]
    %v4707 = vld [vmem:[%s4686 + $0xa0] sm:$0xff]
    %v4708 = vld [vmem:[%s4686 + $0xa8] sm:$0xff]
    %v4709 = vld [vmem:[%s4686 + $0xb0] sm:$0xff]
    %v4710 = vld [vmem:[%s4686 + $0xb8] sm:$0xff]
    %v4711 = vld [vmem:[%s4686 + $0xc0] sm:$0x11]
    %v4712 = vld [vmem:[%s4686 + $0xc8] sm:$0x11]
    %v4739 = vunpack.c.l.b16 %v4687
    %v4740 = vunpack.c.h.b16 %v4687
    %v4741 = vunpack.c.l.b16 %v4688
    %v4742 = vunpack.c.h.b16 %v4688
    %v4743 = vunpack.c.l.b16 %v4689
    %v4744 = vunpack.c.h.b16 %v4689
    %v4745 = vunpack.c.l.b16 %v4690
    %v4746 = vunpack.c.h.b16 %v4690
    %v4747 = vunpack.c.l.b16 %v4691
    %v4748 = vunpack.c.h.b16 %v4691
    %v4749 = vunpack.c.l.b16 %v4692
    %v4750 = vunpack.c.h.b16 %v4692
    %v4751 = vunpack.c.l.b16 %v4693
    %v4752 = vunpack.c.h.b16 %v4693
    %v4753 = vunpack.c.l.b16 %v4694
    %v4754 = vunpack.c.h.b16 %v4694
    %v4755 = vunpack.c.l.b16 %v4695
    %v4756 = vunpack.c.h.b16 %v4695
    %v4757 = vunpack.c.l.b16 %v4696
    %v4758 = vunpack.c.h.b16 %v4696
    %v4759 = vunpack.c.l.b16 %v4697
    %v4760 = vunpack.c.h.b16 %v4697
    %v4761 = vunpack.c.l.b16 %v4698
    %v4762 = vunpack.c.h.b16 %v4698
    %v4763 = vunpack.c.l.b16 %v4699
    %v4764 = vunpack.c.h.b16 %v4699
    %v4765 = vunpack.c.l.b16 %v4700
    %v4766 = vunpack.c.h.b16 %v4700
    %v4767 = vunpack.c.l.b16 %v4701
    %v4768 = vunpack.c.h.b16 %v4701
    %v4769 = vunpack.c.l.b16 %v4702
    %v4770 = vunpack.c.h.b16 %v4702
    %v4771 = vunpack.c.l.b16 %v4703
    %v4772 = vunpack.c.h.b16 %v4703
    %v4773 = vunpack.c.l.b16 %v4704
    %v4774 = vunpack.c.h.b16 %v4704
    %v4775 = vunpack.c.l.b16 %v4705
    %v4776 = vunpack.c.h.b16 %v4705
    %v4777 = vunpack.c.l.b16 %v4706
    %v4778 = vunpack.c.h.b16 %v4706
    %v4779 = vunpack.c.l.b16 %v4707
    %v4780 = vunpack.c.h.b16 %v4707
    %v4781 = vunpack.c.l.b16 %v4708
    %v4782 = vunpack.c.h.b16 %v4708
    %v4783 = vunpack.c.l.b16 %v4709
    %v4784 = vunpack.c.h.b16 %v4709
    %v4785 = vunpack.c.l.b16 %v4710
    %v4786 = vunpack.c.h.b16 %v4710
    %v4787 = vunpack.c.l.b16 %v4711
    %v4788 = vunpack.c.h.b16 %v4711
    %v4789 = vunpack.c.l.b16 %v4712
    %v4790 = vunpack.c.h.b16 %v4712
    %v4791 = vpack.c.b16 %v4743, %v4739
    %v4792 = vpack.c.b16 %v4744, %v4740
    %v4793 = vpack.c.b16 %v4745, %v4741
    %v4794 = vpack.c.b16 %v4746, %v4742
    %v4795 = vpack.c.b16 %v4751, %v4747
    %v4796 = vpack.c.b16 %v4752, %v4748
    %v4797 = vpack.c.b16 %v4753, %v4749
    %v4798 = vpack.c.b16 %v4754, %v4750
    %v4799 = vpack.c.b16 %v4759, %v4755
    %v4800 = vpack.c.b16 %v4760, %v4756
    %v4801 = vpack.c.b16 %v4761, %v4757
    %v4802 = vpack.c.b16 %v4762, %v4758
    %v4803 = vpack.c.b16 %v4767, %v4763
    %v4804 = vpack.c.b16 %v4768, %v4764
    %v4805 = vpack.c.b16 %v4769, %v4765
    %v4806 = vpack.c.b16 %v4770, %v4766
    %v4807 = vpack.c.b16 %v4775, %v4771
    %v4808 = vpack.c.b16 %v4776, %v4772
    %v4809 = vpack.c.b16 %v4777, %v4773
    %v4810 = vpack.c.b16 %v4778, %v4774
    %v4811 = vpack.c.b16 %v4783, %v4779
    %v4812 = vpack.c.b16 %v4784, %v4780
    %v4813 = vpack.c.b16 %v4785, %v4781
    %v4814 = vpack.c.b16 %v4786, %v4782
    %v4815 = vpack.c.b16 %v4787, %v4787
    %v4816 = vpack.c.b16 %v4788, %v4788
    %v4817 = vpack.c.b16 %v4789, %v4789
    %v4818 = vpack.c.b16 %v4790, %v4790
    %v4841 = vsel %vm1880, %v4794, 0
    %v4844 = vsel %vm1880, %v4798, 0
    %v4847 = vsel %vm1880, %v4802, 0
    %v4850 = vsel %vm1880, %v4806, 0
    %v4853 = vsel %vm1880, %v4810, 0
    %v4856 = vsel %vm1880, %v4814, 0
    %v4859 = vsel %vm1880, %v4818, 0
    %4861 = vmatprep.subr.bf16.mxu0 0
    %4862 = vmatpush1.bf16.msra.mxu0 %v1709
    %4863 = vmatprep.subr.bf16.mxu0 0
    %4864 = vmatpush1.bf16.msra.mxu0 %v1708
    %4865 = vmatprep.subr.bf16.mxu0 0
    %4866 = vmatpush1.bf16.msra.mxu0 %v1707
    %4867 = vmatprep.subr.bf16.mxu0 0
    %4868 = vmatpush1.bf16.msra.mxu0 %v1706
    %4869 = vmatprep.subr.bf16.mxu0 0
    %4870 = vmatpush1.bf16.msra.mxu0 %v1705
    %4871 = vmatprep.subr.bf16.mxu0 0
    %4872 = vmatpush1.bf16.msra.mxu0 %v1704
    %4873 = vmatprep.subr.bf16.mxu0 0
    %4874 = vmatpush1.bf16.msra.mxu0 %v1703
    %4875 = vmatprep.subr.bf16.mxu0 0
    %4876 = vmatpush1.bf16.msra.mxu0 %v1702
    %4877 = vmatprep.subr.bf16.mxu0 0
    %4878 = vmatpush2.bf16.msra.mxu0 %v1717
    %4879 = vmatprep.subr.bf16.mxu0 0
    %4880 = vmatpush2.bf16.msra.mxu0 %v1716
    %4881 = vmatprep.subr.bf16.mxu0 0
    %4882 = vmatpush2.bf16.msra.mxu0 %v1715
    %4883 = vmatprep.subr.bf16.mxu0 0
    %4884 = vmatpush2.bf16.msra.mxu0 %v1714
    %4885 = vmatprep.subr.bf16.mxu0 0
    %4886 = vmatpush2.bf16.msra.mxu0 %v1713
    %4887 = vmatprep.subr.bf16.mxu0 0
    %4888 = vmatpush2.bf16.msra.mxu0 %v1712
    %4889 = vmatprep.subr.bf16.mxu0 0
    %4890 = vmatpush2.bf16.msra.mxu0 %v1711
    %4891 = vmatprep.subr.bf16.mxu0 0
    %4892 = vmatpush2.bf16.msra.mxu0 %v1710
    %4893 = vmatprep.mubr.bf16.mxu0 %v4792
    %4894 = vmatmul.mubr.bf16.gmra.mxu0 %v4791
    %v4895 = vpop.f32.mrf.mxu0
    %v4896 = vadd.f32 0.0, %v4895
    %v4897 = vpop.f32.mrf.mxu0
    %v4898 = vpop.f32.mrf.mxu0
    %v4899 = vadd.f32 0.0, %v4898
    %v4900 = vpop.f32.mrf.mxu0
    %4901 = vmatprep.mubr.bf16.mxu0 %v4796
    %4902 = vmatmul.mubr.bf16.gmra.mxu0 %v4795
    %v4903 = vpop.f32.mrf.mxu0
    %v4904 = vadd.f32 0.0, %v4903
    %v4905 = vpop.f32.mrf.mxu0
    %v4906 = vpop.f32.mrf.mxu0
    %v4907 = vadd.f32 0.0, %v4906
    %v4908 = vpop.f32.mrf.mxu0
    %4909 = vmatprep.mubr.bf16.mxu0 %v4800
    %4910 = vmatmul.mubr.bf16.gmra.mxu0 %v4799
    %v4911 = vpop.f32.mrf.mxu0
    %v4912 = vadd.f32 0.0, %v4911
    %v4913 = vpop.f32.mrf.mxu0
    %v4914 = vpop.f32.mrf.mxu0
    %v4915 = vadd.f32 0.0, %v4914
    %v4916 = vpop.f32.mrf.mxu0
    %4917 = vmatprep.mubr.bf16.mxu0 %v4804
    %4918 = vmatmul.mubr.bf16.gmra.mxu0 %v4803
    %v4919 = vpop.f32.mrf.mxu0
    %v4920 = vadd.f32 0.0, %v4919
    %v4921 = vpop.f32.mrf.mxu0
    %v4922 = vpop.f32.mrf.mxu0
    %v4923 = vadd.f32 0.0, %v4922
    %v4924 = vpop.f32.mrf.mxu0
    %4925 = vmatprep.mubr.bf16.mxu0 %v4808
    %4926 = vmatmul.mubr.bf16.gmra.mxu0 %v4807
    %v4927 = vpop.f32.mrf.mxu0
    %v4928 = vadd.f32 0.0, %v4927
    %v4929 = vpop.f32.mrf.mxu0
    %v4930 = vpop.f32.mrf.mxu0
    %v4931 = vadd.f32 0.0, %v4930
    %v4932 = vpop.f32.mrf.mxu0
    %4933 = vmatprep.mubr.bf16.mxu0 %v4812
    %4934 = vmatmul.mubr.bf16.gmra.mxu0 %v4811
    %v4935 = vpop.f32.mrf.mxu0
    %v4936 = vadd.f32 0.0, %v4935
    %v4937 = vpop.f32.mrf.mxu0
    %v4938 = vpop.f32.mrf.mxu0
    %v4939 = vadd.f32 0.0, %v4938
    %v4940 = vpop.f32.mrf.mxu0
    %4941 = vmatprep.mubr.bf16.mxu0 %v4816
    %4942 = vmatmul.mubr.bf16.gmra.mxu0 %v4815
    %v4943 = vpop.f32.mrf.mxu0
    %v4944 = vadd.f32 0.0, %v4943
    %v4945 = vpop.f32.mrf.mxu0
    %v4946 = vpop.f32.mrf.mxu0
    %v4947 = vpop.f32.mrf.mxu0
    %4948 = vdwg.mxu0
    %4949 = vmatprep.subr.bf16.mxu0 0
    %4950 = vmatpush1.bf16.msra.mxu0 %v1725
    %4951 = vmatprep.subr.bf16.mxu0 0
    %4952 = vmatpush1.bf16.msra.mxu0 %v1724
    %4953 = vmatprep.subr.bf16.mxu0 0
    %4954 = vmatpush1.bf16.msra.mxu0 %v1723
    %4955 = vmatprep.subr.bf16.mxu0 0
    %4956 = vmatpush1.bf16.msra.mxu0 %v1722
    %4957 = vmatprep.subr.bf16.mxu0 0
    %4958 = vmatpush1.bf16.msra.mxu0 %v1721
    %4959 = vmatprep.subr.bf16.mxu0 0
    %4960 = vmatpush1.bf16.msra.mxu0 %v1720
    %4961 = vmatprep.subr.bf16.mxu0 0
    %4962 = vmatpush1.bf16.msra.mxu0 %v1719
    %4963 = vmatprep.subr.bf16.mxu0 0
    %4964 = vmatpush1.bf16.msra.mxu0 %v1718
    %4965 = vmatprep.subr.bf16.mxu0 0
    %4966 = vmatpush2.bf16.msra.mxu0 0
    %4967 = vmatprep.subr.bf16.mxu0 0
    %4968 = vmatpush2.bf16.msra.mxu0 0
    %4969 = vmatprep.subr.bf16.mxu0 0
    %4970 = vmatpush2.bf16.msra.mxu0 0
    %4971 = vmatprep.subr.bf16.mxu0 0
    %4972 = vmatpush2.bf16.msra.mxu0 0
    %4973 = vmatprep.subr.bf16.mxu0 0
    %4974 = vmatpush2.bf16.msra.mxu0 0
    %4975 = vmatprep.subr.bf16.mxu0 0
    %4976 = vmatpush2.bf16.msra.mxu0 0
    %4977 = vmatprep.subr.bf16.mxu0 0
    %4978 = vmatpush2.bf16.msra.mxu0 0
    %4979 = vmatprep.subr.bf16.mxu0 0
    %4980 = vmatpush2.bf16.msra.mxu0 %v1903
    %4981 = vmatprep.mubr.bf16.mxu0 %v4841
    %4982 = vmatmul.mubr.bf16.gmra.mxu0 %v4793
    %v4983 = vpop.f32.mrf.mxu0
    %v4984 = vadd.f32 %v4896, %v4983
    %v4985 = vpop.f32.mrf.mxu0
    %v4986 = vpop.f32.mrf.mxu0
    %v4987 = vadd.f32 %v4899, %v4986
    %v4988 = vpop.f32.mrf.mxu0
    %4989 = vmatprep.mubr.bf16.mxu0 %v4844
    %4990 = vmatmul.mubr.bf16.gmra.mxu0 %v4797
    %v4991 = vpop.f32.mrf.mxu0
    %v4992 = vadd.f32 %v4904, %v4991
    %v4993 = vpop.f32.mrf.mxu0
    %v4994 = vpop.f32.mrf.mxu0
    %v4995 = vadd.f32 %v4907, %v4994
    %v4996 = vpop.f32.mrf.mxu0
    %4997 = vmatprep.mubr.bf16.mxu0 %v4847
    %4998 = vmatmul.mubr.bf16.gmra.mxu0 %v4801
    %v4999 = vpop.f32.mrf.mxu0
    %v5000 = vadd.f32 %v4912, %v4999
    %v5001 = vpop.f32.mrf.mxu0
    %v5002 = vpop.f32.mrf.mxu0
    %v5003 = vadd.f32 %v4915, %v5002
    %v5004 = vpop.f32.mrf.mxu0
    %5005 = vmatprep.mubr.bf16.mxu0 %v4850
    %5006 = vmatmul.mubr.bf16.gmra.mxu0 %v4805
    %v5007 = vpop.f32.mrf.mxu0
    %v5008 = vadd.f32 %v4920, %v5007
    %v5009 = vpop.f32.mrf.mxu0
    %v5010 = vpop.f32.mrf.mxu0
    %v5011 = vadd.f32 %v4923, %v5010
    %v5012 = vpop.f32.mrf.mxu0
    %5013 = vmatprep.mubr.bf16.mxu0 %v4853
    %5014 = vmatmul.mubr.bf16.gmra.mxu0 %v4809
    %v5015 = vpop.f32.mrf.mxu0
    %v5016 = vadd.f32 %v4928, %v5015
    %v5017 = vpop.f32.mrf.mxu0
    %v5018 = vpop.f32.mrf.mxu0
    %v5019 = vadd.f32 %v4931, %v5018
    %v5020 = vpop.f32.mrf.mxu0
    %5021 = vmatprep.mubr.bf16.mxu0 %v4856
    %5022 = vmatmul.mubr.bf16.gmra.mxu0 %v4813
    %v5023 = vpop.f32.mrf.mxu0
    %v5024 = vadd.f32 %v4936, %v5023
    %v5025 = vpop.f32.mrf.mxu0
    %v5026 = vpop.f32.mrf.mxu0
    %v5027 = vadd.f32 %v4939, %v5026
    %v5028 = vpop.f32.mrf.mxu0
    %5029 = vmatprep.mubr.bf16.mxu0 %v4859
    %5030 = vmatmul.mubr.bf16.gmra.mxu0 %v4817
    %v5031 = vpop.f32.mrf.mxu0
    %v5032 = vadd.f32 %v4944, %v5031
    %v5033 = vpop.f32.mrf.mxu0
    %v5034 = vpop.f32.mrf.mxu0
    %v5035 = vpop.f32.mrf.mxu0
    %5036 = vdwg.mxu0
    %v5037 = vpack.c.bf16 %v4987, %v4984
    %v5038 = vpack.c.bf16 %v4995, %v4992
    %v5039 = vpack.c.bf16 %v5003, %v5000
    %v5040 = vpack.c.bf16 %v5011, %v5008
    %v5041 = vpack.c.bf16 %v5019, %v5016
    %v5042 = vpack.c.bf16 %v5027, %v5024
    %v5043 = vpack.c.bf16 %v5032, %v5032
    %s5044 = scalar_lea.vmem %s2, 96
    %v5045 = vld [vmem:[%s5044] sm:$0xf]
    %v5046 = vld [vmem:[%s5044 + $0x4] sm:$0xf]
    %v5047 = vld [vmem:[%s5044 + $0x8] sm:$0xf]
    %v5048 = vld [vmem:[%s5044 + $0xc] sm:$0xf]
    %v5053 = vunpack.c.l.b16 %v5045
    %v5054 = vunpack.c.l.b16 %v5046
    %v5055 = vunpack.c.l.b16 %v5047
    %v5056 = vunpack.c.l.b16 %v5048
    %v5057 = vpack.c.b16 %v5054, %v5053
    %v5058 = vpack.c.b16 %v5056, %v5055
    %v5062 = vsel %vm2467, %v5037, 0
    %v5065 = vsel %vm2467, %v5038, 0
    %v5068 = vsel %vm2467, %v5039, 0
    %v5071 = vsel %vm2467, %v5040, 0
    %v5074 = vsel %vm2467, %v5041, 0
    %v5077 = vsel %vm2467, %v5042, 0
    %v5080 = vsel %vm2467, %v5043, 0
    %5082 = vmatprep.subr.bf16.mxu0 0
    %5083 = vmatpush1.bf16.msra.mxu0 0
    %5084 = vmatprep.subr.bf16.mxu0 0
    %5085 = vmatpush1.bf16.msra.mxu0 0
    %5086 = vmatprep.subr.bf16.mxu0 0
    %5087 = vmatpush1.bf16.msra.mxu0 0
    %5088 = vmatprep.subr.bf16.mxu0 0
    %5089 = vmatpush1.bf16.msra.mxu0 0
    %5090 = vmatprep.subr.bf16.mxu0 0
    %5091 = vmatpush1.bf16.msra.mxu0 0
    %5092 = vmatprep.subr.bf16.mxu0 0
    %5093 = vmatpush1.bf16.msra.mxu0 0
    %5094 = vmatprep.subr.bf16.mxu0 0
    %5095 = vmatpush1.bf16.msra.mxu0 %v5058
    %5096 = vmatprep.subr.bf16.mxu0 0
    %5097 = vmatpush1.bf16.msra.mxu0 %v5057
    %5098 = vmatprep.subr.bf16.mxu0 0
    %5099 = vmatpush2.bf16.msra.mxu0 0
    %5100 = vmatprep.subr.bf16.mxu0 0
    %5101 = vmatpush2.bf16.msra.mxu0 0
    %5102 = vmatprep.subr.bf16.mxu0 0
    %5103 = vmatpush2.bf16.msra.mxu0 0
    %5104 = vmatprep.subr.bf16.mxu0 0
    %5105 = vmatpush2.bf16.msra.mxu0 0
    %5106 = vmatprep.subr.bf16.mxu0 0
    %5107 = vmatpush2.bf16.msra.mxu0 0
    %5108 = vmatprep.subr.bf16.mxu0 0
    %5109 = vmatpush2.bf16.msra.mxu0 0
    %5110 = vmatprep.subr.bf16.mxu0 0
    %5111 = vmatpush2.bf16.msra.mxu0 0
    %5112 = vmatprep.subr.bf16.mxu0 0
    %5113 = vmatpush2.bf16.msra.mxu0 0
    %5114 = vmatprep.mubr.bf16.mxu0 0
    %5115 = vmatmul.mubr.bf16.gmra.mxu0 %v5062
    %v5116 = vpop.f32.mrf.mxu0
    %v5117 = vadd.f32 0.0, %v5116
    %v5118 = vpop.f32.mrf.mxu0
    %v5119 = vpop.f32.mrf.mxu0
    %v5120 = vadd.f32 0.0, %v5119
    %v5121 = vpop.f32.mrf.mxu0
    %5122 = vmatprep.mubr.bf16.mxu0 0
    %5123 = vmatmul.mubr.bf16.gmra.mxu0 %v5065
    %v5124 = vpop.f32.mrf.mxu0
    %v5125 = vadd.f32 0.0, %v5124
    %v5126 = vpop.f32.mrf.mxu0
    %v5127 = vpop.f32.mrf.mxu0
    %v5128 = vadd.f32 0.0, %v5127
    %v5129 = vpop.f32.mrf.mxu0
    %5130 = vmatprep.mubr.bf16.mxu0 0
    %5131 = vmatmul.mubr.bf16.gmra.mxu0 %v5068
    %v5132 = vpop.f32.mrf.mxu0
    %v5133 = vadd.f32 0.0, %v5132
    %v5134 = vpop.f32.mrf.mxu0
    %v5135 = vpop.f32.mrf.mxu0
    %v5136 = vadd.f32 0.0, %v5135
    %v5137 = vpop.f32.mrf.mxu0
    %5138 = vmatprep.mubr.bf16.mxu0 0
    %5139 = vmatmul.mubr.bf16.gmra.mxu0 %v5071
    %v5140 = vpop.f32.mrf.mxu0
    %v5141 = vadd.f32 0.0, %v5140
    %v5142 = vpop.f32.mrf.mxu0
    %v5143 = vpop.f32.mrf.mxu0
    %v5144 = vadd.f32 0.0, %v5143
    %v5145 = vpop.f32.mrf.mxu0
    %5146 = vmatprep.mubr.bf16.mxu0 0
    %5147 = vmatmul.mubr.bf16.gmra.mxu0 %v5074
    %v5148 = vpop.f32.mrf.mxu0
    %v5149 = vadd.f32 0.0, %v5148
    %v5150 = vpop.f32.mrf.mxu0
    %v5151 = vpop.f32.mrf.mxu0
    %v5152 = vadd.f32 0.0, %v5151
    %v5153 = vpop.f32.mrf.mxu0
    %5154 = vmatprep.mubr.bf16.mxu0 0
    %5155 = vmatmul.mubr.bf16.gmra.mxu0 %v5077
    %v5156 = vpop.f32.mrf.mxu0
    %v5157 = vadd.f32 0.0, %v5156
    %v5158 = vpop.f32.mrf.mxu0
    %v5159 = vpop.f32.mrf.mxu0
    %v5160 = vadd.f32 0.0, %v5159
    %v5161 = vpop.f32.mrf.mxu0
    %5162 = vmatprep.mubr.bf16.mxu0 0
    %5163 = vmatmul.mubr.bf16.gmra.mxu0 %v5080
    %v5164 = vpop.f32.mrf.mxu0
    %v5165 = vadd.f32 0.0, %v5164
    %v5166 = vpop.f32.mrf.mxu0
    %v5167 = vpop.f32.mrf.mxu0
    %v5168 = vpop.f32.mrf.mxu0
    %5169 = vdwg.mxu0
    %v5170 = vadd.f32 %v4673, %v5117
    %v5171 = vadd.f32 %v4674, %v5120
    %v5172 = vadd.f32 %v4675, %v5125
    %v5173 = vadd.f32 %v4676, %v5128
    %v5174 = vadd.f32 %v4677, %v5133
    %v5175 = vadd.f32 %v4678, %v5136
    %v5176 = vadd.f32 %v4679, %v5141
    %v5177 = vadd.f32 %v4680, %v5144
    %v5178 = vadd.f32 %v4681, %v5149
    %v5179 = vadd.f32 %v4682, %v5152
    %v5180 = vadd.f32 %v4683, %v5157
    %v5181 = vadd.f32 %v4684, %v5160
    %v5182 = vadd.f32 %v4685, %v5165
    %s5183 = scalar_lea.vmem %s5, 1456
    %v5184 = vld [vmem:[%s5183] sm:$0xff]
    %v5185 = vld [vmem:[%s5183 + $0x8] sm:$0xff]
    %v5186 = vld [vmem:[%s5183 + $0x10] sm:$0xff]
    %v5187 = vld [vmem:[%s5183 + $0x18] sm:$0xff]
    %v5188 = vld [vmem:[%s5183 + $0x20] sm:$0xff]
    %v5189 = vld [vmem:[%s5183 + $0x28] sm:$0xff]
    %v5190 = vld [vmem:[%s5183 + $0x30] sm:$0xff]
    %v5191 = vld [vmem:[%s5183 + $0x38] sm:$0xff]
    %v5192 = vld [vmem:[%s5183 + $0x40] sm:$0xff]
    %v5193 = vld [vmem:[%s5183 + $0x48] sm:$0xff]
    %v5194 = vld [vmem:[%s5183 + $0x50] sm:$0xff]
    %v5195 = vld [vmem:[%s5183 + $0x58] sm:$0xff]
    %v5196 = vld [vmem:[%s5183 + $0x60] sm:$0xff]
    %v5197 = vld [vmem:[%s5183 + $0x68] sm:$0xff]
    %v5198 = vld [vmem:[%s5183 + $0x70] sm:$0xff]
    %v5199 = vld [vmem:[%s5183 + $0x78] sm:$0xff]
    %v5200 = vld [vmem:[%s5183 + $0x80] sm:$0xff]
    %v5201 = vld [vmem:[%s5183 + $0x88] sm:$0xff]
    %v5202 = vld [vmem:[%s5183 + $0x90] sm:$0xff]
    %v5203 = vld [vmem:[%s5183 + $0x98] sm:$0xff]
    %v5204 = vld [vmem:[%s5183 + $0xa0] sm:$0xff]
    %v5205 = vld [vmem:[%s5183 + $0xa8] sm:$0xff]
    %v5206 = vld [vmem:[%s5183 + $0xb0] sm:$0xff]
    %v5207 = vld [vmem:[%s5183 + $0xb8] sm:$0xff]
    %v5208 = vld [vmem:[%s5183 + $0xc0] sm:$0x11]
    %v5209 = vld [vmem:[%s5183 + $0xc8] sm:$0x11]
    %v5236 = vunpack.c.l.b16 %v5184
    %v5237 = vunpack.c.h.b16 %v5184
    %v5238 = vunpack.c.l.b16 %v5185
    %v5239 = vunpack.c.h.b16 %v5185
    %v5240 = vunpack.c.l.b16 %v5186
    %v5241 = vunpack.c.h.b16 %v5186
    %v5242 = vunpack.c.l.b16 %v5187
    %v5243 = vunpack.c.h.b16 %v5187
    %v5244 = vunpack.c.l.b16 %v5188
    %v5245 = vunpack.c.h.b16 %v5188
    %v5246 = vunpack.c.l.b16 %v5189
    %v5247 = vunpack.c.h.b16 %v5189
    %v5248 = vunpack.c.l.b16 %v5190
    %v5249 = vunpack.c.h.b16 %v5190
    %v5250 = vunpack.c.l.b16 %v5191
    %v5251 = vunpack.c.h.b16 %v5191
    %v5252 = vunpack.c.l.b16 %v5192
    %v5253 = vunpack.c.h.b16 %v5192
    %v5254 = vunpack.c.l.b16 %v5193
    %v5255 = vunpack.c.h.b16 %v5193
    %v5256 = vunpack.c.l.b16 %v5194
    %v5257 = vunpack.c.h.b16 %v5194
    %v5258 = vunpack.c.l.b16 %v5195
    %v5259 = vunpack.c.h.b16 %v5195
    %v5260 = vunpack.c.l.b16 %v5196
    %v5261 = vunpack.c.h.b16 %v5196
    %v5262 = vunpack.c.l.b16 %v5197
    %v5263 = vunpack.c.h.b16 %v5197
    %v5264 = vunpack.c.l.b16 %v5198
    %v5265 = vunpack.c.h.b16 %v5198
    %v5266 = vunpack.c.l.b16 %v5199
    %v5267 = vunpack.c.h.b16 %v5199
    %v5268 = vunpack.c.l.b16 %v5200
    %v5269 = vunpack.c.h.b16 %v5200
    %v5270 = vunpack.c.l.b16 %v5201
    %v5271 = vunpack.c.h.b16 %v5201
    %v5272 = vunpack.c.l.b16 %v5202
    %v5273 = vunpack.c.h.b16 %v5202
    %v5274 = vunpack.c.l.b16 %v5203
    %v5275 = vunpack.c.h.b16 %v5203
    %v5276 = vunpack.c.l.b16 %v5204
    %v5277 = vunpack.c.h.b16 %v5204
    %v5278 = vunpack.c.l.b16 %v5205
    %v5279 = vunpack.c.h.b16 %v5205
    %v5280 = vunpack.c.l.b16 %v5206
    %v5281 = vunpack.c.h.b16 %v5206
    %v5282 = vunpack.c.l.b16 %v5207
    %v5283 = vunpack.c.h.b16 %v5207
    %v5284 = vunpack.c.l.b16 %v5208
    %v5285 = vunpack.c.h.b16 %v5208
    %v5286 = vunpack.c.l.b16 %v5209
    %v5287 = vunpack.c.h.b16 %v5209
    %v5288 = vpack.c.b16 %v5240, %v5236
    %v5289 = vpack.c.b16 %v5241, %v5237
    %v5290 = vpack.c.b16 %v5242, %v5238
    %v5291 = vpack.c.b16 %v5243, %v5239
    %v5292 = vpack.c.b16 %v5248, %v5244
    %v5293 = vpack.c.b16 %v5249, %v5245
    %v5294 = vpack.c.b16 %v5250, %v5246
    %v5295 = vpack.c.b16 %v5251, %v5247
    %v5296 = vpack.c.b16 %v5256, %v5252
    %v5297 = vpack.c.b16 %v5257, %v5253
    %v5298 = vpack.c.b16 %v5258, %v5254
    %v5299 = vpack.c.b16 %v5259, %v5255
    %v5300 = vpack.c.b16 %v5264, %v5260
    %v5301 = vpack.c.b16 %v5265, %v5261
    %v5302 = vpack.c.b16 %v5266, %v5262
    %v5303 = vpack.c.b16 %v5267, %v5263
    %v5304 = vpack.c.b16 %v5272, %v5268
    %v5305 = vpack.c.b16 %v5273, %v5269
    %v5306 = vpack.c.b16 %v5274, %v5270
    %v5307 = vpack.c.b16 %v5275, %v5271
    %v5308 = vpack.c.b16 %v5280, %v5276
    %v5309 = vpack.c.b16 %v5281, %v5277
    %v5310 = vpack.c.b16 %v5282, %v5278
    %v5311 = vpack.c.b16 %v5283, %v5279
    %v5312 = vpack.c.b16 %v5284, %v5284
    %v5313 = vpack.c.b16 %v5285, %v5285
    %v5314 = vpack.c.b16 %v5286, %v5286
    %v5315 = vpack.c.b16 %v5287, %v5287
    %v5338 = vsel %vm1880, %v5291, 0
    %v5341 = vsel %vm1880, %v5295, 0
    %v5344 = vsel %vm1880, %v5299, 0
    %v5347 = vsel %vm1880, %v5303, 0
    %v5350 = vsel %vm1880, %v5307, 0
    %v5353 = vsel %vm1880, %v5311, 0
    %v5356 = vsel %vm1880, %v5315, 0
    %5358 = vmatprep.subr.bf16.mxu0 0
    %5359 = vmatpush1.bf16.msra.mxu0 %v1709
    %5360 = vmatprep.subr.bf16.mxu0 0
    %5361 = vmatpush1.bf16.msra.mxu0 %v1708
    %5362 = vmatprep.subr.bf16.mxu0 0
    %5363 = vmatpush1.bf16.msra.mxu0 %v1707
    %5364 = vmatprep.subr.bf16.mxu0 0
    %5365 = vmatpush1.bf16.msra.mxu0 %v1706
    %5366 = vmatprep.subr.bf16.mxu0 0
    %5367 = vmatpush1.bf16.msra.mxu0 %v1705
    %5368 = vmatprep.subr.bf16.mxu0 0
    %5369 = vmatpush1.bf16.msra.mxu0 %v1704
    %5370 = vmatprep.subr.bf16.mxu0 0
    %5371 = vmatpush1.bf16.msra.mxu0 %v1703
    %5372 = vmatprep.subr.bf16.mxu0 0
    %5373 = vmatpush1.bf16.msra.mxu0 %v1702
    %5374 = vmatprep.subr.bf16.mxu0 0
    %5375 = vmatpush2.bf16.msra.mxu0 %v1717
    %5376 = vmatprep.subr.bf16.mxu0 0
    %5377 = vmatpush2.bf16.msra.mxu0 %v1716
    %5378 = vmatprep.subr.bf16.mxu0 0
    %5379 = vmatpush2.bf16.msra.mxu0 %v1715
    %5380 = vmatprep.subr.bf16.mxu0 0
    %5381 = vmatpush2.bf16.msra.mxu0 %v1714
    %5382 = vmatprep.subr.bf16.mxu0 0
    %5383 = vmatpush2.bf16.msra.mxu0 %v1713
    %5384 = vmatprep.subr.bf16.mxu0 0
    %5385 = vmatpush2.bf16.msra.mxu0 %v1712
    %5386 = vmatprep.subr.bf16.mxu0 0
    %5387 = vmatpush2.bf16.msra.mxu0 %v1711
    %5388 = vmatprep.subr.bf16.mxu0 0
    %5389 = vmatpush2.bf16.msra.mxu0 %v1710
    %5390 = vmatprep.mubr.bf16.mxu0 %v5289
    %5391 = vmatmul.mubr.bf16.gmra.mxu0 %v5288
    %v5392 = vpop.f32.mrf.mxu0
    %v5393 = vadd.f32 0.0, %v5392
    %v5394 = vpop.f32.mrf.mxu0
    %v5395 = vpop.f32.mrf.mxu0
    %v5396 = vadd.f32 0.0, %v5395
    %v5397 = vpop.f32.mrf.mxu0
    %5398 = vmatprep.mubr.bf16.mxu0 %v5293
    %5399 = vmatmul.mubr.bf16.gmra.mxu0 %v5292
    %v5400 = vpop.f32.mrf.mxu0
    %v5401 = vadd.f32 0.0, %v5400
    %v5402 = vpop.f32.mrf.mxu0
    %v5403 = vpop.f32.mrf.mxu0
    %v5404 = vadd.f32 0.0, %v5403
    %v5405 = vpop.f32.mrf.mxu0
    %5406 = vmatprep.mubr.bf16.mxu0 %v5297
    %5407 = vmatmul.mubr.bf16.gmra.mxu0 %v5296
    %v5408 = vpop.f32.mrf.mxu0
    %v5409 = vadd.f32 0.0, %v5408
    %v5410 = vpop.f32.mrf.mxu0
    %v5411 = vpop.f32.mrf.mxu0
    %v5412 = vadd.f32 0.0, %v5411
    %v5413 = vpop.f32.mrf.mxu0
    %5414 = vmatprep.mubr.bf16.mxu0 %v5301
    %5415 = vmatmul.mubr.bf16.gmra.mxu0 %v5300
    %v5416 = vpop.f32.mrf.mxu0
    %v5417 = vadd.f32 0.0, %v5416
    %v5418 = vpop.f32.mrf.mxu0
    %v5419 = vpop.f32.mrf.mxu0
    %v5420 = vadd.f32 0.0, %v5419
    %v5421 = vpop.f32.mrf.mxu0
    %5422 = vmatprep.mubr.bf16.mxu0 %v5305
    %5423 = vmatmul.mubr.bf16.gmra.mxu0 %v5304
    %v5424 = vpop.f32.mrf.mxu0
    %v5425 = vadd.f32 0.0, %v5424
    %v5426 = vpop.f32.mrf.mxu0
    %v5427 = vpop.f32.mrf.mxu0
    %v5428 = vadd.f32 0.0, %v5427
    %v5429 = vpop.f32.mrf.mxu0
    %5430 = vmatprep.mubr.bf16.mxu0 %v5309
    %5431 = vmatmul.mubr.bf16.gmra.mxu0 %v5308
    %v5432 = vpop.f32.mrf.mxu0
    %v5433 = vadd.f32 0.0, %v5432
    %v5434 = vpop.f32.mrf.mxu0
    %v5435 = vpop.f32.mrf.mxu0
    %v5436 = vadd.f32 0.0, %v5435
    %v5437 = vpop.f32.mrf.mxu0
    %5438 = vmatprep.mubr.bf16.mxu0 %v5313
    %5439 = vmatmul.mubr.bf16.gmra.mxu0 %v5312
    %v5440 = vpop.f32.mrf.mxu0
    %v5441 = vadd.f32 0.0, %v5440
    %v5442 = vpop.f32.mrf.mxu0
    %v5443 = vpop.f32.mrf.mxu0
    %v5444 = vpop.f32.mrf.mxu0
    %5445 = vdwg.mxu0
    %5446 = vmatprep.subr.bf16.mxu0 0
    %5447 = vmatpush1.bf16.msra.mxu0 %v1725
    %5448 = vmatprep.subr.bf16.mxu0 0
    %5449 = vmatpush1.bf16.msra.mxu0 %v1724
    %5450 = vmatprep.subr.bf16.mxu0 0
    %5451 = vmatpush1.bf16.msra.mxu0 %v1723
    %5452 = vmatprep.subr.bf16.mxu0 0
    %5453 = vmatpush1.bf16.msra.mxu0 %v1722
    %5454 = vmatprep.subr.bf16.mxu0 0
    %5455 = vmatpush1.bf16.msra.mxu0 %v1721
    %5456 = vmatprep.subr.bf16.mxu0 0
    %5457 = vmatpush1.bf16.msra.mxu0 %v1720
    %5458 = vmatprep.subr.bf16.mxu0 0
    %5459 = vmatpush1.bf16.msra.mxu0 %v1719
    %5460 = vmatprep.subr.bf16.mxu0 0
    %5461 = vmatpush1.bf16.msra.mxu0 %v1718
    %5462 = vmatprep.subr.bf16.mxu0 0
    %5463 = vmatpush2.bf16.msra.mxu0 0
    %5464 = vmatprep.subr.bf16.mxu0 0
    %5465 = vmatpush2.bf16.msra.mxu0 0
    %5466 = vmatprep.subr.bf16.mxu0 0
    %5467 = vmatpush2.bf16.msra.mxu0 0
    %5468 = vmatprep.subr.bf16.mxu0 0
    %5469 = vmatpush2.bf16.msra.mxu0 0
    %5470 = vmatprep.subr.bf16.mxu0 0
    %5471 = vmatpush2.bf16.msra.mxu0 0
    %5472 = vmatprep.subr.bf16.mxu0 0
    %5473 = vmatpush2.bf16.msra.mxu0 0
    %5474 = vmatprep.subr.bf16.mxu0 0
    %5475 = vmatpush2.bf16.msra.mxu0 0
    %5476 = vmatprep.subr.bf16.mxu0 0
    %5477 = vmatpush2.bf16.msra.mxu0 %v1903
    %5478 = vmatprep.mubr.bf16.mxu0 %v5338
    %5479 = vmatmul.mubr.bf16.gmra.mxu0 %v5290
    %v5480 = vpop.f32.mrf.mxu0
    %v5481 = vadd.f32 %v5393, %v5480
    %v5482 = vpop.f32.mrf.mxu0
    %v5483 = vpop.f32.mrf.mxu0
    %v5484 = vadd.f32 %v5396, %v5483
    %v5485 = vpop.f32.mrf.mxu0
    %5486 = vmatprep.mubr.bf16.mxu0 %v5341
    %5487 = vmatmul.mubr.bf16.gmra.mxu0 %v5294
    %v5488 = vpop.f32.mrf.mxu0
    %v5489 = vadd.f32 %v5401, %v5488
    %v5490 = vpop.f32.mrf.mxu0
    %v5491 = vpop.f32.mrf.mxu0
    %v5492 = vadd.f32 %v5404, %v5491
    %v5493 = vpop.f32.mrf.mxu0
    %5494 = vmatprep.mubr.bf16.mxu0 %v5344
    %5495 = vmatmul.mubr.bf16.gmra.mxu0 %v5298
    %v5496 = vpop.f32.mrf.mxu0
    %v5497 = vadd.f32 %v5409, %v5496
    %v5498 = vpop.f32.mrf.mxu0
    %v5499 = vpop.f32.mrf.mxu0
    %v5500 = vadd.f32 %v5412, %v5499
    %v5501 = vpop.f32.mrf.mxu0
    %5502 = vmatprep.mubr.bf16.mxu0 %v5347
    %5503 = vmatmul.mubr.bf16.gmra.mxu0 %v5302
    %v5504 = vpop.f32.mrf.mxu0
    %v5505 = vadd.f32 %v5417, %v5504
    %v5506 = vpop.f32.mrf.mxu0
    %v5507 = vpop.f32.mrf.mxu0
    %v5508 = vadd.f32 %v5420, %v5507
    %v5509 = vpop.f32.mrf.mxu0
    %5510 = vmatprep.mubr.bf16.mxu0 %v5350
    %5511 = vmatmul.mubr.bf16.gmra.mxu0 %v5306
    %v5512 = vpop.f32.mrf.mxu0
    %v5513 = vadd.f32 %v5425, %v5512
    %v5514 = vpop.f32.mrf.mxu0
    %v5515 = vpop.f32.mrf.mxu0
    %v5516 = vadd.f32 %v5428, %v5515
    %v5517 = vpop.f32.mrf.mxu0
    %5518 = vmatprep.mubr.bf16.mxu0 %v5353
    %5519 = vmatmul.mubr.bf16.gmra.mxu0 %v5310
    %v5520 = vpop.f32.mrf.mxu0
    %v5521 = vadd.f32 %v5433, %v5520
    %v5522 = vpop.f32.mrf.mxu0
    %v5523 = vpop.f32.mrf.mxu0
    %v5524 = vadd.f32 %v5436, %v5523
    %v5525 = vpop.f32.mrf.mxu0
    %5526 = vmatprep.mubr.bf16.mxu0 %v5356
    %5527 = vmatmul.mubr.bf16.gmra.mxu0 %v5314
    %v5528 = vpop.f32.mrf.mxu0
    %v5529 = vadd.f32 %v5441, %v5528
    %v5530 = vpop.f32.mrf.mxu0
    %v5531 = vpop.f32.mrf.mxu0
    %v5532 = vpop.f32.mrf.mxu0
    %5533 = vdwg.mxu0
    %v5534 = vpack.c.bf16 %v5484, %v5481
    %v5535 = vpack.c.bf16 %v5492, %v5489
    %v5536 = vpack.c.bf16 %v5500, %v5497
    %v5537 = vpack.c.bf16 %v5508, %v5505
    %v5538 = vpack.c.bf16 %v5516, %v5513
    %v5539 = vpack.c.bf16 %v5524, %v5521
    %v5540 = vpack.c.bf16 %v5529, %v5529
    %s5541 = scalar_lea.vmem %s2, 112
    %v5542 = vld [vmem:[%s5541] sm:$0xf]
    %v5543 = vld [vmem:[%s5541 + $0x4] sm:$0xf]
    %v5544 = vld [vmem:[%s5541 + $0x8] sm:$0xf]
    %v5545 = vld [vmem:[%s5541 + $0xc] sm:$0xf]
    %v5550 = vunpack.c.l.b16 %v5542
    %v5551 = vunpack.c.l.b16 %v5543
    %v5552 = vunpack.c.l.b16 %v5544
    %v5553 = vunpack.c.l.b16 %v5545
    %v5554 = vpack.c.b16 %v5551, %v5550
    %v5555 = vpack.c.b16 %v5553, %v5552
    %v5559 = vsel %vm2467, %v5534, 0
    %v5562 = vsel %vm2467, %v5535, 0
    %v5565 = vsel %vm2467, %v5536, 0
    %v5568 = vsel %vm2467, %v5537, 0
    %v5571 = vsel %vm2467, %v5538, 0
    %v5574 = vsel %vm2467, %v5539, 0
    %v5577 = vsel %vm2467, %v5540, 0
    %5579 = vmatprep.subr.bf16.mxu0 0
    %5580 = vmatpush1.bf16.msra.mxu0 0
    %5581 = vmatprep.subr.bf16.mxu0 0
    %5582 = vmatpush1.bf16.msra.mxu0 0
    %5583 = vmatprep.subr.bf16.mxu0 0
    %5584 = vmatpush1.bf16.msra.mxu0 0
    %5585 = vmatprep.subr.bf16.mxu0 0
    %5586 = vmatpush1.bf16.msra.mxu0 0
    %5587 = vmatprep.subr.bf16.mxu0 0
    %5588 = vmatpush1.bf16.msra.mxu0 0
    %5589 = vmatprep.subr.bf16.mxu0 0
    %5590 = vmatpush1.bf16.msra.mxu0 0
    %5591 = vmatprep.subr.bf16.mxu0 0
    %5592 = vmatpush1.bf16.msra.mxu0 %v5555
    %5593 = vmatprep.subr.bf16.mxu0 0
    %5594 = vmatpush1.bf16.msra.mxu0 %v5554
    %5595 = vmatprep.subr.bf16.mxu0 0
    %5596 = vmatpush2.bf16.msra.mxu0 0
    %5597 = vmatprep.subr.bf16.mxu0 0
    %5598 = vmatpush2.bf16.msra.mxu0 0
    %5599 = vmatprep.subr.bf16.mxu0 0
    %5600 = vmatpush2.bf16.msra.mxu0 0
    %5601 = vmatprep.subr.bf16.mxu0 0
    %5602 = vmatpush2.bf16.msra.mxu0 0
    %5603 = vmatprep.subr.bf16.mxu0 0
    %5604 = vmatpush2.bf16.msra.mxu0 0
    %5605 = vmatprep.subr.bf16.mxu0 0
    %5606 = vmatpush2.bf16.msra.mxu0 0
    %5607 = vmatprep.subr.bf16.mxu0 0
    %5608 = vmatpush2.bf16.msra.mxu0 0
    %5609 = vmatprep.subr.bf16.mxu0 0
    %5610 = vmatpush2.bf16.msra.mxu0 0
    %5611 = vmatprep.mubr.bf16.mxu0 0
    %5612 = vmatmul.mubr.bf16.gmra.mxu0 %v5559
    %v5613 = vpop.f32.mrf.mxu0
    %v5614 = vadd.f32 0.0, %v5613
    %v5615 = vpop.f32.mrf.mxu0
    %v5616 = vpop.f32.mrf.mxu0
    %v5617 = vadd.f32 0.0, %v5616
    %v5618 = vpop.f32.mrf.mxu0
    %5619 = vmatprep.mubr.bf16.mxu0 0
    %5620 = vmatmul.mubr.bf16.gmra.mxu0 %v5562
    %v5621 = vpop.f32.mrf.mxu0
    %v5622 = vadd.f32 0.0, %v5621
    %v5623 = vpop.f32.mrf.mxu0
    %v5624 = vpop.f32.mrf.mxu0
    %v5625 = vadd.f32 0.0, %v5624
    %v5626 = vpop.f32.mrf.mxu0
    %5627 = vmatprep.mubr.bf16.mxu0 0
    %5628 = vmatmul.mubr.bf16.gmra.mxu0 %v5565
    %v5629 = vpop.f32.mrf.mxu0
    %v5630 = vadd.f32 0.0, %v5629
    %v5631 = vpop.f32.mrf.mxu0
    %v5632 = vpop.f32.mrf.mxu0
    %v5633 = vadd.f32 0.0, %v5632
    %v5634 = vpop.f32.mrf.mxu0
    %5635 = vmatprep.mubr.bf16.mxu0 0
    %5636 = vmatmul.mubr.bf16.gmra.mxu0 %v5568
    %v5637 = vpop.f32.mrf.mxu0
    %v5638 = vadd.f32 0.0, %v5637
    %v5639 = vpop.f32.mrf.mxu0
    %v5640 = vpop.f32.mrf.mxu0
    %v5641 = vadd.f32 0.0, %v5640
    %v5642 = vpop.f32.mrf.mxu0
    %5643 = vmatprep.mubr.bf16.mxu0 0
    %5644 = vmatmul.mubr.bf16.gmra.mxu0 %v5571
    %v5645 = vpop.f32.mrf.mxu0
    %v5646 = vadd.f32 0.0, %v5645
    %v5647 = vpop.f32.mrf.mxu0
    %v5648 = vpop.f32.mrf.mxu0
    %v5649 = vadd.f32 0.0, %v5648
    %v5650 = vpop.f32.mrf.mxu0
    %5651 = vmatprep.mubr.bf16.mxu0 0
    %5652 = vmatmul.mubr.bf16.gmra.mxu0 %v5574
    %v5653 = vpop.f32.mrf.mxu0
    %v5654 = vadd.f32 0.0, %v5653
    %v5655 = vpop.f32.mrf.mxu0
    %v5656 = vpop.f32.mrf.mxu0
    %v5657 = vadd.f32 0.0, %v5656
    %v5658 = vpop.f32.mrf.mxu0
    %5659 = vmatprep.mubr.bf16.mxu0 0
    %5660 = vmatmul.mubr.bf16.gmra.mxu0 %v5577
    %v5661 = vpop.f32.mrf.mxu0
    %v5662 = vadd.f32 0.0, %v5661
    %v5663 = vpop.f32.mrf.mxu0
    %v5664 = vpop.f32.mrf.mxu0
    %v5665 = vpop.f32.mrf.mxu0
    %5666 = vdwg.mxu0
    %v5667 = vadd.f32 %v5170, %v5614
    %v5668 = vadd.f32 %v5171, %v5617
    %v5669 = vadd.f32 %v5172, %v5622
    %v5670 = vadd.f32 %v5173, %v5625
    %v5671 = vadd.f32 %v5174, %v5630
    %v5672 = vadd.f32 %v5175, %v5633
    %v5673 = vadd.f32 %v5176, %v5638
    %v5674 = vadd.f32 %v5177, %v5641
    %v5675 = vadd.f32 %v5178, %v5646
    %v5676 = vadd.f32 %v5179, %v5649
    %v5677 = vadd.f32 %v5180, %v5654
    %v5678 = vadd.f32 %v5181, %v5657
    %v5679 = vadd.f32 %v5182, %v5662
    %s5680 = scalar_lea.vmem %s5, 1664
    %v5681 = vld [vmem:[%s5680] sm:$0xff]
    %v5682 = vld [vmem:[%s5680 + $0x8] sm:$0xff]
    %v5683 = vld [vmem:[%s5680 + $0x10] sm:$0xff]
    %v5684 = vld [vmem:[%s5680 + $0x18] sm:$0xff]
    %v5685 = vld [vmem:[%s5680 + $0x20] sm:$0xff]
    %v5686 = vld [vmem:[%s5680 + $0x28] sm:$0xff]
    %v5687 = vld [vmem:[%s5680 + $0x30] sm:$0xff]
    %v5688 = vld [vmem:[%s5680 + $0x38] sm:$0xff]
    %v5689 = vld [vmem:[%s5680 + $0x40] sm:$0xff]
    %v5690 = vld [vmem:[%s5680 + $0x48] sm:$0xff]
    %v5691 = vld [vmem:[%s5680 + $0x50] sm:$0xff]
    %v5692 = vld [vmem:[%s5680 + $0x58] sm:$0xff]
    %v5693 = vld [vmem:[%s5680 + $0x60] sm:$0xff]
    %v5694 = vld [vmem:[%s5680 + $0x68] sm:$0xff]
    %v5695 = vld [vmem:[%s5680 + $0x70] sm:$0xff]
    %v5696 = vld [vmem:[%s5680 + $0x78] sm:$0xff]
    %v5697 = vld [vmem:[%s5680 + $0x80] sm:$0xff]
    %v5698 = vld [vmem:[%s5680 + $0x88] sm:$0xff]
    %v5699 = vld [vmem:[%s5680 + $0x90] sm:$0xff]
    %v5700 = vld [vmem:[%s5680 + $0x98] sm:$0xff]
    %v5701 = vld [vmem:[%s5680 + $0xa0] sm:$0xff]
    %v5702 = vld [vmem:[%s5680 + $0xa8] sm:$0xff]
    %v5703 = vld [vmem:[%s5680 + $0xb0] sm:$0xff]
    %v5704 = vld [vmem:[%s5680 + $0xb8] sm:$0xff]
    %v5705 = vld [vmem:[%s5680 + $0xc0] sm:$0x11]
    %v5706 = vld [vmem:[%s5680 + $0xc8] sm:$0x11]
    %v5733 = vunpack.c.l.b16 %v5681
    %v5734 = vunpack.c.h.b16 %v5681
    %v5735 = vunpack.c.l.b16 %v5682
    %v5736 = vunpack.c.h.b16 %v5682
    %v5737 = vunpack.c.l.b16 %v5683
    %v5738 = vunpack.c.h.b16 %v5683
    %v5739 = vunpack.c.l.b16 %v5684
    %v5740 = vunpack.c.h.b16 %v5684
    %v5741 = vunpack.c.l.b16 %v5685
    %v5742 = vunpack.c.h.b16 %v5685
    %v5743 = vunpack.c.l.b16 %v5686
    %v5744 = vunpack.c.h.b16 %v5686
    %v5745 = vunpack.c.l.b16 %v5687
    %v5746 = vunpack.c.h.b16 %v5687
    %v5747 = vunpack.c.l.b16 %v5688
    %v5748 = vunpack.c.h.b16 %v5688
    %v5749 = vunpack.c.l.b16 %v5689
    %v5750 = vunpack.c.h.b16 %v5689
    %v5751 = vunpack.c.l.b16 %v5690
    %v5752 = vunpack.c.h.b16 %v5690
    %v5753 = vunpack.c.l.b16 %v5691
    %v5754 = vunpack.c.h.b16 %v5691
    %v5755 = vunpack.c.l.b16 %v5692
    %v5756 = vunpack.c.h.b16 %v5692
    %v5757 = vunpack.c.l.b16 %v5693
    %v5758 = vunpack.c.h.b16 %v5693
    %v5759 = vunpack.c.l.b16 %v5694
    %v5760 = vunpack.c.h.b16 %v5694
    %v5761 = vunpack.c.l.b16 %v5695
    %v5762 = vunpack.c.h.b16 %v5695
    %v5763 = vunpack.c.l.b16 %v5696
    %v5764 = vunpack.c.h.b16 %v5696
    %v5765 = vunpack.c.l.b16 %v5697
    %v5766 = vunpack.c.h.b16 %v5697
    %v5767 = vunpack.c.l.b16 %v5698
    %v5768 = vunpack.c.h.b16 %v5698
    %v5769 = vunpack.c.l.b16 %v5699
    %v5770 = vunpack.c.h.b16 %v5699
    %v5771 = vunpack.c.l.b16 %v5700
    %v5772 = vunpack.c.h.b16 %v5700
    %v5773 = vunpack.c.l.b16 %v5701
    %v5774 = vunpack.c.h.b16 %v5701
    %v5775 = vunpack.c.l.b16 %v5702
    %v5776 = vunpack.c.h.b16 %v5702
    %v5777 = vunpack.c.l.b16 %v5703
    %v5778 = vunpack.c.h.b16 %v5703
    %v5779 = vunpack.c.l.b16 %v5704
    %v5780 = vunpack.c.h.b16 %v5704
    %v5781 = vunpack.c.l.b16 %v5705
    %v5782 = vunpack.c.h.b16 %v5705
    %v5783 = vunpack.c.l.b16 %v5706
    %v5784 = vunpack.c.h.b16 %v5706
    %v5785 = vpack.c.b16 %v5737, %v5733
    %v5786 = vpack.c.b16 %v5738, %v5734
    %v5787 = vpack.c.b16 %v5739, %v5735
    %v5788 = vpack.c.b16 %v5740, %v5736
    %v5789 = vpack.c.b16 %v5745, %v5741
    %v5790 = vpack.c.b16 %v5746, %v5742
    %v5791 = vpack.c.b16 %v5747, %v5743
    %v5792 = vpack.c.b16 %v5748, %v5744
    %v5793 = vpack.c.b16 %v5753, %v5749
    %v5794 = vpack.c.b16 %v5754, %v5750
    %v5795 = vpack.c.b16 %v5755, %v5751
    %v5796 = vpack.c.b16 %v5756, %v5752
    %v5797 = vpack.c.b16 %v5761, %v5757
    %v5798 = vpack.c.b16 %v5762, %v5758
    %v5799 = vpack.c.b16 %v5763, %v5759
    %v5800 = vpack.c.b16 %v5764, %v5760
    %v5801 = vpack.c.b16 %v5769, %v5765
    %v5802 = vpack.c.b16 %v5770, %v5766
    %v5803 = vpack.c.b16 %v5771, %v5767
    %v5804 = vpack.c.b16 %v5772, %v5768
    %v5805 = vpack.c.b16 %v5777, %v5773
    %v5806 = vpack.c.b16 %v5778, %v5774
    %v5807 = vpack.c.b16 %v5779, %v5775
    %v5808 = vpack.c.b16 %v5780, %v5776
    %v5809 = vpack.c.b16 %v5781, %v5781
    %v5810 = vpack.c.b16 %v5782, %v5782
    %v5811 = vpack.c.b16 %v5783, %v5783
    %v5812 = vpack.c.b16 %v5784, %v5784
    %v5835 = vsel %vm1880, %v5788, 0
    %v5838 = vsel %vm1880, %v5792, 0
    %v5841 = vsel %vm1880, %v5796, 0
    %v5844 = vsel %vm1880, %v5800, 0
    %v5847 = vsel %vm1880, %v5804, 0
    %v5850 = vsel %vm1880, %v5808, 0
    %v5853 = vsel %vm1880, %v5812, 0
    %5855 = vmatprep.subr.bf16.mxu0 0
    %5856 = vmatpush1.bf16.msra.mxu0 %v1709
    %5857 = vmatprep.subr.bf16.mxu0 0
    %5858 = vmatpush1.bf16.msra.mxu0 %v1708
    %5859 = vmatprep.subr.bf16.mxu0 0
    %5860 = vmatpush1.bf16.msra.mxu0 %v1707
    %5861 = vmatprep.subr.bf16.mxu0 0
    %5862 = vmatpush1.bf16.msra.mxu0 %v1706
    %5863 = vmatprep.subr.bf16.mxu0 0
    %5864 = vmatpush1.bf16.msra.mxu0 %v1705
    %5865 = vmatprep.subr.bf16.mxu0 0
    %5866 = vmatpush1.bf16.msra.mxu0 %v1704
    %5867 = vmatprep.subr.bf16.mxu0 0
    %5868 = vmatpush1.bf16.msra.mxu0 %v1703
    %5869 = vmatprep.subr.bf16.mxu0 0
    %5870 = vmatpush1.bf16.msra.mxu0 %v1702
    %5871 = vmatprep.subr.bf16.mxu0 0
    %5872 = vmatpush2.bf16.msra.mxu0 %v1717
    %5873 = vmatprep.subr.bf16.mxu0 0
    %5874 = vmatpush2.bf16.msra.mxu0 %v1716
    %5875 = vmatprep.subr.bf16.mxu0 0
    %5876 = vmatpush2.bf16.msra.mxu0 %v1715
    %5877 = vmatprep.subr.bf16.mxu0 0
    %5878 = vmatpush2.bf16.msra.mxu0 %v1714
    %5879 = vmatprep.subr.bf16.mxu0 0
    %5880 = vmatpush2.bf16.msra.mxu0 %v1713
    %5881 = vmatprep.subr.bf16.mxu0 0
    %5882 = vmatpush2.bf16.msra.mxu0 %v1712
    %5883 = vmatprep.subr.bf16.mxu0 0
    %5884 = vmatpush2.bf16.msra.mxu0 %v1711
    %5885 = vmatprep.subr.bf16.mxu0 0
    %5886 = vmatpush2.bf16.msra.mxu0 %v1710
    %5887 = vmatprep.mubr.bf16.mxu0 %v5786
    %5888 = vmatmul.mubr.bf16.gmra.mxu0 %v5785
    %v5889 = vpop.f32.mrf.mxu0
    %v5890 = vadd.f32 0.0, %v5889
    %v5891 = vpop.f32.mrf.mxu0
    %v5892 = vpop.f32.mrf.mxu0
    %v5893 = vadd.f32 0.0, %v5892
    %v5894 = vpop.f32.mrf.mxu0
    %5895 = vmatprep.mubr.bf16.mxu0 %v5790
    %5896 = vmatmul.mubr.bf16.gmra.mxu0 %v5789
    %v5897 = vpop.f32.mrf.mxu0
    %v5898 = vadd.f32 0.0, %v5897
    %v5899 = vpop.f32.mrf.mxu0
    %v5900 = vpop.f32.mrf.mxu0
    %v5901 = vadd.f32 0.0, %v5900
    %v5902 = vpop.f32.mrf.mxu0
    %5903 = vmatprep.mubr.bf16.mxu0 %v5794
    %5904 = vmatmul.mubr.bf16.gmra.mxu0 %v5793
    %v5905 = vpop.f32.mrf.mxu0
    %v5906 = vadd.f32 0.0, %v5905
    %v5907 = vpop.f32.mrf.mxu0
    %v5908 = vpop.f32.mrf.mxu0
    %v5909 = vadd.f32 0.0, %v5908
    %v5910 = vpop.f32.mrf.mxu0
    %5911 = vmatprep.mubr.bf16.mxu0 %v5798
    %5912 = vmatmul.mubr.bf16.gmra.mxu0 %v5797
    %v5913 = vpop.f32.mrf.mxu0
    %v5914 = vadd.f32 0.0, %v5913
    %v5915 = vpop.f32.mrf.mxu0
    %v5916 = vpop.f32.mrf.mxu0
    %v5917 = vadd.f32 0.0, %v5916
    %v5918 = vpop.f32.mrf.mxu0
    %5919 = vmatprep.mubr.bf16.mxu0 %v5802
    %5920 = vmatmul.mubr.bf16.gmra.mxu0 %v5801
    %v5921 = vpop.f32.mrf.mxu0
    %v5922 = vadd.f32 0.0, %v5921
    %v5923 = vpop.f32.mrf.mxu0
    %v5924 = vpop.f32.mrf.mxu0
    %v5925 = vadd.f32 0.0, %v5924
    %v5926 = vpop.f32.mrf.mxu0
    %5927 = vmatprep.mubr.bf16.mxu0 %v5806
    %5928 = vmatmul.mubr.bf16.gmra.mxu0 %v5805
    %v5929 = vpop.f32.mrf.mxu0
    %v5930 = vadd.f32 0.0, %v5929
    %v5931 = vpop.f32.mrf.mxu0
    %v5932 = vpop.f32.mrf.mxu0
    %v5933 = vadd.f32 0.0, %v5932
    %v5934 = vpop.f32.mrf.mxu0
    %5935 = vmatprep.mubr.bf16.mxu0 %v5810
    %5936 = vmatmul.mubr.bf16.gmra.mxu0 %v5809
    %v5937 = vpop.f32.mrf.mxu0
    %v5938 = vadd.f32 0.0, %v5937
    %v5939 = vpop.f32.mrf.mxu0
    %v5940 = vpop.f32.mrf.mxu0
    %v5941 = vpop.f32.mrf.mxu0
    %5942 = vdwg.mxu0
    %5943 = vmatprep.subr.bf16.mxu0 0
    %5944 = vmatpush1.bf16.msra.mxu0 %v1725
    %5945 = vmatprep.subr.bf16.mxu0 0
    %5946 = vmatpush1.bf16.msra.mxu0 %v1724
    %5947 = vmatprep.subr.bf16.mxu0 0
    %5948 = vmatpush1.bf16.msra.mxu0 %v1723
    %5949 = vmatprep.subr.bf16.mxu0 0
    %5950 = vmatpush1.bf16.msra.mxu0 %v1722
    %5951 = vmatprep.subr.bf16.mxu0 0
    %5952 = vmatpush1.bf16.msra.mxu0 %v1721
    %5953 = vmatprep.subr.bf16.mxu0 0
    %5954 = vmatpush1.bf16.msra.mxu0 %v1720
    %5955 = vmatprep.subr.bf16.mxu0 0
    %5956 = vmatpush1.bf16.msra.mxu0 %v1719
    %5957 = vmatprep.subr.bf16.mxu0 0
    %5958 = vmatpush1.bf16.msra.mxu0 %v1718
    %5959 = vmatprep.subr.bf16.mxu0 0
    %5960 = vmatpush2.bf16.msra.mxu0 0
    %5961 = vmatprep.subr.bf16.mxu0 0
    %5962 = vmatpush2.bf16.msra.mxu0 0
    %5963 = vmatprep.subr.bf16.mxu0 0
    %5964 = vmatpush2.bf16.msra.mxu0 0
    %5965 = vmatprep.subr.bf16.mxu0 0
    %5966 = vmatpush2.bf16.msra.mxu0 0
    %5967 = vmatprep.subr.bf16.mxu0 0
    %5968 = vmatpush2.bf16.msra.mxu0 0
    %5969 = vmatprep.subr.bf16.mxu0 0
    %5970 = vmatpush2.bf16.msra.mxu0 0
    %5971 = vmatprep.subr.bf16.mxu0 0
    %5972 = vmatpush2.bf16.msra.mxu0 0
    %5973 = vmatprep.subr.bf16.mxu0 0
    %5974 = vmatpush2.bf16.msra.mxu0 %v1903
    %5975 = vmatprep.mubr.bf16.mxu0 %v5835
    %5976 = vmatmul.mubr.bf16.gmra.mxu0 %v5787
    %v5977 = vpop.f32.mrf.mxu0
    %v5978 = vadd.f32 %v5890, %v5977
    %v5979 = vpop.f32.mrf.mxu0
    %v5980 = vpop.f32.mrf.mxu0
    %v5981 = vadd.f32 %v5893, %v5980
    %v5982 = vpop.f32.mrf.mxu0
    %5983 = vmatprep.mubr.bf16.mxu0 %v5838
    %5984 = vmatmul.mubr.bf16.gmra.mxu0 %v5791
    %v5985 = vpop.f32.mrf.mxu0
    %v5986 = vadd.f32 %v5898, %v5985
    %v5987 = vpop.f32.mrf.mxu0
    %v5988 = vpop.f32.mrf.mxu0
    %v5989 = vadd.f32 %v5901, %v5988
    %v5990 = vpop.f32.mrf.mxu0
    %5991 = vmatprep.mubr.bf16.mxu0 %v5841
    %5992 = vmatmul.mubr.bf16.gmra.mxu0 %v5795
    %v5993 = vpop.f32.mrf.mxu0
    %v5994 = vadd.f32 %v5906, %v5993
    %v5995 = vpop.f32.mrf.mxu0
    %v5996 = vpop.f32.mrf.mxu0
    %v5997 = vadd.f32 %v5909, %v5996
    %v5998 = vpop.f32.mrf.mxu0
    %5999 = vmatprep.mubr.bf16.mxu0 %v5844
    %6000 = vmatmul.mubr.bf16.gmra.mxu0 %v5799
    %v6001 = vpop.f32.mrf.mxu0
    %v6002 = vadd.f32 %v5914, %v6001
    %v6003 = vpop.f32.mrf.mxu0
    %v6004 = vpop.f32.mrf.mxu0
    %v6005 = vadd.f32 %v5917, %v6004
    %v6006 = vpop.f32.mrf.mxu0
    %6007 = vmatprep.mubr.bf16.mxu0 %v5847
    %6008 = vmatmul.mubr.bf16.gmra.mxu0 %v5803
    %v6009 = vpop.f32.mrf.mxu0
    %v6010 = vadd.f32 %v5922, %v6009
    %v6011 = vpop.f32.mrf.mxu0
    %v6012 = vpop.f32.mrf.mxu0
    %v6013 = vadd.f32 %v5925, %v6012
    %v6014 = vpop.f32.mrf.mxu0
    %6015 = vmatprep.mubr.bf16.mxu0 %v5850
    %6016 = vmatmul.mubr.bf16.gmra.mxu0 %v5807
    %v6017 = vpop.f32.mrf.mxu0
    %v6018 = vadd.f32 %v5930, %v6017
    %v6019 = vpop.f32.mrf.mxu0
    %v6020 = vpop.f32.mrf.mxu0
    %v6021 = vadd.f32 %v5933, %v6020
    %v6022 = vpop.f32.mrf.mxu0
    %6023 = vmatprep.mubr.bf16.mxu0 %v5853
    %6024 = vmatmul.mubr.bf16.gmra.mxu0 %v5811
    %v6025 = vpop.f32.mrf.mxu0
    %v6026 = vadd.f32 %v5938, %v6025
    %v6027 = vpop.f32.mrf.mxu0
    %v6028 = vpop.f32.mrf.mxu0
    %v6029 = vpop.f32.mrf.mxu0
    %6030 = vdwg.mxu0
    %v6031 = vpack.c.bf16 %v5981, %v5978
    %v6032 = vpack.c.bf16 %v5989, %v5986
    %v6033 = vpack.c.bf16 %v5997, %v5994
    %v6034 = vpack.c.bf16 %v6005, %v6002
    %v6035 = vpack.c.bf16 %v6013, %v6010
    %v6036 = vpack.c.bf16 %v6021, %v6018
    %v6037 = vpack.c.bf16 %v6026, %v6026
    %s6038 = scalar_lea.vmem %s2, 128
    %v6039 = vld [vmem:[%s6038] sm:$0xf]
    %v6040 = vld [vmem:[%s6038 + $0x4] sm:$0xf]
    %v6041 = vld [vmem:[%s6038 + $0x8] sm:$0xf]
    %v6042 = vld [vmem:[%s6038 + $0xc] sm:$0xf]
    %v6047 = vunpack.c.l.b16 %v6039
    %v6048 = vunpack.c.l.b16 %v6040
    %v6049 = vunpack.c.l.b16 %v6041
    %v6050 = vunpack.c.l.b16 %v6042
    %v6051 = vpack.c.b16 %v6048, %v6047
    %v6052 = vpack.c.b16 %v6050, %v6049
    %v6056 = vsel %vm2467, %v6031, 0
    %v6059 = vsel %vm2467, %v6032, 0
    %v6062 = vsel %vm2467, %v6033, 0
    %v6065 = vsel %vm2467, %v6034, 0
    %v6068 = vsel %vm2467, %v6035, 0
    %v6071 = vsel %vm2467, %v6036, 0
    %v6074 = vsel %vm2467, %v6037, 0
    %6076 = vmatprep.subr.bf16.mxu0 0
    %6077 = vmatpush1.bf16.msra.mxu0 0
    %6078 = vmatprep.subr.bf16.mxu0 0
    %6079 = vmatpush1.bf16.msra.mxu0 0
    %6080 = vmatprep.subr.bf16.mxu0 0
    %6081 = vmatpush1.bf16.msra.mxu0 0
    %6082 = vmatprep.subr.bf16.mxu0 0
    %6083 = vmatpush1.bf16.msra.mxu0 0
    %6084 = vmatprep.subr.bf16.mxu0 0
    %6085 = vmatpush1.bf16.msra.mxu0 0
    %6086 = vmatprep.subr.bf16.mxu0 0
    %6087 = vmatpush1.bf16.msra.mxu0 0
    %6088 = vmatprep.subr.bf16.mxu0 0
    %6089 = vmatpush1.bf16.msra.mxu0 %v6052
    %6090 = vmatprep.subr.bf16.mxu0 0
    %6091 = vmatpush1.bf16.msra.mxu0 %v6051
    %6092 = vmatprep.subr.bf16.mxu0 0
    %6093 = vmatpush2.bf16.msra.mxu0 0
    %6094 = vmatprep.subr.bf16.mxu0 0
    %6095 = vmatpush2.bf16.msra.mxu0 0
    %6096 = vmatprep.subr.bf16.mxu0 0
    %6097 = vmatpush2.bf16.msra.mxu0 0
    %6098 = vmatprep.subr.bf16.mxu0 0
    %6099 = vmatpush2.bf16.msra.mxu0 0
    %6100 = vmatprep.subr.bf16.mxu0 0
    %6101 = vmatpush2.bf16.msra.mxu0 0
    %6102 = vmatprep.subr.bf16.mxu0 0
    %6103 = vmatpush2.bf16.msra.mxu0 0
    %6104 = vmatprep.subr.bf16.mxu0 0
    %6105 = vmatpush2.bf16.msra.mxu0 0
    %6106 = vmatprep.subr.bf16.mxu0 0
    %6107 = vmatpush2.bf16.msra.mxu0 0
    %6108 = vmatprep.mubr.bf16.mxu0 0
    %6109 = vmatmul.mubr.bf16.gmra.mxu0 %v6056
    %v6110 = vpop.f32.mrf.mxu0
    %v6111 = vadd.f32 0.0, %v6110
    %v6112 = vpop.f32.mrf.mxu0
    %v6113 = vpop.f32.mrf.mxu0
    %v6114 = vadd.f32 0.0, %v6113
    %v6115 = vpop.f32.mrf.mxu0
    %6116 = vmatprep.mubr.bf16.mxu0 0
    %6117 = vmatmul.mubr.bf16.gmra.mxu0 %v6059
    %v6118 = vpop.f32.mrf.mxu0
    %v6119 = vadd.f32 0.0, %v6118
    %v6120 = vpop.f32.mrf.mxu0
    %v6121 = vpop.f32.mrf.mxu0
    %v6122 = vadd.f32 0.0, %v6121
    %v6123 = vpop.f32.mrf.mxu0
    %6124 = vmatprep.mubr.bf16.mxu0 0
    %6125 = vmatmul.mubr.bf16.gmra.mxu0 %v6062
    %v6126 = vpop.f32.mrf.mxu0
    %v6127 = vadd.f32 0.0, %v6126
    %v6128 = vpop.f32.mrf.mxu0
    %v6129 = vpop.f32.mrf.mxu0
    %v6130 = vadd.f32 0.0, %v6129
    %v6131 = vpop.f32.mrf.mxu0
    %6132 = vmatprep.mubr.bf16.mxu0 0
    %6133 = vmatmul.mubr.bf16.gmra.mxu0 %v6065
    %v6134 = vpop.f32.mrf.mxu0
    %v6135 = vadd.f32 0.0, %v6134
    %v6136 = vpop.f32.mrf.mxu0
    %v6137 = vpop.f32.mrf.mxu0
    %v6138 = vadd.f32 0.0, %v6137
    %v6139 = vpop.f32.mrf.mxu0
    %6140 = vmatprep.mubr.bf16.mxu0 0
    %6141 = vmatmul.mubr.bf16.gmra.mxu0 %v6068
    %v6142 = vpop.f32.mrf.mxu0
    %v6143 = vadd.f32 0.0, %v6142
    %v6144 = vpop.f32.mrf.mxu0
    %v6145 = vpop.f32.mrf.mxu0
    %v6146 = vadd.f32 0.0, %v6145
    %v6147 = vpop.f32.mrf.mxu0
    %6148 = vmatprep.mubr.bf16.mxu0 0
    %6149 = vmatmul.mubr.bf16.gmra.mxu0 %v6071
    %v6150 = vpop.f32.mrf.mxu0
    %v6151 = vadd.f32 0.0, %v6150
    %v6152 = vpop.f32.mrf.mxu0
    %v6153 = vpop.f32.mrf.mxu0
    %v6154 = vadd.f32 0.0, %v6153
    %v6155 = vpop.f32.mrf.mxu0
    %6156 = vmatprep.mubr.bf16.mxu0 0
    %6157 = vmatmul.mubr.bf16.gmra.mxu0 %v6074
    %v6158 = vpop.f32.mrf.mxu0
    %v6159 = vadd.f32 0.0, %v6158
    %v6160 = vpop.f32.mrf.mxu0
    %v6161 = vpop.f32.mrf.mxu0
    %v6162 = vpop.f32.mrf.mxu0
    %6163 = vdwg.mxu0
    %v6164 = vadd.f32 %v5667, %v6111
    %v6165 = vadd.f32 %v5668, %v6114
    %v6166 = vadd.f32 %v5669, %v6119
    %v6167 = vadd.f32 %v5670, %v6122
    %v6168 = vadd.f32 %v5671, %v6127
    %v6169 = vadd.f32 %v5672, %v6130
    %v6170 = vadd.f32 %v5673, %v6135
    %v6171 = vadd.f32 %v5674, %v6138
    %v6172 = vadd.f32 %v5675, %v6143
    %v6173 = vadd.f32 %v5676, %v6146
    %v6174 = vadd.f32 %v5677, %v6151
    %v6175 = vadd.f32 %v5678, %v6154
    %v6176 = vadd.f32 %v5679, %v6159
    %v6177 = vld [vmem:[%s8 + $0x1] ss:$0 sm:$0xff]
    %v6178 = vadd.f32 %v6164, %v6177
    %v6179 = vadd.f32 %v6165, %v6177
    %v6180 = vadd.f32 %v6166, %v6177
    %v6181 = vadd.f32 %v6167, %v6177
    %v6182 = vadd.f32 %v6168, %v6177
    %v6183 = vadd.f32 %v6169, %v6177
    %v6184 = vadd.f32 %v6170, %v6177
    %v6185 = vadd.f32 %v6171, %v6177
    %v6186 = vadd.f32 %v6172, %v6177
    %v6187 = vadd.f32 %v6173, %v6177
    %v6188 = vadd.f32 %v6174, %v6177
    %v6189 = vadd.f32 %v6175, %v6177
    %v6190 = vadd.f32 %v6176, %v6177
    %v6191 = vmax.f32 %v6178, 0.0
    %v6192 = vmax.f32 %v6179, 0.0
    %v6193 = vmax.f32 %v6180, 0.0
    %v6194 = vmax.f32 %v6181, 0.0
    %v6195 = vmax.f32 %v6182, 0.0
    %v6196 = vmax.f32 %v6183, 0.0
    %v6197 = vmax.f32 %v6184, 0.0
    %v6198 = vmax.f32 %v6185, 0.0
    %v6199 = vmax.f32 %v6186, 0.0
    %v6200 = vmax.f32 %v6187, 0.0
    %v6201 = vmax.f32 %v6188, 0.0
    %v6202 = vmax.f32 %v6189, 0.0
    %v6203 = vmax.f32 %v6190, 0.0
    %v6204 = vpack.c.bf16 %v6192, %v6191
    %v6205 = vpack.c.bf16 %v6194, %v6193
    %v6206 = vpack.c.bf16 %v6196, %v6195
    %v6207 = vpack.c.bf16 %v6198, %v6197
    %v6208 = vpack.c.bf16 %v6200, %v6199
    %v6209 = vpack.c.bf16 %v6202, %v6201
    %v6210 = vpack.c.bf16 %v6203, %v6203
    %v6211 = vld [vmem:[#allocation5] sm:$0xf]
    %v6212 = vld [vmem:[#allocation5 + $0x4] sm:$0xf]
    %v6213 = vld [vmem:[#allocation5 + $0x8] sm:$0xf]
    %v6214 = vld [vmem:[#allocation5 + $0xc] sm:$0xf]
    %v6219 = vunpack.c.l.b16 %v6211
    %v6220 = vunpack.c.l.b16 %v6212
    %v6221 = vunpack.c.l.b16 %v6213
    %v6222 = vunpack.c.l.b16 %v6214
    %v6223 = vpack.c.b16 %v6220, %v6219
    %v6224 = vpack.c.b16 %v6222, %v6221
    %vm6225 = vcmask 801792
    %v6227 = vsel %vm6225, %v6223, 0
    %v6230 = vsel %vm6225, %v6224, 0
    %vm6232 = vcmask 1040384
    %v6234 = vsel %vm6232, %v6210, 0
    %6236 = vmatprep.subr.bf16.mxu0 0
    %6237 = vmatpush1.bf16.msra.mxu0 0
    %6238 = vmatprep.subr.bf16.mxu0 0
    %6239 = vmatpush1.bf16.msra.mxu0 %v6234
    %6240 = vmatprep.subr.bf16.mxu0 0
    %6241 = vmatpush1.bf16.msra.mxu0 %v6209
    %6242 = vmatprep.subr.bf16.mxu0 0
    %6243 = vmatpush1.bf16.msra.mxu0 %v6208
    %6244 = vmatprep.subr.bf16.mxu0 0
    %6245 = vmatpush1.bf16.msra.mxu0 %v6207
    %6246 = vmatprep.subr.bf16.mxu0 0
    %6247 = vmatpush1.bf16.msra.mxu0 %v6206
    %6248 = vmatprep.subr.bf16.mxu0 0
    %6249 = vmatpush1.bf16.msra.mxu0 %v6205
    %6250 = vmatprep.subr.bf16.mxu0 0
    %6251 = vmatpush1.bf16.msra.mxu0 %v6204
    %6252 = vmatprep.subr.bf16.mxu0 0
    %6253 = vmatpush2.bf16.msra.mxu0 0
    %6254 = vmatprep.subr.bf16.mxu0 0
    %6255 = vmatpush2.bf16.msra.mxu0 0
    %6256 = vmatprep.subr.bf16.mxu0 0
    %6257 = vmatpush2.bf16.msra.mxu0 0
    %6258 = vmatprep.subr.bf16.mxu0 0
    %6259 = vmatpush2.bf16.msra.mxu0 0
    %6260 = vmatprep.subr.bf16.mxu0 0
    %6261 = vmatpush2.bf16.msra.mxu0 0
    %6262 = vmatprep.subr.bf16.mxu0 0
    %6263 = vmatpush2.bf16.msra.mxu0 0
    %6264 = vmatprep.subr.bf16.mxu0 0
    %6265 = vmatpush2.bf16.msra.mxu0 0
    %6266 = vmatprep.subr.bf16.mxu0 0
    %6267 = vmatpush2.bf16.msra.mxu0 0
    %6268 = vmatprep.mubr.bf16.mxu0 0
    %6269 = vmatmul.mubr.bf16.gmra.mxu0 %v6227
    %v6270 = vpop.f32.mrf.mxu0
    %v6271 = vadd.f32 0.0, %v6270
    %v6272 = vpop.f32.mrf.mxu0
    %v6273 = vpop.f32.mrf.mxu0
    %v6274 = vadd.f32 0.0, %v6273
    %v6275 = vpop.f32.mrf.mxu0
    %6276 = vmatprep.mubr.bf16.mxu0 0
    %6277 = vmatmul.mubr.bf16.gmra.mxu0 %v6230
    %v6278 = vpop.f32.mrf.mxu0
    %v6279 = vadd.f32 0.0, %v6278
    %v6280 = vpop.f32.mrf.mxu0
    %v6281 = vpop.f32.mrf.mxu0
    %v6282 = vadd.f32 0.0, %v6281
    %v6283 = vpop.f32.mrf.mxu0
    %6284 = vdwg.mxu0
    %v6285 = vpack.c.bf16 %v6274, %v6271
    %v6286 = vpack.c.bf16 %v6282, %v6279
    %v6287 = vld [vmem:[%s3] sm:$0xf]
    %v6288 = vld [vmem:[%s3 + $0x4] sm:$0xf]
    %v6289 = vld [vmem:[%s3 + $0x8] sm:$0xf]
    %v6290 = vld [vmem:[%s3 + $0xc] sm:$0xf]
    %v6291 = vld [vmem:[%s3 + $0x10] sm:$0xf]
    %v6292 = vld [vmem:[%s3 + $0x14] sm:$0xf]
    %v6293 = vld [vmem:[%s3 + $0x18] sm:$0xf]
    %v6294 = vld [vmem:[%s3 + $0x1c] sm:$0xf]
    %s6295 = scalar_lea.vmem [#allocation5], 16
    %v6296 = vld [vmem:[%s6295] sm:$0xf]
    %v6297 = vld [vmem:[%s6295 + $0x4] sm:$0xf]
    %v6298 = vld [vmem:[%s6295 + $0x8] sm:$0xf]
    %v6299 = vld [vmem:[%s6295 + $0xc] sm:$0xf]
    %v6304 = vunpack.c.l.b16 %v6296
    %v6305 = vunpack.c.l.b16 %v6297
    %v6306 = vunpack.c.l.b16 %v6298
    %v6307 = vunpack.c.l.b16 %v6299
    %v6308 = vpack.c.b16 %v6305, %v6304
    %v6309 = vpack.c.b16 %v6307, %v6306
    %v6311 = vsel %vm6225, %v6308, 0
    %v6314 = vsel %vm6225, %v6309, 0
    %6316 = vmatprep.subr.bf16.mxu0 0
    %6317 = vmatpush1.bf16.msra.mxu0 0
    %6318 = vmatprep.subr.bf16.mxu0 0
    %6319 = vmatpush1.bf16.msra.mxu0 %v6234
    %6320 = vmatprep.subr.bf16.mxu0 0
    %6321 = vmatpush1.bf16.msra.mxu0 %v6209
    %6322 = vmatprep.subr.bf16.mxu0 0
    %6323 = vmatpush1.bf16.msra.mxu0 %v6208
    %6324 = vmatprep.subr.bf16.mxu0 0
    %6325 = vmatpush1.bf16.msra.mxu0 %v6207
    %6326 = vmatprep.subr.bf16.mxu0 0
    %6327 = vmatpush1.bf16.msra.mxu0 %v6206
    %6328 = vmatprep.subr.bf16.mxu0 0
    %6329 = vmatpush1.bf16.msra.mxu0 %v6205
    %6330 = vmatprep.subr.bf16.mxu0 0
    %6331 = vmatpush1.bf16.msra.mxu0 %v6204
    %6332 = vmatprep.subr.bf16.mxu0 0
    %6333 = vmatpush2.bf16.msra.mxu0 0
    %6334 = vmatprep.subr.bf16.mxu0 0
    %6335 = vmatpush2.bf16.msra.mxu0 0
    %6336 = vmatprep.subr.bf16.mxu0 0
    %6337 = vmatpush2.bf16.msra.mxu0 0
    %6338 = vmatprep.subr.bf16.mxu0 0
    %6339 = vmatpush2.bf16.msra.mxu0 0
    %6340 = vmatprep.subr.bf16.mxu0 0
    %6341 = vmatpush2.bf16.msra.mxu0 0
    %6342 = vmatprep.subr.bf16.mxu0 0
    %6343 = vmatpush2.bf16.msra.mxu0 0
    %6344 = vmatprep.subr.bf16.mxu0 0
    %6345 = vmatpush2.bf16.msra.mxu0 0
    %6346 = vmatprep.subr.bf16.mxu0 0
    %6347 = vmatpush2.bf16.msra.mxu0 0
    %6348 = vmatprep.mubr.bf16.mxu0 0
    %6349 = vmatmul.mubr.bf16.gmra.mxu0 %v6311
    %v6350 = vpop.f32.mrf.mxu0
    %v6351 = vadd.f32 0.0, %v6350
    %v6352 = vpop.f32.mrf.mxu0
    %v6353 = vpop.f32.mrf.mxu0
    %v6354 = vadd.f32 0.0, %v6353
    %v6355 = vpop.f32.mrf.mxu0
    %6356 = vmatprep.mubr.bf16.mxu0 0
    %6357 = vmatmul.mubr.bf16.gmra.mxu0 %v6314
    %v6358 = vpop.f32.mrf.mxu0
    %v6359 = vadd.f32 0.0, %v6358
    %v6360 = vpop.f32.mrf.mxu0
    %v6361 = vpop.f32.mrf.mxu0
    %v6362 = vadd.f32 0.0, %v6361
    %v6363 = vpop.f32.mrf.mxu0
    %6364 = vdwg.mxu0
    %v6365 = vpack.c.bf16 %v6354, %v6351
    %v6366 = vpack.c.bf16 %v6362, %v6359
    %s6367 = scalar_lea.vmem %s3, 32
    %v6368 = vld [vmem:[%s6367] sm:$0xf]
    %v6369 = vld [vmem:[%s6367 + $0x4] sm:$0xf]
    %v6370 = vld [vmem:[%s6367 + $0x8] sm:$0xf]
    %v6371 = vld [vmem:[%s6367 + $0xc] sm:$0xf]
    %v6372 = vld [vmem:[%s6367 + $0x10] sm:$0xf]
    %v6373 = vld [vmem:[%s6367 + $0x14] sm:$0xf]
    %v6374 = vld [vmem:[%s6367 + $0x18] sm:$0xf]
    %v6375 = vld [vmem:[%s6367 + $0x1c] sm:$0xf]
    %v6384 = vunpack.c.l.b16 %v6368
    %v6385 = vunpack.c.l.b16 %v6369
    %v6386 = vunpack.c.l.b16 %v6370
    %v6387 = vunpack.c.l.b16 %v6371
    %v6388 = vunpack.c.l.b16 %v6372
    %v6389 = vunpack.c.l.b16 %v6373
    %v6390 = vunpack.c.l.b16 %v6374
    %v6391 = vunpack.c.l.b16 %v6375
    %v6392 = vpack.c.b16 %v6385, %v6384
    %v6393 = vpack.c.b16 %v6387, %v6386
    %v6394 = vpack.c.b16 %v6389, %v6388
    %v6395 = vpack.c.b16 %v6391, %v6390
    %vm6400 = vcmask 523264
    %v6402 = vsel %vm6400, %v6365, 0
    %v6405 = vsel %vm6400, %v6366, 0
    %6407 = vmatprep.subr.bf16.mxu0 0
    %6408 = vmatpush1.bf16.msra.mxu0 0
    %6409 = vmatprep.subr.bf16.mxu0 0
    %6410 = vmatpush1.bf16.msra.mxu0 0
    %6411 = vmatprep.subr.bf16.mxu0 0
    %6412 = vmatpush1.bf16.msra.mxu0 0
    %6413 = vmatprep.subr.bf16.mxu0 0
    %6414 = vmatpush1.bf16.msra.mxu0 0
    %6415 = vmatprep.subr.bf16.mxu0 0
    %6416 = vmatpush1.bf16.msra.mxu0 %v6395
    %6417 = vmatprep.subr.bf16.mxu0 0
    %6418 = vmatpush1.bf16.msra.mxu0 %v6394
    %6419 = vmatprep.subr.bf16.mxu0 0
    %6420 = vmatpush1.bf16.msra.mxu0 %v6393
    %6421 = vmatprep.subr.bf16.mxu0 0
    %6422 = vmatpush1.bf16.msra.mxu0 %v6392
    %6423 = vmatprep.subr.bf16.mxu0 0
    %6424 = vmatpush2.bf16.msra.mxu0 0
    %6425 = vmatprep.subr.bf16.mxu0 0
    %6426 = vmatpush2.bf16.msra.mxu0 0
    %6427 = vmatprep.subr.bf16.mxu0 0
    %6428 = vmatpush2.bf16.msra.mxu0 0
    %6429 = vmatprep.subr.bf16.mxu0 0
    %6430 = vmatpush2.bf16.msra.mxu0 0
    %6431 = vmatprep.subr.bf16.mxu0 0
    %6432 = vmatpush2.bf16.msra.mxu0 0
    %6433 = vmatprep.subr.bf16.mxu0 0
    %6434 = vmatpush2.bf16.msra.mxu0 0
    %6435 = vmatprep.subr.bf16.mxu0 0
    %6436 = vmatpush2.bf16.msra.mxu0 0
    %6437 = vmatprep.subr.bf16.mxu0 0
    %6438 = vmatpush2.bf16.msra.mxu0 0
    %6439 = vmatprep.mubr.bf16.mxu0 0
    %6440 = vmatmul.mubr.bf16.gmra.mxu0 %v6402
    %v6441 = vpop.f32.mrf.mxu0
    %v6442 = vadd.f32 0.0, %v6441
    %v6443 = vpop.f32.mrf.mxu0
    %v6444 = vpop.f32.mrf.mxu0
    %v6445 = vadd.f32 0.0, %v6444
    %v6446 = vpop.f32.mrf.mxu0
    %6447 = vmatprep.mubr.bf16.mxu0 0
    %6448 = vmatmul.mubr.bf16.gmra.mxu0 %v6405
    %v6449 = vpop.f32.mrf.mxu0
    %v6450 = vadd.f32 0.0, %v6449
    %v6451 = vpop.f32.mrf.mxu0
    %v6452 = vpop.f32.mrf.mxu0
    %v6453 = vadd.f32 0.0, %v6452
    %v6454 = vpop.f32.mrf.mxu0
    %6455 = vdwg.mxu0
    %v6464 = vunpack.c.l.b16 %v6287
    %v6465 = vunpack.c.l.b16 %v6288
    %v6466 = vunpack.c.l.b16 %v6289
    %v6467 = vunpack.c.l.b16 %v6290
    %v6468 = vunpack.c.l.b16 %v6291
    %v6469 = vunpack.c.l.b16 %v6292
    %v6470 = vunpack.c.l.b16 %v6293
    %v6471 = vunpack.c.l.b16 %v6294
    %v6472 = vpack.c.b16 %v6465, %v6464
    %v6473 = vpack.c.b16 %v6467, %v6466
    %v6474 = vpack.c.b16 %v6469, %v6468
    %v6475 = vpack.c.b16 %v6471, %v6470
    %v6481 = vsel %vm6400, %v6285, 0
    %v6484 = vsel %vm6400, %v6286, 0
    %6486 = vmatprep.subr.bf16.mxu0 0
    %6487 = vmatpush1.bf16.msra.mxu0 0
    %6488 = vmatprep.subr.bf16.mxu0 0
    %6489 = vmatpush1.bf16.msra.mxu0 0
    %6490 = vmatprep.subr.bf16.mxu0 0
    %6491 = vmatpush1.bf16.msra.mxu0 0
    %6492 = vmatprep.subr.bf16.mxu0 0
    %6493 = vmatpush1.bf16.msra.mxu0 0
    %6494 = vmatprep.subr.bf16.mxu0 0
    %6495 = vmatpush1.bf16.msra.mxu0 %v6475
    %6496 = vmatprep.subr.bf16.mxu0 0
    %6497 = vmatpush1.bf16.msra.mxu0 %v6474
    %6498 = vmatprep.subr.bf16.mxu0 0
    %6499 = vmatpush1.bf16.msra.mxu0 %v6473
    %6500 = vmatprep.subr.bf16.mxu0 0
    %6501 = vmatpush1.bf16.msra.mxu0 %v6472
    %6502 = vmatprep.subr.bf16.mxu0 0
    %6503 = vmatpush2.bf16.msra.mxu0 0
    %6504 = vmatprep.subr.bf16.mxu0 0
    %6505 = vmatpush2.bf16.msra.mxu0 0
    %6506 = vmatprep.subr.bf16.mxu0 0
    %6507 = vmatpush2.bf16.msra.mxu0 0
    %6508 = vmatprep.subr.bf16.mxu0 0
    %6509 = vmatpush2.bf16.msra.mxu0 0
    %6510 = vmatprep.subr.bf16.mxu0 0
    %6511 = vmatpush2.bf16.msra.mxu0 0
    %6512 = vmatprep.subr.bf16.mxu0 0
    %6513 = vmatpush2.bf16.msra.mxu0 0
    %6514 = vmatprep.subr.bf16.mxu0 0
    %6515 = vmatpush2.bf16.msra.mxu0 0
    %6516 = vmatprep.subr.bf16.mxu0 0
    %6517 = vmatpush2.bf16.msra.mxu0 0
    %6518 = vmatprep.mubr.bf16.mxu0 0
    %6519 = vmatmul.mubr.bf16.gmra.mxu0 %v6481
    %v6520 = vpop.f32.mrf.mxu0
    %v6521 = vadd.f32 %v6442, %v6520
    %v6522 = vpop.f32.mrf.mxu0
    %v6523 = vpop.f32.mrf.mxu0
    %v6524 = vadd.f32 %v6445, %v6523
    %v6525 = vpop.f32.mrf.mxu0
    %6526 = vmatprep.mubr.bf16.mxu0 0
    %6527 = vmatmul.mubr.bf16.gmra.mxu0 %v6484
    %v6528 = vpop.f32.mrf.mxu0
    %v6529 = vadd.f32 %v6450, %v6528
    %v6530 = vpop.f32.mrf.mxu0
    %v6531 = vpop.f32.mrf.mxu0
    %v6532 = vadd.f32 %v6453, %v6531
    %v6533 = vpop.f32.mrf.mxu0
    %6534 = vdwg.mxu0
    %s6535 = scalar_lea.vmem [#allocation5], 32
    %v6536 = vld [vmem:[%s6535] sm:$0xf]
    %v6537 = vld [vmem:[%s6535 + $0x4] sm:$0xf]
    %v6538 = vld [vmem:[%s6535 + $0x8] sm:$0xf]
    %v6539 = vld [vmem:[%s6535 + $0xc] sm:$0xf]
    %v6544 = vunpack.c.l.b16 %v6536
    %v6545 = vunpack.c.l.b16 %v6537
    %v6546 = vunpack.c.l.b16 %v6538
    %v6547 = vunpack.c.l.b16 %v6539
    %v6548 = vpack.c.b16 %v6545, %v6544
    %v6549 = vpack.c.b16 %v6547, %v6546
    %v6551 = vsel %vm6225, %v6548, 0
    %v6554 = vsel %vm6225, %v6549, 0
    %6556 = vmatprep.subr.bf16.mxu0 0
    %6557 = vmatpush1.bf16.msra.mxu0 0
    %6558 = vmatprep.subr.bf16.mxu0 0
    %6559 = vmatpush1.bf16.msra.mxu0 %v6234
    %6560 = vmatprep.subr.bf16.mxu0 0
    %6561 = vmatpush1.bf16.msra.mxu0 %v6209
    %6562 = vmatprep.subr.bf16.mxu0 0
    %6563 = vmatpush1.bf16.msra.mxu0 %v6208
    %6564 = vmatprep.subr.bf16.mxu0 0
    %6565 = vmatpush1.bf16.msra.mxu0 %v6207
    %6566 = vmatprep.subr.bf16.mxu0 0
    %6567 = vmatpush1.bf16.msra.mxu0 %v6206
    %6568 = vmatprep.subr.bf16.mxu0 0
    %6569 = vmatpush1.bf16.msra.mxu0 %v6205
    %6570 = vmatprep.subr.bf16.mxu0 0
    %6571 = vmatpush1.bf16.msra.mxu0 %v6204
    %6572 = vmatprep.subr.bf16.mxu0 0
    %6573 = vmatpush2.bf16.msra.mxu0 0
    %6574 = vmatprep.subr.bf16.mxu0 0
    %6575 = vmatpush2.bf16.msra.mxu0 0
    %6576 = vmatprep.subr.bf16.mxu0 0
    %6577 = vmatpush2.bf16.msra.mxu0 0
    %6578 = vmatprep.subr.bf16.mxu0 0
    %6579 = vmatpush2.bf16.msra.mxu0 0
    %6580 = vmatprep.subr.bf16.mxu0 0
    %6581 = vmatpush2.bf16.msra.mxu0 0
    %6582 = vmatprep.subr.bf16.mxu0 0
    %6583 = vmatpush2.bf16.msra.mxu0 0
    %6584 = vmatprep.subr.bf16.mxu0 0
    %6585 = vmatpush2.bf16.msra.mxu0 0
    %6586 = vmatprep.subr.bf16.mxu0 0
    %6587 = vmatpush2.bf16.msra.mxu0 0
    %6588 = vmatprep.mubr.bf16.mxu0 0
    %6589 = vmatmul.mubr.bf16.gmra.mxu0 %v6551
    %v6590 = vpop.f32.mrf.mxu0
    %v6591 = vadd.f32 0.0, %v6590
    %v6592 = vpop.f32.mrf.mxu0
    %v6593 = vpop.f32.mrf.mxu0
    %v6594 = vadd.f32 0.0, %v6593
    %v6595 = vpop.f32.mrf.mxu0
    %6596 = vmatprep.mubr.bf16.mxu0 0
    %6597 = vmatmul.mubr.bf16.gmra.mxu0 %v6554
    %v6598 = vpop.f32.mrf.mxu0
    %v6599 = vadd.f32 0.0, %v6598
    %v6600 = vpop.f32.mrf.mxu0
    %v6601 = vpop.f32.mrf.mxu0
    %v6602 = vadd.f32 0.0, %v6601
    %v6603 = vpop.f32.mrf.mxu0
    %6604 = vdwg.mxu0
    %v6605 = vpack.c.bf16 %v6594, %v6591
    %v6606 = vpack.c.bf16 %v6602, %v6599
    %s6607 = scalar_lea.vmem %s3, 64
    %v6608 = vld [vmem:[%s6607] sm:$0xf]
    %v6609 = vld [vmem:[%s6607 + $0x4] sm:$0xf]
    %v6610 = vld [vmem:[%s6607 + $0x8] sm:$0xf]
    %v6611 = vld [vmem:[%s6607 + $0xc] sm:$0xf]
    %v6612 = vld [vmem:[%s6607 + $0x10] sm:$0xf]
    %v6613 = vld [vmem:[%s6607 + $0x14] sm:$0xf]
    %v6614 = vld [vmem:[%s6607 + $0x18] sm:$0xf]
    %v6615 = vld [vmem:[%s6607 + $0x1c] sm:$0xf]
    %v6624 = vunpack.c.l.b16 %v6608
    %v6625 = vunpack.c.l.b16 %v6609
    %v6626 = vunpack.c.l.b16 %v6610
    %v6627 = vunpack.c.l.b16 %v6611
    %v6628 = vunpack.c.l.b16 %v6612
    %v6629 = vunpack.c.l.b16 %v6613
    %v6630 = vunpack.c.l.b16 %v6614
    %v6631 = vunpack.c.l.b16 %v6615
    %v6632 = vpack.c.b16 %v6625, %v6624
    %v6633 = vpack.c.b16 %v6627, %v6626
    %v6634 = vpack.c.b16 %v6629, %v6628
    %v6635 = vpack.c.b16 %v6631, %v6630
    %v6641 = vsel %vm6400, %v6605, 0
    %v6644 = vsel %vm6400, %v6606, 0
    %6646 = vmatprep.subr.bf16.mxu0 0
    %6647 = vmatpush1.bf16.msra.mxu0 0
    %6648 = vmatprep.subr.bf16.mxu0 0
    %6649 = vmatpush1.bf16.msra.mxu0 0
    %6650 = vmatprep.subr.bf16.mxu0 0
    %6651 = vmatpush1.bf16.msra.mxu0 0
    %6652 = vmatprep.subr.bf16.mxu0 0
    %6653 = vmatpush1.bf16.msra.mxu0 0
    %6654 = vmatprep.subr.bf16.mxu0 0
    %6655 = vmatpush1.bf16.msra.mxu0 %v6635
    %6656 = vmatprep.subr.bf16.mxu0 0
    %6657 = vmatpush1.bf16.msra.mxu0 %v6634
    %6658 = vmatprep.subr.bf16.mxu0 0
    %6659 = vmatpush1.bf16.msra.mxu0 %v6633
    %6660 = vmatprep.subr.bf16.mxu0 0
    %6661 = vmatpush1.bf16.msra.mxu0 %v6632
    %6662 = vmatprep.subr.bf16.mxu0 0
    %6663 = vmatpush2.bf16.msra.mxu0 0
    %6664 = vmatprep.subr.bf16.mxu0 0
    %6665 = vmatpush2.bf16.msra.mxu0 0
    %6666 = vmatprep.subr.bf16.mxu0 0
    %6667 = vmatpush2.bf16.msra.mxu0 0
    %6668 = vmatprep.subr.bf16.mxu0 0
    %6669 = vmatpush2.bf16.msra.mxu0 0
    %6670 = vmatprep.subr.bf16.mxu0 0
    %6671 = vmatpush2.bf16.msra.mxu0 0
    %6672 = vmatprep.subr.bf16.mxu0 0
    %6673 = vmatpush2.bf16.msra.mxu0 0
    %6674 = vmatprep.subr.bf16.mxu0 0
    %6675 = vmatpush2.bf16.msra.mxu0 0
    %6676 = vmatprep.subr.bf16.mxu0 0
    %6677 = vmatpush2.bf16.msra.mxu0 0
    %6678 = vmatprep.mubr.bf16.mxu0 0
    %6679 = vmatmul.mubr.bf16.gmra.mxu0 %v6641
    %v6680 = vpop.f32.mrf.mxu0
    %v6681 = vadd.f32 0.0, %v6680
    %v6682 = vpop.f32.mrf.mxu0
    %v6683 = vpop.f32.mrf.mxu0
    %v6684 = vadd.f32 0.0, %v6683
    %v6685 = vpop.f32.mrf.mxu0
    %6686 = vmatprep.mubr.bf16.mxu0 0
    %6687 = vmatmul.mubr.bf16.gmra.mxu0 %v6644
    %v6688 = vpop.f32.mrf.mxu0
    %v6689 = vadd.f32 0.0, %v6688
    %v6690 = vpop.f32.mrf.mxu0
    %v6691 = vpop.f32.mrf.mxu0
    %v6692 = vadd.f32 0.0, %v6691
    %v6693 = vpop.f32.mrf.mxu0
    %6694 = vdwg.mxu0
    %v6695 = vadd.f32 %v6521, %v6681
    %v6696 = vadd.f32 %v6524, %v6684
    %v6697 = vadd.f32 %v6529, %v6689
    %v6698 = vadd.f32 %v6532, %v6692
    %s6699 = scalar_lea.vmem [#allocation5], 48
    %v6700 = vld [vmem:[%s6699] sm:$0xf]
    %v6701 = vld [vmem:[%s6699 + $0x4] sm:$0xf]
    %v6702 = vld [vmem:[%s6699 + $0x8] sm:$0xf]
    %v6703 = vld [vmem:[%s6699 + $0xc] sm:$0xf]
    %v6708 = vunpack.c.l.b16 %v6700
    %v6709 = vunpack.c.l.b16 %v6701
    %v6710 = vunpack.c.l.b16 %v6702
    %v6711 = vunpack.c.l.b16 %v6703
    %v6712 = vpack.c.b16 %v6709, %v6708
    %v6713 = vpack.c.b16 %v6711, %v6710
    %v6715 = vsel %vm6225, %v6712, 0
    %v6718 = vsel %vm6225, %v6713, 0
    %6720 = vmatprep.subr.bf16.mxu0 0
    %6721 = vmatpush1.bf16.msra.mxu0 0
    %6722 = vmatprep.subr.bf16.mxu0 0
    %6723 = vmatpush1.bf16.msra.mxu0 %v6234
    %6724 = vmatprep.subr.bf16.mxu0 0
    %6725 = vmatpush1.bf16.msra.mxu0 %v6209
    %6726 = vmatprep.subr.bf16.mxu0 0
    %6727 = vmatpush1.bf16.msra.mxu0 %v6208
    %6728 = vmatprep.subr.bf16.mxu0 0
    %6729 = vmatpush1.bf16.msra.mxu0 %v6207
    %6730 = vmatprep.subr.bf16.mxu0 0
    %6731 = vmatpush1.bf16.msra.mxu0 %v6206
    %6732 = vmatprep.subr.bf16.mxu0 0
    %6733 = vmatpush1.bf16.msra.mxu0 %v6205
    %6734 = vmatprep.subr.bf16.mxu0 0
    %6735 = vmatpush1.bf16.msra.mxu0 %v6204
    %6736 = vmatprep.subr.bf16.mxu0 0
    %6737 = vmatpush2.bf16.msra.mxu0 0
    %6738 = vmatprep.subr.bf16.mxu0 0
    %6739 = vmatpush2.bf16.msra.mxu0 0
    %6740 = vmatprep.subr.bf16.mxu0 0
    %6741 = vmatpush2.bf16.msra.mxu0 0
    %6742 = vmatprep.subr.bf16.mxu0 0
    %6743 = vmatpush2.bf16.msra.mxu0 0
    %6744 = vmatprep.subr.bf16.mxu0 0
    %6745 = vmatpush2.bf16.msra.mxu0 0
    %6746 = vmatprep.subr.bf16.mxu0 0
    %6747 = vmatpush2.bf16.msra.mxu0 0
    %6748 = vmatprep.subr.bf16.mxu0 0
    %6749 = vmatpush2.bf16.msra.mxu0 0
    %6750 = vmatprep.subr.bf16.mxu0 0
    %6751 = vmatpush2.bf16.msra.mxu0 0
    %6752 = vmatprep.mubr.bf16.mxu0 0
    %6753 = vmatmul.mubr.bf16.gmra.mxu0 %v6715
    %v6754 = vpop.f32.mrf.mxu0
    %v6755 = vadd.f32 0.0, %v6754
    %v6756 = vpop.f32.mrf.mxu0
    %v6757 = vpop.f32.mrf.mxu0
    %v6758 = vadd.f32 0.0, %v6757
    %v6759 = vpop.f32.mrf.mxu0
    %6760 = vmatprep.mubr.bf16.mxu0 0
    %6761 = vmatmul.mubr.bf16.gmra.mxu0 %v6718
    %v6762 = vpop.f32.mrf.mxu0
    %v6763 = vadd.f32 0.0, %v6762
    %v6764 = vpop.f32.mrf.mxu0
    %v6765 = vpop.f32.mrf.mxu0
    %v6766 = vadd.f32 0.0, %v6765
    %v6767 = vpop.f32.mrf.mxu0
    %6768 = vdwg.mxu0
    %v6769 = vpack.c.bf16 %v6758, %v6755
    %v6770 = vpack.c.bf16 %v6766, %v6763
    %s6771 = scalar_lea.vmem %s3, 96
    %v6772 = vld [vmem:[%s6771] sm:$0xf]
    %v6773 = vld [vmem:[%s6771 + $0x4] sm:$0xf]
    %v6774 = vld [vmem:[%s6771 + $0x8] sm:$0xf]
    %v6775 = vld [vmem:[%s6771 + $0xc] sm:$0xf]
    %v6776 = vld [vmem:[%s6771 + $0x10] sm:$0xf]
    %v6777 = vld [vmem:[%s6771 + $0x14] sm:$0xf]
    %v6778 = vld [vmem:[%s6771 + $0x18] sm:$0xf]
    %v6779 = vld [vmem:[%s6771 + $0x1c] sm:$0xf]
    %v6788 = vunpack.c.l.b16 %v6772
    %v6789 = vunpack.c.l.b16 %v6773
    %v6790 = vunpack.c.l.b16 %v6774
    %v6791 = vunpack.c.l.b16 %v6775
    %v6792 = vunpack.c.l.b16 %v6776
    %v6793 = vunpack.c.l.b16 %v6777
    %v6794 = vunpack.c.l.b16 %v6778
    %v6795 = vunpack.c.l.b16 %v6779
    %v6796 = vpack.c.b16 %v6789, %v6788
    %v6797 = vpack.c.b16 %v6791, %v6790
    %v6798 = vpack.c.b16 %v6793, %v6792
    %v6799 = vpack.c.b16 %v6795, %v6794
    %v6805 = vsel %vm6400, %v6769, 0
    %v6808 = vsel %vm6400, %v6770, 0
    %6810 = vmatprep.subr.bf16.mxu0 0
    %6811 = vmatpush1.bf16.msra.mxu0 0
    %6812 = vmatprep.subr.bf16.mxu0 0
    %6813 = vmatpush1.bf16.msra.mxu0 0
    %6814 = vmatprep.subr.bf16.mxu0 0
    %6815 = vmatpush1.bf16.msra.mxu0 0
    %6816 = vmatprep.subr.bf16.mxu0 0
    %6817 = vmatpush1.bf16.msra.mxu0 0
    %6818 = vmatprep.subr.bf16.mxu0 0
    %6819 = vmatpush1.bf16.msra.mxu0 %v6799
    %6820 = vmatprep.subr.bf16.mxu0 0
    %6821 = vmatpush1.bf16.msra.mxu0 %v6798
    %6822 = vmatprep.subr.bf16.mxu0 0
    %6823 = vmatpush1.bf16.msra.mxu0 %v6797
    %6824 = vmatprep.subr.bf16.mxu0 0
    %6825 = vmatpush1.bf16.msra.mxu0 %v6796
    %6826 = vmatprep.subr.bf16.mxu0 0
    %6827 = vmatpush2.bf16.msra.mxu0 0
    %6828 = vmatprep.subr.bf16.mxu0 0
    %6829 = vmatpush2.bf16.msra.mxu0 0
    %6830 = vmatprep.subr.bf16.mxu0 0
    %6831 = vmatpush2.bf16.msra.mxu0 0
    %6832 = vmatprep.subr.bf16.mxu0 0
    %6833 = vmatpush2.bf16.msra.mxu0 0
    %6834 = vmatprep.subr.bf16.mxu0 0
    %6835 = vmatpush2.bf16.msra.mxu0 0
    %6836 = vmatprep.subr.bf16.mxu0 0
    %6837 = vmatpush2.bf16.msra.mxu0 0
    %6838 = vmatprep.subr.bf16.mxu0 0
    %6839 = vmatpush2.bf16.msra.mxu0 0
    %6840 = vmatprep.subr.bf16.mxu0 0
    %6841 = vmatpush2.bf16.msra.mxu0 0
    %6842 = vmatprep.mubr.bf16.mxu0 0
    %6843 = vmatmul.mubr.bf16.gmra.mxu0 %v6805
    %v6844 = vpop.f32.mrf.mxu0
    %v6845 = vadd.f32 0.0, %v6844
    %v6846 = vpop.f32.mrf.mxu0
    %v6847 = vpop.f32.mrf.mxu0
    %v6848 = vadd.f32 0.0, %v6847
    %v6849 = vpop.f32.mrf.mxu0
    %6850 = vmatprep.mubr.bf16.mxu0 0
    %6851 = vmatmul.mubr.bf16.gmra.mxu0 %v6808
    %v6852 = vpop.f32.mrf.mxu0
    %v6853 = vadd.f32 0.0, %v6852
    %v6854 = vpop.f32.mrf.mxu0
    %v6855 = vpop.f32.mrf.mxu0
    %v6856 = vadd.f32 0.0, %v6855
    %v6857 = vpop.f32.mrf.mxu0
    %6858 = vdwg.mxu0
    %v6859 = vadd.f32 %v6695, %v6845
    %v6860 = vadd.f32 %v6696, %v6848
    %v6861 = vadd.f32 %v6697, %v6853
    %v6862 = vadd.f32 %v6698, %v6856
    %s6863 = scalar_lea.vmem [#allocation5], 64
    %v6864 = vld [vmem:[%s6863] sm:$0xf]
    %v6865 = vld [vmem:[%s6863 + $0x4] sm:$0xf]
    %v6866 = vld [vmem:[%s6863 + $0x8] sm:$0xf]
    %v6867 = vld [vmem:[%s6863 + $0xc] sm:$0xf]
    %v6872 = vunpack.c.l.b16 %v6864
    %v6873 = vunpack.c.l.b16 %v6865
    %v6874 = vunpack.c.l.b16 %v6866
    %v6875 = vunpack.c.l.b16 %v6867
    %v6876 = vpack.c.b16 %v6873, %v6872
    %v6877 = vpack.c.b16 %v6875, %v6874
    %v6879 = vsel %vm6225, %v6876, 0
    %v6882 = vsel %vm6225, %v6877, 0
    %6884 = vmatprep.subr.bf16.mxu0 0
    %6885 = vmatpush1.bf16.msra.mxu0 0
    %6886 = vmatprep.subr.bf16.mxu0 0
    %6887 = vmatpush1.bf16.msra.mxu0 %v6234
    %6888 = vmatprep.subr.bf16.mxu0 0
    %6889 = vmatpush1.bf16.msra.mxu0 %v6209
    %6890 = vmatprep.subr.bf16.mxu0 0
    %6891 = vmatpush1.bf16.msra.mxu0 %v6208
    %6892 = vmatprep.subr.bf16.mxu0 0
    %6893 = vmatpush1.bf16.msra.mxu0 %v6207
    %6894 = vmatprep.subr.bf16.mxu0 0
    %6895 = vmatpush1.bf16.msra.mxu0 %v6206
    %6896 = vmatprep.subr.bf16.mxu0 0
    %6897 = vmatpush1.bf16.msra.mxu0 %v6205
    %6898 = vmatprep.subr.bf16.mxu0 0
    %6899 = vmatpush1.bf16.msra.mxu0 %v6204
    %6900 = vmatprep.subr.bf16.mxu0 0
    %6901 = vmatpush2.bf16.msra.mxu0 0
    %6902 = vmatprep.subr.bf16.mxu0 0
    %6903 = vmatpush2.bf16.msra.mxu0 0
    %6904 = vmatprep.subr.bf16.mxu0 0
    %6905 = vmatpush2.bf16.msra.mxu0 0
    %6906 = vmatprep.subr.bf16.mxu0 0
    %6907 = vmatpush2.bf16.msra.mxu0 0
    %6908 = vmatprep.subr.bf16.mxu0 0
    %6909 = vmatpush2.bf16.msra.mxu0 0
    %6910 = vmatprep.subr.bf16.mxu0 0
    %6911 = vmatpush2.bf16.msra.mxu0 0
    %6912 = vmatprep.subr.bf16.mxu0 0
    %6913 = vmatpush2.bf16.msra.mxu0 0
    %6914 = vmatprep.subr.bf16.mxu0 0
    %6915 = vmatpush2.bf16.msra.mxu0 0
    %6916 = vmatprep.mubr.bf16.mxu0 0
    %6917 = vmatmul.mubr.bf16.gmra.mxu0 %v6879
    %v6918 = vpop.f32.mrf.mxu0
    %v6919 = vadd.f32 0.0, %v6918
    %v6920 = vpop.f32.mrf.mxu0
    %v6921 = vpop.f32.mrf.mxu0
    %v6922 = vadd.f32 0.0, %v6921
    %v6923 = vpop.f32.mrf.mxu0
    %6924 = vmatprep.mubr.bf16.mxu0 0
    %6925 = vmatmul.mubr.bf16.gmra.mxu0 %v6882
    %v6926 = vpop.f32.mrf.mxu0
    %v6927 = vadd.f32 0.0, %v6926
    %v6928 = vpop.f32.mrf.mxu0
    %v6929 = vpop.f32.mrf.mxu0
    %v6930 = vadd.f32 0.0, %v6929
    %v6931 = vpop.f32.mrf.mxu0
    %6932 = vdwg.mxu0
    %v6933 = vpack.c.bf16 %v6922, %v6919
    %v6934 = vpack.c.bf16 %v6930, %v6927
    %s6935 = scalar_lea.vmem %s3, 128
    %v6936 = vld [vmem:[%s6935] sm:$0xf]
    %v6937 = vld [vmem:[%s6935 + $0x4] sm:$0xf]
    %v6938 = vld [vmem:[%s6935 + $0x8] sm:$0xf]
    %v6939 = vld [vmem:[%s6935 + $0xc] sm:$0xf]
    %v6940 = vld [vmem:[%s6935 + $0x10] sm:$0xf]
    %v6941 = vld [vmem:[%s6935 + $0x14] sm:$0xf]
    %v6942 = vld [vmem:[%s6935 + $0x18] sm:$0xf]
    %v6943 = vld [vmem:[%s6935 + $0x1c] sm:$0xf]
    %v6952 = vunpack.c.l.b16 %v6936
    %v6953 = vunpack.c.l.b16 %v6937
    %v6954 = vunpack.c.l.b16 %v6938
    %v6955 = vunpack.c.l.b16 %v6939
    %v6956 = vunpack.c.l.b16 %v6940
    %v6957 = vunpack.c.l.b16 %v6941
    %v6958 = vunpack.c.l.b16 %v6942
    %v6959 = vunpack.c.l.b16 %v6943
    %v6960 = vpack.c.b16 %v6953, %v6952
    %v6961 = vpack.c.b16 %v6955, %v6954
    %v6962 = vpack.c.b16 %v6957, %v6956
    %v6963 = vpack.c.b16 %v6959, %v6958
    %v6969 = vsel %vm6400, %v6933, 0
    %v6972 = vsel %vm6400, %v6934, 0
    %6974 = vmatprep.subr.bf16.mxu0 0
    %6975 = vmatpush1.bf16.msra.mxu0 0
    %6976 = vmatprep.subr.bf16.mxu0 0
    %6977 = vmatpush1.bf16.msra.mxu0 0
    %6978 = vmatprep.subr.bf16.mxu0 0
    %6979 = vmatpush1.bf16.msra.mxu0 0
    %6980 = vmatprep.subr.bf16.mxu0 0
    %6981 = vmatpush1.bf16.msra.mxu0 0
    %6982 = vmatprep.subr.bf16.mxu0 0
    %6983 = vmatpush1.bf16.msra.mxu0 %v6963
    %6984 = vmatprep.subr.bf16.mxu0 0
    %6985 = vmatpush1.bf16.msra.mxu0 %v6962
    %6986 = vmatprep.subr.bf16.mxu0 0
    %6987 = vmatpush1.bf16.msra.mxu0 %v6961
    %6988 = vmatprep.subr.bf16.mxu0 0
    %6989 = vmatpush1.bf16.msra.mxu0 %v6960
    %6990 = vmatprep.subr.bf16.mxu0 0
    %6991 = vmatpush2.bf16.msra.mxu0 0
    %6992 = vmatprep.subr.bf16.mxu0 0
    %6993 = vmatpush2.bf16.msra.mxu0 0
    %6994 = vmatprep.subr.bf16.mxu0 0
    %6995 = vmatpush2.bf16.msra.mxu0 0
    %6996 = vmatprep.subr.bf16.mxu0 0
    %6997 = vmatpush2.bf16.msra.mxu0 0
    %6998 = vmatprep.subr.bf16.mxu0 0
    %6999 = vmatpush2.bf16.msra.mxu0 0
    %7000 = vmatprep.subr.bf16.mxu0 0
    %7001 = vmatpush2.bf16.msra.mxu0 0
    %7002 = vmatprep.subr.bf16.mxu0 0
    %7003 = vmatpush2.bf16.msra.mxu0 0
    %7004 = vmatprep.subr.bf16.mxu0 0
    %7005 = vmatpush2.bf16.msra.mxu0 0
    %7006 = vmatprep.mubr.bf16.mxu0 0
    %7007 = vmatmul.mubr.bf16.gmra.mxu0 %v6969
    %v7008 = vpop.f32.mrf.mxu0
    %v7009 = vadd.f32 0.0, %v7008
    %v7010 = vpop.f32.mrf.mxu0
    %v7011 = vpop.f32.mrf.mxu0
    %v7012 = vadd.f32 0.0, %v7011
    %v7013 = vpop.f32.mrf.mxu0
    %7014 = vmatprep.mubr.bf16.mxu0 0
    %7015 = vmatmul.mubr.bf16.gmra.mxu0 %v6972
    %v7016 = vpop.f32.mrf.mxu0
    %v7017 = vadd.f32 0.0, %v7016
    %v7018 = vpop.f32.mrf.mxu0
    %v7019 = vpop.f32.mrf.mxu0
    %v7020 = vadd.f32 0.0, %v7019
    %v7021 = vpop.f32.mrf.mxu0
    %7022 = vdwg.mxu0
    %v7023 = vadd.f32 %v6859, %v7009
    %v7024 = vadd.f32 %v6860, %v7012
    %v7025 = vadd.f32 %v6861, %v7017
    %v7026 = vadd.f32 %v6862, %v7020
    %s7027 = scalar_lea.vmem [#allocation5], 80
    %v7028 = vld [vmem:[%s7027] sm:$0xf]
    %v7029 = vld [vmem:[%s7027 + $0x4] sm:$0xf]
    %v7030 = vld [vmem:[%s7027 + $0x8] sm:$0xf]
    %v7031 = vld [vmem:[%s7027 + $0xc] sm:$0xf]
    %v7036 = vunpack.c.l.b16 %v7028
    %v7037 = vunpack.c.l.b16 %v7029
    %v7038 = vunpack.c.l.b16 %v7030
    %v7039 = vunpack.c.l.b16 %v7031
    %v7040 = vpack.c.b16 %v7037, %v7036
    %v7041 = vpack.c.b16 %v7039, %v7038
    %v7043 = vsel %vm6225, %v7040, 0
    %v7046 = vsel %vm6225, %v7041, 0
    %7048 = vmatprep.subr.bf16.mxu0 0
    %7049 = vmatpush1.bf16.msra.mxu0 0
    %7050 = vmatprep.subr.bf16.mxu0 0
    %7051 = vmatpush1.bf16.msra.mxu0 %v6234
    %7052 = vmatprep.subr.bf16.mxu0 0
    %7053 = vmatpush1.bf16.msra.mxu0 %v6209
    %7054 = vmatprep.subr.bf16.mxu0 0
    %7055 = vmatpush1.bf16.msra.mxu0 %v6208
    %7056 = vmatprep.subr.bf16.mxu0 0
    %7057 = vmatpush1.bf16.msra.mxu0 %v6207
    %7058 = vmatprep.subr.bf16.mxu0 0
    %7059 = vmatpush1.bf16.msra.mxu0 %v6206
    %7060 = vmatprep.subr.bf16.mxu0 0
    %7061 = vmatpush1.bf16.msra.mxu0 %v6205
    %7062 = vmatprep.subr.bf16.mxu0 0
    %7063 = vmatpush1.bf16.msra.mxu0 %v6204
    %7064 = vmatprep.subr.bf16.mxu0 0
    %7065 = vmatpush2.bf16.msra.mxu0 0
    %7066 = vmatprep.subr.bf16.mxu0 0
    %7067 = vmatpush2.bf16.msra.mxu0 0
    %7068 = vmatprep.subr.bf16.mxu0 0
    %7069 = vmatpush2.bf16.msra.mxu0 0
    %7070 = vmatprep.subr.bf16.mxu0 0
    %7071 = vmatpush2.bf16.msra.mxu0 0
    %7072 = vmatprep.subr.bf16.mxu0 0
    %7073 = vmatpush2.bf16.msra.mxu0 0
    %7074 = vmatprep.subr.bf16.mxu0 0
    %7075 = vmatpush2.bf16.msra.mxu0 0
    %7076 = vmatprep.subr.bf16.mxu0 0
    %7077 = vmatpush2.bf16.msra.mxu0 0
    %7078 = vmatprep.subr.bf16.mxu0 0
    %7079 = vmatpush2.bf16.msra.mxu0 0
    %7080 = vmatprep.mubr.bf16.mxu0 0
    %7081 = vmatmul.mubr.bf16.gmra.mxu0 %v7043
    %v7082 = vpop.f32.mrf.mxu0
    %v7083 = vadd.f32 0.0, %v7082
    %v7084 = vpop.f32.mrf.mxu0
    %v7085 = vpop.f32.mrf.mxu0
    %v7086 = vadd.f32 0.0, %v7085
    %v7087 = vpop.f32.mrf.mxu0
    %7088 = vmatprep.mubr.bf16.mxu0 0
    %7089 = vmatmul.mubr.bf16.gmra.mxu0 %v7046
    %v7090 = vpop.f32.mrf.mxu0
    %v7091 = vadd.f32 0.0, %v7090
    %v7092 = vpop.f32.mrf.mxu0
    %v7093 = vpop.f32.mrf.mxu0
    %v7094 = vadd.f32 0.0, %v7093
    %v7095 = vpop.f32.mrf.mxu0
    %7096 = vdwg.mxu0
    %v7097 = vpack.c.bf16 %v7086, %v7083
    %v7098 = vpack.c.bf16 %v7094, %v7091
    %s7099 = scalar_lea.vmem %s3, 160
    %v7100 = vld [vmem:[%s7099] sm:$0xf]
    %v7101 = vld [vmem:[%s7099 + $0x4] sm:$0xf]
    %v7102 = vld [vmem:[%s7099 + $0x8] sm:$0xf]
    %v7103 = vld [vmem:[%s7099 + $0xc] sm:$0xf]
    %v7104 = vld [vmem:[%s7099 + $0x10] sm:$0xf]
    %v7105 = vld [vmem:[%s7099 + $0x14] sm:$0xf]
    %v7106 = vld [vmem:[%s7099 + $0x18] sm:$0xf]
    %v7107 = vld [vmem:[%s7099 + $0x1c] sm:$0xf]
    %v7116 = vunpack.c.l.b16 %v7100
    %v7117 = vunpack.c.l.b16 %v7101
    %v7118 = vunpack.c.l.b16 %v7102
    %v7119 = vunpack.c.l.b16 %v7103
    %v7120 = vunpack.c.l.b16 %v7104
    %v7121 = vunpack.c.l.b16 %v7105
    %v7122 = vunpack.c.l.b16 %v7106
    %v7123 = vunpack.c.l.b16 %v7107
    %v7124 = vpack.c.b16 %v7117, %v7116
    %v7125 = vpack.c.b16 %v7119, %v7118
    %v7126 = vpack.c.b16 %v7121, %v7120
    %v7127 = vpack.c.b16 %v7123, %v7122
    %v7133 = vsel %vm6400, %v7097, 0
    %v7136 = vsel %vm6400, %v7098, 0
    %7138 = vmatprep.subr.bf16.mxu0 0
    %7139 = vmatpush1.bf16.msra.mxu0 0
    %7140 = vmatprep.subr.bf16.mxu0 0
    %7141 = vmatpush1.bf16.msra.mxu0 0
    %7142 = vmatprep.subr.bf16.mxu0 0
    %7143 = vmatpush1.bf16.msra.mxu0 0
    %7144 = vmatprep.subr.bf16.mxu0 0
    %7145 = vmatpush1.bf16.msra.mxu0 0
    %7146 = vmatprep.subr.bf16.mxu0 0
    %7147 = vmatpush1.bf16.msra.mxu0 %v7127
    %7148 = vmatprep.subr.bf16.mxu0 0
    %7149 = vmatpush1.bf16.msra.mxu0 %v7126
    %7150 = vmatprep.subr.bf16.mxu0 0
    %7151 = vmatpush1.bf16.msra.mxu0 %v7125
    %7152 = vmatprep.subr.bf16.mxu0 0
    %7153 = vmatpush1.bf16.msra.mxu0 %v7124
    %7154 = vmatprep.subr.bf16.mxu0 0
    %7155 = vmatpush2.bf16.msra.mxu0 0
    %7156 = vmatprep.subr.bf16.mxu0 0
    %7157 = vmatpush2.bf16.msra.mxu0 0
    %7158 = vmatprep.subr.bf16.mxu0 0
    %7159 = vmatpush2.bf16.msra.mxu0 0
    %7160 = vmatprep.subr.bf16.mxu0 0
    %7161 = vmatpush2.bf16.msra.mxu0 0
    %7162 = vmatprep.subr.bf16.mxu0 0
    %7163 = vmatpush2.bf16.msra.mxu0 0
    %7164 = vmatprep.subr.bf16.mxu0 0
    %7165 = vmatpush2.bf16.msra.mxu0 0
    %7166 = vmatprep.subr.bf16.mxu0 0
    %7167 = vmatpush2.bf16.msra.mxu0 0
    %7168 = vmatprep.subr.bf16.mxu0 0
    %7169 = vmatpush2.bf16.msra.mxu0 0
    %7170 = vmatprep.mubr.bf16.mxu0 0
    %7171 = vmatmul.mubr.bf16.gmra.mxu0 %v7133
    %v7172 = vpop.f32.mrf.mxu0
    %v7173 = vadd.f32 0.0, %v7172
    %v7174 = vpop.f32.mrf.mxu0
    %v7175 = vpop.f32.mrf.mxu0
    %v7176 = vadd.f32 0.0, %v7175
    %v7177 = vpop.f32.mrf.mxu0
    %7178 = vmatprep.mubr.bf16.mxu0 0
    %7179 = vmatmul.mubr.bf16.gmra.mxu0 %v7136
    %v7180 = vpop.f32.mrf.mxu0
    %v7181 = vadd.f32 0.0, %v7180
    %v7182 = vpop.f32.mrf.mxu0
    %v7183 = vpop.f32.mrf.mxu0
    %v7184 = vadd.f32 0.0, %v7183
    %v7185 = vpop.f32.mrf.mxu0
    %7186 = vdwg.mxu0
    %v7187 = vadd.f32 %v7023, %v7173
    %v7188 = vadd.f32 %v7024, %v7176
    %v7189 = vadd.f32 %v7025, %v7181
    %v7190 = vadd.f32 %v7026, %v7184
    %s7191 = scalar_lea.vmem [#allocation5], 96
    %v7192 = vld [vmem:[%s7191] sm:$0xf]
    %v7193 = vld [vmem:[%s7191 + $0x4] sm:$0xf]
    %v7194 = vld [vmem:[%s7191 + $0x8] sm:$0xf]
    %v7195 = vld [vmem:[%s7191 + $0xc] sm:$0xf]
    %v7200 = vunpack.c.l.b16 %v7192
    %v7201 = vunpack.c.l.b16 %v7193
    %v7202 = vunpack.c.l.b16 %v7194
    %v7203 = vunpack.c.l.b16 %v7195
    %v7204 = vpack.c.b16 %v7201, %v7200
    %v7205 = vpack.c.b16 %v7203, %v7202
    %v7207 = vsel %vm6225, %v7204, 0
    %v7210 = vsel %vm6225, %v7205, 0
    %7212 = vmatprep.subr.bf16.mxu0 0
    %7213 = vmatpush1.bf16.msra.mxu0 0
    %7214 = vmatprep.subr.bf16.mxu0 0
    %7215 = vmatpush1.bf16.msra.mxu0 %v6234
    %7216 = vmatprep.subr.bf16.mxu0 0
    %7217 = vmatpush1.bf16.msra.mxu0 %v6209
    %7218 = vmatprep.subr.bf16.mxu0 0
    %7219 = vmatpush1.bf16.msra.mxu0 %v6208
    %7220 = vmatprep.subr.bf16.mxu0 0
    %7221 = vmatpush1.bf16.msra.mxu0 %v6207
    %7222 = vmatprep.subr.bf16.mxu0 0
    %7223 = vmatpush1.bf16.msra.mxu0 %v6206
    %7224 = vmatprep.subr.bf16.mxu0 0
    %7225 = vmatpush1.bf16.msra.mxu0 %v6205
    %7226 = vmatprep.subr.bf16.mxu0 0
    %7227 = vmatpush1.bf16.msra.mxu0 %v6204
    %7228 = vmatprep.subr.bf16.mxu0 0
    %7229 = vmatpush2.bf16.msra.mxu0 0
    %7230 = vmatprep.subr.bf16.mxu0 0
    %7231 = vmatpush2.bf16.msra.mxu0 0
    %7232 = vmatprep.subr.bf16.mxu0 0
    %7233 = vmatpush2.bf16.msra.mxu0 0
    %7234 = vmatprep.subr.bf16.mxu0 0
    %7235 = vmatpush2.bf16.msra.mxu0 0
    %7236 = vmatprep.subr.bf16.mxu0 0
    %7237 = vmatpush2.bf16.msra.mxu0 0
    %7238 = vmatprep.subr.bf16.mxu0 0
    %7239 = vmatpush2.bf16.msra.mxu0 0
    %7240 = vmatprep.subr.bf16.mxu0 0
    %7241 = vmatpush2.bf16.msra.mxu0 0
    %7242 = vmatprep.subr.bf16.mxu0 0
    %7243 = vmatpush2.bf16.msra.mxu0 0
    %7244 = vmatprep.mubr.bf16.mxu0 0
    %7245 = vmatmul.mubr.bf16.gmra.mxu0 %v7207
    %v7246 = vpop.f32.mrf.mxu0
    %v7247 = vadd.f32 0.0, %v7246
    %v7248 = vpop.f32.mrf.mxu0
    %v7249 = vpop.f32.mrf.mxu0
    %v7250 = vadd.f32 0.0, %v7249
    %v7251 = vpop.f32.mrf.mxu0
    %7252 = vmatprep.mubr.bf16.mxu0 0
    %7253 = vmatmul.mubr.bf16.gmra.mxu0 %v7210
    %v7254 = vpop.f32.mrf.mxu0
    %v7255 = vadd.f32 0.0, %v7254
    %v7256 = vpop.f32.mrf.mxu0
    %v7257 = vpop.f32.mrf.mxu0
    %v7258 = vadd.f32 0.0, %v7257
    %v7259 = vpop.f32.mrf.mxu0
    %7260 = vdwg.mxu0
    %v7261 = vpack.c.bf16 %v7250, %v7247
    %v7262 = vpack.c.bf16 %v7258, %v7255
    %s7263 = scalar_lea.vmem %s3, 192
    %v7264 = vld [vmem:[%s7263] sm:$0xf]
    %v7265 = vld [vmem:[%s7263 + $0x4] sm:$0xf]
    %v7266 = vld [vmem:[%s7263 + $0x8] sm:$0xf]
    %v7267 = vld [vmem:[%s7263 + $0xc] sm:$0xf]
    %v7268 = vld [vmem:[%s7263 + $0x10] sm:$0xf]
    %v7269 = vld [vmem:[%s7263 + $0x14] sm:$0xf]
    %v7270 = vld [vmem:[%s7263 + $0x18] sm:$0xf]
    %v7271 = vld [vmem:[%s7263 + $0x1c] sm:$0xf]
    %v7280 = vunpack.c.l.b16 %v7264
    %v7281 = vunpack.c.l.b16 %v7265
    %v7282 = vunpack.c.l.b16 %v7266
    %v7283 = vunpack.c.l.b16 %v7267
    %v7284 = vunpack.c.l.b16 %v7268
    %v7285 = vunpack.c.l.b16 %v7269
    %v7286 = vunpack.c.l.b16 %v7270
    %v7287 = vunpack.c.l.b16 %v7271
    %v7288 = vpack.c.b16 %v7281, %v7280
    %v7289 = vpack.c.b16 %v7283, %v7282
    %v7290 = vpack.c.b16 %v7285, %v7284
    %v7291 = vpack.c.b16 %v7287, %v7286
    %v7297 = vsel %vm6400, %v7261, 0
    %v7300 = vsel %vm6400, %v7262, 0
    %7302 = vmatprep.subr.bf16.mxu0 0
    %7303 = vmatpush1.bf16.msra.mxu0 0
    %7304 = vmatprep.subr.bf16.mxu0 0
    %7305 = vmatpush1.bf16.msra.mxu0 0
    %7306 = vmatprep.subr.bf16.mxu0 0
    %7307 = vmatpush1.bf16.msra.mxu0 0
    %7308 = vmatprep.subr.bf16.mxu0 0
    %7309 = vmatpush1.bf16.msra.mxu0 0
    %7310 = vmatprep.subr.bf16.mxu0 0
    %7311 = vmatpush1.bf16.msra.mxu0 %v7291
    %7312 = vmatprep.subr.bf16.mxu0 0
    %7313 = vmatpush1.bf16.msra.mxu0 %v7290
    %7314 = vmatprep.subr.bf16.mxu0 0
    %7315 = vmatpush1.bf16.msra.mxu0 %v7289
    %7316 = vmatprep.subr.bf16.mxu0 0
    %7317 = vmatpush1.bf16.msra.mxu0 %v7288
    %7318 = vmatprep.subr.bf16.mxu0 0
    %7319 = vmatpush2.bf16.msra.mxu0 0
    %7320 = vmatprep.subr.bf16.mxu0 0
    %7321 = vmatpush2.bf16.msra.mxu0 0
    %7322 = vmatprep.subr.bf16.mxu0 0
    %7323 = vmatpush2.bf16.msra.mxu0 0
    %7324 = vmatprep.subr.bf16.mxu0 0
    %7325 = vmatpush2.bf16.msra.mxu0 0
    %7326 = vmatprep.subr.bf16.mxu0 0
    %7327 = vmatpush2.bf16.msra.mxu0 0
    %7328 = vmatprep.subr.bf16.mxu0 0
    %7329 = vmatpush2.bf16.msra.mxu0 0
    %7330 = vmatprep.subr.bf16.mxu0 0
    %7331 = vmatpush2.bf16.msra.mxu0 0
    %7332 = vmatprep.subr.bf16.mxu0 0
    %7333 = vmatpush2.bf16.msra.mxu0 0
    %7334 = vmatprep.mubr.bf16.mxu0 0
    %7335 = vmatmul.mubr.bf16.gmra.mxu0 %v7297
    %v7336 = vpop.f32.mrf.mxu0
    %v7337 = vadd.f32 0.0, %v7336
    %v7338 = vpop.f32.mrf.mxu0
    %v7339 = vpop.f32.mrf.mxu0
    %v7340 = vadd.f32 0.0, %v7339
    %v7341 = vpop.f32.mrf.mxu0
    %7342 = vmatprep.mubr.bf16.mxu0 0
    %7343 = vmatmul.mubr.bf16.gmra.mxu0 %v7300
    %v7344 = vpop.f32.mrf.mxu0
    %v7345 = vadd.f32 0.0, %v7344
    %v7346 = vpop.f32.mrf.mxu0
    %v7347 = vpop.f32.mrf.mxu0
    %v7348 = vadd.f32 0.0, %v7347
    %v7349 = vpop.f32.mrf.mxu0
    %7350 = vdwg.mxu0
    %v7351 = vadd.f32 %v7187, %v7337
    %v7352 = vadd.f32 %v7188, %v7340
    %v7353 = vadd.f32 %v7189, %v7345
    %v7354 = vadd.f32 %v7190, %v7348
    %s7355 = scalar_lea.vmem [#allocation5], 112
    %v7356 = vld [vmem:[%s7355] sm:$0xf]
    %v7357 = vld [vmem:[%s7355 + $0x4] sm:$0xf]
    %v7358 = vld [vmem:[%s7355 + $0x8] sm:$0xf]
    %v7359 = vld [vmem:[%s7355 + $0xc] sm:$0xf]
    %v7364 = vunpack.c.l.b16 %v7356
    %v7365 = vunpack.c.l.b16 %v7357
    %v7366 = vunpack.c.l.b16 %v7358
    %v7367 = vunpack.c.l.b16 %v7359
    %v7368 = vpack.c.b16 %v7365, %v7364
    %v7369 = vpack.c.b16 %v7367, %v7366
    %v7371 = vsel %vm6225, %v7368, 0
    %v7374 = vsel %vm6225, %v7369, 0
    %7376 = vmatprep.subr.bf16.mxu0 0
    %7377 = vmatpush1.bf16.msra.mxu0 0
    %7378 = vmatprep.subr.bf16.mxu0 0
    %7379 = vmatpush1.bf16.msra.mxu0 %v6234
    %7380 = vmatprep.subr.bf16.mxu0 0
    %7381 = vmatpush1.bf16.msra.mxu0 %v6209
    %7382 = vmatprep.subr.bf16.mxu0 0
    %7383 = vmatpush1.bf16.msra.mxu0 %v6208
    %7384 = vmatprep.subr.bf16.mxu0 0
    %7385 = vmatpush1.bf16.msra.mxu0 %v6207
    %7386 = vmatprep.subr.bf16.mxu0 0
    %7387 = vmatpush1.bf16.msra.mxu0 %v6206
    %7388 = vmatprep.subr.bf16.mxu0 0
    %7389 = vmatpush1.bf16.msra.mxu0 %v6205
    %7390 = vmatprep.subr.bf16.mxu0 0
    %7391 = vmatpush1.bf16.msra.mxu0 %v6204
    %7392 = vmatprep.subr.bf16.mxu0 0
    %7393 = vmatpush2.bf16.msra.mxu0 0
    %7394 = vmatprep.subr.bf16.mxu0 0
    %7395 = vmatpush2.bf16.msra.mxu0 0
    %7396 = vmatprep.subr.bf16.mxu0 0
    %7397 = vmatpush2.bf16.msra.mxu0 0
    %7398 = vmatprep.subr.bf16.mxu0 0
    %7399 = vmatpush2.bf16.msra.mxu0 0
    %7400 = vmatprep.subr.bf16.mxu0 0
    %7401 = vmatpush2.bf16.msra.mxu0 0
    %7402 = vmatprep.subr.bf16.mxu0 0
    %7403 = vmatpush2.bf16.msra.mxu0 0
    %7404 = vmatprep.subr.bf16.mxu0 0
    %7405 = vmatpush2.bf16.msra.mxu0 0
    %7406 = vmatprep.subr.bf16.mxu0 0
    %7407 = vmatpush2.bf16.msra.mxu0 0
    %7408 = vmatprep.mubr.bf16.mxu0 0
    %7409 = vmatmul.mubr.bf16.gmra.mxu0 %v7371
    %v7410 = vpop.f32.mrf.mxu0
    %v7411 = vadd.f32 0.0, %v7410
    %v7412 = vpop.f32.mrf.mxu0
    %v7413 = vpop.f32.mrf.mxu0
    %v7414 = vadd.f32 0.0, %v7413
    %v7415 = vpop.f32.mrf.mxu0
    %7416 = vmatprep.mubr.bf16.mxu0 0
    %7417 = vmatmul.mubr.bf16.gmra.mxu0 %v7374
    %v7418 = vpop.f32.mrf.mxu0
    %v7419 = vadd.f32 0.0, %v7418
    %v7420 = vpop.f32.mrf.mxu0
    %v7421 = vpop.f32.mrf.mxu0
    %v7422 = vadd.f32 0.0, %v7421
    %v7423 = vpop.f32.mrf.mxu0
    %7424 = vdwg.mxu0
    %v7425 = vpack.c.bf16 %v7414, %v7411
    %v7426 = vpack.c.bf16 %v7422, %v7419
    %s7427 = scalar_lea.vmem %s3, 224
    %v7428 = vld [vmem:[%s7427] sm:$0xf]
    %v7429 = vld [vmem:[%s7427 + $0x4] sm:$0xf]
    %v7430 = vld [vmem:[%s7427 + $0x8] sm:$0xf]
    %v7431 = vld [vmem:[%s7427 + $0xc] sm:$0xf]
    %v7432 = vld [vmem:[%s7427 + $0x10] sm:$0xf]
    %v7433 = vld [vmem:[%s7427 + $0x14] sm:$0xf]
    %v7434 = vld [vmem:[%s7427 + $0x18] sm:$0xf]
    %v7435 = vld [vmem:[%s7427 + $0x1c] sm:$0xf]
    %v7444 = vunpack.c.l.b16 %v7428
    %v7445 = vunpack.c.l.b16 %v7429
    %v7446 = vunpack.c.l.b16 %v7430
    %v7447 = vunpack.c.l.b16 %v7431
    %v7448 = vunpack.c.l.b16 %v7432
    %v7449 = vunpack.c.l.b16 %v7433
    %v7450 = vunpack.c.l.b16 %v7434
    %v7451 = vunpack.c.l.b16 %v7435
    %v7452 = vpack.c.b16 %v7445, %v7444
    %v7453 = vpack.c.b16 %v7447, %v7446
    %v7454 = vpack.c.b16 %v7449, %v7448
    %v7455 = vpack.c.b16 %v7451, %v7450
    %v7461 = vsel %vm6400, %v7425, 0
    %v7464 = vsel %vm6400, %v7426, 0
    %7466 = vmatprep.subr.bf16.mxu0 0
    %7467 = vmatpush1.bf16.msra.mxu0 0
    %7468 = vmatprep.subr.bf16.mxu0 0
    %7469 = vmatpush1.bf16.msra.mxu0 0
    %7470 = vmatprep.subr.bf16.mxu0 0
    %7471 = vmatpush1.bf16.msra.mxu0 0
    %7472 = vmatprep.subr.bf16.mxu0 0
    %7473 = vmatpush1.bf16.msra.mxu0 0
    %7474 = vmatprep.subr.bf16.mxu0 0
    %7475 = vmatpush1.bf16.msra.mxu0 %v7455
    %7476 = vmatprep.subr.bf16.mxu0 0
    %7477 = vmatpush1.bf16.msra.mxu0 %v7454
    %7478 = vmatprep.subr.bf16.mxu0 0
    %7479 = vmatpush1.bf16.msra.mxu0 %v7453
    %7480 = vmatprep.subr.bf16.mxu0 0
    %7481 = vmatpush1.bf16.msra.mxu0 %v7452
    %7482 = vmatprep.subr.bf16.mxu0 0
    %7483 = vmatpush2.bf16.msra.mxu0 0
    %7484 = vmatprep.subr.bf16.mxu0 0
    %7485 = vmatpush2.bf16.msra.mxu0 0
    %7486 = vmatprep.subr.bf16.mxu0 0
    %7487 = vmatpush2.bf16.msra.mxu0 0
    %7488 = vmatprep.subr.bf16.mxu0 0
    %7489 = vmatpush2.bf16.msra.mxu0 0
    %7490 = vmatprep.subr.bf16.mxu0 0
    %7491 = vmatpush2.bf16.msra.mxu0 0
    %7492 = vmatprep.subr.bf16.mxu0 0
    %7493 = vmatpush2.bf16.msra.mxu0 0
    %7494 = vmatprep.subr.bf16.mxu0 0
    %7495 = vmatpush2.bf16.msra.mxu0 0
    %7496 = vmatprep.subr.bf16.mxu0 0
    %7497 = vmatpush2.bf16.msra.mxu0 0
    %7498 = vmatprep.mubr.bf16.mxu0 0
    %7499 = vmatmul.mubr.bf16.gmra.mxu0 %v7461
    %v7500 = vpop.f32.mrf.mxu0
    %v7501 = vadd.f32 0.0, %v7500
    %v7502 = vpop.f32.mrf.mxu0
    %v7503 = vpop.f32.mrf.mxu0
    %v7504 = vadd.f32 0.0, %v7503
    %v7505 = vpop.f32.mrf.mxu0
    %7506 = vmatprep.mubr.bf16.mxu0 0
    %7507 = vmatmul.mubr.bf16.gmra.mxu0 %v7464
    %v7508 = vpop.f32.mrf.mxu0
    %v7509 = vadd.f32 0.0, %v7508
    %v7510 = vpop.f32.mrf.mxu0
    %v7511 = vpop.f32.mrf.mxu0
    %v7512 = vadd.f32 0.0, %v7511
    %v7513 = vpop.f32.mrf.mxu0
    %7514 = vdwg.mxu0
    %v7515 = vadd.f32 %v7351, %v7501
    %v7516 = vadd.f32 %v7352, %v7504
    %v7517 = vadd.f32 %v7353, %v7509
    %v7518 = vadd.f32 %v7354, %v7512
    %s7519 = scalar_lea.vmem [#allocation5], 128
    %v7520 = vld [vmem:[%s7519] sm:$0xf]
    %v7521 = vld [vmem:[%s7519 + $0x4] sm:$0xf]
    %v7522 = vld [vmem:[%s7519 + $0x8] sm:$0xf]
    %v7523 = vld [vmem:[%s7519 + $0xc] sm:$0xf]
    %v7528 = vunpack.c.l.b16 %v7520
    %v7529 = vunpack.c.l.b16 %v7521
    %v7530 = vunpack.c.l.b16 %v7522
    %v7531 = vunpack.c.l.b16 %v7523
    %v7532 = vpack.c.b16 %v7529, %v7528
    %v7533 = vpack.c.b16 %v7531, %v7530
    %v7535 = vsel %vm6225, %v7532, 0
    %v7538 = vsel %vm6225, %v7533, 0
    %7540 = vmatprep.subr.bf16.mxu0 0
    %7541 = vmatpush1.bf16.msra.mxu0 0
    %7542 = vmatprep.subr.bf16.mxu0 0
    %7543 = vmatpush1.bf16.msra.mxu0 %v6234
    %7544 = vmatprep.subr.bf16.mxu0 0
    %7545 = vmatpush1.bf16.msra.mxu0 %v6209
    %7546 = vmatprep.subr.bf16.mxu0 0
    %7547 = vmatpush1.bf16.msra.mxu0 %v6208
    %7548 = vmatprep.subr.bf16.mxu0 0
    %7549 = vmatpush1.bf16.msra.mxu0 %v6207
    %7550 = vmatprep.subr.bf16.mxu0 0
    %7551 = vmatpush1.bf16.msra.mxu0 %v6206
    %7552 = vmatprep.subr.bf16.mxu0 0
    %7553 = vmatpush1.bf16.msra.mxu0 %v6205
    %7554 = vmatprep.subr.bf16.mxu0 0
    %7555 = vmatpush1.bf16.msra.mxu0 %v6204
    %7556 = vmatprep.subr.bf16.mxu0 0
    %7557 = vmatpush2.bf16.msra.mxu0 0
    %7558 = vmatprep.subr.bf16.mxu0 0
    %7559 = vmatpush2.bf16.msra.mxu0 0
    %7560 = vmatprep.subr.bf16.mxu0 0
    %7561 = vmatpush2.bf16.msra.mxu0 0
    %7562 = vmatprep.subr.bf16.mxu0 0
    %7563 = vmatpush2.bf16.msra.mxu0 0
    %7564 = vmatprep.subr.bf16.mxu0 0
    %7565 = vmatpush2.bf16.msra.mxu0 0
    %7566 = vmatprep.subr.bf16.mxu0 0
    %7567 = vmatpush2.bf16.msra.mxu0 0
    %7568 = vmatprep.subr.bf16.mxu0 0
    %7569 = vmatpush2.bf16.msra.mxu0 0
    %7570 = vmatprep.subr.bf16.mxu0 0
    %7571 = vmatpush2.bf16.msra.mxu0 0
    %7572 = vmatprep.mubr.bf16.mxu0 0
    %7573 = vmatmul.mubr.bf16.gmra.mxu0 %v7535
    %v7574 = vpop.f32.mrf.mxu0
    %v7575 = vadd.f32 0.0, %v7574
    %v7576 = vpop.f32.mrf.mxu0
    %v7577 = vpop.f32.mrf.mxu0
    %v7578 = vadd.f32 0.0, %v7577
    %v7579 = vpop.f32.mrf.mxu0
    %7580 = vmatprep.mubr.bf16.mxu0 0
    %7581 = vmatmul.mubr.bf16.gmra.mxu0 %v7538
    %v7582 = vpop.f32.mrf.mxu0
    %v7583 = vadd.f32 0.0, %v7582
    %v7584 = vpop.f32.mrf.mxu0
    %v7585 = vpop.f32.mrf.mxu0
    %v7586 = vadd.f32 0.0, %v7585
    %v7587 = vpop.f32.mrf.mxu0
    %7588 = vdwg.mxu0
    %v7589 = vpack.c.bf16 %v7578, %v7575
    %v7590 = vpack.c.bf16 %v7586, %v7583
    %s7591 = scalar_lea.vmem %s3, 256
    %v7592 = vld [vmem:[%s7591] sm:$0xf]
    %v7593 = vld [vmem:[%s7591 + $0x4] sm:$0xf]
    %v7594 = vld [vmem:[%s7591 + $0x8] sm:$0xf]
    %v7595 = vld [vmem:[%s7591 + $0xc] sm:$0xf]
    %v7596 = vld [vmem:[%s7591 + $0x10] sm:$0xf]
    %v7597 = vld [vmem:[%s7591 + $0x14] sm:$0xf]
    %v7598 = vld [vmem:[%s7591 + $0x18] sm:$0xf]
    %v7599 = vld [vmem:[%s7591 + $0x1c] sm:$0xf]
    %v7608 = vunpack.c.l.b16 %v7592
    %v7609 = vunpack.c.l.b16 %v7593
    %v7610 = vunpack.c.l.b16 %v7594
    %v7611 = vunpack.c.l.b16 %v7595
    %v7612 = vunpack.c.l.b16 %v7596
    %v7613 = vunpack.c.l.b16 %v7597
    %v7614 = vunpack.c.l.b16 %v7598
    %v7615 = vunpack.c.l.b16 %v7599
    %v7616 = vpack.c.b16 %v7609, %v7608
    %v7617 = vpack.c.b16 %v7611, %v7610
    %v7618 = vpack.c.b16 %v7613, %v7612
    %v7619 = vpack.c.b16 %v7615, %v7614
    %v7625 = vsel %vm6400, %v7589, 0
    %v7628 = vsel %vm6400, %v7590, 0
    %7630 = vmatprep.subr.bf16.mxu0 0
    %7631 = vmatpush1.bf16.msra.mxu0 0
    %7632 = vmatprep.subr.bf16.mxu0 0
    %7633 = vmatpush1.bf16.msra.mxu0 0
    %7634 = vmatprep.subr.bf16.mxu0 0
    %7635 = vmatpush1.bf16.msra.mxu0 0
    %7636 = vmatprep.subr.bf16.mxu0 0
    %7637 = vmatpush1.bf16.msra.mxu0 0
    %7638 = vmatprep.subr.bf16.mxu0 0
    %7639 = vmatpush1.bf16.msra.mxu0 %v7619
    %7640 = vmatprep.subr.bf16.mxu0 0
    %7641 = vmatpush1.bf16.msra.mxu0 %v7618
    %7642 = vmatprep.subr.bf16.mxu0 0
    %7643 = vmatpush1.bf16.msra.mxu0 %v7617
    %7644 = vmatprep.subr.bf16.mxu0 0
    %7645 = vmatpush1.bf16.msra.mxu0 %v7616
    %7646 = vmatprep.subr.bf16.mxu0 0
    %7647 = vmatpush2.bf16.msra.mxu0 0
    %7648 = vmatprep.subr.bf16.mxu0 0
    %7649 = vmatpush2.bf16.msra.mxu0 0
    %7650 = vmatprep.subr.bf16.mxu0 0
    %7651 = vmatpush2.bf16.msra.mxu0 0
    %7652 = vmatprep.subr.bf16.mxu0 0
    %7653 = vmatpush2.bf16.msra.mxu0 0
    %7654 = vmatprep.subr.bf16.mxu0 0
    %7655 = vmatpush2.bf16.msra.mxu0 0
    %7656 = vmatprep.subr.bf16.mxu0 0
    %7657 = vmatpush2.bf16.msra.mxu0 0
    %7658 = vmatprep.subr.bf16.mxu0 0
    %7659 = vmatpush2.bf16.msra.mxu0 0
    %7660 = vmatprep.subr.bf16.mxu0 0
    %7661 = vmatpush2.bf16.msra.mxu0 0
    %7662 = vmatprep.mubr.bf16.mxu0 0
    %7663 = vmatmul.mubr.bf16.gmra.mxu0 %v7625
    %v7664 = vpop.f32.mrf.mxu0
    %v7665 = vadd.f32 0.0, %v7664
    %v7666 = vpop.f32.mrf.mxu0
    %v7667 = vpop.f32.mrf.mxu0
    %v7668 = vadd.f32 0.0, %v7667
    %v7669 = vpop.f32.mrf.mxu0
    %7670 = vmatprep.mubr.bf16.mxu0 0
    %7671 = vmatmul.mubr.bf16.gmra.mxu0 %v7628
    %v7672 = vpop.f32.mrf.mxu0
    %v7673 = vadd.f32 0.0, %v7672
    %v7674 = vpop.f32.mrf.mxu0
    %v7675 = vpop.f32.mrf.mxu0
    %v7676 = vadd.f32 0.0, %v7675
    %v7677 = vpop.f32.mrf.mxu0
    %7678 = vdwg.mxu0
    %v7679 = vadd.f32 %v7515, %v7665
    %v7680 = vadd.f32 %v7516, %v7668
    %v7681 = vadd.f32 %v7517, %v7673
    %v7682 = vadd.f32 %v7518, %v7676
    %v7683 = vld [vmem:[%s8 + $0x2] ss:$0 sm:$0xff]
    %v7684 = vadd.f32 %v7679, %v7683
    %v7685 = vadd.f32 %v7680, %v7683
    %v7686 = vadd.f32 %v7681, %v7683
    %v7687 = vadd.f32 %v7682, %v7683
    %v7688 = vmax.f32 %v7684, 0.0
    %v7689 = vmax.f32 %v7685, 0.0
    %v7690 = vmax.f32 %v7686, 0.0
    %v7691 = vmax.f32 %v7687, 0.0
    %v7692 = vpack.c.bf16 %v7689, %v7688
    %v7693 = vpack.c.bf16 %v7691, %v7690
    %v7694 = vld [vmem:[%s7] sm:$0xf]
    %v7696 = vsel %vm2467, %v7694, 0
    %7698 = vmatprep.subr.bf16.mxu0 0
    %7699 = vmatpush1.bf16.msra.mxu0 0
    %7700 = vmatprep.subr.bf16.mxu0 0
    %7701 = vmatpush1.bf16.msra.mxu0 0
    %7702 = vmatprep.subr.bf16.mxu0 0
    %7703 = vmatpush1.bf16.msra.mxu0 0
    %7704 = vmatprep.subr.bf16.mxu0 0
    %7705 = vmatpush1.bf16.msra.mxu0 0
    %7706 = vmatprep.subr.bf16.mxu0 0
    %7707 = vmatpush1.bf16.msra.mxu0 0
    %7708 = vmatprep.subr.bf16.mxu0 0
    %7709 = vmatpush1.bf16.msra.mxu0 0
    %7710 = vmatprep.subr.bf16.mxu0 0
    %7711 = vmatpush1.bf16.msra.mxu0 %v7693
    %7712 = vmatprep.subr.bf16.mxu0 0
    %7713 = vmatpush1.bf16.msra.mxu0 %v7692
    %7714 = vmatprep.subr.bf16.mxu0 0
    %7715 = vmatpush2.bf16.msra.mxu0 0
    %7716 = vmatprep.subr.bf16.mxu0 0
    %7717 = vmatpush2.bf16.msra.mxu0 0
    %7718 = vmatprep.subr.bf16.mxu0 0
    %7719 = vmatpush2.bf16.msra.mxu0 0
    %7720 = vmatprep.subr.bf16.mxu0 0
    %7721 = vmatpush2.bf16.msra.mxu0 0
    %7722 = vmatprep.subr.bf16.mxu0 0
    %7723 = vmatpush2.bf16.msra.mxu0 0
    %7724 = vmatprep.subr.bf16.mxu0 0
    %7725 = vmatpush2.bf16.msra.mxu0 0
    %7726 = vmatprep.subr.bf16.mxu0 0
    %7727 = vmatpush2.bf16.msra.mxu0 0
    %7728 = vmatprep.subr.bf16.mxu0 0
    %7729 = vmatpush2.bf16.msra.mxu0 0
    %7730 = vmatprep.mubr.bf16.mxu0 0
    %7731 = vmatmul.mubr.bf16.gmra.mxu0 %v7696
    %v7732 = vpop.f32.mrf.mxu0
    %v7733 = vadd.f32 0.0, %v7732
    %v7734 = vpop.f32.mrf.mxu0
    %v7735 = vpop.f32.mrf.mxu0
    %v7736 = vpop.f32.mrf.mxu0
    %7737 = vdwg.mxu0
    %v7738 = vpack.c.bf16 %v7733, %v7733
    %v7739 = vld [vmem:[%s4] sm:$0xff]
    %v7740 = vld [vmem:[%s4 + $0x8] sm:$0xff]
    %v7741 = vld [vmem:[%s4 + $0x10] sm:$0xff]
    %v7742 = vld [vmem:[%s4 + $0x18] sm:$0xff]
    %v7743 = vld [vmem:[%s4 + $0x20] sm:$0xff]
    %v7744 = vld [vmem:[%s4 + $0x28] sm:$0xff]
    %v7745 = vld [vmem:[%s4 + $0x30] sm:$0xff]
    %v7746 = vld [vmem:[%s4 + $0x38] sm:$0xff]
    %v7747 = vld [vmem:[%s4 + $0x40] sm:$0xff]
    %v7748 = vld [vmem:[%s4 + $0x48] sm:$0xff]
    %v7749 = vld [vmem:[%s4 + $0x50] sm:$0xff]
    %v7750 = vld [vmem:[%s4 + $0x58] sm:$0xff]
    %v7751 = vld [vmem:[%s4 + $0x60] sm:$0xff]
    %v7752 = vld [vmem:[%s4 + $0x68] sm:$0xff]
    %v7753 = vld [vmem:[%s4 + $0x70] sm:$0xff]
    %v7754 = vld [vmem:[%s4 + $0x78] sm:$0xff]
    %s7755 = scalar_lea.vmem %s7, 4
    %v7756 = vld [vmem:[%s7755] sm:$0xf]
    %v7758 = vsel %vm2467, %v7756, 0
    %7760 = vmatprep.subr.bf16.mxu0 0
    %7761 = vmatpush1.bf16.msra.mxu0 0
    %7762 = vmatprep.subr.bf16.mxu0 0
    %7763 = vmatpush1.bf16.msra.mxu0 0
    %7764 = vmatprep.subr.bf16.mxu0 0
    %7765 = vmatpush1.bf16.msra.mxu0 0
    %7766 = vmatprep.subr.bf16.mxu0 0
    %7767 = vmatpush1.bf16.msra.mxu0 0
    %7768 = vmatprep.subr.bf16.mxu0 0
    %7769 = vmatpush1.bf16.msra.mxu0 0
    %7770 = vmatprep.subr.bf16.mxu0 0
    %7771 = vmatpush1.bf16.msra.mxu0 0
    %7772 = vmatprep.subr.bf16.mxu0 0
    %7773 = vmatpush1.bf16.msra.mxu0 %v7693
    %7774 = vmatprep.subr.bf16.mxu0 0
    %7775 = vmatpush1.bf16.msra.mxu0 %v7692
    %7776 = vmatprep.subr.bf16.mxu0 0
    %7777 = vmatpush2.bf16.msra.mxu0 0
    %7778 = vmatprep.subr.bf16.mxu0 0
    %7779 = vmatpush2.bf16.msra.mxu0 0
    %7780 = vmatprep.subr.bf16.mxu0 0
    %7781 = vmatpush2.bf16.msra.mxu0 0
    %7782 = vmatprep.subr.bf16.mxu0 0
    %7783 = vmatpush2.bf16.msra.mxu0 0
    %7784 = vmatprep.subr.bf16.mxu0 0
    %7785 = vmatpush2.bf16.msra.mxu0 0
    %7786 = vmatprep.subr.bf16.mxu0 0
    %7787 = vmatpush2.bf16.msra.mxu0 0
    %7788 = vmatprep.subr.bf16.mxu0 0
    %7789 = vmatpush2.bf16.msra.mxu0 0
    %7790 = vmatprep.subr.bf16.mxu0 0
    %7791 = vmatpush2.bf16.msra.mxu0 0
    %7792 = vmatprep.mubr.bf16.mxu0 0
    %7793 = vmatmul.mubr.bf16.gmra.mxu0 %v7758
    %v7794 = vpop.f32.mrf.mxu0
    %v7795 = vadd.f32 0.0, %v7794
    %v7796 = vpop.f32.mrf.mxu0
    %v7797 = vpop.f32.mrf.mxu0
    %v7798 = vpop.f32.mrf.mxu0
    %7799 = vdwg.mxu0
    %v7800 = vpack.c.bf16 %v7795, %v7795
    %s7801 = scalar_lea.vmem %s4, 128
    %v7802 = vld [vmem:[%s7801] sm:$0xff]
    %v7803 = vld [vmem:[%s7801 + $0x8] sm:$0xff]
    %v7804 = vld [vmem:[%s7801 + $0x10] sm:$0xff]
    %v7805 = vld [vmem:[%s7801 + $0x18] sm:$0xff]
    %v7806 = vld [vmem:[%s7801 + $0x20] sm:$0xff]
    %v7807 = vld [vmem:[%s7801 + $0x28] sm:$0xff]
    %v7808 = vld [vmem:[%s7801 + $0x30] sm:$0xff]
    %v7809 = vld [vmem:[%s7801 + $0x38] sm:$0xff]
    %v7810 = vld [vmem:[%s7801 + $0x40] sm:$0xff]
    %v7811 = vld [vmem:[%s7801 + $0x48] sm:$0xff]
    %v7812 = vld [vmem:[%s7801 + $0x50] sm:$0xff]
    %v7813 = vld [vmem:[%s7801 + $0x58] sm:$0xff]
    %v7814 = vld [vmem:[%s7801 + $0x60] sm:$0xff]
    %v7815 = vld [vmem:[%s7801 + $0x68] sm:$0xff]
    %v7816 = vld [vmem:[%s7801 + $0x70] sm:$0xff]
    %v7817 = vld [vmem:[%s7801 + $0x78] sm:$0xff]
    %v7834 = vunpack.c.l.b16 %v7802
    %v7835 = vunpack.c.h.b16 %v7802
    %v7836 = vunpack.c.l.b16 %v7803
    %v7837 = vunpack.c.h.b16 %v7803
    %v7838 = vunpack.c.l.b16 %v7804
    %v7839 = vunpack.c.h.b16 %v7804
    %v7840 = vunpack.c.l.b16 %v7805
    %v7841 = vunpack.c.h.b16 %v7805
    %v7842 = vunpack.c.l.b16 %v7806
    %v7843 = vunpack.c.h.b16 %v7806
    %v7844 = vunpack.c.l.b16 %v7807
    %v7845 = vunpack.c.h.b16 %v7807
    %v7846 = vunpack.c.l.b16 %v7808
    %v7847 = vunpack.c.h.b16 %v7808
    %v7848 = vunpack.c.l.b16 %v7809
    %v7849 = vunpack.c.h.b16 %v7809
    %v7850 = vunpack.c.l.b16 %v7810
    %v7851 = vunpack.c.h.b16 %v7810
    %v7852 = vunpack.c.l.b16 %v7811
    %v7853 = vunpack.c.h.b16 %v7811
    %v7854 = vunpack.c.l.b16 %v7812
    %v7855 = vunpack.c.h.b16 %v7812
    %v7856 = vunpack.c.l.b16 %v7813
    %v7857 = vunpack.c.h.b16 %v7813
    %v7858 = vunpack.c.l.b16 %v7814
    %v7859 = vunpack.c.h.b16 %v7814
    %v7860 = vunpack.c.l.b16 %v7815
    %v7861 = vunpack.c.h.b16 %v7815
    %v7862 = vunpack.c.l.b16 %v7816
    %v7863 = vunpack.c.h.b16 %v7816
    %v7864 = vunpack.c.l.b16 %v7817
    %v7865 = vunpack.c.h.b16 %v7817
    %v7866 = vpack.c.b16 %v7836, %v7834
    %v7867 = vpack.c.b16 %v7837, %v7835
    %v7868 = vpack.c.b16 %v7840, %v7838
    %v7869 = vpack.c.b16 %v7841, %v7839
    %v7870 = vpack.c.b16 %v7844, %v7842
    %v7871 = vpack.c.b16 %v7845, %v7843
    %v7872 = vpack.c.b16 %v7848, %v7846
    %v7873 = vpack.c.b16 %v7849, %v7847
    %v7874 = vpack.c.b16 %v7852, %v7850
    %v7875 = vpack.c.b16 %v7853, %v7851
    %v7876 = vpack.c.b16 %v7856, %v7854
    %v7877 = vpack.c.b16 %v7857, %v7855
    %v7878 = vpack.c.b16 %v7860, %v7858
    %v7879 = vpack.c.b16 %v7861, %v7859
    %v7880 = vpack.c.b16 %v7864, %v7862
    %v7881 = vpack.c.b16 %v7865, %v7863
    %7898 = vmatprep.subr.bf16.mxu0 %v7881
    %7899 = vmatpush1.bf16.msra.mxu0 %v7880
    %7900 = vmatprep.subr.bf16.mxu0 %v7879
    %7901 = vmatpush1.bf16.msra.mxu0 %v7878
    %7902 = vmatprep.subr.bf16.mxu0 %v7877
    %7903 = vmatpush1.bf16.msra.mxu0 %v7876
    %7904 = vmatprep.subr.bf16.mxu0 %v7875
    %7905 = vmatpush1.bf16.msra.mxu0 %v7874
    %7906 = vmatprep.subr.bf16.mxu0 %v7873
    %7907 = vmatpush1.bf16.msra.mxu0 %v7872
    %7908 = vmatprep.subr.bf16.mxu0 %v7871
    %7909 = vmatpush1.bf16.msra.mxu0 %v7870
    %7910 = vmatprep.subr.bf16.mxu0 %v7869
    %7911 = vmatpush1.bf16.msra.mxu0 %v7868
    %7912 = vmatprep.subr.bf16.mxu0 %v7867
    %7913 = vmatpush1.bf16.msra.mxu0 %v7866
    %7914 = vmatprep.subr.bf16.mxu0 0
    %7915 = vmatpush2.bf16.msra.mxu0 0
    %7916 = vmatprep.subr.bf16.mxu0 0
    %7917 = vmatpush2.bf16.msra.mxu0 0
    %7918 = vmatprep.subr.bf16.mxu0 0
    %7919 = vmatpush2.bf16.msra.mxu0 0
    %7920 = vmatprep.subr.bf16.mxu0 0
    %7921 = vmatpush2.bf16.msra.mxu0 0
    %7922 = vmatprep.subr.bf16.mxu0 0
    %7923 = vmatpush2.bf16.msra.mxu0 0
    %7924 = vmatprep.subr.bf16.mxu0 0
    %7925 = vmatpush2.bf16.msra.mxu0 0
    %7926 = vmatprep.subr.bf16.mxu0 0
    %7927 = vmatpush2.bf16.msra.mxu0 0
    %7928 = vmatprep.subr.bf16.mxu0 0
    %7929 = vmatpush2.bf16.msra.mxu0 0
    %7930 = vmatprep.mubr.bf16.mxu0 0
    %7931 = vmatmul.mubr.bf16.gmra.mxu0 %v7800
    %v7932 = vpop.f32.mrf.mxu0
    %v7933 = vadd.f32 0.0, %v7932
    %v7934 = vpop.f32.mrf.mxu0
    %v7935 = vadd.f32 0.0, %v7934
    %v7936 = vpop.f32.mrf.mxu0
    %v7937 = vpop.f32.mrf.mxu0
    %7938 = vdwg.mxu0
    %v7955 = vunpack.c.l.b16 %v7739
    %v7956 = vunpack.c.h.b16 %v7739
    %v7957 = vunpack.c.l.b16 %v7740
    %v7958 = vunpack.c.h.b16 %v7740
    %v7959 = vunpack.c.l.b16 %v7741
    %v7960 = vunpack.c.h.b16 %v7741
    %v7961 = vunpack.c.l.b16 %v7742
    %v7962 = vunpack.c.h.b16 %v7742
    %v7963 = vunpack.c.l.b16 %v7743
    %v7964 = vunpack.c.h.b16 %v7743
    %v7965 = vunpack.c.l.b16 %v7744
    %v7966 = vunpack.c.h.b16 %v7744
    %v7967 = vunpack.c.l.b16 %v7745
    %v7968 = vunpack.c.h.b16 %v7745
    %v7969 = vunpack.c.l.b16 %v7746
    %v7970 = vunpack.c.h.b16 %v7746
    %v7971 = vunpack.c.l.b16 %v7747
    %v7972 = vunpack.c.h.b16 %v7747
    %v7973 = vunpack.c.l.b16 %v7748
    %v7974 = vunpack.c.h.b16 %v7748
    %v7975 = vunpack.c.l.b16 %v7749
    %v7976 = vunpack.c.h.b16 %v7749
    %v7977 = vunpack.c.l.b16 %v7750
    %v7978 = vunpack.c.h.b16 %v7750
    %v7979 = vunpack.c.l.b16 %v7751
    %v7980 = vunpack.c.h.b16 %v7751
    %v7981 = vunpack.c.l.b16 %v7752
    %v7982 = vunpack.c.h.b16 %v7752
    %v7983 = vunpack.c.l.b16 %v7753
    %v7984 = vunpack.c.h.b16 %v7753
    %v7985 = vunpack.c.l.b16 %v7754
    %v7986 = vunpack.c.h.b16 %v7754
    %v7987 = vpack.c.b16 %v7957, %v7955
    %v7988 = vpack.c.b16 %v7958, %v7956
    %v7989 = vpack.c.b16 %v7961, %v7959
    %v7990 = vpack.c.b16 %v7962, %v7960
    %v7991 = vpack.c.b16 %v7965, %v7963
    %v7992 = vpack.c.b16 %v7966, %v7964
    %v7993 = vpack.c.b16 %v7969, %v7967
    %v7994 = vpack.c.b16 %v7970, %v7968
    %v7995 = vpack.c.b16 %v7973, %v7971
    %v7996 = vpack.c.b16 %v7974, %v7972
    %v7997 = vpack.c.b16 %v7977, %v7975
    %v7998 = vpack.c.b16 %v7978, %v7976
    %v7999 = vpack.c.b16 %v7981, %v7979
    %v8000 = vpack.c.b16 %v7982, %v7980
    %v8001 = vpack.c.b16 %v7985, %v7983
    %v8002 = vpack.c.b16 %v7986, %v7984
    %8019 = vmatprep.subr.bf16.mxu0 %v8002
    %8020 = vmatpush1.bf16.msra.mxu0 %v8001
    %8021 = vmatprep.subr.bf16.mxu0 %v8000
    %8022 = vmatpush1.bf16.msra.mxu0 %v7999
    %8023 = vmatprep.subr.bf16.mxu0 %v7998
    %8024 = vmatpush1.bf16.msra.mxu0 %v7997
    %8025 = vmatprep.subr.bf16.mxu0 %v7996
    %8026 = vmatpush1.bf16.msra.mxu0 %v7995
    %8027 = vmatprep.subr.bf16.mxu0 %v7994
    %8028 = vmatpush1.bf16.msra.mxu0 %v7993
    %8029 = vmatprep.subr.bf16.mxu0 %v7992
    %8030 = vmatpush1.bf16.msra.mxu0 %v7991
    %8031 = vmatprep.subr.bf16.mxu0 %v7990
    %8032 = vmatpush1.bf16.msra.mxu0 %v7989
    %8033 = vmatprep.subr.bf16.mxu0 %v7988
    %8034 = vmatpush1.bf16.msra.mxu0 %v7987
    %8035 = vmatprep.subr.bf16.mxu0 0
    %8036 = vmatpush2.bf16.msra.mxu0 0
    %8037 = vmatprep.subr.bf16.mxu0 0
    %8038 = vmatpush2.bf16.msra.mxu0 0
    %8039 = vmatprep.subr.bf16.mxu0 0
    %8040 = vmatpush2.bf16.msra.mxu0 0
    %8041 = vmatprep.subr.bf16.mxu0 0
    %8042 = vmatpush2.bf16.msra.mxu0 0
    %8043 = vmatprep.subr.bf16.mxu0 0
    %8044 = vmatpush2.bf16.msra.mxu0 0
    %8045 = vmatprep.subr.bf16.mxu0 0
    %8046 = vmatpush2.bf16.msra.mxu0 0
    %8047 = vmatprep.subr.bf16.mxu0 0
    %8048 = vmatpush2.bf16.msra.mxu0 0
    %8049 = vmatprep.subr.bf16.mxu0 0
    %8050 = vmatpush2.bf16.msra.mxu0 0
    %8051 = vmatprep.mubr.bf16.mxu0 0
    %8052 = vmatmul.mubr.bf16.gmra.mxu0 %v7738
    %v8053 = vpop.f32.mrf.mxu0
    %v8054 = vadd.f32 %v7933, %v8053
    %v8055 = vpop.f32.mrf.mxu0
    %v8056 = vadd.f32 %v7935, %v8055
    %v8057 = vpop.f32.mrf.mxu0
    %v8058 = vpop.f32.mrf.mxu0
    %8059 = vdwg.mxu0
    %s8060 = scalar_lea.vmem %s7, 8
    %v8061 = vld [vmem:[%s8060] sm:$0xf]
    %v8063 = vsel %vm2467, %v8061, 0
    %8065 = vmatprep.subr.bf16.mxu0 0
    %8066 = vmatpush1.bf16.msra.mxu0 0
    %8067 = vmatprep.subr.bf16.mxu0 0
    %8068 = vmatpush1.bf16.msra.mxu0 0
    %8069 = vmatprep.subr.bf16.mxu0 0
    %8070 = vmatpush1.bf16.msra.mxu0 0
    %8071 = vmatprep.subr.bf16.mxu0 0
    %8072 = vmatpush1.bf16.msra.mxu0 0
    %8073 = vmatprep.subr.bf16.mxu0 0
    %8074 = vmatpush1.bf16.msra.mxu0 0
    %8075 = vmatprep.subr.bf16.mxu0 0
    %8076 = vmatpush1.bf16.msra.mxu0 0
    %8077 = vmatprep.subr.bf16.mxu0 0
    %8078 = vmatpush1.bf16.msra.mxu0 %v7693
    %8079 = vmatprep.subr.bf16.mxu0 0
    %8080 = vmatpush1.bf16.msra.mxu0 %v7692
    %8081 = vmatprep.subr.bf16.mxu0 0
    %8082 = vmatpush2.bf16.msra.mxu0 0
    %8083 = vmatprep.subr.bf16.mxu0 0
    %8084 = vmatpush2.bf16.msra.mxu0 0
    %8085 = vmatprep.subr.bf16.mxu0 0
    %8086 = vmatpush2.bf16.msra.mxu0 0
    %8087 = vmatprep.subr.bf16.mxu0 0
    %8088 = vmatpush2.bf16.msra.mxu0 0
    %8089 = vmatprep.subr.bf16.mxu0 0
    %8090 = vmatpush2.bf16.msra.mxu0 0
    %8091 = vmatprep.subr.bf16.mxu0 0
    %8092 = vmatpush2.bf16.msra.mxu0 0
    %8093 = vmatprep.subr.bf16.mxu0 0
    %8094 = vmatpush2.bf16.msra.mxu0 0
    %8095 = vmatprep.subr.bf16.mxu0 0
    %8096 = vmatpush2.bf16.msra.mxu0 0
    %8097 = vmatprep.mubr.bf16.mxu0 0
    %8098 = vmatmul.mubr.bf16.gmra.mxu0 %v8063
    %v8099 = vpop.f32.mrf.mxu0
    %v8100 = vadd.f32 0.0, %v8099
    %v8101 = vpop.f32.mrf.mxu0
    %v8102 = vpop.f32.mrf.mxu0
    %v8103 = vpop.f32.mrf.mxu0
    %8104 = vdwg.mxu0
    %v8105 = vpack.c.bf16 %v8100, %v8100
    %s8106 = scalar_lea.vmem %s4, 256
    %v8107 = vld [vmem:[%s8106] sm:$0xff]
    %v8108 = vld [vmem:[%s8106 + $0x8] sm:$0xff]
    %v8109 = vld [vmem:[%s8106 + $0x10] sm:$0xff]
    %v8110 = vld [vmem:[%s8106 + $0x18] sm:$0xff]
    %v8111 = vld [vmem:[%s8106 + $0x20] sm:$0xff]
    %v8112 = vld [vmem:[%s8106 + $0x28] sm:$0xff]
    %v8113 = vld [vmem:[%s8106 + $0x30] sm:$0xff]
    %v8114 = vld [vmem:[%s8106 + $0x38] sm:$0xff]
    %v8115 = vld [vmem:[%s8106 + $0x40] sm:$0xff]
    %v8116 = vld [vmem:[%s8106 + $0x48] sm:$0xff]
    %v8117 = vld [vmem:[%s8106 + $0x50] sm:$0xff]
    %v8118 = vld [vmem:[%s8106 + $0x58] sm:$0xff]
    %v8119 = vld [vmem:[%s8106 + $0x60] sm:$0xff]
    %v8120 = vld [vmem:[%s8106 + $0x68] sm:$0xff]
    %v8121 = vld [vmem:[%s8106 + $0x70] sm:$0xff]
    %v8122 = vld [vmem:[%s8106 + $0x78] sm:$0xff]
    %v8139 = vunpack.c.l.b16 %v8107
    %v8140 = vunpack.c.h.b16 %v8107
    %v8141 = vunpack.c.l.b16 %v8108
    %v8142 = vunpack.c.h.b16 %v8108
    %v8143 = vunpack.c.l.b16 %v8109
    %v8144 = vunpack.c.h.b16 %v8109
    %v8145 = vunpack.c.l.b16 %v8110
    %v8146 = vunpack.c.h.b16 %v8110
    %v8147 = vunpack.c.l.b16 %v8111
    %v8148 = vunpack.c.h.b16 %v8111
    %v8149 = vunpack.c.l.b16 %v8112
    %v8150 = vunpack.c.h.b16 %v8112
    %v8151 = vunpack.c.l.b16 %v8113
    %v8152 = vunpack.c.h.b16 %v8113
    %v8153 = vunpack.c.l.b16 %v8114
    %v8154 = vunpack.c.h.b16 %v8114
    %v8155 = vunpack.c.l.b16 %v8115
    %v8156 = vunpack.c.h.b16 %v8115
    %v8157 = vunpack.c.l.b16 %v8116
    %v8158 = vunpack.c.h.b16 %v8116
    %v8159 = vunpack.c.l.b16 %v8117
    %v8160 = vunpack.c.h.b16 %v8117
    %v8161 = vunpack.c.l.b16 %v8118
    %v8162 = vunpack.c.h.b16 %v8118
    %v8163 = vunpack.c.l.b16 %v8119
    %v8164 = vunpack.c.h.b16 %v8119
    %v8165 = vunpack.c.l.b16 %v8120
    %v8166 = vunpack.c.h.b16 %v8120
    %v8167 = vunpack.c.l.b16 %v8121
    %v8168 = vunpack.c.h.b16 %v8121
    %v8169 = vunpack.c.l.b16 %v8122
    %v8170 = vunpack.c.h.b16 %v8122
    %v8171 = vpack.c.b16 %v8141, %v8139
    %v8172 = vpack.c.b16 %v8142, %v8140
    %v8173 = vpack.c.b16 %v8145, %v8143
    %v8174 = vpack.c.b16 %v8146, %v8144
    %v8175 = vpack.c.b16 %v8149, %v8147
    %v8176 = vpack.c.b16 %v8150, %v8148
    %v8177 = vpack.c.b16 %v8153, %v8151
    %v8178 = vpack.c.b16 %v8154, %v8152
    %v8179 = vpack.c.b16 %v8157, %v8155
    %v8180 = vpack.c.b16 %v8158, %v8156
    %v8181 = vpack.c.b16 %v8161, %v8159
    %v8182 = vpack.c.b16 %v8162, %v8160
    %v8183 = vpack.c.b16 %v8165, %v8163
    %v8184 = vpack.c.b16 %v8166, %v8164
    %v8185 = vpack.c.b16 %v8169, %v8167
    %v8186 = vpack.c.b16 %v8170, %v8168
    %8203 = vmatprep.subr.bf16.mxu0 %v8186
    %8204 = vmatpush1.bf16.msra.mxu0 %v8185
    %8205 = vmatprep.subr.bf16.mxu0 %v8184
    %8206 = vmatpush1.bf16.msra.mxu0 %v8183
    %8207 = vmatprep.subr.bf16.mxu0 %v8182
    %8208 = vmatpush1.bf16.msra.mxu0 %v8181
    %8209 = vmatprep.subr.bf16.mxu0 %v8180
    %8210 = vmatpush1.bf16.msra.mxu0 %v8179
    %8211 = vmatprep.subr.bf16.mxu0 %v8178
    %8212 = vmatpush1.bf16.msra.mxu0 %v8177
    %8213 = vmatprep.subr.bf16.mxu0 %v8176
    %8214 = vmatpush1.bf16.msra.mxu0 %v8175
    %8215 = vmatprep.subr.bf16.mxu0 %v8174
    %8216 = vmatpush1.bf16.msra.mxu0 %v8173
    %8217 = vmatprep.subr.bf16.mxu0 %v8172
    %8218 = vmatpush1.bf16.msra.mxu0 %v8171
    %8219 = vmatprep.subr.bf16.mxu0 0
    %8220 = vmatpush2.bf16.msra.mxu0 0
    %8221 = vmatprep.subr.bf16.mxu0 0
    %8222 = vmatpush2.bf16.msra.mxu0 0
    %8223 = vmatprep.subr.bf16.mxu0 0
    %8224 = vmatpush2.bf16.msra.mxu0 0
    %8225 = vmatprep.subr.bf16.mxu0 0
    %8226 = vmatpush2.bf16.msra.mxu0 0
    %8227 = vmatprep.subr.bf16.mxu0 0
    %8228 = vmatpush2.bf16.msra.mxu0 0
    %8229 = vmatprep.subr.bf16.mxu0 0
    %8230 = vmatpush2.bf16.msra.mxu0 0
    %8231 = vmatprep.subr.bf16.mxu0 0
    %8232 = vmatpush2.bf16.msra.mxu0 0
    %8233 = vmatprep.subr.bf16.mxu0 0
    %8234 = vmatpush2.bf16.msra.mxu0 0
    %8235 = vmatprep.mubr.bf16.mxu0 0
    %8236 = vmatmul.mubr.bf16.gmra.mxu0 %v8105
    %v8237 = vpop.f32.mrf.mxu0
    %v8238 = vadd.f32 0.0, %v8237
    %v8239 = vpop.f32.mrf.mxu0
    %v8240 = vadd.f32 0.0, %v8239
    %v8241 = vpop.f32.mrf.mxu0
    %v8242 = vpop.f32.mrf.mxu0
    %8243 = vdwg.mxu0
    %v8244 = vadd.f32 %v8054, %v8238
    %v8245 = vadd.f32 %v8056, %v8240
    %s8246 = scalar_lea.vmem %s7, 12
    %v8247 = vld [vmem:[%s8246] sm:$0xf]
    %v8249 = vsel %vm2467, %v8247, 0
    %8251 = vmatprep.subr.bf16.mxu0 0
    %8252 = vmatpush1.bf16.msra.mxu0 0
    %8253 = vmatprep.subr.bf16.mxu0 0
    %8254 = vmatpush1.bf16.msra.mxu0 0
    %8255 = vmatprep.subr.bf16.mxu0 0
    %8256 = vmatpush1.bf16.msra.mxu0 0
    %8257 = vmatprep.subr.bf16.mxu0 0
    %8258 = vmatpush1.bf16.msra.mxu0 0
    %8259 = vmatprep.subr.bf16.mxu0 0
    %8260 = vmatpush1.bf16.msra.mxu0 0
    %8261 = vmatprep.subr.bf16.mxu0 0
    %8262 = vmatpush1.bf16.msra.mxu0 0
    %8263 = vmatprep.subr.bf16.mxu0 0
    %8264 = vmatpush1.bf16.msra.mxu0 %v7693
    %8265 = vmatprep.subr.bf16.mxu0 0
    %8266 = vmatpush1.bf16.msra.mxu0 %v7692
    %8267 = vmatprep.subr.bf16.mxu0 0
    %8268 = vmatpush2.bf16.msra.mxu0 0
    %8269 = vmatprep.subr.bf16.mxu0 0
    %8270 = vmatpush2.bf16.msra.mxu0 0
    %8271 = vmatprep.subr.bf16.mxu0 0
    %8272 = vmatpush2.bf16.msra.mxu0 0
    %8273 = vmatprep.subr.bf16.mxu0 0
    %8274 = vmatpush2.bf16.msra.mxu0 0
    %8275 = vmatprep.subr.bf16.mxu0 0
    %8276 = vmatpush2.bf16.msra.mxu0 0
    %8277 = vmatprep.subr.bf16.mxu0 0
    %8278 = vmatpush2.bf16.msra.mxu0 0
    %8279 = vmatprep.subr.bf16.mxu0 0
    %8280 = vmatpush2.bf16.msra.mxu0 0
    %8281 = vmatprep.subr.bf16.mxu0 0
    %8282 = vmatpush2.bf16.msra.mxu0 0
    %8283 = vmatprep.mubr.bf16.mxu0 0
    %8284 = vmatmul.mubr.bf16.gmra.mxu0 %v8249
    %v8285 = vpop.f32.mrf.mxu0
    %v8286 = vadd.f32 0.0, %v8285
    %v8287 = vpop.f32.mrf.mxu0
    %v8288 = vpop.f32.mrf.mxu0
    %v8289 = vpop.f32.mrf.mxu0
    %8290 = vdwg.mxu0
    %v8291 = vpack.c.bf16 %v8286, %v8286
    %s8292 = scalar_lea.vmem %s4, 384
    %v8293 = vld [vmem:[%s8292] sm:$0xff]
    %v8294 = vld [vmem:[%s8292 + $0x8] sm:$0xff]
    %v8295 = vld [vmem:[%s8292 + $0x10] sm:$0xff]
    %v8296 = vld [vmem:[%s8292 + $0x18] sm:$0xff]
    %v8297 = vld [vmem:[%s8292 + $0x20] sm:$0xff]
    %v8298 = vld [vmem:[%s8292 + $0x28] sm:$0xff]
    %v8299 = vld [vmem:[%s8292 + $0x30] sm:$0xff]
    %v8300 = vld [vmem:[%s8292 + $0x38] sm:$0xff]
    %v8301 = vld [vmem:[%s8292 + $0x40] sm:$0xff]
    %v8302 = vld [vmem:[%s8292 + $0x48] sm:$0xff]
    %v8303 = vld [vmem:[%s8292 + $0x50] sm:$0xff]
    %v8304 = vld [vmem:[%s8292 + $0x58] sm:$0xff]
    %v8305 = vld [vmem:[%s8292 + $0x60] sm:$0xff]
    %v8306 = vld [vmem:[%s8292 + $0x68] sm:$0xff]
    %v8307 = vld [vmem:[%s8292 + $0x70] sm:$0xff]
    %v8308 = vld [vmem:[%s8292 + $0x78] sm:$0xff]
    %v8325 = vunpack.c.l.b16 %v8293
    %v8326 = vunpack.c.h.b16 %v8293
    %v8327 = vunpack.c.l.b16 %v8294
    %v8328 = vunpack.c.h.b16 %v8294
    %v8329 = vunpack.c.l.b16 %v8295
    %v8330 = vunpack.c.h.b16 %v8295
    %v8331 = vunpack.c.l.b16 %v8296
    %v8332 = vunpack.c.h.b16 %v8296
    %v8333 = vunpack.c.l.b16 %v8297
    %v8334 = vunpack.c.h.b16 %v8297
    %v8335 = vunpack.c.l.b16 %v8298
    %v8336 = vunpack.c.h.b16 %v8298
    %v8337 = vunpack.c.l.b16 %v8299
    %v8338 = vunpack.c.h.b16 %v8299
    %v8339 = vunpack.c.l.b16 %v8300
    %v8340 = vunpack.c.h.b16 %v8300
    %v8341 = vunpack.c.l.b16 %v8301
    %v8342 = vunpack.c.h.b16 %v8301
    %v8343 = vunpack.c.l.b16 %v8302
    %v8344 = vunpack.c.h.b16 %v8302
    %v8345 = vunpack.c.l.b16 %v8303
    %v8346 = vunpack.c.h.b16 %v8303
    %v8347 = vunpack.c.l.b16 %v8304
    %v8348 = vunpack.c.h.b16 %v8304
    %v8349 = vunpack.c.l.b16 %v8305
    %v8350 = vunpack.c.h.b16 %v8305
    %v8351 = vunpack.c.l.b16 %v8306
    %v8352 = vunpack.c.h.b16 %v8306
    %v8353 = vunpack.c.l.b16 %v8307
    %v8354 = vunpack.c.h.b16 %v8307
    %v8355 = vunpack.c.l.b16 %v8308
    %v8356 = vunpack.c.h.b16 %v8308
    %v8357 = vpack.c.b16 %v8327, %v8325
    %v8358 = vpack.c.b16 %v8328, %v8326
    %v8359 = vpack.c.b16 %v8331, %v8329
    %v8360 = vpack.c.b16 %v8332, %v8330
    %v8361 = vpack.c.b16 %v8335, %v8333
    %v8362 = vpack.c.b16 %v8336, %v8334
    %v8363 = vpack.c.b16 %v8339, %v8337
    %v8364 = vpack.c.b16 %v8340, %v8338
    %v8365 = vpack.c.b16 %v8343, %v8341
    %v8366 = vpack.c.b16 %v8344, %v8342
    %v8367 = vpack.c.b16 %v8347, %v8345
    %v8368 = vpack.c.b16 %v8348, %v8346
    %v8369 = vpack.c.b16 %v8351, %v8349
    %v8370 = vpack.c.b16 %v8352, %v8350
    %v8371 = vpack.c.b16 %v8355, %v8353
    %v8372 = vpack.c.b16 %v8356, %v8354
    %8389 = vmatprep.subr.bf16.mxu0 %v8372
    %8390 = vmatpush1.bf16.msra.mxu0 %v8371
    %8391 = vmatprep.subr.bf16.mxu0 %v8370
    %8392 = vmatpush1.bf16.msra.mxu0 %v8369
    %8393 = vmatprep.subr.bf16.mxu0 %v8368
    %8394 = vmatpush1.bf16.msra.mxu0 %v8367
    %8395 = vmatprep.subr.bf16.mxu0 %v8366
    %8396 = vmatpush1.bf16.msra.mxu0 %v8365
    %8397 = vmatprep.subr.bf16.mxu0 %v8364
    %8398 = vmatpush1.bf16.msra.mxu0 %v8363
    %8399 = vmatprep.subr.bf16.mxu0 %v8362
    %8400 = vmatpush1.bf16.msra.mxu0 %v8361
    %8401 = vmatprep.subr.bf16.mxu0 %v8360
    %8402 = vmatpush1.bf16.msra.mxu0 %v8359
    %8403 = vmatprep.subr.bf16.mxu0 %v8358
    %8404 = vmatpush1.bf16.msra.mxu0 %v8357
    %8405 = vmatprep.subr.bf16.mxu0 0
    %8406 = vmatpush2.bf16.msra.mxu0 0
    %8407 = vmatprep.subr.bf16.mxu0 0
    %8408 = vmatpush2.bf16.msra.mxu0 0
    %8409 = vmatprep.subr.bf16.mxu0 0
    %8410 = vmatpush2.bf16.msra.mxu0 0
    %8411 = vmatprep.subr.bf16.mxu0 0
    %8412 = vmatpush2.bf16.msra.mxu0 0
    %8413 = vmatprep.subr.bf16.mxu0 0
    %8414 = vmatpush2.bf16.msra.mxu0 0
    %8415 = vmatprep.subr.bf16.mxu0 0
    %8416 = vmatpush2.bf16.msra.mxu0 0
    %8417 = vmatprep.subr.bf16.mxu0 0
    %8418 = vmatpush2.bf16.msra.mxu0 0
    %8419 = vmatprep.subr.bf16.mxu0 0
    %8420 = vmatpush2.bf16.msra.mxu0 0
    %8421 = vmatprep.mubr.bf16.mxu0 0
    %8422 = vmatmul.mubr.bf16.gmra.mxu0 %v8291
    %v8423 = vpop.f32.mrf.mxu0
    %v8424 = vadd.f32 0.0, %v8423
    %v8425 = vpop.f32.mrf.mxu0
    %v8426 = vadd.f32 0.0, %v8425
    %v8427 = vpop.f32.mrf.mxu0
    %v8428 = vpop.f32.mrf.mxu0
    %8429 = vdwg.mxu0
    %v8430 = vadd.f32 %v8244, %v8424
    %v8431 = vadd.f32 %v8245, %v8426
    %s8432 = scalar_lea.vmem %s8, 3
    %v8433 = vld [vmem:[%s8432] ss:$8 sm:$0x3]
    %v8435 = vlaneseq
    %v8436 = vshrl.u32 %v8435, 7
    %v8437 = vsub.s32 0, %v8436
    %v8438 = vrot.slane %v8433, %v8437
    %v8439 = vlaneseq
    %v8440 = vshrl.u32 %v8439, 7
    %v8441 = vsub.s32 1, %v8440
    %v8442 = vrot.slane %v8433, %v8441
    %v8445 = vadd.f32 %v8430, %v8438
    %v8446 = vadd.f32 %v8431, %v8442
    %v8447 = vmax.f32 %v8445, 0.0
    %v8448 = vmax.f32 %v8446, 0.0
    %v8449 = vpack.c.bf16 %v8447, %v8447
    %v8450 = vpack.c.bf16 %v8448, %v8448
    %v8453 = vcombine.low %v8449, %v8450
    %v8455 = vunpack.c.l.s4 1966171168
    %v8456 = vunpack.c.0.s8 %v8455
    %v8457 = vlaneseq
    %v8458 = vshrl.u32 %v8457, 7
    %v8459 = vsub.s32 %v8456, %v8458
    %v8460 = vrot.slane %v8453, %v8459
    %v8462 = vunpack.c.l.s4 1966171168
    %v8463 = vunpack.c.0.s8 %v8462
    %v8464 = vlaneseq
    %v8465 = vshrl.u32 %v8464, 7
    %v8466 = vsub.s32 %v8463, %v8465
    %v8467 = vrot.slane %v8460, %v8466
    %8469 = vst [vmem:[#allocation2] sm:$0x3] %v8467
    %v8470 = vcombine.high %v8460, %v8460
    %v8472 = vunpack.c.l.s4 1966171168
    %v8473 = vunpack.c.0.s8 %v8472
    %v8474 = vlaneseq
    %v8475 = vshrl.u32 %v8474, 7
    %v8476 = vsub.s32 %v8473, %v8475
    %v8477 = vrot.slane %v8470, %v8476
    %8479 = vst [vmem:[#allocation2 + $0x2] sm:$0x3] %v8477
    %v8480 = vcombine.high %v8467, %v8467
    %8482 = vst [vmem:[#allocation2 + $0x4] sm:$0x3] %v8480
    %v8483 = vcombine.high %v8477, %v8477
    %8485 = vst [vmem:[#allocation2 + $0x6] sm:$0x3] %v8483
    %v8486 = vld [vmem:[#allocation2] sm:$0xff]
    %s8487 = smul.u32 4, 128
    %s8488 = smul.u32 %s8487, 4
    %s8489 = sshll.u32 %s8488, 4
    %8490 = dma.done [#allocation4], %s8489
    %v8491 = vld [vmem:[#allocation3] sm:$0xff]
    %v8492 = vld [vmem:[#allocation3 + $0x8] sm:$0xff]
    %v8493 = vld [vmem:[#allocation3 + $0x10] sm:$0xff]
    %v8494 = vld [vmem:[#allocation3 + $0x18] sm:$0xff]
    %v8495 = vld [vmem:[#allocation3 + $0x20] sm:$0xff]
    %v8496 = vld [vmem:[#allocation3 + $0x28] sm:$0xff]
    %v8497 = vld [vmem:[#allocation3 + $0x30] sm:$0xff]
    %v8498 = vld [vmem:[#allocation3 + $0x38] sm:$0xff]
    %v8499 = vld [vmem:[#allocation3 + $0x40] sm:$0xff]
    %v8500 = vld [vmem:[#allocation3 + $0x48] sm:$0xff]
    %v8501 = vld [vmem:[#allocation3 + $0x50] sm:$0xff]
    %v8502 = vld [vmem:[#allocation3 + $0x58] sm:$0xff]
    %v8503 = vld [vmem:[#allocation3 + $0x60] sm:$0xff]
    %v8504 = vld [vmem:[#allocation3 + $0x68] sm:$0xff]
    %v8505 = vld [vmem:[#allocation3 + $0x70] sm:$0xff]
    %v8506 = vld [vmem:[#allocation3 + $0x78] sm:$0xff]
    %v8507 = vld [vmem:[#allocation3 + $0x80] sm:$0xff]
    %v8508 = vld [vmem:[#allocation3 + $0x88] sm:$0xff]
    %v8509 = vld [vmem:[#allocation3 + $0x90] sm:$0xff]
    %v8510 = vld [vmem:[#allocation3 + $0x98] sm:$0xff]
    %v8511 = vld [vmem:[#allocation3 + $0xa0] sm:$0xff]
    %v8512 = vld [vmem:[#allocation3 + $0xa8] sm:$0xff]
    %v8513 = vld [vmem:[#allocation3 + $0xb0] sm:$0xff]
    %v8514 = vld [vmem:[#allocation3 + $0xb8] sm:$0xff]
    %v8515 = vld [vmem:[#allocation3 + $0xc0] sm:$0xff]
    %v8516 = vld [vmem:[#allocation3 + $0xc8] sm:$0xff]
    %v8517 = vld [vmem:[#allocation3 + $0xd0] sm:$0xff]
    %v8518 = vld [vmem:[#allocation3 + $0xd8] sm:$0xff]
    %v8519 = vld [vmem:[#allocation3 + $0xe0] sm:$0xff]
    %v8520 = vld [vmem:[#allocation3 + $0xe8] sm:$0xff]
    %v8521 = vld [vmem:[#allocation3 + $0xf0] sm:$0xff]
    %v8522 = vld [vmem:[#allocation3 + $0xf8] sm:$0xff]
    %v8523 = vld [vmem:[#allocation3 + $0x100] sm:$0xff]
    %v8524 = vld [vmem:[#allocation3 + $0x108] sm:$0xff]
    %v8525 = vld [vmem:[#allocation3 + $0x110] sm:$0xff]
    %v8526 = vld [vmem:[#allocation3 + $0x118] sm:$0xff]
    %v8527 = vld [vmem:[#allocation3 + $0x120] sm:$0xff]
    %v8528 = vld [vmem:[#allocation3 + $0x128] sm:$0xff]
    %v8529 = vld [vmem:[#allocation3 + $0x130] sm:$0xff]
    %v8530 = vld [vmem:[#allocation3 + $0x138] sm:$0xff]
    %v8531 = vld [vmem:[#allocation3 + $0x140] sm:$0xff]
    %v8532 = vld [vmem:[#allocation3 + $0x148] sm:$0xff]
    %v8533 = vld [vmem:[#allocation3 + $0x150] sm:$0xff]
    %v8534 = vld [vmem:[#allocation3 + $0x158] sm:$0xff]
    %v8535 = vld [vmem:[#allocation3 + $0x160] sm:$0xff]
    %v8536 = vld [vmem:[#allocation3 + $0x168] sm:$0xff]
    %v8537 = vld [vmem:[#allocation3 + $0x170] sm:$0xff]
    %v8538 = vld [vmem:[#allocation3 + $0x178] sm:$0xff]
    %v8539 = vld [vmem:[#allocation3 + $0x180] sm:$0xff]
    %v8540 = vld [vmem:[#allocation3 + $0x188] sm:$0xff]
    %v8541 = vld [vmem:[#allocation3 + $0x190] sm:$0xff]
    %v8542 = vld [vmem:[#allocation3 + $0x198] sm:$0xff]
    %v8543 = vld [vmem:[#allocation3 + $0x1a0] sm:$0xff]
    %v8544 = vld [vmem:[#allocation3 + $0x1a8] sm:$0xff]
    %v8545 = vld [vmem:[#allocation3 + $0x1b0] sm:$0xff]
    %v8546 = vld [vmem:[#allocation3 + $0x1b8] sm:$0xff]
    %v8547 = vld [vmem:[#allocation3 + $0x1c0] sm:$0xff]
    %v8548 = vld [vmem:[#allocation3 + $0x1c8] sm:$0xff]
    %v8549 = vld [vmem:[#allocation3 + $0x1d0] sm:$0xff]
    %v8550 = vld [vmem:[#allocation3 + $0x1d8] sm:$0xff]
    %v8551 = vld [vmem:[#allocation3 + $0x1e0] sm:$0xff]
    %v8552 = vld [vmem:[#allocation3 + $0x1e8] sm:$0xff]
    %v8553 = vld [vmem:[#allocation3 + $0x1f0] sm:$0xff]
    %v8554 = vld [vmem:[#allocation3 + $0x1f8] sm:$0xff]
    %v8555 = vld [vmem:[#allocation3 + $0x200] sm:$0xff]
    %v8556 = vld [vmem:[#allocation3 + $0x208] sm:$0xff]
    %v8557 = vld [vmem:[#allocation3 + $0x210] sm:$0xff]
    %v8558 = vld [vmem:[#allocation3 + $0x218] sm:$0xff]
    %v8559 = vld [vmem:[#allocation3 + $0x220] sm:$0xff]
    %v8560 = vld [vmem:[#allocation3 + $0x228] sm:$0xff]
    %v8561 = vld [vmem:[#allocation3 + $0x230] sm:$0xff]
    %v8562 = vld [vmem:[#allocation3 + $0x238] sm:$0xff]
    %v8563 = vld [vmem:[#allocation3 + $0x240] sm:$0xff]
    %v8564 = vld [vmem:[#allocation3 + $0x248] sm:$0xff]
    %v8565 = vld [vmem:[#allocation3 + $0x250] sm:$0xff]
    %v8566 = vld [vmem:[#allocation3 + $0x258] sm:$0xff]
    %v8567 = vld [vmem:[#allocation3 + $0x260] sm:$0xff]
    %v8568 = vld [vmem:[#allocation3 + $0x268] sm:$0xff]
    %v8569 = vld [vmem:[#allocation3 + $0x270] sm:$0xff]
    %v8570 = vld [vmem:[#allocation3 + $0x278] sm:$0xff]
    %v8571 = vld [vmem:[#allocation3 + $0x280] sm:$0xff]
    %v8572 = vld [vmem:[#allocation3 + $0x288] sm:$0xff]
    %v8573 = vld [vmem:[#allocation3 + $0x290] sm:$0xff]
    %v8574 = vld [vmem:[#allocation3 + $0x298] sm:$0xff]
    %v8575 = vld [vmem:[#allocation3 + $0x2a0] sm:$0xff]
    %v8576 = vld [vmem:[#allocation3 + $0x2a8] sm:$0xff]
    %v8577 = vld [vmem:[#allocation3 + $0x2b0] sm:$0xff]
    %v8578 = vld [vmem:[#allocation3 + $0x2b8] sm:$0xff]
    %v8579 = vld [vmem:[#allocation3 + $0x2c0] sm:$0xff]
    %v8580 = vld [vmem:[#allocation3 + $0x2c8] sm:$0xff]
    %v8581 = vld [vmem:[#allocation3 + $0x2d0] sm:$0xff]
    %v8582 = vld [vmem:[#allocation3 + $0x2d8] sm:$0xff]
    %v8583 = vld [vmem:[#allocation3 + $0x2e0] sm:$0xff]
    %v8584 = vld [vmem:[#allocation3 + $0x2e8] sm:$0xff]
    %v8585 = vld [vmem:[#allocation3 + $0x2f0] sm:$0xff]
    %v8586 = vld [vmem:[#allocation3 + $0x2f8] sm:$0xff]
    %v8587 = vld [vmem:[#allocation3 + $0x300] sm:$0xff]
    %v8588 = vld [vmem:[#allocation3 + $0x308] sm:$0xff]
    %v8589 = vld [vmem:[#allocation3 + $0x310] sm:$0xff]
    %v8590 = vld [vmem:[#allocation3 + $0x318] sm:$0xff]
    %v8591 = vld [vmem:[#allocation3 + $0x320] sm:$0xff]
    %v8592 = vld [vmem:[#allocation3 + $0x328] sm:$0xff]
    %v8593 = vld [vmem:[#allocation3 + $0x330] sm:$0xff]
    %v8594 = vld [vmem:[#allocation3 + $0x338] sm:$0xff]
    %v8595 = vld [vmem:[#allocation3 + $0x340] sm:$0xff]
    %v8596 = vld [vmem:[#allocation3 + $0x348] sm:$0xff]
    %v8597 = vld [vmem:[#allocation3 + $0x350] sm:$0xff]
    %v8598 = vld [vmem:[#allocation3 + $0x358] sm:$0xff]
    %v8599 = vld [vmem:[#allocation3 + $0x360] sm:$0xff]
    %v8600 = vld [vmem:[#allocation3 + $0x368] sm:$0xff]
    %v8601 = vld [vmem:[#allocation3 + $0x370] sm:$0xff]
    %v8602 = vld [vmem:[#allocation3 + $0x378] sm:$0xff]
    %v8603 = vld [vmem:[#allocation3 + $0x380] sm:$0xff]
    %v8604 = vld [vmem:[#allocation3 + $0x388] sm:$0xff]
    %v8605 = vld [vmem:[#allocation3 + $0x390] sm:$0xff]
    %v8606 = vld [vmem:[#allocation3 + $0x398] sm:$0xff]
    %v8607 = vld [vmem:[#allocation3 + $0x3a0] sm:$0xff]
    %v8608 = vld [vmem:[#allocation3 + $0x3a8] sm:$0xff]
    %v8609 = vld [vmem:[#allocation3 + $0x3b0] sm:$0xff]
    %v8610 = vld [vmem:[#allocation3 + $0x3b8] sm:$0xff]
    %v8611 = vld [vmem:[#allocation3 + $0x3c0] sm:$0xff]
    %v8612 = vld [vmem:[#allocation3 + $0x3c8] sm:$0xff]
    %v8613 = vld [vmem:[#allocation3 + $0x3d0] sm:$0xff]
    %v8614 = vld [vmem:[#allocation3 + $0x3d8] sm:$0xff]
    %v8615 = vld [vmem:[#allocation3 + $0x3e0] sm:$0xff]
    %v8616 = vld [vmem:[#allocation3 + $0x3e8] sm:$0xff]
    %v8617 = vld [vmem:[#allocation3 + $0x3f0] sm:$0xff]
    %v8618 = vld [vmem:[#allocation3 + $0x3f8] sm:$0xff]
    %v8619 = vld [vmem:[#allocation3 + $0x400] sm:$0xff]
    %v8620 = vld [vmem:[#allocation3 + $0x408] sm:$0xff]
    %v8621 = vld [vmem:[#allocation3 + $0x410] sm:$0xff]
    %v8622 = vld [vmem:[#allocation3 + $0x418] sm:$0xff]
    %v8623 = vld [vmem:[#allocation3 + $0x420] sm:$0xff]
    %v8624 = vld [vmem:[#allocation3 + $0x428] sm:$0xff]
    %v8625 = vld [vmem:[#allocation3 + $0x430] sm:$0xff]
    %v8626 = vld [vmem:[#allocation3 + $0x438] sm:$0xff]
    %v8627 = vld [vmem:[#allocation3 + $0x440] sm:$0xff]
    %v8628 = vld [vmem:[#allocation3 + $0x448] sm:$0xff]
    %v8629 = vld [vmem:[#allocation3 + $0x450] sm:$0xff]
    %v8630 = vld [vmem:[#allocation3 + $0x458] sm:$0xff]
    %v8631 = vld [vmem:[#allocation3 + $0x460] sm:$0xff]
    %v8632 = vld [vmem:[#allocation3 + $0x468] sm:$0xff]
    %v8633 = vld [vmem:[#allocation3 + $0x470] sm:$0xff]
    %v8634 = vld [vmem:[#allocation3 + $0x478] sm:$0xff]
    %v8635 = vld [vmem:[#allocation3 + $0x480] sm:$0xff]
    %v8636 = vld [vmem:[#allocation3 + $0x488] sm:$0xff]
    %v8637 = vld [vmem:[#allocation3 + $0x490] sm:$0xff]
    %v8638 = vld [vmem:[#allocation3 + $0x498] sm:$0xff]
    %v8639 = vld [vmem:[#allocation3 + $0x4a0] sm:$0xff]
    %v8640 = vld [vmem:[#allocation3 + $0x4a8] sm:$0xff]
    %v8641 = vld [vmem:[#allocation3 + $0x4b0] sm:$0xff]
    %v8642 = vld [vmem:[#allocation3 + $0x4b8] sm:$0xff]
    %v8643 = vld [vmem:[#allocation3 + $0x4c0] sm:$0xff]
    %v8644 = vld [vmem:[#allocation3 + $0x4c8] sm:$0xff]
    %v8645 = vld [vmem:[#allocation3 + $0x4d0] sm:$0xff]
    %v8646 = vld [vmem:[#allocation3 + $0x4d8] sm:$0xff]
    %v8647 = vld [vmem:[#allocation3 + $0x4e0] sm:$0xff]
    %v8648 = vld [vmem:[#allocation3 + $0x4e8] sm:$0xff]
    %v8649 = vld [vmem:[#allocation3 + $0x4f0] sm:$0xff]
    %v8650 = vld [vmem:[#allocation3 + $0x4f8] sm:$0xff]
    %v8651 = vld [vmem:[#allocation3 + $0x500] sm:$0xff]
    %v8652 = vld [vmem:[#allocation3 + $0x508] sm:$0xff]
    %v8653 = vld [vmem:[#allocation3 + $0x510] sm:$0xff]
    %v8654 = vld [vmem:[#allocation3 + $0x518] sm:$0xff]
    %v8655 = vld [vmem:[#allocation3 + $0x520] sm:$0xff]
    %v8656 = vld [vmem:[#allocation3 + $0x528] sm:$0xff]
    %v8657 = vld [vmem:[#allocation3 + $0x530] sm:$0xff]
    %v8658 = vld [vmem:[#allocation3 + $0x538] sm:$0xff]
    %v8659 = vld [vmem:[#allocation3 + $0x540] sm:$0xff]
    %v8660 = vld [vmem:[#allocation3 + $0x548] sm:$0xff]
    %v8661 = vld [vmem:[#allocation3 + $0x550] sm:$0xff]
    %v8662 = vld [vmem:[#allocation3 + $0x558] sm:$0xff]
    %v8663 = vld [vmem:[#allocation3 + $0x560] sm:$0xff]
    %v8664 = vld [vmem:[#allocation3 + $0x568] sm:$0xff]
    %v8665 = vld [vmem:[#allocation3 + $0x570] sm:$0xff]
    %v8666 = vld [vmem:[#allocation3 + $0x578] sm:$0xff]
    %v8667 = vld [vmem:[#allocation3 + $0x580] sm:$0xff]
    %v8668 = vld [vmem:[#allocation3 + $0x588] sm:$0xff]
    %v8669 = vld [vmem:[#allocation3 + $0x590] sm:$0xff]
    %v8670 = vld [vmem:[#allocation3 + $0x598] sm:$0xff]
    %v8671 = vld [vmem:[#allocation3 + $0x5a0] sm:$0xff]
    %v8672 = vld [vmem:[#allocation3 + $0x5a8] sm:$0xff]
    %v8673 = vld [vmem:[#allocation3 + $0x5b0] sm:$0xff]
    %v8674 = vld [vmem:[#allocation3 + $0x5b8] sm:$0xff]
    %v8675 = vld [vmem:[#allocation3 + $0x5c0] sm:$0xff]
    %v8676 = vld [vmem:[#allocation3 + $0x5c8] sm:$0xff]
    %v8677 = vld [vmem:[#allocation3 + $0x5d0] sm:$0xff]
    %v8678 = vld [vmem:[#allocation3 + $0x5d8] sm:$0xff]
    %v8679 = vld [vmem:[#allocation3 + $0x5e0] sm:$0xff]
    %v8680 = vld [vmem:[#allocation3 + $0x5e8] sm:$0xff]
    %v8681 = vld [vmem:[#allocation3 + $0x5f0] sm:$0xff]
    %v8682 = vld [vmem:[#allocation3 + $0x5f8] sm:$0xff]
    %v8683 = vld [vmem:[#allocation3 + $0x600] sm:$0xff]
    %v8684 = vld [vmem:[#allocation3 + $0x608] sm:$0xff]
    %v8685 = vld [vmem:[#allocation3 + $0x610] sm:$0xff]
    %v8686 = vld [vmem:[#allocation3 + $0x618] sm:$0xff]
    %v8687 = vld [vmem:[#allocation3 + $0x620] sm:$0xff]
    %v8688 = vld [vmem:[#allocation3 + $0x628] sm:$0xff]
    %v8689 = vld [vmem:[#allocation3 + $0x630] sm:$0xff]
    %v8690 = vld [vmem:[#allocation3 + $0x638] sm:$0xff]
    %v8691 = vld [vmem:[#allocation3 + $0x640] sm:$0xff]
    %v8692 = vld [vmem:[#allocation3 + $0x648] sm:$0xff]
    %v8693 = vld [vmem:[#allocation3 + $0x650] sm:$0xff]
    %v8694 = vld [vmem:[#allocation3 + $0x658] sm:$0xff]
    %v8695 = vld [vmem:[#allocation3 + $0x660] sm:$0xff]
    %v8696 = vld [vmem:[#allocation3 + $0x668] sm:$0xff]
    %v8697 = vld [vmem:[#allocation3 + $0x670] sm:$0xff]
    %v8698 = vld [vmem:[#allocation3 + $0x678] sm:$0xff]
    %v8699 = vld [vmem:[#allocation3 + $0x680] sm:$0xff]
    %v8700 = vld [vmem:[#allocation3 + $0x688] sm:$0xff]
    %v8701 = vld [vmem:[#allocation3 + $0x690] sm:$0xff]
    %v8702 = vld [vmem:[#allocation3 + $0x698] sm:$0xff]
    %v8703 = vld [vmem:[#allocation3 + $0x6a0] sm:$0xff]
    %v8704 = vld [vmem:[#allocation3 + $0x6a8] sm:$0xff]
    %v8705 = vld [vmem:[#allocation3 + $0x6b0] sm:$0xff]
    %v8706 = vld [vmem:[#allocation3 + $0x6b8] sm:$0xff]
    %v8707 = vld [vmem:[#allocation3 + $0x6c0] sm:$0xff]
    %v8708 = vld [vmem:[#allocation3 + $0x6c8] sm:$0xff]
    %v8709 = vld [vmem:[#allocation3 + $0x6d0] sm:$0xff]
    %v8710 = vld [vmem:[#allocation3 + $0x6d8] sm:$0xff]
    %v8711 = vld [vmem:[#allocation3 + $0x6e0] sm:$0xff]
    %v8712 = vld [vmem:[#allocation3 + $0x6e8] sm:$0xff]
    %v8713 = vld [vmem:[#allocation3 + $0x6f0] sm:$0xff]
    %v8714 = vld [vmem:[#allocation3 + $0x6f8] sm:$0xff]
    %v8715 = vld [vmem:[#allocation3 + $0x700] sm:$0xff]
    %v8716 = vld [vmem:[#allocation3 + $0x708] sm:$0xff]
    %v8717 = vld [vmem:[#allocation3 + $0x710] sm:$0xff]
    %v8718 = vld [vmem:[#allocation3 + $0x718] sm:$0xff]
    %v8719 = vld [vmem:[#allocation3 + $0x720] sm:$0xff]
    %v8720 = vld [vmem:[#allocation3 + $0x728] sm:$0xff]
    %v8721 = vld [vmem:[#allocation3 + $0x730] sm:$0xff]
    %v8722 = vld [vmem:[#allocation3 + $0x738] sm:$0xff]
    %v8723 = vld [vmem:[#allocation3 + $0x740] sm:$0xff]
    %v8724 = vld [vmem:[#allocation3 + $0x748] sm:$0xff]
    %v8725 = vld [vmem:[#allocation3 + $0x750] sm:$0xff]
    %v8726 = vld [vmem:[#allocation3 + $0x758] sm:$0xff]
    %v8727 = vld [vmem:[#allocation3 + $0x760] sm:$0xff]
    %v8728 = vld [vmem:[#allocation3 + $0x768] sm:$0xff]
    %v8729 = vld [vmem:[#allocation3 + $0x770] sm:$0xff]
    %v8730 = vld [vmem:[#allocation3 + $0x778] sm:$0xff]
    %v8731 = vld [vmem:[#allocation3 + $0x780] sm:$0xff]
    %v8732 = vld [vmem:[#allocation3 + $0x788] sm:$0xff]
    %v8733 = vld [vmem:[#allocation3 + $0x790] sm:$0xff]
    %v8734 = vld [vmem:[#allocation3 + $0x798] sm:$0xff]
    %v8735 = vld [vmem:[#allocation3 + $0x7a0] sm:$0xff]
    %v8736 = vld [vmem:[#allocation3 + $0x7a8] sm:$0xff]
    %v8737 = vld [vmem:[#allocation3 + $0x7b0] sm:$0xff]
    %v8738 = vld [vmem:[#allocation3 + $0x7b8] sm:$0xff]
    %v8739 = vld [vmem:[#allocation3 + $0x7c0] sm:$0xff]
    %v8740 = vld [vmem:[#allocation3 + $0x7c8] sm:$0xff]
    %v8741 = vld [vmem:[#allocation3 + $0x7d0] sm:$0xff]
    %v8742 = vld [vmem:[#allocation3 + $0x7d8] sm:$0xff]
    %v8743 = vld [vmem:[#allocation3 + $0x7e0] sm:$0xff]
    %v8744 = vld [vmem:[#allocation3 + $0x7e8] sm:$0xff]
    %v8745 = vld [vmem:[#allocation3 + $0x7f0] sm:$0xff]
    %v8746 = vld [vmem:[#allocation3 + $0x7f8] sm:$0xff]
    %s8747 = scalar_lea.vmem %s8, 4
    %v8748 = vld [vmem:[%s8747] ss:$8 sm:$0xf]
    %v8750 = vlaneseq
    %v8751 = vshrl.u32 %v8750, 7
    %v8752 = vsub.s32 0, %v8751
    %v8753 = vrot.slane %v8748, %v8752
    %v8754 = vlaneseq
    %v8755 = vshrl.u32 %v8754, 7
    %v8756 = vsub.s32 1, %v8755
    %v8757 = vrot.slane %v8748, %v8756
    %v8758 = vlaneseq
    %v8759 = vshrl.u32 %v8758, 7
    %v8760 = vsub.s32 2, %v8759
    %v8761 = vrot.slane %v8748, %v8760
    %v8762 = vlaneseq
    %v8763 = vshrl.u32 %v8762, 7
    %v8764 = vsub.s32 3, %v8763
    %v8765 = vrot.slane %v8748, %v8764
    %v8771 = vcombine.high %v8486, %v8486
    %v8773 = vunpack.c.l.s4 1966171168
    %v8774 = vunpack.c.0.s8 %v8773
    %v8775 = vlaneseq
    %v8776 = vshrl.u32 %v8775, 7
    %v8777 = vsub.s32 %v8774, %v8776
    %v8778 = vrot.slane %v8486, %v8777
    %v8780 = vunpack.c.l.s4 1966171168
    %v8781 = vunpack.c.0.s8 %v8780
    %v8782 = vlaneseq
    %v8783 = vshrl.u32 %v8782, 7
    %v8784 = vsub.s32 %v8781, %v8783
    %v8785 = vrot.slane %v8771, %v8784
    %v8786 = vcombine.high %v8778, %v8778
    %v8787 = vcombine.high %v8785, %v8785
    %v8789 = vunpack.c.l.s4 1966171168
    %v8790 = vunpack.c.0.s8 %v8789
    %v8791 = vlaneseq
    %v8792 = vshrl.u32 %v8791, 7
    %v8793 = vsub.s32 %v8790, %v8792
    %v8794 = vrot.slane %v8778, %v8793
    %v8796 = vunpack.c.l.s4 1966171168
    %v8797 = vunpack.c.0.s8 %v8796
    %v8798 = vlaneseq
    %v8799 = vshrl.u32 %v8798, 7
    %v8800 = vsub.s32 %v8797, %v8799
    %v8801 = vrot.slane %v8785, %v8800
    %v8803 = vunpack.c.l.s4 1966171168
    %v8804 = vunpack.c.0.s8 %v8803
    %v8805 = vlaneseq
    %v8806 = vshrl.u32 %v8805, 7
    %v8807 = vsub.s32 %v8804, %v8806
    %v8808 = vrot.slane %v8786, %v8807
    %v8810 = vunpack.c.l.s4 1966171168
    %v8811 = vunpack.c.0.s8 %v8810
    %v8812 = vlaneseq
    %v8813 = vshrl.u32 %v8812, 7
    %v8814 = vsub.s32 %v8811, %v8813
    %v8815 = vrot.slane %v8787, %v8814
    %v8816 = vcombine.high %v8794, %v8794
    %v8817 = vcombine.high %v8801, %v8801
    %v8818 = vcombine.high %v8808, %v8808
    %v8819 = vcombine.high %v8815, %v8815
    %v9084 = vunpack.c.l.b16 %v8491
    %v9085 = vunpack.c.h.b16 %v8491
    %v9086 = vunpack.c.l.b16 %v8492
    %v9087 = vunpack.c.h.b16 %v8492
    %v9088 = vunpack.c.l.b16 %v8493
    %v9089 = vunpack.c.h.b16 %v8493
    %v9090 = vunpack.c.l.b16 %v8494
    %v9091 = vunpack.c.h.b16 %v8494
    %v9092 = vunpack.c.l.b16 %v8495
    %v9093 = vunpack.c.h.b16 %v8495
    %v9094 = vunpack.c.l.b16 %v8496
    %v9095 = vunpack.c.h.b16 %v8496
    %v9096 = vunpack.c.l.b16 %v8497
    %v9097 = vunpack.c.h.b16 %v8497
    %v9098 = vunpack.c.l.b16 %v8498
    %v9099 = vunpack.c.h.b16 %v8498
    %v9100 = vunpack.c.l.b16 %v8499
    %v9101 = vunpack.c.h.b16 %v8499
    %v9102 = vunpack.c.l.b16 %v8500
    %v9103 = vunpack.c.h.b16 %v8500
    %v9104 = vunpack.c.l.b16 %v8501
    %v9105 = vunpack.c.h.b16 %v8501
    %v9106 = vunpack.c.l.b16 %v8502
    %v9107 = vunpack.c.h.b16 %v8502
    %v9108 = vunpack.c.l.b16 %v8503
    %v9109 = vunpack.c.h.b16 %v8503
    %v9110 = vunpack.c.l.b16 %v8504
    %v9111 = vunpack.c.h.b16 %v8504
    %v9112 = vunpack.c.l.b16 %v8505
    %v9113 = vunpack.c.h.b16 %v8505
    %v9114 = vunpack.c.l.b16 %v8506
    %v9115 = vunpack.c.h.b16 %v8506
    %v9116 = vunpack.c.l.b16 %v8507
    %v9117 = vunpack.c.h.b16 %v8507
    %v9118 = vunpack.c.l.b16 %v8508
    %v9119 = vunpack.c.h.b16 %v8508
    %v9120 = vunpack.c.l.b16 %v8509
    %v9121 = vunpack.c.h.b16 %v8509
    %v9122 = vunpack.c.l.b16 %v8510
    %v9123 = vunpack.c.h.b16 %v8510
    %v9124 = vunpack.c.l.b16 %v8511
    %v9125 = vunpack.c.h.b16 %v8511
    %v9126 = vunpack.c.l.b16 %v8512
    %v9127 = vunpack.c.h.b16 %v8512
    %v9128 = vunpack.c.l.b16 %v8513
    %v9129 = vunpack.c.h.b16 %v8513
    %v9130 = vunpack.c.l.b16 %v8514
    %v9131 = vunpack.c.h.b16 %v8514
    %v9132 = vunpack.c.l.b16 %v8515
    %v9133 = vunpack.c.h.b16 %v8515
    %v9134 = vunpack.c.l.b16 %v8516
    %v9135 = vunpack.c.h.b16 %v8516
    %v9136 = vunpack.c.l.b16 %v8517
    %v9137 = vunpack.c.h.b16 %v8517
    %v9138 = vunpack.c.l.b16 %v8518
    %v9139 = vunpack.c.h.b16 %v8518
    %v9140 = vunpack.c.l.b16 %v8519
    %v9141 = vunpack.c.h.b16 %v8519
    %v9142 = vunpack.c.l.b16 %v8520
    %v9143 = vunpack.c.h.b16 %v8520
    %v9144 = vunpack.c.l.b16 %v8521
    %v9145 = vunpack.c.h.b16 %v8521
    %v9146 = vunpack.c.l.b16 %v8522
    %v9147 = vunpack.c.h.b16 %v8522
    %v9148 = vunpack.c.l.b16 %v8523
    %v9149 = vunpack.c.h.b16 %v8523
    %v9150 = vunpack.c.l.b16 %v8524
    %v9151 = vunpack.c.h.b16 %v8524
    %v9152 = vunpack.c.l.b16 %v8525
    %v9153 = vunpack.c.h.b16 %v8525
    %v9154 = vunpack.c.l.b16 %v8526
    %v9155 = vunpack.c.h.b16 %v8526
    %v9156 = vunpack.c.l.b16 %v8527
    %v9157 = vunpack.c.h.b16 %v8527
    %v9158 = vunpack.c.l.b16 %v8528
    %v9159 = vunpack.c.h.b16 %v8528
    %v9160 = vunpack.c.l.b16 %v8529
    %v9161 = vunpack.c.h.b16 %v8529
    %v9162 = vunpack.c.l.b16 %v8530
    %v9163 = vunpack.c.h.b16 %v8530
    %v9164 = vunpack.c.l.b16 %v8531
    %v9165 = vunpack.c.h.b16 %v8531
    %v9166 = vunpack.c.l.b16 %v8532
    %v9167 = vunpack.c.h.b16 %v8532
    %v9168 = vunpack.c.l.b16 %v8533
    %v9169 = vunpack.c.h.b16 %v8533
    %v9170 = vunpack.c.l.b16 %v8534
    %v9171 = vunpack.c.h.b16 %v8534
    %v9172 = vunpack.c.l.b16 %v8535
    %v9173 = vunpack.c.h.b16 %v8535
    %v9174 = vunpack.c.l.b16 %v8536
    %v9175 = vunpack.c.h.b16 %v8536
    %v9176 = vunpack.c.l.b16 %v8537
    %v9177 = vunpack.c.h.b16 %v8537
    %v9178 = vunpack.c.l.b16 %v8538
    %v9179 = vunpack.c.h.b16 %v8538
    %v9180 = vunpack.c.l.b16 %v8539
    %v9181 = vunpack.c.h.b16 %v8539
    %v9182 = vunpack.c.l.b16 %v8540
    %v9183 = vunpack.c.h.b16 %v8540
    %v9184 = vunpack.c.l.b16 %v8541
    %v9185 = vunpack.c.h.b16 %v8541
    %v9186 = vunpack.c.l.b16 %v8542
    %v9187 = vunpack.c.h.b16 %v8542
    %v9188 = vunpack.c.l.b16 %v8543
    %v9189 = vunpack.c.h.b16 %v8543
    %v9190 = vunpack.c.l.b16 %v8544
    %v9191 = vunpack.c.h.b16 %v8544
    %v9192 = vunpack.c.l.b16 %v8545
    %v9193 = vunpack.c.h.b16 %v8545
    %v9194 = vunpack.c.l.b16 %v8546
    %v9195 = vunpack.c.h.b16 %v8546
    %v9196 = vunpack.c.l.b16 %v8547
    %v9197 = vunpack.c.h.b16 %v8547
    %v9198 = vunpack.c.l.b16 %v8548
    %v9199 = vunpack.c.h.b16 %v8548
    %v9200 = vunpack.c.l.b16 %v8549
    %v9201 = vunpack.c.h.b16 %v8549
    %v9202 = vunpack.c.l.b16 %v8550
    %v9203 = vunpack.c.h.b16 %v8550
    %v9204 = vunpack.c.l.b16 %v8551
    %v9205 = vunpack.c.h.b16 %v8551
    %v9206 = vunpack.c.l.b16 %v8552
    %v9207 = vunpack.c.h.b16 %v8552
    %v9208 = vunpack.c.l.b16 %v8553
    %v9209 = vunpack.c.h.b16 %v8553
    %v9210 = vunpack.c.l.b16 %v8554
    %v9211 = vunpack.c.h.b16 %v8554
    %v9212 = vunpack.c.l.b16 %v8555
    %v9213 = vunpack.c.h.b16 %v8555
    %v9214 = vunpack.c.l.b16 %v8556
    %v9215 = vunpack.c.h.b16 %v8556
    %v9216 = vunpack.c.l.b16 %v8557
    %v9217 = vunpack.c.h.b16 %v8557
    %v9218 = vunpack.c.l.b16 %v8558
    %v9219 = vunpack.c.h.b16 %v8558
    %v9220 = vunpack.c.l.b16 %v8559
    %v9221 = vunpack.c.h.b16 %v8559
    %v9222 = vunpack.c.l.b16 %v8560
    %v9223 = vunpack.c.h.b16 %v8560
    %v9224 = vunpack.c.l.b16 %v8561
    %v9225 = vunpack.c.h.b16 %v8561
    %v9226 = vunpack.c.l.b16 %v8562
    %v9227 = vunpack.c.h.b16 %v8562
    %v9228 = vunpack.c.l.b16 %v8563
    %v9229 = vunpack.c.h.b16 %v8563
    %v9230 = vunpack.c.l.b16 %v8564
    %v9231 = vunpack.c.h.b16 %v8564
    %v9232 = vunpack.c.l.b16 %v8565
    %v9233 = vunpack.c.h.b16 %v8565
    %v9234 = vunpack.c.l.b16 %v8566
    %v9235 = vunpack.c.h.b16 %v8566
    %v9236 = vunpack.c.l.b16 %v8567
    %v9237 = vunpack.c.h.b16 %v8567
    %v9238 = vunpack.c.l.b16 %v8568
    %v9239 = vunpack.c.h.b16 %v8568
    %v9240 = vunpack.c.l.b16 %v8569
    %v9241 = vunpack.c.h.b16 %v8569
    %v9242 = vunpack.c.l.b16 %v8570
    %v9243 = vunpack.c.h.b16 %v8570
    %v9244 = vunpack.c.l.b16 %v8571
    %v9245 = vunpack.c.h.b16 %v8571
    %v9246 = vunpack.c.l.b16 %v8572
    %v9247 = vunpack.c.h.b16 %v8572
    %v9248 = vunpack.c.l.b16 %v8573
    %v9249 = vunpack.c.h.b16 %v8573
    %v9250 = vunpack.c.l.b16 %v8574
    %v9251 = vunpack.c.h.b16 %v8574
    %v9252 = vunpack.c.l.b16 %v8575
    %v9253 = vunpack.c.h.b16 %v8575
    %v9254 = vunpack.c.l.b16 %v8576
    %v9255 = vunpack.c.h.b16 %v8576
    %v9256 = vunpack.c.l.b16 %v8577
    %v9257 = vunpack.c.h.b16 %v8577
    %v9258 = vunpack.c.l.b16 %v8578
    %v9259 = vunpack.c.h.b16 %v8578
    %v9260 = vunpack.c.l.b16 %v8579
    %v9261 = vunpack.c.h.b16 %v8579
    %v9262 = vunpack.c.l.b16 %v8580
    %v9263 = vunpack.c.h.b16 %v8580
    %v9264 = vunpack.c.l.b16 %v8581
    %v9265 = vunpack.c.h.b16 %v8581
    %v9266 = vunpack.c.l.b16 %v8582
    %v9267 = vunpack.c.h.b16 %v8582
    %v9268 = vunpack.c.l.b16 %v8583
    %v9269 = vunpack.c.h.b16 %v8583
    %v9270 = vunpack.c.l.b16 %v8584
    %v9271 = vunpack.c.h.b16 %v8584
    %v9272 = vunpack.c.l.b16 %v8585
    %v9273 = vunpack.c.h.b16 %v8585
    %v9274 = vunpack.c.l.b16 %v8586
    %v9275 = vunpack.c.h.b16 %v8586
    %v9276 = vunpack.c.l.b16 %v8587
    %v9277 = vunpack.c.h.b16 %v8587
    %v9278 = vunpack.c.l.b16 %v8588
    %v9279 = vunpack.c.h.b16 %v8588
    %v9280 = vunpack.c.l.b16 %v8589
    %v9281 = vunpack.c.h.b16 %v8589
    %v9282 = vunpack.c.l.b16 %v8590
    %v9283 = vunpack.c.h.b16 %v8590
    %v9284 = vunpack.c.l.b16 %v8591
    %v9285 = vunpack.c.h.b16 %v8591
    %v9286 = vunpack.c.l.b16 %v8592
    %v9287 = vunpack.c.h.b16 %v8592
    %v9288 = vunpack.c.l.b16 %v8593
    %v9289 = vunpack.c.h.b16 %v8593
    %v9290 = vunpack.c.l.b16 %v8594
    %v9291 = vunpack.c.h.b16 %v8594
    %v9292 = vunpack.c.l.b16 %v8595
    %v9293 = vunpack.c.h.b16 %v8595
    %v9294 = vunpack.c.l.b16 %v8596
    %v9295 = vunpack.c.h.b16 %v8596
    %v9296 = vunpack.c.l.b16 %v8597
    %v9297 = vunpack.c.h.b16 %v8597
    %v9298 = vunpack.c.l.b16 %v8598
    %v9299 = vunpack.c.h.b16 %v8598
    %v9300 = vunpack.c.l.b16 %v8599
    %v9301 = vunpack.c.h.b16 %v8599
    %v9302 = vunpack.c.l.b16 %v8600
    %v9303 = vunpack.c.h.b16 %v8600
    %v9304 = vunpack.c.l.b16 %v8601
    %v9305 = vunpack.c.h.b16 %v8601
    %v9306 = vunpack.c.l.b16 %v8602
    %v9307 = vunpack.c.h.b16 %v8602
    %v9308 = vunpack.c.l.b16 %v8603
    %v9309 = vunpack.c.h.b16 %v8603
    %v9310 = vunpack.c.l.b16 %v8604
    %v9311 = vunpack.c.h.b16 %v8604
    %v9312 = vunpack.c.l.b16 %v8605
    %v9313 = vunpack.c.h.b16 %v8605
    %v9314 = vunpack.c.l.b16 %v8606
    %v9315 = vunpack.c.h.b16 %v8606
    %v9316 = vunpack.c.l.b16 %v8607
    %v9317 = vunpack.c.h.b16 %v8607
    %v9318 = vunpack.c.l.b16 %v8608
    %v9319 = vunpack.c.h.b16 %v8608
    %v9320 = vunpack.c.l.b16 %v8609
    %v9321 = vunpack.c.h.b16 %v8609
    %v9322 = vunpack.c.l.b16 %v8610
    %v9323 = vunpack.c.h.b16 %v8610
    %v9324 = vunpack.c.l.b16 %v8611
    %v9325 = vunpack.c.h.b16 %v8611
    %v9326 = vunpack.c.l.b16 %v8612
    %v9327 = vunpack.c.h.b16 %v8612
    %v9328 = vunpack.c.l.b16 %v8613
    %v9329 = vunpack.c.h.b16 %v8613
    %v9330 = vunpack.c.l.b16 %v8614
    %v9331 = vunpack.c.h.b16 %v8614
    %v9332 = vunpack.c.l.b16 %v8615
    %v9333 = vunpack.c.h.b16 %v8615
    %v9334 = vunpack.c.l.b16 %v8616
    %v9335 = vunpack.c.h.b16 %v8616
    %v9336 = vunpack.c.l.b16 %v8617
    %v9337 = vunpack.c.h.b16 %v8617
    %v9338 = vunpack.c.l.b16 %v8618
    %v9339 = vunpack.c.h.b16 %v8618
    %v9340 = vunpack.c.l.b16 %v8619
    %v9341 = vunpack.c.h.b16 %v8619
    %v9342 = vunpack.c.l.b16 %v8620
    %v9343 = vunpack.c.h.b16 %v8620
    %v9344 = vunpack.c.l.b16 %v8621
    %v9345 = vunpack.c.h.b16 %v8621
    %v9346 = vunpack.c.l.b16 %v8622
    %v9347 = vunpack.c.h.b16 %v8622
    %v9348 = vunpack.c.l.b16 %v8623
    %v9349 = vunpack.c.h.b16 %v8623
    %v9350 = vunpack.c.l.b16 %v8624
    %v9351 = vunpack.c.h.b16 %v8624
    %v9352 = vunpack.c.l.b16 %v8625
    %v9353 = vunpack.c.h.b16 %v8625
    %v9354 = vunpack.c.l.b16 %v8626
    %v9355 = vunpack.c.h.b16 %v8626
    %v9356 = vunpack.c.l.b16 %v8627
    %v9357 = vunpack.c.h.b16 %v8627
    %v9358 = vunpack.c.l.b16 %v8628
    %v9359 = vunpack.c.h.b16 %v8628
    %v9360 = vunpack.c.l.b16 %v8629
    %v9361 = vunpack.c.h.b16 %v8629
    %v9362 = vunpack.c.l.b16 %v8630
    %v9363 = vunpack.c.h.b16 %v8630
    %v9364 = vunpack.c.l.b16 %v8631
    %v9365 = vunpack.c.h.b16 %v8631
    %v9366 = vunpack.c.l.b16 %v8632
    %v9367 = vunpack.c.h.b16 %v8632
    %v9368 = vunpack.c.l.b16 %v8633
    %v9369 = vunpack.c.h.b16 %v8633
    %v9370 = vunpack.c.l.b16 %v8634
    %v9371 = vunpack.c.h.b16 %v8634
    %v9372 = vunpack.c.l.b16 %v8635
    %v9373 = vunpack.c.h.b16 %v8635
    %v9374 = vunpack.c.l.b16 %v8636
    %v9375 = vunpack.c.h.b16 %v8636
    %v9376 = vunpack.c.l.b16 %v8637
    %v9377 = vunpack.c.h.b16 %v8637
    %v9378 = vunpack.c.l.b16 %v8638
    %v9379 = vunpack.c.h.b16 %v8638
    %v9380 = vunpack.c.l.b16 %v8639
    %v9381 = vunpack.c.h.b16 %v8639
    %v9382 = vunpack.c.l.b16 %v8640
    %v9383 = vunpack.c.h.b16 %v8640
    %v9384 = vunpack.c.l.b16 %v8641
    %v9385 = vunpack.c.h.b16 %v8641
    %v9386 = vunpack.c.l.b16 %v8642
    %v9387 = vunpack.c.h.b16 %v8642
    %v9388 = vunpack.c.l.b16 %v8643
    %v9389 = vunpack.c.h.b16 %v8643
    %v9390 = vunpack.c.l.b16 %v8644
    %v9391 = vunpack.c.h.b16 %v8644
    %v9392 = vunpack.c.l.b16 %v8645
    %v9393 = vunpack.c.h.b16 %v8645
    %v9394 = vunpack.c.l.b16 %v8646
    %v9395 = vunpack.c.h.b16 %v8646
    %v9396 = vunpack.c.l.b16 %v8647
    %v9397 = vunpack.c.h.b16 %v8647
    %v9398 = vunpack.c.l.b16 %v8648
    %v9399 = vunpack.c.h.b16 %v8648
    %v9400 = vunpack.c.l.b16 %v8649
    %v9401 = vunpack.c.h.b16 %v8649
    %v9402 = vunpack.c.l.b16 %v8650
    %v9403 = vunpack.c.h.b16 %v8650
    %v9404 = vunpack.c.l.b16 %v8651
    %v9405 = vunpack.c.h.b16 %v8651
    %v9406 = vunpack.c.l.b16 %v8652
    %v9407 = vunpack.c.h.b16 %v8652
    %v9408 = vunpack.c.l.b16 %v8653
    %v9409 = vunpack.c.h.b16 %v8653
    %v9410 = vunpack.c.l.b16 %v8654
    %v9411 = vunpack.c.h.b16 %v8654
    %v9412 = vunpack.c.l.b16 %v8655
    %v9413 = vunpack.c.h.b16 %v8655
    %v9414 = vunpack.c.l.b16 %v8656
    %v9415 = vunpack.c.h.b16 %v8656
    %v9416 = vunpack.c.l.b16 %v8657
    %v9417 = vunpack.c.h.b16 %v8657
    %v9418 = vunpack.c.l.b16 %v8658
    %v9419 = vunpack.c.h.b16 %v8658
    %v9420 = vunpack.c.l.b16 %v8659
    %v9421 = vunpack.c.h.b16 %v8659
    %v9422 = vunpack.c.l.b16 %v8660
    %v9423 = vunpack.c.h.b16 %v8660
    %v9424 = vunpack.c.l.b16 %v8661
    %v9425 = vunpack.c.h.b16 %v8661
    %v9426 = vunpack.c.l.b16 %v8662
    %v9427 = vunpack.c.h.b16 %v8662
    %v9428 = vunpack.c.l.b16 %v8663
    %v9429 = vunpack.c.h.b16 %v8663
    %v9430 = vunpack.c.l.b16 %v8664
    %v9431 = vunpack.c.h.b16 %v8664
    %v9432 = vunpack.c.l.b16 %v8665
    %v9433 = vunpack.c.h.b16 %v8665
    %v9434 = vunpack.c.l.b16 %v8666
    %v9435 = vunpack.c.h.b16 %v8666
    %v9436 = vunpack.c.l.b16 %v8667
    %v9437 = vunpack.c.h.b16 %v8667
    %v9438 = vunpack.c.l.b16 %v8668
    %v9439 = vunpack.c.h.b16 %v8668
    %v9440 = vunpack.c.l.b16 %v8669
    %v9441 = vunpack.c.h.b16 %v8669
    %v9442 = vunpack.c.l.b16 %v8670
    %v9443 = vunpack.c.h.b16 %v8670
    %v9444 = vunpack.c.l.b16 %v8671
    %v9445 = vunpack.c.h.b16 %v8671
    %v9446 = vunpack.c.l.b16 %v8672
    %v9447 = vunpack.c.h.b16 %v8672
    %v9448 = vunpack.c.l.b16 %v8673
    %v9449 = vunpack.c.h.b16 %v8673
    %v9450 = vunpack.c.l.b16 %v8674
    %v9451 = vunpack.c.h.b16 %v8674
    %v9452 = vunpack.c.l.b16 %v8675
    %v9453 = vunpack.c.h.b16 %v8675
    %v9454 = vunpack.c.l.b16 %v8676
    %v9455 = vunpack.c.h.b16 %v8676
    %v9456 = vunpack.c.l.b16 %v8677
    %v9457 = vunpack.c.h.b16 %v8677
    %v9458 = vunpack.c.l.b16 %v8678
    %v9459 = vunpack.c.h.b16 %v8678
    %v9460 = vunpack.c.l.b16 %v8679
    %v9461 = vunpack.c.h.b16 %v8679
    %v9462 = vunpack.c.l.b16 %v8680
    %v9463 = vunpack.c.h.b16 %v8680
    %v9464 = vunpack.c.l.b16 %v8681
    %v9465 = vunpack.c.h.b16 %v8681
    %v9466 = vunpack.c.l.b16 %v8682
    %v9467 = vunpack.c.h.b16 %v8682
    %v9468 = vunpack.c.l.b16 %v8683
    %v9469 = vunpack.c.h.b16 %v8683
    %v9470 = vunpack.c.l.b16 %v8684
    %v9471 = vunpack.c.h.b16 %v8684
    %v9472 = vunpack.c.l.b16 %v8685
    %v9473 = vunpack.c.h.b16 %v8685
    %v9474 = vunpack.c.l.b16 %v8686
    %v9475 = vunpack.c.h.b16 %v8686
    %v9476 = vunpack.c.l.b16 %v8687
    %v9477 = vunpack.c.h.b16 %v8687
    %v9478 = vunpack.c.l.b16 %v8688
    %v9479 = vunpack.c.h.b16 %v8688
    %v9480 = vunpack.c.l.b16 %v8689
    %v9481 = vunpack.c.h.b16 %v8689
    %v9482 = vunpack.c.l.b16 %v8690
    %v9483 = vunpack.c.h.b16 %v8690
    %v9484 = vunpack.c.l.b16 %v8691
    %v9485 = vunpack.c.h.b16 %v8691
    %v9486 = vunpack.c.l.b16 %v8692
    %v9487 = vunpack.c.h.b16 %v8692
    %v9488 = vunpack.c.l.b16 %v8693
    %v9489 = vunpack.c.h.b16 %v8693
    %v9490 = vunpack.c.l.b16 %v8694
    %v9491 = vunpack.c.h.b16 %v8694
    %v9492 = vunpack.c.l.b16 %v8695
    %v9493 = vunpack.c.h.b16 %v8695
    %v9494 = vunpack.c.l.b16 %v8696
    %v9495 = vunpack.c.h.b16 %v8696
    %v9496 = vunpack.c.l.b16 %v8697
    %v9497 = vunpack.c.h.b16 %v8697
    %v9498 = vunpack.c.l.b16 %v8698
    %v9499 = vunpack.c.h.b16 %v8698
    %v9500 = vunpack.c.l.b16 %v8699
    %v9501 = vunpack.c.h.b16 %v8699
    %v9502 = vunpack.c.l.b16 %v8700
    %v9503 = vunpack.c.h.b16 %v8700
    %v9504 = vunpack.c.l.b16 %v8701
    %v9505 = vunpack.c.h.b16 %v8701
    %v9506 = vunpack.c.l.b16 %v8702
    %v9507 = vunpack.c.h.b16 %v8702
    %v9508 = vunpack.c.l.b16 %v8703
    %v9509 = vunpack.c.h.b16 %v8703
    %v9510 = vunpack.c.l.b16 %v8704
    %v9511 = vunpack.c.h.b16 %v8704
    %v9512 = vunpack.c.l.b16 %v8705
    %v9513 = vunpack.c.h.b16 %v8705
    %v9514 = vunpack.c.l.b16 %v8706
    %v9515 = vunpack.c.h.b16 %v8706
    %v9516 = vunpack.c.l.b16 %v8707
    %v9517 = vunpack.c.h.b16 %v8707
    %v9518 = vunpack.c.l.b16 %v8708
    %v9519 = vunpack.c.h.b16 %v8708
    %v9520 = vunpack.c.l.b16 %v8709
    %v9521 = vunpack.c.h.b16 %v8709
    %v9522 = vunpack.c.l.b16 %v8710
    %v9523 = vunpack.c.h.b16 %v8710
    %v9524 = vunpack.c.l.b16 %v8711
    %v9525 = vunpack.c.h.b16 %v8711
    %v9526 = vunpack.c.l.b16 %v8712
    %v9527 = vunpack.c.h.b16 %v8712
    %v9528 = vunpack.c.l.b16 %v8713
    %v9529 = vunpack.c.h.b16 %v8713
    %v9530 = vunpack.c.l.b16 %v8714
    %v9531 = vunpack.c.h.b16 %v8714
    %v9532 = vunpack.c.l.b16 %v8715
    %v9533 = vunpack.c.h.b16 %v8715
    %v9534 = vunpack.c.l.b16 %v8716
    %v9535 = vunpack.c.h.b16 %v8716
    %v9536 = vunpack.c.l.b16 %v8717
    %v9537 = vunpack.c.h.b16 %v8717
    %v9538 = vunpack.c.l.b16 %v8718
    %v9539 = vunpack.c.h.b16 %v8718
    %v9540 = vunpack.c.l.b16 %v8719
    %v9541 = vunpack.c.h.b16 %v8719
    %v9542 = vunpack.c.l.b16 %v8720
    %v9543 = vunpack.c.h.b16 %v8720
    %v9544 = vunpack.c.l.b16 %v8721
    %v9545 = vunpack.c.h.b16 %v8721
    %v9546 = vunpack.c.l.b16 %v8722
    %v9547 = vunpack.c.h.b16 %v8722
    %v9548 = vunpack.c.l.b16 %v8723
    %v9549 = vunpack.c.h.b16 %v8723
    %v9550 = vunpack.c.l.b16 %v8724
    %v9551 = vunpack.c.h.b16 %v8724
    %v9552 = vunpack.c.l.b16 %v8725
    %v9553 = vunpack.c.h.b16 %v8725
    %v9554 = vunpack.c.l.b16 %v8726
    %v9555 = vunpack.c.h.b16 %v8726
    %v9556 = vunpack.c.l.b16 %v8727
    %v9557 = vunpack.c.h.b16 %v8727
    %v9558 = vunpack.c.l.b16 %v8728
    %v9559 = vunpack.c.h.b16 %v8728
    %v9560 = vunpack.c.l.b16 %v8729
    %v9561 = vunpack.c.h.b16 %v8729
    %v9562 = vunpack.c.l.b16 %v8730
    %v9563 = vunpack.c.h.b16 %v8730
    %v9564 = vunpack.c.l.b16 %v8731
    %v9565 = vunpack.c.h.b16 %v8731
    %v9566 = vunpack.c.l.b16 %v8732
    %v9567 = vunpack.c.h.b16 %v8732
    %v9568 = vunpack.c.l.b16 %v8733
    %v9569 = vunpack.c.h.b16 %v8733
    %v9570 = vunpack.c.l.b16 %v8734
    %v9571 = vunpack.c.h.b16 %v8734
    %v9572 = vunpack.c.l.b16 %v8735
    %v9573 = vunpack.c.h.b16 %v8735
    %v9574 = vunpack.c.l.b16 %v8736
    %v9575 = vunpack.c.h.b16 %v8736
    %v9576 = vunpack.c.l.b16 %v8737
    %v9577 = vunpack.c.h.b16 %v8737
    %v9578 = vunpack.c.l.b16 %v8738
    %v9579 = vunpack.c.h.b16 %v8738
    %v9580 = vunpack.c.l.b16 %v8739
    %v9581 = vunpack.c.h.b16 %v8739
    %v9582 = vunpack.c.l.b16 %v8740
    %v9583 = vunpack.c.h.b16 %v8740
    %v9584 = vunpack.c.l.b16 %v8741
    %v9585 = vunpack.c.h.b16 %v8741
    %v9586 = vunpack.c.l.b16 %v8742
    %v9587 = vunpack.c.h.b16 %v8742
    %v9588 = vunpack.c.l.b16 %v8743
    %v9589 = vunpack.c.h.b16 %v8743
    %v9590 = vunpack.c.l.b16 %v8744
    %v9591 = vunpack.c.h.b16 %v8744
    %v9592 = vunpack.c.l.b16 %v8745
    %v9593 = vunpack.c.h.b16 %v8745
    %v9594 = vunpack.c.l.b16 %v8746
    %v9595 = vunpack.c.h.b16 %v8746
    %v9596 = vpack.c.b16 %v9088, %v9084
    %v9597 = vpack.c.b16 %v9089, %v9085
    %v9598 = vpack.c.b16 %v9090, %v9086
    %v9599 = vpack.c.b16 %v9091, %v9087
    %v9600 = vpack.c.b16 %v9096, %v9092
    %v9601 = vpack.c.b16 %v9097, %v9093
    %v9602 = vpack.c.b16 %v9098, %v9094
    %v9603 = vpack.c.b16 %v9099, %v9095
    %v9604 = vpack.c.b16 %v9104, %v9100
    %v9605 = vpack.c.b16 %v9105, %v9101
    %v9606 = vpack.c.b16 %v9106, %v9102
    %v9607 = vpack.c.b16 %v9107, %v9103
    %v9608 = vpack.c.b16 %v9112, %v9108
    %v9609 = vpack.c.b16 %v9113, %v9109
    %v9610 = vpack.c.b16 %v9114, %v9110
    %v9611 = vpack.c.b16 %v9115, %v9111
    %v9612 = vpack.c.b16 %v9120, %v9116
    %v9613 = vpack.c.b16 %v9121, %v9117
    %v9614 = vpack.c.b16 %v9122, %v9118
    %v9615 = vpack.c.b16 %v9123, %v9119
    %v9616 = vpack.c.b16 %v9128, %v9124
    %v9617 = vpack.c.b16 %v9129, %v9125
    %v9618 = vpack.c.b16 %v9130, %v9126
    %v9619 = vpack.c.b16 %v9131, %v9127
    %v9620 = vpack.c.b16 %v9136, %v9132
    %v9621 = vpack.c.b16 %v9137, %v9133
    %v9622 = vpack.c.b16 %v9138, %v9134
    %v9623 = vpack.c.b16 %v9139, %v9135
    %v9624 = vpack.c.b16 %v9144, %v9140
    %v9625 = vpack.c.b16 %v9145, %v9141
    %v9626 = vpack.c.b16 %v9146, %v9142
    %v9627 = vpack.c.b16 %v9147, %v9143
    %v9628 = vpack.c.b16 %v9152, %v9148
    %v9629 = vpack.c.b16 %v9153, %v9149
    %v9630 = vpack.c.b16 %v9154, %v9150
    %v9631 = vpack.c.b16 %v9155, %v9151
    %v9632 = vpack.c.b16 %v9160, %v9156
    %v9633 = vpack.c.b16 %v9161, %v9157
    %v9634 = vpack.c.b16 %v9162, %v9158
    %v9635 = vpack.c.b16 %v9163, %v9159
    %v9636 = vpack.c.b16 %v9168, %v9164
    %v9637 = vpack.c.b16 %v9169, %v9165
    %v9638 = vpack.c.b16 %v9170, %v9166
    %v9639 = vpack.c.b16 %v9171, %v9167
    %v9640 = vpack.c.b16 %v9176, %v9172
    %v9641 = vpack.c.b16 %v9177, %v9173
    %v9642 = vpack.c.b16 %v9178, %v9174
    %v9643 = vpack.c.b16 %v9179, %v9175
    %v9644 = vpack.c.b16 %v9184, %v9180
    %v9645 = vpack.c.b16 %v9185, %v9181
    %v9646 = vpack.c.b16 %v9186, %v9182
    %v9647 = vpack.c.b16 %v9187, %v9183
    %v9648 = vpack.c.b16 %v9192, %v9188
    %v9649 = vpack.c.b16 %v9193, %v9189
    %v9650 = vpack.c.b16 %v9194, %v9190
    %v9651 = vpack.c.b16 %v9195, %v9191
    %v9652 = vpack.c.b16 %v9200, %v9196
    %v9653 = vpack.c.b16 %v9201, %v9197
    %v9654 = vpack.c.b16 %v9202, %v9198
    %v9655 = vpack.c.b16 %v9203, %v9199
    %v9656 = vpack.c.b16 %v9208, %v9204
    %v9657 = vpack.c.b16 %v9209, %v9205
    %v9658 = vpack.c.b16 %v9210, %v9206
    %v9659 = vpack.c.b16 %v9211, %v9207
    %v9660 = vpack.c.b16 %v9216, %v9212
    %v9661 = vpack.c.b16 %v9217, %v9213
    %v9662 = vpack.c.b16 %v9218, %v9214
    %v9663 = vpack.c.b16 %v9219, %v9215
    %v9664 = vpack.c.b16 %v9224, %v9220
    %v9665 = vpack.c.b16 %v9225, %v9221
    %v9666 = vpack.c.b16 %v9226, %v9222
    %v9667 = vpack.c.b16 %v9227, %v9223
    %v9668 = vpack.c.b16 %v9232, %v9228
    %v9669 = vpack.c.b16 %v9233, %v9229
    %v9670 = vpack.c.b16 %v9234, %v9230
    %v9671 = vpack.c.b16 %v9235, %v9231
    %v9672 = vpack.c.b16 %v9240, %v9236
    %v9673 = vpack.c.b16 %v9241, %v9237
    %v9674 = vpack.c.b16 %v9242, %v9238
    %v9675 = vpack.c.b16 %v9243, %v9239
    %v9676 = vpack.c.b16 %v9248, %v9244
    %v9677 = vpack.c.b16 %v9249, %v9245
    %v9678 = vpack.c.b16 %v9250, %v9246
    %v9679 = vpack.c.b16 %v9251, %v9247
    %v9680 = vpack.c.b16 %v9256, %v9252
    %v9681 = vpack.c.b16 %v9257, %v9253
    %v9682 = vpack.c.b16 %v9258, %v9254
    %v9683 = vpack.c.b16 %v9259, %v9255
    %v9684 = vpack.c.b16 %v9264, %v9260
    %v9685 = vpack.c.b16 %v9265, %v9261
    %v9686 = vpack.c.b16 %v9266, %v9262
    %v9687 = vpack.c.b16 %v9267, %v9263
    %v9688 = vpack.c.b16 %v9272, %v9268
    %v9689 = vpack.c.b16 %v9273, %v9269
    %v9690 = vpack.c.b16 %v9274, %v9270
    %v9691 = vpack.c.b16 %v9275, %v9271
    %v9692 = vpack.c.b16 %v9280, %v9276
    %v9693 = vpack.c.b16 %v9281, %v9277
    %v9694 = vpack.c.b16 %v9282, %v9278
    %v9695 = vpack.c.b16 %v9283, %v9279
    %v9696 = vpack.c.b16 %v9288, %v9284
    %v9697 = vpack.c.b16 %v9289, %v9285
    %v9698 = vpack.c.b16 %v9290, %v9286
    %v9699 = vpack.c.b16 %v9291, %v9287
    %v9700 = vpack.c.b16 %v9296, %v9292
    %v9701 = vpack.c.b16 %v9297, %v9293
    %v9702 = vpack.c.b16 %v9298, %v9294
    %v9703 = vpack.c.b16 %v9299, %v9295
    %v9704 = vpack.c.b16 %v9304, %v9300
    %v9705 = vpack.c.b16 %v9305, %v9301
    %v9706 = vpack.c.b16 %v9306, %v9302
    %v9707 = vpack.c.b16 %v9307, %v9303
    %v9708 = vpack.c.b16 %v9312, %v9308
    %v9709 = vpack.c.b16 %v9313, %v9309
    %v9710 = vpack.c.b16 %v9314, %v9310
    %v9711 = vpack.c.b16 %v9315, %v9311
    %v9712 = vpack.c.b16 %v9320, %v9316
    %v9713 = vpack.c.b16 %v9321, %v9317
    %v9714 = vpack.c.b16 %v9322, %v9318
    %v9715 = vpack.c.b16 %v9323, %v9319
    %v9716 = vpack.c.b16 %v9328, %v9324
    %v9717 = vpack.c.b16 %v9329, %v9325
    %v9718 = vpack.c.b16 %v9330, %v9326
    %v9719 = vpack.c.b16 %v9331, %v9327
    %v9720 = vpack.c.b16 %v9336, %v9332
    %v9721 = vpack.c.b16 %v9337, %v9333
    %v9722 = vpack.c.b16 %v9338, %v9334
    %v9723 = vpack.c.b16 %v9339, %v9335
    %v9724 = vpack.c.b16 %v9344, %v9340
    %v9725 = vpack.c.b16 %v9345, %v9341
    %v9726 = vpack.c.b16 %v9346, %v9342
    %v9727 = vpack.c.b16 %v9347, %v9343
    %v9728 = vpack.c.b16 %v9352, %v9348
    %v9729 = vpack.c.b16 %v9353, %v9349
    %v9730 = vpack.c.b16 %v9354, %v9350
    %v9731 = vpack.c.b16 %v9355, %v9351
    %v9732 = vpack.c.b16 %v9360, %v9356
    %v9733 = vpack.c.b16 %v9361, %v9357
    %v9734 = vpack.c.b16 %v9362, %v9358
    %v9735 = vpack.c.b16 %v9363, %v9359
    %v9736 = vpack.c.b16 %v9368, %v9364
    %v9737 = vpack.c.b16 %v9369, %v9365
    %v9738 = vpack.c.b16 %v9370, %v9366
    %v9739 = vpack.c.b16 %v9371, %v9367
    %v9740 = vpack.c.b16 %v9376, %v9372
    %v9741 = vpack.c.b16 %v9377, %v9373
    %v9742 = vpack.c.b16 %v9378, %v9374
    %v9743 = vpack.c.b16 %v9379, %v9375
    %v9744 = vpack.c.b16 %v9384, %v9380
    %v9745 = vpack.c.b16 %v9385, %v9381
    %v9746 = vpack.c.b16 %v9386, %v9382
    %v9747 = vpack.c.b16 %v9387, %v9383
    %v9748 = vpack.c.b16 %v9392, %v9388
    %v9749 = vpack.c.b16 %v9393, %v9389
    %v9750 = vpack.c.b16 %v9394, %v9390
    %v9751 = vpack.c.b16 %v9395, %v9391
    %v9752 = vpack.c.b16 %v9400, %v9396
    %v9753 = vpack.c.b16 %v9401, %v9397
    %v9754 = vpack.c.b16 %v9402, %v9398
    %v9755 = vpack.c.b16 %v9403, %v9399
    %v9756 = vpack.c.b16 %v9408, %v9404
    %v9757 = vpack.c.b16 %v9409, %v9405
    %v9758 = vpack.c.b16 %v9410, %v9406
    %v9759 = vpack.c.b16 %v9411, %v9407
    %v9760 = vpack.c.b16 %v9416, %v9412
    %v9761 = vpack.c.b16 %v9417, %v9413
    %v9762 = vpack.c.b16 %v9418, %v9414
    %v9763 = vpack.c.b16 %v9419, %v9415
    %v9764 = vpack.c.b16 %v9424, %v9420
    %v9765 = vpack.c.b16 %v9425, %v9421
    %v9766 = vpack.c.b16 %v9426, %v9422
    %v9767 = vpack.c.b16 %v9427, %v9423
    %v9768 = vpack.c.b16 %v9432, %v9428
    %v9769 = vpack.c.b16 %v9433, %v9429
    %v9770 = vpack.c.b16 %v9434, %v9430
    %v9771 = vpack.c.b16 %v9435, %v9431
    %v9772 = vpack.c.b16 %v9440, %v9436
    %v9773 = vpack.c.b16 %v9441, %v9437
    %v9774 = vpack.c.b16 %v9442, %v9438
    %v9775 = vpack.c.b16 %v9443, %v9439
    %v9776 = vpack.c.b16 %v9448, %v9444
    %v9777 = vpack.c.b16 %v9449, %v9445
    %v9778 = vpack.c.b16 %v9450, %v9446
    %v9779 = vpack.c.b16 %v9451, %v9447
    %v9780 = vpack.c.b16 %v9456, %v9452
    %v9781 = vpack.c.b16 %v9457, %v9453
    %v9782 = vpack.c.b16 %v9458, %v9454
    %v9783 = vpack.c.b16 %v9459, %v9455
    %v9784 = vpack.c.b16 %v9464, %v9460
    %v9785 = vpack.c.b16 %v9465, %v9461
    %v9786 = vpack.c.b16 %v9466, %v9462
    %v9787 = vpack.c.b16 %v9467, %v9463
    %v9788 = vpack.c.b16 %v9472, %v9468
    %v9789 = vpack.c.b16 %v9473, %v9469
    %v9790 = vpack.c.b16 %v9474, %v9470
    %v9791 = vpack.c.b16 %v9475, %v9471
    %v9792 = vpack.c.b16 %v9480, %v9476
    %v9793 = vpack.c.b16 %v9481, %v9477
    %v9794 = vpack.c.b16 %v9482, %v9478
    %v9795 = vpack.c.b16 %v9483, %v9479
    %v9796 = vpack.c.b16 %v9488, %v9484
    %v9797 = vpack.c.b16 %v9489, %v9485
    %v9798 = vpack.c.b16 %v9490, %v9486
    %v9799 = vpack.c.b16 %v9491, %v9487
    %v9800 = vpack.c.b16 %v9496, %v9492
    %v9801 = vpack.c.b16 %v9497, %v9493
    %v9802 = vpack.c.b16 %v9498, %v9494
    %v9803 = vpack.c.b16 %v9499, %v9495
    %v9804 = vpack.c.b16 %v9504, %v9500
    %v9805 = vpack.c.b16 %v9505, %v9501
    %v9806 = vpack.c.b16 %v9506, %v9502
    %v9807 = vpack.c.b16 %v9507, %v9503
    %v9808 = vpack.c.b16 %v9512, %v9508
    %v9809 = vpack.c.b16 %v9513, %v9509
    %v9810 = vpack.c.b16 %v9514, %v9510
    %v9811 = vpack.c.b16 %v9515, %v9511
    %v9812 = vpack.c.b16 %v9520, %v9516
    %v9813 = vpack.c.b16 %v9521, %v9517
    %v9814 = vpack.c.b16 %v9522, %v9518
    %v9815 = vpack.c.b16 %v9523, %v9519
    %v9816 = vpack.c.b16 %v9528, %v9524
    %v9817 = vpack.c.b16 %v9529, %v9525
    %v9818 = vpack.c.b16 %v9530, %v9526
    %v9819 = vpack.c.b16 %v9531, %v9527
    %v9820 = vpack.c.b16 %v9536, %v9532
    %v9821 = vpack.c.b16 %v9537, %v9533
    %v9822 = vpack.c.b16 %v9538, %v9534
    %v9823 = vpack.c.b16 %v9539, %v9535
    %v9824 = vpack.c.b16 %v9544, %v9540
    %v9825 = vpack.c.b16 %v9545, %v9541
    %v9826 = vpack.c.b16 %v9546, %v9542
    %v9827 = vpack.c.b16 %v9547, %v9543
    %v9828 = vpack.c.b16 %v9552, %v9548
    %v9829 = vpack.c.b16 %v9553, %v9549
    %v9830 = vpack.c.b16 %v9554, %v9550
    %v9831 = vpack.c.b16 %v9555, %v9551
    %v9832 = vpack.c.b16 %v9560, %v9556
    %v9833 = vpack.c.b16 %v9561, %v9557
    %v9834 = vpack.c.b16 %v9562, %v9558
    %v9835 = vpack.c.b16 %v9563, %v9559
    %v9836 = vpack.c.b16 %v9568, %v9564
    %v9837 = vpack.c.b16 %v9569, %v9565
    %v9838 = vpack.c.b16 %v9570, %v9566
    %v9839 = vpack.c.b16 %v9571, %v9567
    %v9840 = vpack.c.b16 %v9576, %v9572
    %v9841 = vpack.c.b16 %v9577, %v9573
    %v9842 = vpack.c.b16 %v9578, %v9574
    %v9843 = vpack.c.b16 %v9579, %v9575
    %v9844 = vpack.c.b16 %v9584, %v9580
    %v9845 = vpack.c.b16 %v9585, %v9581
    %v9846 = vpack.c.b16 %v9586, %v9582
    %v9847 = vpack.c.b16 %v9587, %v9583
    %v9848 = vpack.c.b16 %v9592, %v9588
    %v9849 = vpack.c.b16 %v9593, %v9589
    %v9850 = vpack.c.b16 %v9594, %v9590
    %v9851 = vpack.c.b16 %v9595, %v9591
    %10108 = vmatprep.subr.bf16.mxu0 %v9625
    %10109 = vmatpush1.bf16.msra.mxu0 %v9624
    %10110 = vmatprep.subr.bf16.mxu0 %v9621
    %10111 = vmatpush1.bf16.msra.mxu0 %v9620
    %10112 = vmatprep.subr.bf16.mxu0 %v9617
    %10113 = vmatpush1.bf16.msra.mxu0 %v9616
    %10114 = vmatprep.subr.bf16.mxu0 %v9613
    %10115 = vmatpush1.bf16.msra.mxu0 %v9612
    %10116 = vmatprep.subr.bf16.mxu0 %v9609
    %10117 = vmatpush1.bf16.msra.mxu0 %v9608
    %10118 = vmatprep.subr.bf16.mxu0 %v9605
    %10119 = vmatpush1.bf16.msra.mxu0 %v9604
    %10120 = vmatprep.subr.bf16.mxu0 %v9601
    %10121 = vmatpush1.bf16.msra.mxu0 %v9600
    %10122 = vmatprep.subr.bf16.mxu0 %v9597
    %10123 = vmatpush1.bf16.msra.mxu0 %v9596
    %10124 = vmatprep.subr.bf16.mxu0 %v9657
    %10125 = vmatpush2.bf16.msra.mxu0 %v9656
    %10126 = vmatprep.subr.bf16.mxu0 %v9653
    %10127 = vmatpush2.bf16.msra.mxu0 %v9652
    %10128 = vmatprep.subr.bf16.mxu0 %v9649
    %10129 = vmatpush2.bf16.msra.mxu0 %v9648
    %10130 = vmatprep.subr.bf16.mxu0 %v9645
    %10131 = vmatpush2.bf16.msra.mxu0 %v9644
    %10132 = vmatprep.subr.bf16.mxu0 %v9641
    %10133 = vmatpush2.bf16.msra.mxu0 %v9640
    %10134 = vmatprep.subr.bf16.mxu0 %v9637
    %10135 = vmatpush2.bf16.msra.mxu0 %v9636
    %10136 = vmatprep.subr.bf16.mxu0 %v9633
    %10137 = vmatpush2.bf16.msra.mxu0 %v9632
    %10138 = vmatprep.subr.bf16.mxu0 %v9629
    %10139 = vmatpush2.bf16.msra.mxu0 %v9628
    %10140 = vmatprep.mubr.bf16.mxu0 %v8808
    %10141 = vmatmul.mubr.bf16.gmra.mxu0 %v8794
    %v10142 = vpop.f32.mrf.mxu0
    %v10143 = vadd.f32 %v8753, %v10142
    %v10144 = vpop.f32.mrf.mxu0
    %v10145 = vadd.f32 %v8757, %v10144
    %v10146 = vpop.f32.mrf.mxu0
    %v10147 = vpop.f32.mrf.mxu0
    %10148 = vdwg.mxu0
    %10149 = vmatprep.subr.bf16.mxu0 %v9689
    %10150 = vmatpush1.bf16.msra.mxu0 %v9688
    %10151 = vmatprep.subr.bf16.mxu0 %v9685
    %10152 = vmatpush1.bf16.msra.mxu0 %v9684
    %10153 = vmatprep.subr.bf16.mxu0 %v9681
    %10154 = vmatpush1.bf16.msra.mxu0 %v9680
    %10155 = vmatprep.subr.bf16.mxu0 %v9677
    %10156 = vmatpush1.bf16.msra.mxu0 %v9676
    %10157 = vmatprep.subr.bf16.mxu0 %v9673
    %10158 = vmatpush1.bf16.msra.mxu0 %v9672
    %10159 = vmatprep.subr.bf16.mxu0 %v9669
    %10160 = vmatpush1.bf16.msra.mxu0 %v9668
    %10161 = vmatprep.subr.bf16.mxu0 %v9665
    %10162 = vmatpush1.bf16.msra.mxu0 %v9664
    %10163 = vmatprep.subr.bf16.mxu0 %v9661
    %10164 = vmatpush1.bf16.msra.mxu0 %v9660
    %10165 = vmatprep.subr.bf16.mxu0 %v9721
    %10166 = vmatpush2.bf16.msra.mxu0 %v9720
    %10167 = vmatprep.subr.bf16.mxu0 %v9717
    %10168 = vmatpush2.bf16.msra.mxu0 %v9716
    %10169 = vmatprep.subr.bf16.mxu0 %v9713
    %10170 = vmatpush2.bf16.msra.mxu0 %v9712
    %10171 = vmatprep.subr.bf16.mxu0 %v9709
    %10172 = vmatpush2.bf16.msra.mxu0 %v9708
    %10173 = vmatprep.subr.bf16.mxu0 %v9705
    %10174 = vmatpush2.bf16.msra.mxu0 %v9704
    %10175 = vmatprep.subr.bf16.mxu0 %v9701
    %10176 = vmatpush2.bf16.msra.mxu0 %v9700
    %10177 = vmatprep.subr.bf16.mxu0 %v9697
    %10178 = vmatpush2.bf16.msra.mxu0 %v9696
    %10179 = vmatprep.subr.bf16.mxu0 %v9693
    %10180 = vmatpush2.bf16.msra.mxu0 %v9692
    %10181 = vmatprep.mubr.bf16.mxu0 %v8818
    %10182 = vmatmul.mubr.bf16.gmra.mxu0 %v8816
    %v10183 = vpop.f32.mrf.mxu0
    %v10184 = vadd.f32 %v10143, %v10183
    %v10185 = vpop.f32.mrf.mxu0
    %v10186 = vadd.f32 %v10145, %v10185
    %v10187 = vpop.f32.mrf.mxu0
    %v10188 = vpop.f32.mrf.mxu0
    %10189 = vdwg.mxu0
    %10190 = vmatprep.subr.bf16.mxu0 %v9753
    %10191 = vmatpush1.bf16.msra.mxu0 %v9752
    %10192 = vmatprep.subr.bf16.mxu0 %v9749
    %10193 = vmatpush1.bf16.msra.mxu0 %v9748
    %10194 = vmatprep.subr.bf16.mxu0 %v9745
    %10195 = vmatpush1.bf16.msra.mxu0 %v9744
    %10196 = vmatprep.subr.bf16.mxu0 %v9741
    %10197 = vmatpush1.bf16.msra.mxu0 %v9740
    %10198 = vmatprep.subr.bf16.mxu0 %v9737
    %10199 = vmatpush1.bf16.msra.mxu0 %v9736
    %10200 = vmatprep.subr.bf16.mxu0 %v9733
    %10201 = vmatpush1.bf16.msra.mxu0 %v9732
    %10202 = vmatprep.subr.bf16.mxu0 %v9729
    %10203 = vmatpush1.bf16.msra.mxu0 %v9728
    %10204 = vmatprep.subr.bf16.mxu0 %v9725
    %10205 = vmatpush1.bf16.msra.mxu0 %v9724
    %10206 = vmatprep.subr.bf16.mxu0 %v9785
    %10207 = vmatpush2.bf16.msra.mxu0 %v9784
    %10208 = vmatprep.subr.bf16.mxu0 %v9781
    %10209 = vmatpush2.bf16.msra.mxu0 %v9780
    %10210 = vmatprep.subr.bf16.mxu0 %v9777
    %10211 = vmatpush2.bf16.msra.mxu0 %v9776
    %10212 = vmatprep.subr.bf16.mxu0 %v9773
    %10213 = vmatpush2.bf16.msra.mxu0 %v9772
    %10214 = vmatprep.subr.bf16.mxu0 %v9769
    %10215 = vmatpush2.bf16.msra.mxu0 %v9768
    %10216 = vmatprep.subr.bf16.mxu0 %v9765
    %10217 = vmatpush2.bf16.msra.mxu0 %v9764
    %10218 = vmatprep.subr.bf16.mxu0 %v9761
    %10219 = vmatpush2.bf16.msra.mxu0 %v9760
    %10220 = vmatprep.subr.bf16.mxu0 %v9757
    %10221 = vmatpush2.bf16.msra.mxu0 %v9756
    %10222 = vmatprep.mubr.bf16.mxu0 %v8815
    %10223 = vmatmul.mubr.bf16.gmra.mxu0 %v8801
    %v10224 = vpop.f32.mrf.mxu0
    %v10225 = vadd.f32 %v10184, %v10224
    %v10226 = vpop.f32.mrf.mxu0
    %v10227 = vadd.f32 %v10186, %v10226
    %v10228 = vpop.f32.mrf.mxu0
    %v10229 = vpop.f32.mrf.mxu0
    %10230 = vdwg.mxu0
    %10231 = vmatprep.subr.bf16.mxu0 %v9817
    %10232 = vmatpush1.bf16.msra.mxu0 %v9816
    %10233 = vmatprep.subr.bf16.mxu0 %v9813
    %10234 = vmatpush1.bf16.msra.mxu0 %v9812
    %10235 = vmatprep.subr.bf16.mxu0 %v9809
    %10236 = vmatpush1.bf16.msra.mxu0 %v9808
    %10237 = vmatprep.subr.bf16.mxu0 %v9805
    %10238 = vmatpush1.bf16.msra.mxu0 %v9804
    %10239 = vmatprep.subr.bf16.mxu0 %v9801
    %10240 = vmatpush1.bf16.msra.mxu0 %v9800
    %10241 = vmatprep.subr.bf16.mxu0 %v9797
    %10242 = vmatpush1.bf16.msra.mxu0 %v9796
    %10243 = vmatprep.subr.bf16.mxu0 %v9793
    %10244 = vmatpush1.bf16.msra.mxu0 %v9792
    %10245 = vmatprep.subr.bf16.mxu0 %v9789
    %10246 = vmatpush1.bf16.msra.mxu0 %v9788
    %10247 = vmatprep.subr.bf16.mxu0 %v9849
    %10248 = vmatpush2.bf16.msra.mxu0 %v9848
    %10249 = vmatprep.subr.bf16.mxu0 %v9845
    %10250 = vmatpush2.bf16.msra.mxu0 %v9844
    %10251 = vmatprep.subr.bf16.mxu0 %v9841
    %10252 = vmatpush2.bf16.msra.mxu0 %v9840
    %10253 = vmatprep.subr.bf16.mxu0 %v9837
    %10254 = vmatpush2.bf16.msra.mxu0 %v9836
    %10255 = vmatprep.subr.bf16.mxu0 %v9833
    %10256 = vmatpush2.bf16.msra.mxu0 %v9832
    %10257 = vmatprep.subr.bf16.mxu0 %v9829
    %10258 = vmatpush2.bf16.msra.mxu0 %v9828
    %10259 = vmatprep.subr.bf16.mxu0 %v9825
    %10260 = vmatpush2.bf16.msra.mxu0 %v9824
    %10261 = vmatprep.subr.bf16.mxu0 %v9821
    %10262 = vmatpush2.bf16.msra.mxu0 %v9820
    %10263 = vmatprep.mubr.bf16.mxu0 %v8819
    %10264 = vmatmul.mubr.bf16.gmra.mxu0 %v8817
    %v10265 = vpop.f32.mrf.mxu0
    %v10266 = vadd.f32 %v10225, %v10265
    %v10267 = vpop.f32.mrf.mxu0
    %v10268 = vadd.f32 %v10227, %v10267
    %v10269 = vpop.f32.mrf.mxu0
    %v10270 = vpop.f32.mrf.mxu0
    %10271 = vdwg.mxu0
    %10272 = vmatprep.subr.bf16.mxu0 %v9627
    %10273 = vmatpush1.bf16.msra.mxu0 %v9626
    %10274 = vmatprep.subr.bf16.mxu0 %v9623
    %10275 = vmatpush1.bf16.msra.mxu0 %v9622
    %10276 = vmatprep.subr.bf16.mxu0 %v9619
    %10277 = vmatpush1.bf16.msra.mxu0 %v9618
    %10278 = vmatprep.subr.bf16.mxu0 %v9615
    %10279 = vmatpush1.bf16.msra.mxu0 %v9614
    %10280 = vmatprep.subr.bf16.mxu0 %v9611
    %10281 = vmatpush1.bf16.msra.mxu0 %v9610
    %10282 = vmatprep.subr.bf16.mxu0 %v9607
    %10283 = vmatpush1.bf16.msra.mxu0 %v9606
    %10284 = vmatprep.subr.bf16.mxu0 %v9603
    %10285 = vmatpush1.bf16.msra.mxu0 %v9602
    %10286 = vmatprep.subr.bf16.mxu0 %v9599
    %10287 = vmatpush1.bf16.msra.mxu0 %v9598
    %10288 = vmatprep.subr.bf16.mxu0 %v9659
    %10289 = vmatpush2.bf16.msra.mxu0 %v9658
    %10290 = vmatprep.subr.bf16.mxu0 %v9655
    %10291 = vmatpush2.bf16.msra.mxu0 %v9654
    %10292 = vmatprep.subr.bf16.mxu0 %v9651
    %10293 = vmatpush2.bf16.msra.mxu0 %v9650
    %10294 = vmatprep.subr.bf16.mxu0 %v9647
    %10295 = vmatpush2.bf16.msra.mxu0 %v9646
    %10296 = vmatprep.subr.bf16.mxu0 %v9643
    %10297 = vmatpush2.bf16.msra.mxu0 %v9642
    %10298 = vmatprep.subr.bf16.mxu0 %v9639
    %10299 = vmatpush2.bf16.msra.mxu0 %v9638
    %10300 = vmatprep.subr.bf16.mxu0 %v9635
    %10301 = vmatpush2.bf16.msra.mxu0 %v9634
    %10302 = vmatprep.subr.bf16.mxu0 %v9631
    %10303 = vmatpush2.bf16.msra.mxu0 %v9630
    %10304 = vmatprep.mubr.bf16.mxu0 %v8808
    %10305 = vmatmul.mubr.bf16.gmra.mxu0 %v8794
    %v10306 = vpop.f32.mrf.mxu0
    %v10307 = vadd.f32 %v8761, %v10306
    %v10308 = vpop.f32.mrf.mxu0
    %v10309 = vadd.f32 %v8765, %v10308
    %v10310 = vpop.f32.mrf.mxu0
    %v10311 = vpop.f32.mrf.mxu0
    %10312 = vdwg.mxu0
    %10313 = vmatprep.subr.bf16.mxu0 %v9691
    %10314 = vmatpush1.bf16.msra.mxu0 %v9690
    %10315 = vmatprep.subr.bf16.mxu0 %v9687
    %10316 = vmatpush1.bf16.msra.mxu0 %v9686
    %10317 = vmatprep.subr.bf16.mxu0 %v9683
    %10318 = vmatpush1.bf16.msra.mxu0 %v9682
    %10319 = vmatprep.subr.bf16.mxu0 %v9679
    %10320 = vmatpush1.bf16.msra.mxu0 %v9678
    %10321 = vmatprep.subr.bf16.mxu0 %v9675
    %10322 = vmatpush1.bf16.msra.mxu0 %v9674
    %10323 = vmatprep.subr.bf16.mxu0 %v9671
    %10324 = vmatpush1.bf16.msra.mxu0 %v9670
    %10325 = vmatprep.subr.bf16.mxu0 %v9667
    %10326 = vmatpush1.bf16.msra.mxu0 %v9666
    %10327 = vmatprep.subr.bf16.mxu0 %v9663
    %10328 = vmatpush1.bf16.msra.mxu0 %v9662
    %10329 = vmatprep.subr.bf16.mxu0 %v9723
    %10330 = vmatpush2.bf16.msra.mxu0 %v9722
    %10331 = vmatprep.subr.bf16.mxu0 %v9719
    %10332 = vmatpush2.bf16.msra.mxu0 %v9718
    %10333 = vmatprep.subr.bf16.mxu0 %v9715
    %10334 = vmatpush2.bf16.msra.mxu0 %v9714
    %10335 = vmatprep.subr.bf16.mxu0 %v9711
    %10336 = vmatpush2.bf16.msra.mxu0 %v9710
    %10337 = vmatprep.subr.bf16.mxu0 %v9707
    %10338 = vmatpush2.bf16.msra.mxu0 %v9706
    %10339 = vmatprep.subr.bf16.mxu0 %v9703
    %10340 = vmatpush2.bf16.msra.mxu0 %v9702
    %10341 = vmatprep.subr.bf16.mxu0 %v9699
    %10342 = vmatpush2.bf16.msra.mxu0 %v9698
    %10343 = vmatprep.subr.bf16.mxu0 %v9695
    %10344 = vmatpush2.bf16.msra.mxu0 %v9694
    %10345 = vmatprep.mubr.bf16.mxu0 %v8818
    %10346 = vmatmul.mubr.bf16.gmra.mxu0 %v8816
    %v10347 = vpop.f32.mrf.mxu0
    %v10348 = vadd.f32 %v10307, %v10347
    %v10349 = vpop.f32.mrf.mxu0
    %v10350 = vadd.f32 %v10309, %v10349
    %v10351 = vpop.f32.mrf.mxu0
    %v10352 = vpop.f32.mrf.mxu0
    %10353 = vdwg.mxu0
    %10354 = vmatprep.subr.bf16.mxu0 %v9755
    %10355 = vmatpush1.bf16.msra.mxu0 %v9754
    %10356 = vmatprep.subr.bf16.mxu0 %v9751
    %10357 = vmatpush1.bf16.msra.mxu0 %v9750
    %10358 = vmatprep.subr.bf16.mxu0 %v9747
    %10359 = vmatpush1.bf16.msra.mxu0 %v9746
    %10360 = vmatprep.subr.bf16.mxu0 %v9743
    %10361 = vmatpush1.bf16.msra.mxu0 %v9742
    %10362 = vmatprep.subr.bf16.mxu0 %v9739
    %10363 = vmatpush1.bf16.msra.mxu0 %v9738
    %10364 = vmatprep.subr.bf16.mxu0 %v9735
    %10365 = vmatpush1.bf16.msra.mxu0 %v9734
    %10366 = vmatprep.subr.bf16.mxu0 %v9731
    %10367 = vmatpush1.bf16.msra.mxu0 %v9730
    %10368 = vmatprep.subr.bf16.mxu0 %v9727
    %10369 = vmatpush1.bf16.msra.mxu0 %v9726
    %10370 = vmatprep.subr.bf16.mxu0 %v9787
    %10371 = vmatpush2.bf16.msra.mxu0 %v9786
    %10372 = vmatprep.subr.bf16.mxu0 %v9783
    %10373 = vmatpush2.bf16.msra.mxu0 %v9782
    %10374 = vmatprep.subr.bf16.mxu0 %v9779
    %10375 = vmatpush2.bf16.msra.mxu0 %v9778
    %10376 = vmatprep.subr.bf16.mxu0 %v9775
    %10377 = vmatpush2.bf16.msra.mxu0 %v9774
    %10378 = vmatprep.subr.bf16.mxu0 %v9771
    %10379 = vmatpush2.bf16.msra.mxu0 %v9770
    %10380 = vmatprep.subr.bf16.mxu0 %v9767
    %10381 = vmatpush2.bf16.msra.mxu0 %v9766
    %10382 = vmatprep.subr.bf16.mxu0 %v9763
    %10383 = vmatpush2.bf16.msra.mxu0 %v9762
    %10384 = vmatprep.subr.bf16.mxu0 %v9759
    %10385 = vmatpush2.bf16.msra.mxu0 %v9758
    %10386 = vmatprep.mubr.bf16.mxu0 %v8815
    %10387 = vmatmul.mubr.bf16.gmra.mxu0 %v8801
    %v10388 = vpop.f32.mrf.mxu0
    %v10389 = vadd.f32 %v10348, %v10388
    %v10390 = vpop.f32.mrf.mxu0
    %v10391 = vadd.f32 %v10350, %v10390
    %v10392 = vpop.f32.mrf.mxu0
    %v10393 = vpop.f32.mrf.mxu0
    %10394 = vdwg.mxu0
    %10395 = vmatprep.subr.bf16.mxu0 %v9819
    %10396 = vmatpush1.bf16.msra.mxu0 %v9818
    %10397 = vmatprep.subr.bf16.mxu0 %v9815
    %10398 = vmatpush1.bf16.msra.mxu0 %v9814
    %10399 = vmatprep.subr.bf16.mxu0 %v9811
    %10400 = vmatpush1.bf16.msra.mxu0 %v9810
    %10401 = vmatprep.subr.bf16.mxu0 %v9807
    %10402 = vmatpush1.bf16.msra.mxu0 %v9806
    %10403 = vmatprep.subr.bf16.mxu0 %v9803
    %10404 = vmatpush1.bf16.msra.mxu0 %v9802
    %10405 = vmatprep.subr.bf16.mxu0 %v9799
    %10406 = vmatpush1.bf16.msra.mxu0 %v9798
    %10407 = vmatprep.subr.bf16.mxu0 %v9795
    %10408 = vmatpush1.bf16.msra.mxu0 %v9794
    %10409 = vmatprep.subr.bf16.mxu0 %v9791
    %10410 = vmatpush1.bf16.msra.mxu0 %v9790
    %10411 = vmatprep.subr.bf16.mxu0 %v9851
    %10412 = vmatpush2.bf16.msra.mxu0 %v9850
    %10413 = vmatprep.subr.bf16.mxu0 %v9847
    %10414 = vmatpush2.bf16.msra.mxu0 %v9846
    %10415 = vmatprep.subr.bf16.mxu0 %v9843
    %10416 = vmatpush2.bf16.msra.mxu0 %v9842
    %10417 = vmatprep.subr.bf16.mxu0 %v9839
    %10418 = vmatpush2.bf16.msra.mxu0 %v9838
    %10419 = vmatprep.subr.bf16.mxu0 %v9835
    %10420 = vmatpush2.bf16.msra.mxu0 %v9834
    %10421 = vmatprep.subr.bf16.mxu0 %v9831
    %10422 = vmatpush2.bf16.msra.mxu0 %v9830
    %10423 = vmatprep.subr.bf16.mxu0 %v9827
    %10424 = vmatpush2.bf16.msra.mxu0 %v9826
    %10425 = vmatprep.subr.bf16.mxu0 %v9823
    %10426 = vmatpush2.bf16.msra.mxu0 %v9822
    %10427 = vmatprep.mubr.bf16.mxu0 %v8819
    %10428 = vmatmul.mubr.bf16.gmra.mxu0 %v8817
    %v10429 = vpop.f32.mrf.mxu0
    %v10430 = vadd.f32 %v10389, %v10429
    %v10431 = vpop.f32.mrf.mxu0
    %v10432 = vadd.f32 %v10391, %v10431
    %v10433 = vpop.f32.mrf.mxu0
    %v10434 = vpop.f32.mrf.mxu0
    %10435 = vdwg.mxu0
    %v10440 = vcombine.low %v10266, %v10268
    %v10441 = vcombine.low %v10430, %v10432
    %v10443 = vunpack.c.l.s4 1983009808
    %v10444 = vunpack.c.0.s8 %v10443
    %v10445 = vlaneseq
    %v10446 = vshrl.u32 %v10445, 7
    %v10447 = vsub.s32 %v10444, %v10446
    %v10448 = vrot.slane %v10440, %v10447
    %v10450 = vunpack.c.l.s4 1983009808
    %v10451 = vunpack.c.0.s8 %v10450
    %v10452 = vlaneseq
    %v10453 = vshrl.u32 %v10452, 7
    %v10454 = vsub.s32 %v10451, %v10453
    %v10455 = vrot.slane %v10441, %v10454
    %v10456 = vcombine.low %v10448, %v10455
    %10458 = vst [vmem:[#allocation8] sm:$0xff] %v10456
    %s10459 = sshll.u32 %s8488, 4
    %10460 = dma.done %s604, %s10459
    %v10461 = vld [vmem:[%s603] sm:$0xff]
    %v10462 = vld [vmem:[%s603 + $0x8] sm:$0xff]
    %v10463 = vld [vmem:[%s603 + $0x10] sm:$0xff]
    %v10464 = vld [vmem:[%s603 + $0x18] sm:$0xff]
    %v10465 = vld [vmem:[%s603 + $0x20] sm:$0xff]
    %v10466 = vld [vmem:[%s603 + $0x28] sm:$0xff]
    %v10467 = vld [vmem:[%s603 + $0x30] sm:$0xff]
    %v10468 = vld [vmem:[%s603 + $0x38] sm:$0xff]
    %v10469 = vld [vmem:[%s603 + $0x40] sm:$0xff]
    %v10470 = vld [vmem:[%s603 + $0x48] sm:$0xff]
    %v10471 = vld [vmem:[%s603 + $0x50] sm:$0xff]
    %v10472 = vld [vmem:[%s603 + $0x58] sm:$0xff]
    %v10473 = vld [vmem:[%s603 + $0x60] sm:$0xff]
    %v10474 = vld [vmem:[%s603 + $0x68] sm:$0xff]
    %v10475 = vld [vmem:[%s603 + $0x70] sm:$0xff]
    %v10476 = vld [vmem:[%s603 + $0x78] sm:$0xff]
    %v10477 = vld [vmem:[%s603 + $0x80] sm:$0xff]
    %v10478 = vld [vmem:[%s603 + $0x88] sm:$0xff]
    %v10479 = vld [vmem:[%s603 + $0x90] sm:$0xff]
    %v10480 = vld [vmem:[%s603 + $0x98] sm:$0xff]
    %v10481 = vld [vmem:[%s603 + $0xa0] sm:$0xff]
    %v10482 = vld [vmem:[%s603 + $0xa8] sm:$0xff]
    %v10483 = vld [vmem:[%s603 + $0xb0] sm:$0xff]
    %v10484 = vld [vmem:[%s603 + $0xb8] sm:$0xff]
    %v10485 = vld [vmem:[%s603 + $0xc0] sm:$0xff]
    %v10486 = vld [vmem:[%s603 + $0xc8] sm:$0xff]
    %v10487 = vld [vmem:[%s603 + $0xd0] sm:$0xff]
    %v10488 = vld [vmem:[%s603 + $0xd8] sm:$0xff]
    %v10489 = vld [vmem:[%s603 + $0xe0] sm:$0xff]
    %v10490 = vld [vmem:[%s603 + $0xe8] sm:$0xff]
    %v10491 = vld [vmem:[%s603 + $0xf0] sm:$0xff]
    %v10492 = vld [vmem:[%s603 + $0xf8] sm:$0xff]
    %v10493 = vld [vmem:[%s603 + $0x100] sm:$0xff]
    %v10494 = vld [vmem:[%s603 + $0x108] sm:$0xff]
    %v10495 = vld [vmem:[%s603 + $0x110] sm:$0xff]
    %v10496 = vld [vmem:[%s603 + $0x118] sm:$0xff]
    %v10497 = vld [vmem:[%s603 + $0x120] sm:$0xff]
    %v10498 = vld [vmem:[%s603 + $0x128] sm:$0xff]
    %v10499 = vld [vmem:[%s603 + $0x130] sm:$0xff]
    %v10500 = vld [vmem:[%s603 + $0x138] sm:$0xff]
    %v10501 = vld [vmem:[%s603 + $0x140] sm:$0xff]
    %v10502 = vld [vmem:[%s603 + $0x148] sm:$0xff]
    %v10503 = vld [vmem:[%s603 + $0x150] sm:$0xff]
    %v10504 = vld [vmem:[%s603 + $0x158] sm:$0xff]
    %v10505 = vld [vmem:[%s603 + $0x160] sm:$0xff]
    %v10506 = vld [vmem:[%s603 + $0x168] sm:$0xff]
    %v10507 = vld [vmem:[%s603 + $0x170] sm:$0xff]
    %v10508 = vld [vmem:[%s603 + $0x178] sm:$0xff]
    %v10509 = vld [vmem:[%s603 + $0x180] sm:$0xff]
    %v10510 = vld [vmem:[%s603 + $0x188] sm:$0xff]
    %v10511 = vld [vmem:[%s603 + $0x190] sm:$0xff]
    %v10512 = vld [vmem:[%s603 + $0x198] sm:$0xff]
    %v10513 = vld [vmem:[%s603 + $0x1a0] sm:$0xff]
    %v10514 = vld [vmem:[%s603 + $0x1a8] sm:$0xff]
    %v10515 = vld [vmem:[%s603 + $0x1b0] sm:$0xff]
    %v10516 = vld [vmem:[%s603 + $0x1b8] sm:$0xff]
    %v10517 = vld [vmem:[%s603 + $0x1c0] sm:$0xff]
    %v10518 = vld [vmem:[%s603 + $0x1c8] sm:$0xff]
    %v10519 = vld [vmem:[%s603 + $0x1d0] sm:$0xff]
    %v10520 = vld [vmem:[%s603 + $0x1d8] sm:$0xff]
    %v10521 = vld [vmem:[%s603 + $0x1e0] sm:$0xff]
    %v10522 = vld [vmem:[%s603 + $0x1e8] sm:$0xff]
    %v10523 = vld [vmem:[%s603 + $0x1f0] sm:$0xff]
    %v10524 = vld [vmem:[%s603 + $0x1f8] sm:$0xff]
    %v10525 = vld [vmem:[%s603 + $0x200] sm:$0xff]
    %v10526 = vld [vmem:[%s603 + $0x208] sm:$0xff]
    %v10527 = vld [vmem:[%s603 + $0x210] sm:$0xff]
    %v10528 = vld [vmem:[%s603 + $0x218] sm:$0xff]
    %v10529 = vld [vmem:[%s603 + $0x220] sm:$0xff]
    %v10530 = vld [vmem:[%s603 + $0x228] sm:$0xff]
    %v10531 = vld [vmem:[%s603 + $0x230] sm:$0xff]
    %v10532 = vld [vmem:[%s603 + $0x238] sm:$0xff]
    %v10533 = vld [vmem:[%s603 + $0x240] sm:$0xff]
    %v10534 = vld [vmem:[%s603 + $0x248] sm:$0xff]
    %v10535 = vld [vmem:[%s603 + $0x250] sm:$0xff]
    %v10536 = vld [vmem:[%s603 + $0x258] sm:$0xff]
    %v10537 = vld [vmem:[%s603 + $0x260] sm:$0xff]
    %v10538 = vld [vmem:[%s603 + $0x268] sm:$0xff]
    %v10539 = vld [vmem:[%s603 + $0x270] sm:$0xff]
    %v10540 = vld [vmem:[%s603 + $0x278] sm:$0xff]
    %v10541 = vld [vmem:[%s603 + $0x280] sm:$0xff]
    %v10542 = vld [vmem:[%s603 + $0x288] sm:$0xff]
    %v10543 = vld [vmem:[%s603 + $0x290] sm:$0xff]
    %v10544 = vld [vmem:[%s603 + $0x298] sm:$0xff]
    %v10545 = vld [vmem:[%s603 + $0x2a0] sm:$0xff]
    %v10546 = vld [vmem:[%s603 + $0x2a8] sm:$0xff]
    %v10547 = vld [vmem:[%s603 + $0x2b0] sm:$0xff]
    %v10548 = vld [vmem:[%s603 + $0x2b8] sm:$0xff]
    %v10549 = vld [vmem:[%s603 + $0x2c0] sm:$0xff]
    %v10550 = vld [vmem:[%s603 + $0x2c8] sm:$0xff]
    %v10551 = vld [vmem:[%s603 + $0x2d0] sm:$0xff]
    %v10552 = vld [vmem:[%s603 + $0x2d8] sm:$0xff]
    %v10553 = vld [vmem:[%s603 + $0x2e0] sm:$0xff]
    %v10554 = vld [vmem:[%s603 + $0x2e8] sm:$0xff]
    %v10555 = vld [vmem:[%s603 + $0x2f0] sm:$0xff]
    %v10556 = vld [vmem:[%s603 + $0x2f8] sm:$0xff]
    %v10557 = vld [vmem:[%s603 + $0x300] sm:$0xff]
    %v10558 = vld [vmem:[%s603 + $0x308] sm:$0xff]
    %v10559 = vld [vmem:[%s603 + $0x310] sm:$0xff]
    %v10560 = vld [vmem:[%s603 + $0x318] sm:$0xff]
    %v10561 = vld [vmem:[%s603 + $0x320] sm:$0xff]
    %v10562 = vld [vmem:[%s603 + $0x328] sm:$0xff]
    %v10563 = vld [vmem:[%s603 + $0x330] sm:$0xff]
    %v10564 = vld [vmem:[%s603 + $0x338] sm:$0xff]
    %v10565 = vld [vmem:[%s603 + $0x340] sm:$0xff]
    %v10566 = vld [vmem:[%s603 + $0x348] sm:$0xff]
    %v10567 = vld [vmem:[%s603 + $0x350] sm:$0xff]
    %v10568 = vld [vmem:[%s603 + $0x358] sm:$0xff]
    %v10569 = vld [vmem:[%s603 + $0x360] sm:$0xff]
    %v10570 = vld [vmem:[%s603 + $0x368] sm:$0xff]
    %v10571 = vld [vmem:[%s603 + $0x370] sm:$0xff]
    %v10572 = vld [vmem:[%s603 + $0x378] sm:$0xff]
    %v10573 = vld [vmem:[%s603 + $0x380] sm:$0xff]
    %v10574 = vld [vmem:[%s603 + $0x388] sm:$0xff]
    %v10575 = vld [vmem:[%s603 + $0x390] sm:$0xff]
    %v10576 = vld [vmem:[%s603 + $0x398] sm:$0xff]
    %v10577 = vld [vmem:[%s603 + $0x3a0] sm:$0xff]
    %v10578 = vld [vmem:[%s603 + $0x3a8] sm:$0xff]
    %v10579 = vld [vmem:[%s603 + $0x3b0] sm:$0xff]
    %v10580 = vld [vmem:[%s603 + $0x3b8] sm:$0xff]
    %v10581 = vld [vmem:[%s603 + $0x3c0] sm:$0xff]
    %v10582 = vld [vmem:[%s603 + $0x3c8] sm:$0xff]
    %v10583 = vld [vmem:[%s603 + $0x3d0] sm:$0xff]
    %v10584 = vld [vmem:[%s603 + $0x3d8] sm:$0xff]
    %v10585 = vld [vmem:[%s603 + $0x3e0] sm:$0xff]
    %v10586 = vld [vmem:[%s603 + $0x3e8] sm:$0xff]
    %v10587 = vld [vmem:[%s603 + $0x3f0] sm:$0xff]
    %v10588 = vld [vmem:[%s603 + $0x3f8] sm:$0xff]
    %v10589 = vld [vmem:[%s603 + $0x400] sm:$0xff]
    %v10590 = vld [vmem:[%s603 + $0x408] sm:$0xff]
    %v10591 = vld [vmem:[%s603 + $0x410] sm:$0xff]
    %v10592 = vld [vmem:[%s603 + $0x418] sm:$0xff]
    %v10593 = vld [vmem:[%s603 + $0x420] sm:$0xff]
    %v10594 = vld [vmem:[%s603 + $0x428] sm:$0xff]
    %v10595 = vld [vmem:[%s603 + $0x430] sm:$0xff]
    %v10596 = vld [vmem:[%s603 + $0x438] sm:$0xff]
    %v10597 = vld [vmem:[%s603 + $0x440] sm:$0xff]
    %v10598 = vld [vmem:[%s603 + $0x448] sm:$0xff]
    %v10599 = vld [vmem:[%s603 + $0x450] sm:$0xff]
    %v10600 = vld [vmem:[%s603 + $0x458] sm:$0xff]
    %v10601 = vld [vmem:[%s603 + $0x460] sm:$0xff]
    %v10602 = vld [vmem:[%s603 + $0x468] sm:$0xff]
    %v10603 = vld [vmem:[%s603 + $0x470] sm:$0xff]
    %v10604 = vld [vmem:[%s603 + $0x478] sm:$0xff]
    %v10605 = vld [vmem:[%s603 + $0x480] sm:$0xff]
    %v10606 = vld [vmem:[%s603 + $0x488] sm:$0xff]
    %v10607 = vld [vmem:[%s603 + $0x490] sm:$0xff]
    %v10608 = vld [vmem:[%s603 + $0x498] sm:$0xff]
    %v10609 = vld [vmem:[%s603 + $0x4a0] sm:$0xff]
    %v10610 = vld [vmem:[%s603 + $0x4a8] sm:$0xff]
    %v10611 = vld [vmem:[%s603 + $0x4b0] sm:$0xff]
    %v10612 = vld [vmem:[%s603 + $0x4b8] sm:$0xff]
    %v10613 = vld [vmem:[%s603 + $0x4c0] sm:$0xff]
    %v10614 = vld [vmem:[%s603 + $0x4c8] sm:$0xff]
    %v10615 = vld [vmem:[%s603 + $0x4d0] sm:$0xff]
    %v10616 = vld [vmem:[%s603 + $0x4d8] sm:$0xff]
    %v10617 = vld [vmem:[%s603 + $0x4e0] sm:$0xff]
    %v10618 = vld [vmem:[%s603 + $0x4e8] sm:$0xff]
    %v10619 = vld [vmem:[%s603 + $0x4f0] sm:$0xff]
    %v10620 = vld [vmem:[%s603 + $0x4f8] sm:$0xff]
    %v10621 = vld [vmem:[%s603 + $0x500] sm:$0xff]
    %v10622 = vld [vmem:[%s603 + $0x508] sm:$0xff]
    %v10623 = vld [vmem:[%s603 + $0x510] sm:$0xff]
    %v10624 = vld [vmem:[%s603 + $0x518] sm:$0xff]
    %v10625 = vld [vmem:[%s603 + $0x520] sm:$0xff]
    %v10626 = vld [vmem:[%s603 + $0x528] sm:$0xff]
    %v10627 = vld [vmem:[%s603 + $0x530] sm:$0xff]
    %v10628 = vld [vmem:[%s603 + $0x538] sm:$0xff]
    %v10629 = vld [vmem:[%s603 + $0x540] sm:$0xff]
    %v10630 = vld [vmem:[%s603 + $0x548] sm:$0xff]
    %v10631 = vld [vmem:[%s603 + $0x550] sm:$0xff]
    %v10632 = vld [vmem:[%s603 + $0x558] sm:$0xff]
    %v10633 = vld [vmem:[%s603 + $0x560] sm:$0xff]
    %v10634 = vld [vmem:[%s603 + $0x568] sm:$0xff]
    %v10635 = vld [vmem:[%s603 + $0x570] sm:$0xff]
    %v10636 = vld [vmem:[%s603 + $0x578] sm:$0xff]
    %v10637 = vld [vmem:[%s603 + $0x580] sm:$0xff]
    %v10638 = vld [vmem:[%s603 + $0x588] sm:$0xff]
    %v10639 = vld [vmem:[%s603 + $0x590] sm:$0xff]
    %v10640 = vld [vmem:[%s603 + $0x598] sm:$0xff]
    %v10641 = vld [vmem:[%s603 + $0x5a0] sm:$0xff]
    %v10642 = vld [vmem:[%s603 + $0x5a8] sm:$0xff]
    %v10643 = vld [vmem:[%s603 + $0x5b0] sm:$0xff]
    %v10644 = vld [vmem:[%s603 + $0x5b8] sm:$0xff]
    %v10645 = vld [vmem:[%s603 + $0x5c0] sm:$0xff]
    %v10646 = vld [vmem:[%s603 + $0x5c8] sm:$0xff]
    %v10647 = vld [vmem:[%s603 + $0x5d0] sm:$0xff]
    %v10648 = vld [vmem:[%s603 + $0x5d8] sm:$0xff]
    %v10649 = vld [vmem:[%s603 + $0x5e0] sm:$0xff]
    %v10650 = vld [vmem:[%s603 + $0x5e8] sm:$0xff]
    %v10651 = vld [vmem:[%s603 + $0x5f0] sm:$0xff]
    %v10652 = vld [vmem:[%s603 + $0x5f8] sm:$0xff]
    %v10653 = vld [vmem:[%s603 + $0x600] sm:$0xff]
    %v10654 = vld [vmem:[%s603 + $0x608] sm:$0xff]
    %v10655 = vld [vmem:[%s603 + $0x610] sm:$0xff]
    %v10656 = vld [vmem:[%s603 + $0x618] sm:$0xff]
    %v10657 = vld [vmem:[%s603 + $0x620] sm:$0xff]
    %v10658 = vld [vmem:[%s603 + $0x628] sm:$0xff]
    %v10659 = vld [vmem:[%s603 + $0x630] sm:$0xff]
    %v10660 = vld [vmem:[%s603 + $0x638] sm:$0xff]
    %v10661 = vld [vmem:[%s603 + $0x640] sm:$0xff]
    %v10662 = vld [vmem:[%s603 + $0x648] sm:$0xff]
    %v10663 = vld [vmem:[%s603 + $0x650] sm:$0xff]
    %v10664 = vld [vmem:[%s603 + $0x658] sm:$0xff]
    %v10665 = vld [vmem:[%s603 + $0x660] sm:$0xff]
    %v10666 = vld [vmem:[%s603 + $0x668] sm:$0xff]
    %v10667 = vld [vmem:[%s603 + $0x670] sm:$0xff]
    %v10668 = vld [vmem:[%s603 + $0x678] sm:$0xff]
    %v10669 = vld [vmem:[%s603 + $0x680] sm:$0xff]
    %v10670 = vld [vmem:[%s603 + $0x688] sm:$0xff]
    %v10671 = vld [vmem:[%s603 + $0x690] sm:$0xff]
    %v10672 = vld [vmem:[%s603 + $0x698] sm:$0xff]
    %v10673 = vld [vmem:[%s603 + $0x6a0] sm:$0xff]
    %v10674 = vld [vmem:[%s603 + $0x6a8] sm:$0xff]
    %v10675 = vld [vmem:[%s603 + $0x6b0] sm:$0xff]
    %v10676 = vld [vmem:[%s603 + $0x6b8] sm:$0xff]
    %v10677 = vld [vmem:[%s603 + $0x6c0] sm:$0xff]
    %v10678 = vld [vmem:[%s603 + $0x6c8] sm:$0xff]
    %v10679 = vld [vmem:[%s603 + $0x6d0] sm:$0xff]
    %v10680 = vld [vmem:[%s603 + $0x6d8] sm:$0xff]
    %v10681 = vld [vmem:[%s603 + $0x6e0] sm:$0xff]
    %v10682 = vld [vmem:[%s603 + $0x6e8] sm:$0xff]
    %v10683 = vld [vmem:[%s603 + $0x6f0] sm:$0xff]
    %v10684 = vld [vmem:[%s603 + $0x6f8] sm:$0xff]
    %v10685 = vld [vmem:[%s603 + $0x700] sm:$0xff]
    %v10686 = vld [vmem:[%s603 + $0x708] sm:$0xff]
    %v10687 = vld [vmem:[%s603 + $0x710] sm:$0xff]
    %v10688 = vld [vmem:[%s603 + $0x718] sm:$0xff]
    %v10689 = vld [vmem:[%s603 + $0x720] sm:$0xff]
    %v10690 = vld [vmem:[%s603 + $0x728] sm:$0xff]
    %v10691 = vld [vmem:[%s603 + $0x730] sm:$0xff]
    %v10692 = vld [vmem:[%s603 + $0x738] sm:$0xff]
    %v10693 = vld [vmem:[%s603 + $0x740] sm:$0xff]
    %v10694 = vld [vmem:[%s603 + $0x748] sm:$0xff]
    %v10695 = vld [vmem:[%s603 + $0x750] sm:$0xff]
    %v10696 = vld [vmem:[%s603 + $0x758] sm:$0xff]
    %v10697 = vld [vmem:[%s603 + $0x760] sm:$0xff]
    %v10698 = vld [vmem:[%s603 + $0x768] sm:$0xff]
    %v10699 = vld [vmem:[%s603 + $0x770] sm:$0xff]
    %v10700 = vld [vmem:[%s603 + $0x778] sm:$0xff]
    %v10701 = vld [vmem:[%s603 + $0x780] sm:$0xff]
    %v10702 = vld [vmem:[%s603 + $0x788] sm:$0xff]
    %v10703 = vld [vmem:[%s603 + $0x790] sm:$0xff]
    %v10704 = vld [vmem:[%s603 + $0x798] sm:$0xff]
    %v10705 = vld [vmem:[%s603 + $0x7a0] sm:$0xff]
    %v10706 = vld [vmem:[%s603 + $0x7a8] sm:$0xff]
    %v10707 = vld [vmem:[%s603 + $0x7b0] sm:$0xff]
    %v10708 = vld [vmem:[%s603 + $0x7b8] sm:$0xff]
    %v10709 = vld [vmem:[%s603 + $0x7c0] sm:$0xff]
    %v10710 = vld [vmem:[%s603 + $0x7c8] sm:$0xff]
    %v10711 = vld [vmem:[%s603 + $0x7d0] sm:$0xff]
    %v10712 = vld [vmem:[%s603 + $0x7d8] sm:$0xff]
    %v10713 = vld [vmem:[%s603 + $0x7e0] sm:$0xff]
    %v10714 = vld [vmem:[%s603 + $0x7e8] sm:$0xff]
    %v10715 = vld [vmem:[%s603 + $0x7f0] sm:$0xff]
    %v10716 = vld [vmem:[%s603 + $0x7f8] sm:$0xff]
    %s10717 = scalar_lea.vmem %s8, 36
    %v10718 = vld [vmem:[%s10717] ss:$8 sm:$0xf]
    %v10720 = vlaneseq
    %v10721 = vshrl.u32 %v10720, 7
    %v10722 = vsub.s32 0, %v10721
    %v10723 = vrot.slane %v10718, %v10722
    %v10724 = vlaneseq
    %v10725 = vshrl.u32 %v10724, 7
    %v10726 = vsub.s32 1, %v10725
    %v10727 = vrot.slane %v10718, %v10726
    %v10728 = vlaneseq
    %v10729 = vshrl.u32 %v10728, 7
    %v10730 = vsub.s32 2, %v10729
    %v10731 = vrot.slane %v10718, %v10730
    %v10732 = vlaneseq
    %v10733 = vshrl.u32 %v10732, 7
    %v10734 = vsub.s32 3, %v10733
    %v10735 = vrot.slane %v10718, %v10734
    %v10996 = vunpack.c.l.b16 %v10461
    %v10997 = vunpack.c.h.b16 %v10461
    %v10998 = vunpack.c.l.b16 %v10462
    %v10999 = vunpack.c.h.b16 %v10462
    %v11000 = vunpack.c.l.b16 %v10463
    %v11001 = vunpack.c.h.b16 %v10463
    %v11002 = vunpack.c.l.b16 %v10464
    %v11003 = vunpack.c.h.b16 %v10464
    %v11004 = vunpack.c.l.b16 %v10465
    %v11005 = vunpack.c.h.b16 %v10465
    %v11006 = vunpack.c.l.b16 %v10466
    %v11007 = vunpack.c.h.b16 %v10466
    %v11008 = vunpack.c.l.b16 %v10467
    %v11009 = vunpack.c.h.b16 %v10467
    %v11010 = vunpack.c.l.b16 %v10468
    %v11011 = vunpack.c.h.b16 %v10468
    %v11012 = vunpack.c.l.b16 %v10469
    %v11013 = vunpack.c.h.b16 %v10469
    %v11014 = vunpack.c.l.b16 %v10470
    %v11015 = vunpack.c.h.b16 %v10470
    %v11016 = vunpack.c.l.b16 %v10471
    %v11017 = vunpack.c.h.b16 %v10471
    %v11018 = vunpack.c.l.b16 %v10472
    %v11019 = vunpack.c.h.b16 %v10472
    %v11020 = vunpack.c.l.b16 %v10473
    %v11021 = vunpack.c.h.b16 %v10473
    %v11022 = vunpack.c.l.b16 %v10474
    %v11023 = vunpack.c.h.b16 %v10474
    %v11024 = vunpack.c.l.b16 %v10475
    %v11025 = vunpack.c.h.b16 %v10475
    %v11026 = vunpack.c.l.b16 %v10476
    %v11027 = vunpack.c.h.b16 %v10476
    %v11028 = vunpack.c.l.b16 %v10477
    %v11029 = vunpack.c.h.b16 %v10477
    %v11030 = vunpack.c.l.b16 %v10478
    %v11031 = vunpack.c.h.b16 %v10478
    %v11032 = vunpack.c.l.b16 %v10479
    %v11033 = vunpack.c.h.b16 %v10479
    %v11034 = vunpack.c.l.b16 %v10480
    %v11035 = vunpack.c.h.b16 %v10480
    %v11036 = vunpack.c.l.b16 %v10481
    %v11037 = vunpack.c.h.b16 %v10481
    %v11038 = vunpack.c.l.b16 %v10482
    %v11039 = vunpack.c.h.b16 %v10482
    %v11040 = vunpack.c.l.b16 %v10483
    %v11041 = vunpack.c.h.b16 %v10483
    %v11042 = vunpack.c.l.b16 %v10484
    %v11043 = vunpack.c.h.b16 %v10484
    %v11044 = vunpack.c.l.b16 %v10485
    %v11045 = vunpack.c.h.b16 %v10485
    %v11046 = vunpack.c.l.b16 %v10486
    %v11047 = vunpack.c.h.b16 %v10486
    %v11048 = vunpack.c.l.b16 %v10487
    %v11049 = vunpack.c.h.b16 %v10487
    %v11050 = vunpack.c.l.b16 %v10488
    %v11051 = vunpack.c.h.b16 %v10488
    %v11052 = vunpack.c.l.b16 %v10489
    %v11053 = vunpack.c.h.b16 %v10489
    %v11054 = vunpack.c.l.b16 %v10490
    %v11055 = vunpack.c.h.b16 %v10490
    %v11056 = vunpack.c.l.b16 %v10491
    %v11057 = vunpack.c.h.b16 %v10491
    %v11058 = vunpack.c.l.b16 %v10492
    %v11059 = vunpack.c.h.b16 %v10492
    %v11060 = vunpack.c.l.b16 %v10493
    %v11061 = vunpack.c.h.b16 %v10493
    %v11062 = vunpack.c.l.b16 %v10494
    %v11063 = vunpack.c.h.b16 %v10494
    %v11064 = vunpack.c.l.b16 %v10495
    %v11065 = vunpack.c.h.b16 %v10495
    %v11066 = vunpack.c.l.b16 %v10496
    %v11067 = vunpack.c.h.b16 %v10496
    %v11068 = vunpack.c.l.b16 %v10497
    %v11069 = vunpack.c.h.b16 %v10497
    %v11070 = vunpack.c.l.b16 %v10498
    %v11071 = vunpack.c.h.b16 %v10498
    %v11072 = vunpack.c.l.b16 %v10499
    %v11073 = vunpack.c.h.b16 %v10499
    %v11074 = vunpack.c.l.b16 %v10500
    %v11075 = vunpack.c.h.b16 %v10500
    %v11076 = vunpack.c.l.b16 %v10501
    %v11077 = vunpack.c.h.b16 %v10501
    %v11078 = vunpack.c.l.b16 %v10502
    %v11079 = vunpack.c.h.b16 %v10502
    %v11080 = vunpack.c.l.b16 %v10503
    %v11081 = vunpack.c.h.b16 %v10503
    %v11082 = vunpack.c.l.b16 %v10504
    %v11083 = vunpack.c.h.b16 %v10504
    %v11084 = vunpack.c.l.b16 %v10505
    %v11085 = vunpack.c.h.b16 %v10505
    %v11086 = vunpack.c.l.b16 %v10506
    %v11087 = vunpack.c.h.b16 %v10506
    %v11088 = vunpack.c.l.b16 %v10507
    %v11089 = vunpack.c.h.b16 %v10507
    %v11090 = vunpack.c.l.b16 %v10508
    %v11091 = vunpack.c.h.b16 %v10508
    %v11092 = vunpack.c.l.b16 %v10509
    %v11093 = vunpack.c.h.b16 %v10509
    %v11094 = vunpack.c.l.b16 %v10510
    %v11095 = vunpack.c.h.b16 %v10510
    %v11096 = vunpack.c.l.b16 %v10511
    %v11097 = vunpack.c.h.b16 %v10511
    %v11098 = vunpack.c.l.b16 %v10512
    %v11099 = vunpack.c.h.b16 %v10512
    %v11100 = vunpack.c.l.b16 %v10513
    %v11101 = vunpack.c.h.b16 %v10513
    %v11102 = vunpack.c.l.b16 %v10514
    %v11103 = vunpack.c.h.b16 %v10514
    %v11104 = vunpack.c.l.b16 %v10515
    %v11105 = vunpack.c.h.b16 %v10515
    %v11106 = vunpack.c.l.b16 %v10516
    %v11107 = vunpack.c.h.b16 %v10516
    %v11108 = vunpack.c.l.b16 %v10517
    %v11109 = vunpack.c.h.b16 %v10517
    %v11110 = vunpack.c.l.b16 %v10518
    %v11111 = vunpack.c.h.b16 %v10518
    %v11112 = vunpack.c.l.b16 %v10519
    %v11113 = vunpack.c.h.b16 %v10519
    %v11114 = vunpack.c.l.b16 %v10520
    %v11115 = vunpack.c.h.b16 %v10520
    %v11116 = vunpack.c.l.b16 %v10521
    %v11117 = vunpack.c.h.b16 %v10521
    %v11118 = vunpack.c.l.b16 %v10522
    %v11119 = vunpack.c.h.b16 %v10522
    %v11120 = vunpack.c.l.b16 %v10523
    %v11121 = vunpack.c.h.b16 %v10523
    %v11122 = vunpack.c.l.b16 %v10524
    %v11123 = vunpack.c.h.b16 %v10524
    %v11124 = vunpack.c.l.b16 %v10525
    %v11125 = vunpack.c.h.b16 %v10525
    %v11126 = vunpack.c.l.b16 %v10526
    %v11127 = vunpack.c.h.b16 %v10526
    %v11128 = vunpack.c.l.b16 %v10527
    %v11129 = vunpack.c.h.b16 %v10527
    %v11130 = vunpack.c.l.b16 %v10528
    %v11131 = vunpack.c.h.b16 %v10528
    %v11132 = vunpack.c.l.b16 %v10529
    %v11133 = vunpack.c.h.b16 %v10529
    %v11134 = vunpack.c.l.b16 %v10530
    %v11135 = vunpack.c.h.b16 %v10530
    %v11136 = vunpack.c.l.b16 %v10531
    %v11137 = vunpack.c.h.b16 %v10531
    %v11138 = vunpack.c.l.b16 %v10532
    %v11139 = vunpack.c.h.b16 %v10532
    %v11140 = vunpack.c.l.b16 %v10533
    %v11141 = vunpack.c.h.b16 %v10533
    %v11142 = vunpack.c.l.b16 %v10534
    %v11143 = vunpack.c.h.b16 %v10534
    %v11144 = vunpack.c.l.b16 %v10535
    %v11145 = vunpack.c.h.b16 %v10535
    %v11146 = vunpack.c.l.b16 %v10536
    %v11147 = vunpack.c.h.b16 %v10536
    %v11148 = vunpack.c.l.b16 %v10537
    %v11149 = vunpack.c.h.b16 %v10537
    %v11150 = vunpack.c.l.b16 %v10538
    %v11151 = vunpack.c.h.b16 %v10538
    %v11152 = vunpack.c.l.b16 %v10539
    %v11153 = vunpack.c.h.b16 %v10539
    %v11154 = vunpack.c.l.b16 %v10540
    %v11155 = vunpack.c.h.b16 %v10540
    %v11156 = vunpack.c.l.b16 %v10541
    %v11157 = vunpack.c.h.b16 %v10541
    %v11158 = vunpack.c.l.b16 %v10542
    %v11159 = vunpack.c.h.b16 %v10542
    %v11160 = vunpack.c.l.b16 %v10543
    %v11161 = vunpack.c.h.b16 %v10543
    %v11162 = vunpack.c.l.b16 %v10544
    %v11163 = vunpack.c.h.b16 %v10544
    %v11164 = vunpack.c.l.b16 %v10545
    %v11165 = vunpack.c.h.b16 %v10545
    %v11166 = vunpack.c.l.b16 %v10546
    %v11167 = vunpack.c.h.b16 %v10546
    %v11168 = vunpack.c.l.b16 %v10547
    %v11169 = vunpack.c.h.b16 %v10547
    %v11170 = vunpack.c.l.b16 %v10548
    %v11171 = vunpack.c.h.b16 %v10548
    %v11172 = vunpack.c.l.b16 %v10549
    %v11173 = vunpack.c.h.b16 %v10549
    %v11174 = vunpack.c.l.b16 %v10550
    %v11175 = vunpack.c.h.b16 %v10550
    %v11176 = vunpack.c.l.b16 %v10551
    %v11177 = vunpack.c.h.b16 %v10551
    %v11178 = vunpack.c.l.b16 %v10552
    %v11179 = vunpack.c.h.b16 %v10552
    %v11180 = vunpack.c.l.b16 %v10553
    %v11181 = vunpack.c.h.b16 %v10553
    %v11182 = vunpack.c.l.b16 %v10554
    %v11183 = vunpack.c.h.b16 %v10554
    %v11184 = vunpack.c.l.b16 %v10555
    %v11185 = vunpack.c.h.b16 %v10555
    %v11186 = vunpack.c.l.b16 %v10556
    %v11187 = vunpack.c.h.b16 %v10556
    %v11188 = vunpack.c.l.b16 %v10557
    %v11189 = vunpack.c.h.b16 %v10557
    %v11190 = vunpack.c.l.b16 %v10558
    %v11191 = vunpack.c.h.b16 %v10558
    %v11192 = vunpack.c.l.b16 %v10559
    %v11193 = vunpack.c.h.b16 %v10559
    %v11194 = vunpack.c.l.b16 %v10560
    %v11195 = vunpack.c.h.b16 %v10560
    %v11196 = vunpack.c.l.b16 %v10561
    %v11197 = vunpack.c.h.b16 %v10561
    %v11198 = vunpack.c.l.b16 %v10562
    %v11199 = vunpack.c.h.b16 %v10562
    %v11200 = vunpack.c.l.b16 %v10563
    %v11201 = vunpack.c.h.b16 %v10563
    %v11202 = vunpack.c.l.b16 %v10564
    %v11203 = vunpack.c.h.b16 %v10564
    %v11204 = vunpack.c.l.b16 %v10565
    %v11205 = vunpack.c.h.b16 %v10565
    %v11206 = vunpack.c.l.b16 %v10566
    %v11207 = vunpack.c.h.b16 %v10566
    %v11208 = vunpack.c.l.b16 %v10567
    %v11209 = vunpack.c.h.b16 %v10567
    %v11210 = vunpack.c.l.b16 %v10568
    %v11211 = vunpack.c.h.b16 %v10568
    %v11212 = vunpack.c.l.b16 %v10569
    %v11213 = vunpack.c.h.b16 %v10569
    %v11214 = vunpack.c.l.b16 %v10570
    %v11215 = vunpack.c.h.b16 %v10570
    %v11216 = vunpack.c.l.b16 %v10571
    %v11217 = vunpack.c.h.b16 %v10571
    %v11218 = vunpack.c.l.b16 %v10572
    %v11219 = vunpack.c.h.b16 %v10572
    %v11220 = vunpack.c.l.b16 %v10573
    %v11221 = vunpack.c.h.b16 %v10573
    %v11222 = vunpack.c.l.b16 %v10574
    %v11223 = vunpack.c.h.b16 %v10574
    %v11224 = vunpack.c.l.b16 %v10575
    %v11225 = vunpack.c.h.b16 %v10575
    %v11226 = vunpack.c.l.b16 %v10576
    %v11227 = vunpack.c.h.b16 %v10576
    %v11228 = vunpack.c.l.b16 %v10577
    %v11229 = vunpack.c.h.b16 %v10577
    %v11230 = vunpack.c.l.b16 %v10578
    %v11231 = vunpack.c.h.b16 %v10578
    %v11232 = vunpack.c.l.b16 %v10579
    %v11233 = vunpack.c.h.b16 %v10579
    %v11234 = vunpack.c.l.b16 %v10580
    %v11235 = vunpack.c.h.b16 %v10580
    %v11236 = vunpack.c.l.b16 %v10581
    %v11237 = vunpack.c.h.b16 %v10581
    %v11238 = vunpack.c.l.b16 %v10582
    %v11239 = vunpack.c.h.b16 %v10582
    %v11240 = vunpack.c.l.b16 %v10583
    %v11241 = vunpack.c.h.b16 %v10583
    %v11242 = vunpack.c.l.b16 %v10584
    %v11243 = vunpack.c.h.b16 %v10584
    %v11244 = vunpack.c.l.b16 %v10585
    %v11245 = vunpack.c.h.b16 %v10585
    %v11246 = vunpack.c.l.b16 %v10586
    %v11247 = vunpack.c.h.b16 %v10586
    %v11248 = vunpack.c.l.b16 %v10587
    %v11249 = vunpack.c.h.b16 %v10587
    %v11250 = vunpack.c.l.b16 %v10588
    %v11251 = vunpack.c.h.b16 %v10588
    %v11252 = vunpack.c.l.b16 %v10589
    %v11253 = vunpack.c.h.b16 %v10589
    %v11254 = vunpack.c.l.b16 %v10590
    %v11255 = vunpack.c.h.b16 %v10590
    %v11256 = vunpack.c.l.b16 %v10591
    %v11257 = vunpack.c.h.b16 %v10591
    %v11258 = vunpack.c.l.b16 %v10592
    %v11259 = vunpack.c.h.b16 %v10592
    %v11260 = vunpack.c.l.b16 %v10593
    %v11261 = vunpack.c.h.b16 %v10593
    %v11262 = vunpack.c.l.b16 %v10594
    %v11263 = vunpack.c.h.b16 %v10594
    %v11264 = vunpack.c.l.b16 %v10595
    %v11265 = vunpack.c.h.b16 %v10595
    %v11266 = vunpack.c.l.b16 %v10596
    %v11267 = vunpack.c.h.b16 %v10596
    %v11268 = vunpack.c.l.b16 %v10597
    %v11269 = vunpack.c.h.b16 %v10597
    %v11270 = vunpack.c.l.b16 %v10598
    %v11271 = vunpack.c.h.b16 %v10598
    %v11272 = vunpack.c.l.b16 %v10599
    %v11273 = vunpack.c.h.b16 %v10599
    %v11274 = vunpack.c.l.b16 %v10600
    %v11275 = vunpack.c.h.b16 %v10600
    %v11276 = vunpack.c.l.b16 %v10601
    %v11277 = vunpack.c.h.b16 %v10601
    %v11278 = vunpack.c.l.b16 %v10602
    %v11279 = vunpack.c.h.b16 %v10602
    %v11280 = vunpack.c.l.b16 %v10603
    %v11281 = vunpack.c.h.b16 %v10603
    %v11282 = vunpack.c.l.b16 %v10604
    %v11283 = vunpack.c.h.b16 %v10604
    %v11284 = vunpack.c.l.b16 %v10605
    %v11285 = vunpack.c.h.b16 %v10605
    %v11286 = vunpack.c.l.b16 %v10606
    %v11287 = vunpack.c.h.b16 %v10606
    %v11288 = vunpack.c.l.b16 %v10607
    %v11289 = vunpack.c.h.b16 %v10607
    %v11290 = vunpack.c.l.b16 %v10608
    %v11291 = vunpack.c.h.b16 %v10608
    %v11292 = vunpack.c.l.b16 %v10609
    %v11293 = vunpack.c.h.b16 %v10609
    %v11294 = vunpack.c.l.b16 %v10610
    %v11295 = vunpack.c.h.b16 %v10610
    %v11296 = vunpack.c.l.b16 %v10611
    %v11297 = vunpack.c.h.b16 %v10611
    %v11298 = vunpack.c.l.b16 %v10612
    %v11299 = vunpack.c.h.b16 %v10612
    %v11300 = vunpack.c.l.b16 %v10613
    %v11301 = vunpack.c.h.b16 %v10613
    %v11302 = vunpack.c.l.b16 %v10614
    %v11303 = vunpack.c.h.b16 %v10614
    %v11304 = vunpack.c.l.b16 %v10615
    %v11305 = vunpack.c.h.b16 %v10615
    %v11306 = vunpack.c.l.b16 %v10616
    %v11307 = vunpack.c.h.b16 %v10616
    %v11308 = vunpack.c.l.b16 %v10617
    %v11309 = vunpack.c.h.b16 %v10617
    %v11310 = vunpack.c.l.b16 %v10618
    %v11311 = vunpack.c.h.b16 %v10618
    %v11312 = vunpack.c.l.b16 %v10619
    %v11313 = vunpack.c.h.b16 %v10619
    %v11314 = vunpack.c.l.b16 %v10620
    %v11315 = vunpack.c.h.b16 %v10620
    %v11316 = vunpack.c.l.b16 %v10621
    %v11317 = vunpack.c.h.b16 %v10621
    %v11318 = vunpack.c.l.b16 %v10622
    %v11319 = vunpack.c.h.b16 %v10622
    %v11320 = vunpack.c.l.b16 %v10623
    %v11321 = vunpack.c.h.b16 %v10623
    %v11322 = vunpack.c.l.b16 %v10624
    %v11323 = vunpack.c.h.b16 %v10624
    %v11324 = vunpack.c.l.b16 %v10625
    %v11325 = vunpack.c.h.b16 %v10625
    %v11326 = vunpack.c.l.b16 %v10626
    %v11327 = vunpack.c.h.b16 %v10626
    %v11328 = vunpack.c.l.b16 %v10627
    %v11329 = vunpack.c.h.b16 %v10627
    %v11330 = vunpack.c.l.b16 %v10628
    %v11331 = vunpack.c.h.b16 %v10628
    %v11332 = vunpack.c.l.b16 %v10629
    %v11333 = vunpack.c.h.b16 %v10629
    %v11334 = vunpack.c.l.b16 %v10630
    %v11335 = vunpack.c.h.b16 %v10630
    %v11336 = vunpack.c.l.b16 %v10631
    %v11337 = vunpack.c.h.b16 %v10631
    %v11338 = vunpack.c.l.b16 %v10632
    %v11339 = vunpack.c.h.b16 %v10632
    %v11340 = vunpack.c.l.b16 %v10633
    %v11341 = vunpack.c.h.b16 %v10633
    %v11342 = vunpack.c.l.b16 %v10634
    %v11343 = vunpack.c.h.b16 %v10634
    %v11344 = vunpack.c.l.b16 %v10635
    %v11345 = vunpack.c.h.b16 %v10635
    %v11346 = vunpack.c.l.b16 %v10636
    %v11347 = vunpack.c.h.b16 %v10636
    %v11348 = vunpack.c.l.b16 %v10637
    %v11349 = vunpack.c.h.b16 %v10637
    %v11350 = vunpack.c.l.b16 %v10638
    %v11351 = vunpack.c.h.b16 %v10638
    %v11352 = vunpack.c.l.b16 %v10639
    %v11353 = vunpack.c.h.b16 %v10639
    %v11354 = vunpack.c.l.b16 %v10640
    %v11355 = vunpack.c.h.b16 %v10640
    %v11356 = vunpack.c.l.b16 %v10641
    %v11357 = vunpack.c.h.b16 %v10641
    %v11358 = vunpack.c.l.b16 %v10642
    %v11359 = vunpack.c.h.b16 %v10642
    %v11360 = vunpack.c.l.b16 %v10643
    %v11361 = vunpack.c.h.b16 %v10643
    %v11362 = vunpack.c.l.b16 %v10644
    %v11363 = vunpack.c.h.b16 %v10644
    %v11364 = vunpack.c.l.b16 %v10645
    %v11365 = vunpack.c.h.b16 %v10645
    %v11366 = vunpack.c.l.b16 %v10646
    %v11367 = vunpack.c.h.b16 %v10646
    %v11368 = vunpack.c.l.b16 %v10647
    %v11369 = vunpack.c.h.b16 %v10647
    %v11370 = vunpack.c.l.b16 %v10648
    %v11371 = vunpack.c.h.b16 %v10648
    %v11372 = vunpack.c.l.b16 %v10649
    %v11373 = vunpack.c.h.b16 %v10649
    %v11374 = vunpack.c.l.b16 %v10650
    %v11375 = vunpack.c.h.b16 %v10650
    %v11376 = vunpack.c.l.b16 %v10651
    %v11377 = vunpack.c.h.b16 %v10651
    %v11378 = vunpack.c.l.b16 %v10652
    %v11379 = vunpack.c.h.b16 %v10652
    %v11380 = vunpack.c.l.b16 %v10653
    %v11381 = vunpack.c.h.b16 %v10653
    %v11382 = vunpack.c.l.b16 %v10654
    %v11383 = vunpack.c.h.b16 %v10654
    %v11384 = vunpack.c.l.b16 %v10655
    %v11385 = vunpack.c.h.b16 %v10655
    %v11386 = vunpack.c.l.b16 %v10656
    %v11387 = vunpack.c.h.b16 %v10656
    %v11388 = vunpack.c.l.b16 %v10657
    %v11389 = vunpack.c.h.b16 %v10657
    %v11390 = vunpack.c.l.b16 %v10658
    %v11391 = vunpack.c.h.b16 %v10658
    %v11392 = vunpack.c.l.b16 %v10659
    %v11393 = vunpack.c.h.b16 %v10659
    %v11394 = vunpack.c.l.b16 %v10660
    %v11395 = vunpack.c.h.b16 %v10660
    %v11396 = vunpack.c.l.b16 %v10661
    %v11397 = vunpack.c.h.b16 %v10661
    %v11398 = vunpack.c.l.b16 %v10662
    %v11399 = vunpack.c.h.b16 %v10662
    %v11400 = vunpack.c.l.b16 %v10663
    %v11401 = vunpack.c.h.b16 %v10663
    %v11402 = vunpack.c.l.b16 %v10664
    %v11403 = vunpack.c.h.b16 %v10664
    %v11404 = vunpack.c.l.b16 %v10665
    %v11405 = vunpack.c.h.b16 %v10665
    %v11406 = vunpack.c.l.b16 %v10666
    %v11407 = vunpack.c.h.b16 %v10666
    %v11408 = vunpack.c.l.b16 %v10667
    %v11409 = vunpack.c.h.b16 %v10667
    %v11410 = vunpack.c.l.b16 %v10668
    %v11411 = vunpack.c.h.b16 %v10668
    %v11412 = vunpack.c.l.b16 %v10669
    %v11413 = vunpack.c.h.b16 %v10669
    %v11414 = vunpack.c.l.b16 %v10670
    %v11415 = vunpack.c.h.b16 %v10670
    %v11416 = vunpack.c.l.b16 %v10671
    %v11417 = vunpack.c.h.b16 %v10671
    %v11418 = vunpack.c.l.b16 %v10672
    %v11419 = vunpack.c.h.b16 %v10672
    %v11420 = vunpack.c.l.b16 %v10673
    %v11421 = vunpack.c.h.b16 %v10673
    %v11422 = vunpack.c.l.b16 %v10674
    %v11423 = vunpack.c.h.b16 %v10674
    %v11424 = vunpack.c.l.b16 %v10675
    %v11425 = vunpack.c.h.b16 %v10675
    %v11426 = vunpack.c.l.b16 %v10676
    %v11427 = vunpack.c.h.b16 %v10676
    %v11428 = vunpack.c.l.b16 %v10677
    %v11429 = vunpack.c.h.b16 %v10677
    %v11430 = vunpack.c.l.b16 %v10678
    %v11431 = vunpack.c.h.b16 %v10678
    %v11432 = vunpack.c.l.b16 %v10679
    %v11433 = vunpack.c.h.b16 %v10679
    %v11434 = vunpack.c.l.b16 %v10680
    %v11435 = vunpack.c.h.b16 %v10680
    %v11436 = vunpack.c.l.b16 %v10681
    %v11437 = vunpack.c.h.b16 %v10681
    %v11438 = vunpack.c.l.b16 %v10682
    %v11439 = vunpack.c.h.b16 %v10682
    %v11440 = vunpack.c.l.b16 %v10683
    %v11441 = vunpack.c.h.b16 %v10683
    %v11442 = vunpack.c.l.b16 %v10684
    %v11443 = vunpack.c.h.b16 %v10684
    %v11444 = vunpack.c.l.b16 %v10685
    %v11445 = vunpack.c.h.b16 %v10685
    %v11446 = vunpack.c.l.b16 %v10686
    %v11447 = vunpack.c.h.b16 %v10686
    %v11448 = vunpack.c.l.b16 %v10687
    %v11449 = vunpack.c.h.b16 %v10687
    %v11450 = vunpack.c.l.b16 %v10688
    %v11451 = vunpack.c.h.b16 %v10688
    %v11452 = vunpack.c.l.b16 %v10689
    %v11453 = vunpack.c.h.b16 %v10689
    %v11454 = vunpack.c.l.b16 %v10690
    %v11455 = vunpack.c.h.b16 %v10690
    %v11456 = vunpack.c.l.b16 %v10691
    %v11457 = vunpack.c.h.b16 %v10691
    %v11458 = vunpack.c.l.b16 %v10692
    %v11459 = vunpack.c.h.b16 %v10692
    %v11460 = vunpack.c.l.b16 %v10693
    %v11461 = vunpack.c.h.b16 %v10693
    %v11462 = vunpack.c.l.b16 %v10694
    %v11463 = vunpack.c.h.b16 %v10694
    %v11464 = vunpack.c.l.b16 %v10695
    %v11465 = vunpack.c.h.b16 %v10695
    %v11466 = vunpack.c.l.b16 %v10696
    %v11467 = vunpack.c.h.b16 %v10696
    %v11468 = vunpack.c.l.b16 %v10697
    %v11469 = vunpack.c.h.b16 %v10697
    %v11470 = vunpack.c.l.b16 %v10698
    %v11471 = vunpack.c.h.b16 %v10698
    %v11472 = vunpack.c.l.b16 %v10699
    %v11473 = vunpack.c.h.b16 %v10699
    %v11474 = vunpack.c.l.b16 %v10700
    %v11475 = vunpack.c.h.b16 %v10700
    %v11476 = vunpack.c.l.b16 %v10701
    %v11477 = vunpack.c.h.b16 %v10701
    %v11478 = vunpack.c.l.b16 %v10702
    %v11479 = vunpack.c.h.b16 %v10702
    %v11480 = vunpack.c.l.b16 %v10703
    %v11481 = vunpack.c.h.b16 %v10703
    %v11482 = vunpack.c.l.b16 %v10704
    %v11483 = vunpack.c.h.b16 %v10704
    %v11484 = vunpack.c.l.b16 %v10705
    %v11485 = vunpack.c.h.b16 %v10705
    %v11486 = vunpack.c.l.b16 %v10706
    %v11487 = vunpack.c.h.b16 %v10706
    %v11488 = vunpack.c.l.b16 %v10707
    %v11489 = vunpack.c.h.b16 %v10707
    %v11490 = vunpack.c.l.b16 %v10708
    %v11491 = vunpack.c.h.b16 %v10708
    %v11492 = vunpack.c.l.b16 %v10709
    %v11493 = vunpack.c.h.b16 %v10709
    %v11494 = vunpack.c.l.b16 %v10710
    %v11495 = vunpack.c.h.b16 %v10710
    %v11496 = vunpack.c.l.b16 %v10711
    %v11497 = vunpack.c.h.b16 %v10711
    %v11498 = vunpack.c.l.b16 %v10712
    %v11499 = vunpack.c.h.b16 %v10712
    %v11500 = vunpack.c.l.b16 %v10713
    %v11501 = vunpack.c.h.b16 %v10713
    %v11502 = vunpack.c.l.b16 %v10714
    %v11503 = vunpack.c.h.b16 %v10714
    %v11504 = vunpack.c.l.b16 %v10715
    %v11505 = vunpack.c.h.b16 %v10715
    %v11506 = vunpack.c.l.b16 %v10716
    %v11507 = vunpack.c.h.b16 %v10716
    %v11508 = vpack.c.b16 %v11000, %v10996
    %v11509 = vpack.c.b16 %v11001, %v10997
    %v11510 = vpack.c.b16 %v11002, %v10998
    %v11511 = vpack.c.b16 %v11003, %v10999
    %v11512 = vpack.c.b16 %v11008, %v11004
    %v11513 = vpack.c.b16 %v11009, %v11005
    %v11514 = vpack.c.b16 %v11010, %v11006
    %v11515 = vpack.c.b16 %v11011, %v11007
    %v11516 = vpack.c.b16 %v11016, %v11012
    %v11517 = vpack.c.b16 %v11017, %v11013
    %v11518 = vpack.c.b16 %v11018, %v11014
    %v11519 = vpack.c.b16 %v11019, %v11015
    %v11520 = vpack.c.b16 %v11024, %v11020
    %v11521 = vpack.c.b16 %v11025, %v11021
    %v11522 = vpack.c.b16 %v11026, %v11022
    %v11523 = vpack.c.b16 %v11027, %v11023
    %v11524 = vpack.c.b16 %v11032, %v11028
    %v11525 = vpack.c.b16 %v11033, %v11029
    %v11526 = vpack.c.b16 %v11034, %v11030
    %v11527 = vpack.c.b16 %v11035, %v11031
    %v11528 = vpack.c.b16 %v11040, %v11036
    %v11529 = vpack.c.b16 %v11041, %v11037
    %v11530 = vpack.c.b16 %v11042, %v11038
    %v11531 = vpack.c.b16 %v11043, %v11039
    %v11532 = vpack.c.b16 %v11048, %v11044
    %v11533 = vpack.c.b16 %v11049, %v11045
    %v11534 = vpack.c.b16 %v11050, %v11046
    %v11535 = vpack.c.b16 %v11051, %v11047
    %v11536 = vpack.c.b16 %v11056, %v11052
    %v11537 = vpack.c.b16 %v11057, %v11053
    %v11538 = vpack.c.b16 %v11058, %v11054
    %v11539 = vpack.c.b16 %v11059, %v11055
    %v11540 = vpack.c.b16 %v11064, %v11060
    %v11541 = vpack.c.b16 %v11065, %v11061
    %v11542 = vpack.c.b16 %v11066, %v11062
    %v11543 = vpack.c.b16 %v11067, %v11063
    %v11544 = vpack.c.b16 %v11072, %v11068
    %v11545 = vpack.c.b16 %v11073, %v11069
    %v11546 = vpack.c.b16 %v11074, %v11070
    %v11547 = vpack.c.b16 %v11075, %v11071
    %v11548 = vpack.c.b16 %v11080, %v11076
    %v11549 = vpack.c.b16 %v11081, %v11077
    %v11550 = vpack.c.b16 %v11082, %v11078
    %v11551 = vpack.c.b16 %v11083, %v11079
    %v11552 = vpack.c.b16 %v11088, %v11084
    %v11553 = vpack.c.b16 %v11089, %v11085
    %v11554 = vpack.c.b16 %v11090, %v11086
    %v11555 = vpack.c.b16 %v11091, %v11087
    %v11556 = vpack.c.b16 %v11096, %v11092
    %v11557 = vpack.c.b16 %v11097, %v11093
    %v11558 = vpack.c.b16 %v11098, %v11094
    %v11559 = vpack.c.b16 %v11099, %v11095
    %v11560 = vpack.c.b16 %v11104, %v11100
    %v11561 = vpack.c.b16 %v11105, %v11101
    %v11562 = vpack.c.b16 %v11106, %v11102
    %v11563 = vpack.c.b16 %v11107, %v11103
    %v11564 = vpack.c.b16 %v11112, %v11108
    %v11565 = vpack.c.b16 %v11113, %v11109
    %v11566 = vpack.c.b16 %v11114, %v11110
    %v11567 = vpack.c.b16 %v11115, %v11111
    %v11568 = vpack.c.b16 %v11120, %v11116
    %v11569 = vpack.c.b16 %v11121, %v11117
    %v11570 = vpack.c.b16 %v11122, %v11118
    %v11571 = vpack.c.b16 %v11123, %v11119
    %v11572 = vpack.c.b16 %v11128, %v11124
    %v11573 = vpack.c.b16 %v11129, %v11125
    %v11574 = vpack.c.b16 %v11130, %v11126
    %v11575 = vpack.c.b16 %v11131, %v11127
    %v11576 = vpack.c.b16 %v11136, %v11132
    %v11577 = vpack.c.b16 %v11137, %v11133
    %v11578 = vpack.c.b16 %v11138, %v11134
    %v11579 = vpack.c.b16 %v11139, %v11135
    %v11580 = vpack.c.b16 %v11144, %v11140
    %v11581 = vpack.c.b16 %v11145, %v11141
    %v11582 = vpack.c.b16 %v11146, %v11142
    %v11583 = vpack.c.b16 %v11147, %v11143
    %v11584 = vpack.c.b16 %v11152, %v11148
    %v11585 = vpack.c.b16 %v11153, %v11149
    %v11586 = vpack.c.b16 %v11154, %v11150
    %v11587 = vpack.c.b16 %v11155, %v11151
    %v11588 = vpack.c.b16 %v11160, %v11156
    %v11589 = vpack.c.b16 %v11161, %v11157
    %v11590 = vpack.c.b16 %v11162, %v11158
    %v11591 = vpack.c.b16 %v11163, %v11159
    %v11592 = vpack.c.b16 %v11168, %v11164
    %v11593 = vpack.c.b16 %v11169, %v11165
    %v11594 = vpack.c.b16 %v11170, %v11166
    %v11595 = vpack.c.b16 %v11171, %v11167
    %v11596 = vpack.c.b16 %v11176, %v11172
    %v11597 = vpack.c.b16 %v11177, %v11173
    %v11598 = vpack.c.b16 %v11178, %v11174
    %v11599 = vpack.c.b16 %v11179, %v11175
    %v11600 = vpack.c.b16 %v11184, %v11180
    %v11601 = vpack.c.b16 %v11185, %v11181
    %v11602 = vpack.c.b16 %v11186, %v11182
    %v11603 = vpack.c.b16 %v11187, %v11183
    %v11604 = vpack.c.b16 %v11192, %v11188
    %v11605 = vpack.c.b16 %v11193, %v11189
    %v11606 = vpack.c.b16 %v11194, %v11190
    %v11607 = vpack.c.b16 %v11195, %v11191
    %v11608 = vpack.c.b16 %v11200, %v11196
    %v11609 = vpack.c.b16 %v11201, %v11197
    %v11610 = vpack.c.b16 %v11202, %v11198
    %v11611 = vpack.c.b16 %v11203, %v11199
    %v11612 = vpack.c.b16 %v11208, %v11204
    %v11613 = vpack.c.b16 %v11209, %v11205
    %v11614 = vpack.c.b16 %v11210, %v11206
    %v11615 = vpack.c.b16 %v11211, %v11207
    %v11616 = vpack.c.b16 %v11216, %v11212
    %v11617 = vpack.c.b16 %v11217, %v11213
    %v11618 = vpack.c.b16 %v11218, %v11214
    %v11619 = vpack.c.b16 %v11219, %v11215
    %v11620 = vpack.c.b16 %v11224, %v11220
    %v11621 = vpack.c.b16 %v11225, %v11221
    %v11622 = vpack.c.b16 %v11226, %v11222
    %v11623 = vpack.c.b16 %v11227, %v11223
    %v11624 = vpack.c.b16 %v11232, %v11228
    %v11625 = vpack.c.b16 %v11233, %v11229
    %v11626 = vpack.c.b16 %v11234, %v11230
    %v11627 = vpack.c.b16 %v11235, %v11231
    %v11628 = vpack.c.b16 %v11240, %v11236
    %v11629 = vpack.c.b16 %v11241, %v11237
    %v11630 = vpack.c.b16 %v11242, %v11238
    %v11631 = vpack.c.b16 %v11243, %v11239
    %v11632 = vpack.c.b16 %v11248, %v11244
    %v11633 = vpack.c.b16 %v11249, %v11245
    %v11634 = vpack.c.b16 %v11250, %v11246
    %v11635 = vpack.c.b16 %v11251, %v11247
    %v11636 = vpack.c.b16 %v11256, %v11252
    %v11637 = vpack.c.b16 %v11257, %v11253
    %v11638 = vpack.c.b16 %v11258, %v11254
    %v11639 = vpack.c.b16 %v11259, %v11255
    %v11640 = vpack.c.b16 %v11264, %v11260
    %v11641 = vpack.c.b16 %v11265, %v11261
    %v11642 = vpack.c.b16 %v11266, %v11262
    %v11643 = vpack.c.b16 %v11267, %v11263
    %v11644 = vpack.c.b16 %v11272, %v11268
    %v11645 = vpack.c.b16 %v11273, %v11269
    %v11646 = vpack.c.b16 %v11274, %v11270
    %v11647 = vpack.c.b16 %v11275, %v11271
    %v11648 = vpack.c.b16 %v11280, %v11276
    %v11649 = vpack.c.b16 %v11281, %v11277
    %v11650 = vpack.c.b16 %v11282, %v11278
    %v11651 = vpack.c.b16 %v11283, %v11279
    %v11652 = vpack.c.b16 %v11288, %v11284
    %v11653 = vpack.c.b16 %v11289, %v11285
    %v11654 = vpack.c.b16 %v11290, %v11286
    %v11655 = vpack.c.b16 %v11291, %v11287
    %v11656 = vpack.c.b16 %v11296, %v11292
    %v11657 = vpack.c.b16 %v11297, %v11293
    %v11658 = vpack.c.b16 %v11298, %v11294
    %v11659 = vpack.c.b16 %v11299, %v11295
    %v11660 = vpack.c.b16 %v11304, %v11300
    %v11661 = vpack.c.b16 %v11305, %v11301
    %v11662 = vpack.c.b16 %v11306, %v11302
    %v11663 = vpack.c.b16 %v11307, %v11303
    %v11664 = vpack.c.b16 %v11312, %v11308
    %v11665 = vpack.c.b16 %v11313, %v11309
    %v11666 = vpack.c.b16 %v11314, %v11310
    %v11667 = vpack.c.b16 %v11315, %v11311
    %v11668 = vpack.c.b16 %v11320, %v11316
    %v11669 = vpack.c.b16 %v11321, %v11317
    %v11670 = vpack.c.b16 %v11322, %v11318
    %v11671 = vpack.c.b16 %v11323, %v11319
    %v11672 = vpack.c.b16 %v11328, %v11324
    %v11673 = vpack.c.b16 %v11329, %v11325
    %v11674 = vpack.c.b16 %v11330, %v11326
    %v11675 = vpack.c.b16 %v11331, %v11327
    %v11676 = vpack.c.b16 %v11336, %v11332
    %v11677 = vpack.c.b16 %v11337, %v11333
    %v11678 = vpack.c.b16 %v11338, %v11334
    %v11679 = vpack.c.b16 %v11339, %v11335
    %v11680 = vpack.c.b16 %v11344, %v11340
    %v11681 = vpack.c.b16 %v11345, %v11341
    %v11682 = vpack.c.b16 %v11346, %v11342
    %v11683 = vpack.c.b16 %v11347, %v11343
    %v11684 = vpack.c.b16 %v11352, %v11348
    %v11685 = vpack.c.b16 %v11353, %v11349
    %v11686 = vpack.c.b16 %v11354, %v11350
    %v11687 = vpack.c.b16 %v11355, %v11351
    %v11688 = vpack.c.b16 %v11360, %v11356
    %v11689 = vpack.c.b16 %v11361, %v11357
    %v11690 = vpack.c.b16 %v11362, %v11358
    %v11691 = vpack.c.b16 %v11363, %v11359
    %v11692 = vpack.c.b16 %v11368, %v11364
    %v11693 = vpack.c.b16 %v11369, %v11365
    %v11694 = vpack.c.b16 %v11370, %v11366
    %v11695 = vpack.c.b16 %v11371, %v11367
    %v11696 = vpack.c.b16 %v11376, %v11372
    %v11697 = vpack.c.b16 %v11377, %v11373
    %v11698 = vpack.c.b16 %v11378, %v11374
    %v11699 = vpack.c.b16 %v11379, %v11375
    %v11700 = vpack.c.b16 %v11384, %v11380
    %v11701 = vpack.c.b16 %v11385, %v11381
    %v11702 = vpack.c.b16 %v11386, %v11382
    %v11703 = vpack.c.b16 %v11387, %v11383
    %v11704 = vpack.c.b16 %v11392, %v11388
    %v11705 = vpack.c.b16 %v11393, %v11389
    %v11706 = vpack.c.b16 %v11394, %v11390
    %v11707 = vpack.c.b16 %v11395, %v11391
    %v11708 = vpack.c.b16 %v11400, %v11396
    %v11709 = vpack.c.b16 %v11401, %v11397
    %v11710 = vpack.c.b16 %v11402, %v11398
    %v11711 = vpack.c.b16 %v11403, %v11399
    %v11712 = vpack.c.b16 %v11408, %v11404
    %v11713 = vpack.c.b16 %v11409, %v11405
    %v11714 = vpack.c.b16 %v11410, %v11406
    %v11715 = vpack.c.b16 %v11411, %v11407
    %v11716 = vpack.c.b16 %v11416, %v11412
    %v11717 = vpack.c.b16 %v11417, %v11413
    %v11718 = vpack.c.b16 %v11418, %v11414
    %v11719 = vpack.c.b16 %v11419, %v11415
    %v11720 = vpack.c.b16 %v11424, %v11420
    %v11721 = vpack.c.b16 %v11425, %v11421
    %v11722 = vpack.c.b16 %v11426, %v11422
    %v11723 = vpack.c.b16 %v11427, %v11423
    %v11724 = vpack.c.b16 %v11432, %v11428
    %v11725 = vpack.c.b16 %v11433, %v11429
    %v11726 = vpack.c.b16 %v11434, %v11430
    %v11727 = vpack.c.b16 %v11435, %v11431
    %v11728 = vpack.c.b16 %v11440, %v11436
    %v11729 = vpack.c.b16 %v11441, %v11437
    %v11730 = vpack.c.b16 %v11442, %v11438
    %v11731 = vpack.c.b16 %v11443, %v11439
    %v11732 = vpack.c.b16 %v11448, %v11444
    %v11733 = vpack.c.b16 %v11449, %v11445
    %v11734 = vpack.c.b16 %v11450, %v11446
    %v11735 = vpack.c.b16 %v11451, %v11447
    %v11736 = vpack.c.b16 %v11456, %v11452
    %v11737 = vpack.c.b16 %v11457, %v11453
    %v11738 = vpack.c.b16 %v11458, %v11454
    %v11739 = vpack.c.b16 %v11459, %v11455
    %v11740 = vpack.c.b16 %v11464, %v11460
    %v11741 = vpack.c.b16 %v11465, %v11461
    %v11742 = vpack.c.b16 %v11466, %v11462
    %v11743 = vpack.c.b16 %v11467, %v11463
    %v11744 = vpack.c.b16 %v11472, %v11468
    %v11745 = vpack.c.b16 %v11473, %v11469
    %v11746 = vpack.c.b16 %v11474, %v11470
    %v11747 = vpack.c.b16 %v11475, %v11471
    %v11748 = vpack.c.b16 %v11480, %v11476
    %v11749 = vpack.c.b16 %v11481, %v11477
    %v11750 = vpack.c.b16 %v11482, %v11478
    %v11751 = vpack.c.b16 %v11483, %v11479
    %v11752 = vpack.c.b16 %v11488, %v11484
    %v11753 = vpack.c.b16 %v11489, %v11485
    %v11754 = vpack.c.b16 %v11490, %v11486
    %v11755 = vpack.c.b16 %v11491, %v11487
    %v11756 = vpack.c.b16 %v11496, %v11492
    %v11757 = vpack.c.b16 %v11497, %v11493
    %v11758 = vpack.c.b16 %v11498, %v11494
    %v11759 = vpack.c.b16 %v11499, %v11495
    %v11760 = vpack.c.b16 %v11504, %v11500
    %v11761 = vpack.c.b16 %v11505, %v11501
    %v11762 = vpack.c.b16 %v11506, %v11502
    %v11763 = vpack.c.b16 %v11507, %v11503
    %12020 = vmatprep.subr.bf16.mxu0 %v11537
    %12021 = vmatpush1.bf16.msra.mxu0 %v11536
    %12022 = vmatprep.subr.bf16.mxu0 %v11533
    %12023 = vmatpush1.bf16.msra.mxu0 %v11532
    %12024 = vmatprep.subr.bf16.mxu0 %v11529
    %12025 = vmatpush1.bf16.msra.mxu0 %v11528
    %12026 = vmatprep.subr.bf16.mxu0 %v11525
    %12027 = vmatpush1.bf16.msra.mxu0 %v11524
    %12028 = vmatprep.subr.bf16.mxu0 %v11521
    %12029 = vmatpush1.bf16.msra.mxu0 %v11520
    %12030 = vmatprep.subr.bf16.mxu0 %v11517
    %12031 = vmatpush1.bf16.msra.mxu0 %v11516
    %12032 = vmatprep.subr.bf16.mxu0 %v11513
    %12033 = vmatpush1.bf16.msra.mxu0 %v11512
    %12034 = vmatprep.subr.bf16.mxu0 %v11509
    %12035 = vmatpush1.bf16.msra.mxu0 %v11508
    %12036 = vmatprep.subr.bf16.mxu0 %v11569
    %12037 = vmatpush2.bf16.msra.mxu0 %v11568
    %12038 = vmatprep.subr.bf16.mxu0 %v11565
    %12039 = vmatpush2.bf16.msra.mxu0 %v11564
    %12040 = vmatprep.subr.bf16.mxu0 %v11561
    %12041 = vmatpush2.bf16.msra.mxu0 %v11560
    %12042 = vmatprep.subr.bf16.mxu0 %v11557
    %12043 = vmatpush2.bf16.msra.mxu0 %v11556
    %12044 = vmatprep.subr.bf16.mxu0 %v11553
    %12045 = vmatpush2.bf16.msra.mxu0 %v11552
    %12046 = vmatprep.subr.bf16.mxu0 %v11549
    %12047 = vmatpush2.bf16.msra.mxu0 %v11548
    %12048 = vmatprep.subr.bf16.mxu0 %v11545
    %12049 = vmatpush2.bf16.msra.mxu0 %v11544
    %12050 = vmatprep.subr.bf16.mxu0 %v11541
    %12051 = vmatpush2.bf16.msra.mxu0 %v11540
    %12052 = vmatprep.mubr.bf16.mxu0 %v8808
    %12053 = vmatmul.mubr.bf16.gmra.mxu0 %v8794
    %v12054 = vpop.f32.mrf.mxu0
    %v12055 = vadd.f32 %v10723, %v12054
    %v12056 = vpop.f32.mrf.mxu0
    %v12057 = vadd.f32 %v10727, %v12056
    %v12058 = vpop.f32.mrf.mxu0
    %v12059 = vpop.f32.mrf.mxu0
    %12060 = vdwg.mxu0
    %12061 = vmatprep.subr.bf16.mxu0 %v11601
    %12062 = vmatpush1.bf16.msra.mxu0 %v11600
    %12063 = vmatprep.subr.bf16.mxu0 %v11597
    %12064 = vmatpush1.bf16.msra.mxu0 %v11596
    %12065 = vmatprep.subr.bf16.mxu0 %v11593
    %12066 = vmatpush1.bf16.msra.mxu0 %v11592
    %12067 = vmatprep.subr.bf16.mxu0 %v11589
    %12068 = vmatpush1.bf16.msra.mxu0 %v11588
    %12069 = vmatprep.subr.bf16.mxu0 %v11585
    %12070 = vmatpush1.bf16.msra.mxu0 %v11584
    %12071 = vmatprep.subr.bf16.mxu0 %v11581
    %12072 = vmatpush1.bf16.msra.mxu0 %v11580
    %12073 = vmatprep.subr.bf16.mxu0 %v11577
    %12074 = vmatpush1.bf16.msra.mxu0 %v11576
    %12075 = vmatprep.subr.bf16.mxu0 %v11573
    %12076 = vmatpush1.bf16.msra.mxu0 %v11572
    %12077 = vmatprep.subr.bf16.mxu0 %v11633
    %12078 = vmatpush2.bf16.msra.mxu0 %v11632
    %12079 = vmatprep.subr.bf16.mxu0 %v11629
    %12080 = vmatpush2.bf16.msra.mxu0 %v11628
    %12081 = vmatprep.subr.bf16.mxu0 %v11625
    %12082 = vmatpush2.bf16.msra.mxu0 %v11624
    %12083 = vmatprep.subr.bf16.mxu0 %v11621
    %12084 = vmatpush2.bf16.msra.mxu0 %v11620
    %12085 = vmatprep.subr.bf16.mxu0 %v11617
    %12086 = vmatpush2.bf16.msra.mxu0 %v11616
    %12087 = vmatprep.subr.bf16.mxu0 %v11613
    %12088 = vmatpush2.bf16.msra.mxu0 %v11612
    %12089 = vmatprep.subr.bf16.mxu0 %v11609
    %12090 = vmatpush2.bf16.msra.mxu0 %v11608
    %12091 = vmatprep.subr.bf16.mxu0 %v11605
    %12092 = vmatpush2.bf16.msra.mxu0 %v11604
    %12093 = vmatprep.mubr.bf16.mxu0 %v8818
    %12094 = vmatmul.mubr.bf16.gmra.mxu0 %v8816
    %v12095 = vpop.f32.mrf.mxu0
    %v12096 = vadd.f32 %v12055, %v12095
    %v12097 = vpop.f32.mrf.mxu0
    %v12098 = vadd.f32 %v12057, %v12097
    %v12099 = vpop.f32.mrf.mxu0
    %v12100 = vpop.f32.mrf.mxu0
    %12101 = vdwg.mxu0
    %12102 = vmatprep.subr.bf16.mxu0 %v11665
    %12103 = vmatpush1.bf16.msra.mxu0 %v11664
    %12104 = vmatprep.subr.bf16.mxu0 %v11661
    %12105 = vmatpush1.bf16.msra.mxu0 %v11660
    %12106 = vmatprep.subr.bf16.mxu0 %v11657
    %12107 = vmatpush1.bf16.msra.mxu0 %v11656
    %12108 = vmatprep.subr.bf16.mxu0 %v11653
    %12109 = vmatpush1.bf16.msra.mxu0 %v11652
    %12110 = vmatprep.subr.bf16.mxu0 %v11649
    %12111 = vmatpush1.bf16.msra.mxu0 %v11648
    %12112 = vmatprep.subr.bf16.mxu0 %v11645
    %12113 = vmatpush1.bf16.msra.mxu0 %v11644
    %12114 = vmatprep.subr.bf16.mxu0 %v11641
    %12115 = vmatpush1.bf16.msra.mxu0 %v11640
    %12116 = vmatprep.subr.bf16.mxu0 %v11637
    %12117 = vmatpush1.bf16.msra.mxu0 %v11636
    %12118 = vmatprep.subr.bf16.mxu0 %v11697
    %12119 = vmatpush2.bf16.msra.mxu0 %v11696
    %12120 = vmatprep.subr.bf16.mxu0 %v11693
    %12121 = vmatpush2.bf16.msra.mxu0 %v11692
    %12122 = vmatprep.subr.bf16.mxu0 %v11689
    %12123 = vmatpush2.bf16.msra.mxu0 %v11688
    %12124 = vmatprep.subr.bf16.mxu0 %v11685
    %12125 = vmatpush2.bf16.msra.mxu0 %v11684
    %12126 = vmatprep.subr.bf16.mxu0 %v11681
    %12127 = vmatpush2.bf16.msra.mxu0 %v11680
    %12128 = vmatprep.subr.bf16.mxu0 %v11677
    %12129 = vmatpush2.bf16.msra.mxu0 %v11676
    %12130 = vmatprep.subr.bf16.mxu0 %v11673
    %12131 = vmatpush2.bf16.msra.mxu0 %v11672
    %12132 = vmatprep.subr.bf16.mxu0 %v11669
    %12133 = vmatpush2.bf16.msra.mxu0 %v11668
    %12134 = vmatprep.mubr.bf16.mxu0 %v8815
    %12135 = vmatmul.mubr.bf16.gmra.mxu0 %v8801
    %v12136 = vpop.f32.mrf.mxu0
    %v12137 = vadd.f32 %v12096, %v12136
    %v12138 = vpop.f32.mrf.mxu0
    %v12139 = vadd.f32 %v12098, %v12138
    %v12140 = vpop.f32.mrf.mxu0
    %v12141 = vpop.f32.mrf.mxu0
    %12142 = vdwg.mxu0
    %12143 = vmatprep.subr.bf16.mxu0 %v11729
    %12144 = vmatpush1.bf16.msra.mxu0 %v11728
    %12145 = vmatprep.subr.bf16.mxu0 %v11725
    %12146 = vmatpush1.bf16.msra.mxu0 %v11724
    %12147 = vmatprep.subr.bf16.mxu0 %v11721
    %12148 = vmatpush1.bf16.msra.mxu0 %v11720
    %12149 = vmatprep.subr.bf16.mxu0 %v11717
    %12150 = vmatpush1.bf16.msra.mxu0 %v11716
    %12151 = vmatprep.subr.bf16.mxu0 %v11713
    %12152 = vmatpush1.bf16.msra.mxu0 %v11712
    %12153 = vmatprep.subr.bf16.mxu0 %v11709
    %12154 = vmatpush1.bf16.msra.mxu0 %v11708
    %12155 = vmatprep.subr.bf16.mxu0 %v11705
    %12156 = vmatpush1.bf16.msra.mxu0 %v11704
    %12157 = vmatprep.subr.bf16.mxu0 %v11701
    %12158 = vmatpush1.bf16.msra.mxu0 %v11700
    %12159 = vmatprep.subr.bf16.mxu0 %v11761
    %12160 = vmatpush2.bf16.msra.mxu0 %v11760
    %12161 = vmatprep.subr.bf16.mxu0 %v11757
    %12162 = vmatpush2.bf16.msra.mxu0 %v11756
    %12163 = vmatprep.subr.bf16.mxu0 %v11753
    %12164 = vmatpush2.bf16.msra.mxu0 %v11752
    %12165 = vmatprep.subr.bf16.mxu0 %v11749
    %12166 = vmatpush2.bf16.msra.mxu0 %v11748
    %12167 = vmatprep.subr.bf16.mxu0 %v11745
    %12168 = vmatpush2.bf16.msra.mxu0 %v11744
    %12169 = vmatprep.subr.bf16.mxu0 %v11741
    %12170 = vmatpush2.bf16.msra.mxu0 %v11740
    %12171 = vmatprep.subr.bf16.mxu0 %v11737
    %12172 = vmatpush2.bf16.msra.mxu0 %v11736
    %12173 = vmatprep.subr.bf16.mxu0 %v11733
    %12174 = vmatpush2.bf16.msra.mxu0 %v11732
    %12175 = vmatprep.mubr.bf16.mxu0 %v8819
    %12176 = vmatmul.mubr.bf16.gmra.mxu0 %v8817
    %v12177 = vpop.f32.mrf.mxu0
    %v12178 = vadd.f32 %v12137, %v12177
    %v12179 = vpop.f32.mrf.mxu0
    %v12180 = vadd.f32 %v12139, %v12179
    %v12181 = vpop.f32.mrf.mxu0
    %v12182 = vpop.f32.mrf.mxu0
    %12183 = vdwg.mxu0
    %12184 = vmatprep.subr.bf16.mxu0 %v11539
    %12185 = vmatpush1.bf16.msra.mxu0 %v11538
    %12186 = vmatprep.subr.bf16.mxu0 %v11535
    %12187 = vmatpush1.bf16.msra.mxu0 %v11534
    %12188 = vmatprep.subr.bf16.mxu0 %v11531
    %12189 = vmatpush1.bf16.msra.mxu0 %v11530
    %12190 = vmatprep.subr.bf16.mxu0 %v11527
    %12191 = vmatpush1.bf16.msra.mxu0 %v11526
    %12192 = vmatprep.subr.bf16.mxu0 %v11523
    %12193 = vmatpush1.bf16.msra.mxu0 %v11522
    %12194 = vmatprep.subr.bf16.mxu0 %v11519
    %12195 = vmatpush1.bf16.msra.mxu0 %v11518
    %12196 = vmatprep.subr.bf16.mxu0 %v11515
    %12197 = vmatpush1.bf16.msra.mxu0 %v11514
    %12198 = vmatprep.subr.bf16.mxu0 %v11511
    %12199 = vmatpush1.bf16.msra.mxu0 %v11510
    %12200 = vmatprep.subr.bf16.mxu0 %v11571
    %12201 = vmatpush2.bf16.msra.mxu0 %v11570
    %12202 = vmatprep.subr.bf16.mxu0 %v11567
    %12203 = vmatpush2.bf16.msra.mxu0 %v11566
    %12204 = vmatprep.subr.bf16.mxu0 %v11563
    %12205 = vmatpush2.bf16.msra.mxu0 %v11562
    %12206 = vmatprep.subr.bf16.mxu0 %v11559
    %12207 = vmatpush2.bf16.msra.mxu0 %v11558
    %12208 = vmatprep.subr.bf16.mxu0 %v11555
    %12209 = vmatpush2.bf16.msra.mxu0 %v11554
    %12210 = vmatprep.subr.bf16.mxu0 %v11551
    %12211 = vmatpush2.bf16.msra.mxu0 %v11550
    %12212 = vmatprep.subr.bf16.mxu0 %v11547
    %12213 = vmatpush2.bf16.msra.mxu0 %v11546
    %12214 = vmatprep.subr.bf16.mxu0 %v11543
    %12215 = vmatpush2.bf16.msra.mxu0 %v11542
    %12216 = vmatprep.mubr.bf16.mxu0 %v8808
    %12217 = vmatmul.mubr.bf16.gmra.mxu0 %v8794
    %v12218 = vpop.f32.mrf.mxu0
    %v12219 = vadd.f32 %v10731, %v12218
    %v12220 = vpop.f32.mrf.mxu0
    %v12221 = vadd.f32 %v10735, %v12220
    %v12222 = vpop.f32.mrf.mxu0
    %v12223 = vpop.f32.mrf.mxu0
    %12224 = vdwg.mxu0
    %12225 = vmatprep.subr.bf16.mxu0 %v11603
    %12226 = vmatpush1.bf16.msra.mxu0 %v11602
    %12227 = vmatprep.subr.bf16.mxu0 %v11599
    %12228 = vmatpush1.bf16.msra.mxu0 %v11598
    %12229 = vmatprep.subr.bf16.mxu0 %v11595
    %12230 = vmatpush1.bf16.msra.mxu0 %v11594
    %12231 = vmatprep.subr.bf16.mxu0 %v11591
    %12232 = vmatpush1.bf16.msra.mxu0 %v11590
    %12233 = vmatprep.subr.bf16.mxu0 %v11587
    %12234 = vmatpush1.bf16.msra.mxu0 %v11586
    %12235 = vmatprep.subr.bf16.mxu0 %v11583
    %12236 = vmatpush1.bf16.msra.mxu0 %v11582
    %12237 = vmatprep.subr.bf16.mxu0 %v11579
    %12238 = vmatpush1.bf16.msra.mxu0 %v11578
    %12239 = vmatprep.subr.bf16.mxu0 %v11575
    %12240 = vmatpush1.bf16.msra.mxu0 %v11574
    %12241 = vmatprep.subr.bf16.mxu0 %v11635
    %12242 = vmatpush2.bf16.msra.mxu0 %v11634
    %12243 = vmatprep.subr.bf16.mxu0 %v11631
    %12244 = vmatpush2.bf16.msra.mxu0 %v11630
    %12245 = vmatprep.subr.bf16.mxu0 %v11627
    %12246 = vmatpush2.bf16.msra.mxu0 %v11626
    %12247 = vmatprep.subr.bf16.mxu0 %v11623
    %12248 = vmatpush2.bf16.msra.mxu0 %v11622
    %12249 = vmatprep.subr.bf16.mxu0 %v11619
    %12250 = vmatpush2.bf16.msra.mxu0 %v11618
    %12251 = vmatprep.subr.bf16.mxu0 %v11615
    %12252 = vmatpush2.bf16.msra.mxu0 %v11614
    %12253 = vmatprep.subr.bf16.mxu0 %v11611
    %12254 = vmatpush2.bf16.msra.mxu0 %v11610
    %12255 = vmatprep.subr.bf16.mxu0 %v11607
    %12256 = vmatpush2.bf16.msra.mxu0 %v11606
    %12257 = vmatprep.mubr.bf16.mxu0 %v8818
    %12258 = vmatmul.mubr.bf16.gmra.mxu0 %v8816
    %v12259 = vpop.f32.mrf.mxu0
    %v12260 = vadd.f32 %v12219, %v12259
    %v12261 = vpop.f32.mrf.mxu0
    %v12262 = vadd.f32 %v12221, %v12261
    %v12263 = vpop.f32.mrf.mxu0
    %v12264 = vpop.f32.mrf.mxu0
    %12265 = vdwg.mxu0
    %12266 = vmatprep.subr.bf16.mxu0 %v11667
    %12267 = vmatpush1.bf16.msra.mxu0 %v11666
    %12268 = vmatprep.subr.bf16.mxu0 %v11663
    %12269 = vmatpush1.bf16.msra.mxu0 %v11662
    %12270 = vmatprep.subr.bf16.mxu0 %v11659
    %12271 = vmatpush1.bf16.msra.mxu0 %v11658
    %12272 = vmatprep.subr.bf16.mxu0 %v11655
    %12273 = vmatpush1.bf16.msra.mxu0 %v11654
    %12274 = vmatprep.subr.bf16.mxu0 %v11651
    %12275 = vmatpush1.bf16.msra.mxu0 %v11650
    %12276 = vmatprep.subr.bf16.mxu0 %v11647
    %12277 = vmatpush1.bf16.msra.mxu0 %v11646
    %12278 = vmatprep.subr.bf16.mxu0 %v11643
    %12279 = vmatpush1.bf16.msra.mxu0 %v11642
    %12280 = vmatprep.subr.bf16.mxu0 %v11639
    %12281 = vmatpush1.bf16.msra.mxu0 %v11638
    %12282 = vmatprep.subr.bf16.mxu0 %v11699
    %12283 = vmatpush2.bf16.msra.mxu0 %v11698
    %12284 = vmatprep.subr.bf16.mxu0 %v11695
    %12285 = vmatpush2.bf16.msra.mxu0 %v11694
    %12286 = vmatprep.subr.bf16.mxu0 %v11691
    %12287 = vmatpush2.bf16.msra.mxu0 %v11690
    %12288 = vmatprep.subr.bf16.mxu0 %v11687
    %12289 = vmatpush2.bf16.msra.mxu0 %v11686
    %12290 = vmatprep.subr.bf16.mxu0 %v11683
    %12291 = vmatpush2.bf16.msra.mxu0 %v11682
    %12292 = vmatprep.subr.bf16.mxu0 %v11679
    %12293 = vmatpush2.bf16.msra.mxu0 %v11678
    %12294 = vmatprep.subr.bf16.mxu0 %v11675
    %12295 = vmatpush2.bf16.msra.mxu0 %v11674
    %12296 = vmatprep.subr.bf16.mxu0 %v11671
    %12297 = vmatpush2.bf16.msra.mxu0 %v11670
    %12298 = vmatprep.mubr.bf16.mxu0 %v8815
    %12299 = vmatmul.mubr.bf16.gmra.mxu0 %v8801
    %v12300 = vpop.f32.mrf.mxu0
    %v12301 = vadd.f32 %v12260, %v12300
    %v12302 = vpop.f32.mrf.mxu0
    %v12303 = vadd.f32 %v12262, %v12302
    %v12304 = vpop.f32.mrf.mxu0
    %v12305 = vpop.f32.mrf.mxu0
    %12306 = vdwg.mxu0
    %12307 = vmatprep.subr.bf16.mxu0 %v11731
    %12308 = vmatpush1.bf16.msra.mxu0 %v11730
    %12309 = vmatprep.subr.bf16.mxu0 %v11727
    %12310 = vmatpush1.bf16.msra.mxu0 %v11726
    %12311 = vmatprep.subr.bf16.mxu0 %v11723
    %12312 = vmatpush1.bf16.msra.mxu0 %v11722
    %12313 = vmatprep.subr.bf16.mxu0 %v11719
    %12314 = vmatpush1.bf16.msra.mxu0 %v11718
    %12315 = vmatprep.subr.bf16.mxu0 %v11715
    %12316 = vmatpush1.bf16.msra.mxu0 %v11714
    %12317 = vmatprep.subr.bf16.mxu0 %v11711
    %12318 = vmatpush1.bf16.msra.mxu0 %v11710
    %12319 = vmatprep.subr.bf16.mxu0 %v11707
    %12320 = vmatpush1.bf16.msra.mxu0 %v11706
    %12321 = vmatprep.subr.bf16.mxu0 %v11703
    %12322 = vmatpush1.bf16.msra.mxu0 %v11702
    %12323 = vmatprep.subr.bf16.mxu0 %v11763
    %12324 = vmatpush2.bf16.msra.mxu0 %v11762
    %12325 = vmatprep.subr.bf16.mxu0 %v11759
    %12326 = vmatpush2.bf16.msra.mxu0 %v11758
    %12327 = vmatprep.subr.bf16.mxu0 %v11755
    %12328 = vmatpush2.bf16.msra.mxu0 %v11754
    %12329 = vmatprep.subr.bf16.mxu0 %v11751
    %12330 = vmatpush2.bf16.msra.mxu0 %v11750
    %12331 = vmatprep.subr.bf16.mxu0 %v11747
    %12332 = vmatpush2.bf16.msra.mxu0 %v11746
    %12333 = vmatprep.subr.bf16.mxu0 %v11743
    %12334 = vmatpush2.bf16.msra.mxu0 %v11742
    %12335 = vmatprep.subr.bf16.mxu0 %v11739
    %12336 = vmatpush2.bf16.msra.mxu0 %v11738
    %12337 = vmatprep.subr.bf16.mxu0 %v11735
    %12338 = vmatpush2.bf16.msra.mxu0 %v11734
    %12339 = vmatprep.mubr.bf16.mxu0 %v8819
    %12340 = vmatmul.mubr.bf16.gmra.mxu0 %v8817
    %v12341 = vpop.f32.mrf.mxu0
    %v12342 = vadd.f32 %v12301, %v12341
    %v12343 = vpop.f32.mrf.mxu0
    %v12344 = vadd.f32 %v12303, %v12343
    %v12345 = vpop.f32.mrf.mxu0
    %v12346 = vpop.f32.mrf.mxu0
    %12347 = vdwg.mxu0
    %v12352 = vcombine.low %v12178, %v12180
    %v12353 = vcombine.low %v12342, %v12344
    %v12355 = vunpack.c.l.s4 1983009808
    %v12356 = vunpack.c.0.s8 %v12355
    %v12357 = vlaneseq
    %v12358 = vshrl.u32 %v12357, 7
    %v12359 = vsub.s32 %v12356, %v12358
    %v12360 = vrot.slane %v12352, %v12359
    %v12362 = vunpack.c.l.s4 1983009808
    %v12363 = vunpack.c.0.s8 %v12362
    %v12364 = vlaneseq
    %v12365 = vshrl.u32 %v12364, 7
    %v12366 = vsub.s32 %v12363, %v12365
    %v12367 = vrot.slane %v12353, %v12366
    %v12368 = vcombine.low %v12360, %v12367
    %12370 = vst [vmem:[#allocation8 + $0x8] sm:$0xff] %v12368
    // Predicated region
    $region110: #{cnn_encoder_forward.1} parent=1 // pred_check
      _
    $region111: #{cnn_encoder_forward.1} parent=1 // pred_check_branch
      %12372 = sbr.rel (0) target = $region113
    $region112: #{cnn_encoder_forward.1} parent=1 // pred_region
      %s12374 = ssub.s32 256, 256
      %12375 = vsyncadd [#allocation7], %s12374
      %s12377 = sshll.u32 [#allocation8], 4
      %s12378 = int_to_ptr.vmem [resolvable:$true] %s12377
      %12380 = dma.vmem_to_hbm [thread:$0]  %s12378, 256, %s10, [#allocation7]
    $region113: #{cnn_encoder_forward.1} parent=1 // pred_fallthru
      _
    // Predicated region
    $region114: #{cnn_encoder_forward.1} parent=1 // pred_check
      _
    $region115: #{cnn_encoder_forward.1} parent=1 // pred_check_branch
      %12382 = sbr.rel (0) target = $region117
    $region116: #{cnn_encoder_forward.1} parent=1 // pred_region
      %12383 = dma.done [#allocation7], 256
    $region117: #{cnn_encoder_forward.1} parent=1 // pred_fallthru
      _
    %12384 = vsyncpa [#allocation6], 1
    %12385 = vsyncpa [#allocation7], 1
  %12386 = vsyncmov [#allocation4]
  %s12387 = vpop.sfrf %12386
  %p12388 = scmp.eq.s32.totalorder %s12387, 0
  %p12389 = pneg %p12388
  %12391 = shalt.err (%p12389)
  %s12392 = scalar_lea.sflag [#allocation4], 1
  %12393 = vsyncmov %s12392
  %s12394 = vpop.sfrf %12393
  %p12395 = scmp.eq.s32.totalorder %s12394, 0
  %p12396 = pneg %p12395
  %12398 = shalt.err (%p12396)

</llo_original>
